<compile_context>
chip_gen: v7x
topology: tpu7x:2x2x1
jax: 0.10.0
libtpu: 0.0.40
codegen_flags: <defaults>
</compile_context>

<pallas_src>
import functools

import jax
import jax.numpy as jnp
from jax import lax
from jax.experimental import pallas as pl
from jax.experimental.pallas import tpu as pltpu

# ---------------- scaled-down ViT config ----------------
IMG = 32            # image size (torch: 224)
PATCH = 16          # patch size (same as ViT-B/16)
CH = 3              # input channels
D = 64              # hidden dim (torch: 768)
HEADS = 4           # attention heads (torch: 12)
HEAD_DIM = D // HEADS
MLP = 4 * D         # MLP dim (torch: 3072)
LAYERS = 2          # encoder layers (torch: 12)
NUM_CLASS = 10      # custom classification head
NUM_CLASS_PAD = 128  # lane-dense head output, sliced to NUM_CLASS in wrapper
EPS = 1e-6          # torchvision ViT uses LayerNorm(eps=1e-6)

N_PATCH = (IMG // PATCH) ** 2      # 4 patches
SEQ = N_PATCH + 1                  # 5 real tokens (cls + patches)
S_PAD = 8                          # sublane-aligned sequence length
CPP = CH * PATCH * PATCH           # 768 = 6 * 128 (lane aligned)

# 16 images per grid step -> M = 128 token rows per matmul (native v5e MXU
# height; on v6e/v7x TILE_B=32 would also fit comfortably in VMEM).
TILE_B = 16
M_TOK = TILE_B * S_PAD             # 128

_VMEM = pl.BlockSpec(memory_space=pltpu.MemorySpace.VMEM)

# rows in the packed "small params" array (each row padded to MLP lanes)
_SMALL_ROWS_PER_LAYER = 8          # ln1_g, ln1_b, ln2_g, ln2_b, qkv_b, out_b, fc1_b, fc2_b
_SMALL_ROWS = LAYERS * _SMALL_ROWS_PER_LAYER + 3  # + final ln_g, ln_b, head_b


# ---------------- in-kernel helpers ----------------
def _layernorm(x, g, b):
    mu = jnp.mean(x, axis=-1, keepdims=True)
    var = jnp.mean((x - mu) ** 2, axis=-1, keepdims=True)
    return (x - mu) * lax.rsqrt(var + EPS) * g + b


def _gelu(x):
    # torch nn.GELU() default: exact erf form.
    return 0.5 * x * (1.0 + lax.erf(x * 0.7071067811865476))


def _mm(a, b):
    # bf16 MXU matmul, fp32 accumulation.
    return jnp.dot(a.astype(jnp.bfloat16), b.astype(jnp.bfloat16),
                   preferred_element_type=jnp.float32)


def _mm_nt(a, b):
    # a @ b.T without materializing the transpose.
    return lax.dot_general(a.astype(jnp.bfloat16), b.astype(jnp.bfloat16),
                           (((1,), (1,)), ((), ())),
                           preferred_element_type=jnp.float32)


# ---------------- fused kernel (one grid step == TILE_B images) ----------------
def vit_fused_kernel(patches_ref, base_ref, conv_w_ref, small_ref, *rest):
    big_refs = rest[:4 * LAYERS]              # per layer: qkv_w, out_w, fc1_w, fc2_w
    head_w_ref = rest[4 * LAYERS]
    out_ref = rest[4 * LAYERS + 1]

    def srow(r, width):
        # static row / prefix-lane slice of the packed small-param array
        return small_ref[r:r + 1, :width]

    # ---- patch embedding (conv_proj expressed as im2col matmul) ----
    # M = 128 token rows for TILE_B images; `base` carries class_token + pos
    # for row 0 of every image, conv bias + pos for patch rows, zeros for pads.
    x = _mm(patches_ref[...], conv_w_ref[...]) + base_ref[...]     # [M, D] f32
    # TODO(synk): torch forward hook would copy this conv_proj output to CPU.

    # static block-diagonal attention mask: same image AND key token < SEQ.
    shift = S_PAD.bit_length() - 1            # S_PAD is a power of two
    row = lax.broadcasted_iota(jnp.int32, (M_TOK, M_TOK), 0)
    col = lax.broadcasted_iota(jnp.int32, (M_TOK, M_TOK), 1)
    mask = jnp.logical_and((row >> shift) == (col >> shift),
                           (col & (S_PAD - 1)) < SEQ)

    for li in range(LAYERS):                  # static unroll (2 layers)
        qkvw, ow, w1, w2 = big_refs[4 * li:4 * li + 4]
        r0 = li * _SMALL_ROWS_PER_LAYER
        ln1g = srow(r0 + 0, D)
        ln1b = srow(r0 + 1, D)
        ln2g = srow(r0 + 2, D)
        ln2b = srow(r0 + 3, D)
        qkvb = srow(r0 + 4, 3 * D)            # q part pre-scaled by 1/sqrt(hd)
        ob = srow(r0 + 5, D)
        b1 = srow(r0 + 6, MLP)
        b2 = srow(r0 + 7, D)

        # ---- pre-LN multi-head self-attention (all TILE_B images at once) ----
        h = _layernorm(x, ln1g, ln1b)
        qkv = _mm(h, qkvw[...]) + qkvb                              # [M, 3D]
        q = qkv[:, 0 * D:1 * D]
        k = qkv[:, 1 * D:2 * D]
        v = qkv[:, 2 * D:3 * D]

        head_outs = []
        for hh in range(HEADS):               # static unroll, lane slices
            lo = hh * HEAD_DIM
            hi = lo + HEAD_DIM
            s = _mm_nt(q[:, lo:hi], k[:, lo:hi])                    # [M, M]
            s = jnp.where(mask, s, -1e30)
            s = s - jnp.max(s, axis=-1, keepdims=True)
            p = jnp.exp(s)
            p = p * pl.reciprocal(jnp.sum(p, axis=-1, keepdims=True),
                                  approx=True)
            head_outs.append(_mm(p, v[:, lo:hi]))                   # [M, hd]
        attn = jnp.concatenate(head_outs, axis=-1)                  # [M, D]
        x = x + _mm(attn, ow[...]) + ob

        # ---- pre-LN MLP ----
        h2 = _layernorm(x, ln2g, ln2b)
        f = _gelu(_mm(h2, w1[...]) + b1)                            # [M, MLP]
        x = x + _mm(f, w2[...]) + b2

    # ---- final LayerNorm, gather class-token rows, classification head ----
    r0 = LAYERS * _SMALL_ROWS_PER_LAYER
    ln_g = srow(r0 + 0, D)
    ln_b = srow(r0 + 1, D)
    head_b = srow(r0 + 2, NUM_CLASS_PAD)

    hf = _layernorm(x, ln_g, ln_b)                                  # [M, D]
    # gather the TILE_B class-token rows (rows i*S_PAD) via a static
    # 0/1 selection matmul -- cheap MXU op, no strided relayout needed.
    ri = lax.broadcasted_iota(jnp.int32, (TILE_B, M_TOK), 0)
    ci = lax.broadcasted_iota(jnp.int32, (TILE_B, M_TOK), 1)
    sel = (ci == ri * S_PAD).astype(jnp.bfloat16)                   # [TILE_B, M]
    cls = _mm(sel, hf)                                              # [TILE_B, D]
    out_ref[...] = _mm(cls, head_w_ref[...]) + head_b               # [TILE_B, 128]


# ---------------- wrapper ----------------
def vit16_forward(x, params):
    # x: NCHW [B, CH, IMG, IMG] float32
    B = x.shape[0]
    n_steps = pl.cdiv(B, TILE_B)
    B_pad = n_steps * TILE_B
    gh = gw = IMG // PATCH

    # im2col matching conv_proj(kernel=stride=PATCH): each patch flattened
    # channel-major (C, ph, pw), patches in row-major raster order.
    patches = (x.reshape(B, CH, gh, PATCH, gw, PATCH)
                .transpose(0, 2, 4, 1, 3, 5)
                .reshape(B, N_PATCH, CPP))
    # pad to sublane-aligned sequence + padded batch, stream in bf16.
    patches_pad = jnp.zeros((B_pad, S_PAD, CPP), jnp.bfloat16)
    patches_pad = patches_pad.at[:B, 1:1 + N_PATCH, :].set(
        patches.astype(jnp.bfloat16))
    patches_flat = patches_pad.reshape(B_pad * S_PAD, CPP)

    # additive per-token base (class token + pos, conv bias + pos, pad zeros),
    # tiled over the TILE_B images of one grid step.
    base = jnp.zeros((S_PAD, D), jnp.float32)
    base = base.at[0, :].set(params['class_token'].reshape(D)
                             + params['pos_embedding'][0, 0])
    base = base.at[1:SEQ, :].set(params['conv_b'].reshape(1, D)
                                 + params['pos_embedding'][0, 1:SEQ])
    base_tiled = jnp.tile(base, (TILE_B, 1))                        # [M_TOK, D]

    bf16 = lambda w: w.astype(jnp.bfloat16)

    def pad_row(v):
        v = jnp.asarray(v, jnp.float32).reshape(1, -1)
        return jnp.pad(v, ((0, 0), (0, MLP - v.shape[1])))

    # fold 1/sqrt(HEAD_DIM) into the q columns of qkv weights & bias.
    scale = 1.0 / (HEAD_DIM ** 0.5)
    col_scale = jnp.concatenate(
        [jnp.full((3 * D,), 1.0, jnp.float32).at[:D].set(scale)])[None, :]

    small_rows = []
    big_args = []
    for lp in params['layers']:
        qkv_w = lp['qkv_w'] * col_scale
        qkv_b = lp['qkv_b'] * col_scale
        small_rows += [pad_row(lp['ln1_g']), pad_row(lp['ln1_b']),
                       pad_row(lp['ln2_g']), pad_row(lp['ln2_b']),
                       pad_row(qkv_b), pad_row(lp['out_b']),
                       pad_row(lp['fc1_b']), pad_row(lp['fc2_b'])]
        big_args += [bf16(qkv_w), bf16(lp['out_w']),
                     bf16(lp['fc1_w']), bf16(lp['fc2_w'])]

    head_b = jnp.zeros((1, NUM_CLASS_PAD), jnp.float32)
    head_b = head_b.at[:, :NUM_CLASS].set(params['head_b'])
    small_rows += [pad_row(params['ln_g']), pad_row(params['ln_b']),
                   pad_row(head_b)]
    small = jnp.concatenate(small_rows, axis=0)         # [_SMALL_ROWS, MLP] f32

    head_w = jnp.zeros((D, NUM_CLASS_PAD), jnp.float32)
    head_w = head_w.at[:, :NUM_CLASS].set(params['head_w'])

    args = ([patches_flat, base_tiled, bf16(params['conv_w']), small]
            + big_args + [bf16(head_w)])

    in_specs = ([pl.BlockSpec((M_TOK, CPP), lambda b: (b, 0))]
                + [_VMEM] * (len(args) - 1))

    out = pl.pallas_call(
        vit_fused_kernel,
        out_shape=jax.ShapeDtypeStruct((B_pad, NUM_CLASS_PAD), jnp.float32),
        grid=(n_steps,),
        in_specs=in_specs,
        out_specs=pl.BlockSpec((TILE_B, NUM_CLASS_PAD), lambda b: (b, 0)),
        compiler_params=pltpu.CompilerParams(
            dimension_semantics=("parallel",)),
    )(*args)
    # lanes beyond NUM_CLASS and rows beyond B are padding.
    return out[:B, :NUM_CLASS]


# ---------------- parameter init (deterministic, synthetic) ----------------
def init_params(key):
    def nrm(k, shape, scale=0.02):
        return (scale * jax.random.normal(k, shape)).astype(jnp.float32)

    keys = jax.random.split(key, 8 + LAYERS * 8)
    seq = N_PATCH + 1
    params = {
        'conv_w': nrm(keys[0], (CPP, D)),                    # conv_proj, [in, out]
        'conv_b': jnp.zeros((1, D), jnp.float32),
        'class_token': nrm(keys[1], (1, 1, D)),
        'pos_embedding': nrm(keys[2], (1, seq, D)),
        'ln_g': jnp.ones((1, D), jnp.float32),               # encoder.ln
        'ln_b': jnp.zeros((1, D), jnp.float32),
        'head_w': nrm(keys[3], (D, NUM_CLASS)),              # heads[0], [in, out]
        'head_b': jnp.zeros((1, NUM_CLASS), jnp.float32),
        'layers': [],
    }
    for li in range(LAYERS):
        k = keys[8 + li * 8: 8 + (li + 1) * 8]
        params['layers'].append({
            'ln1_g': jnp.ones((1, D), jnp.float32),
            'ln1_b': jnp.zeros((1, D), jnp.float32),
            'qkv_w': nrm(k[0], (D, 3 * D)),
            'qkv_b': jnp.zeros((1, 3 * D), jnp.float32),
            'out_w': nrm(k[1], (D, D)),
            'out_b': jnp.zeros((1, D), jnp.float32),
            'ln2_g': jnp.ones((1, D), jnp.float32),
            'ln2_b': jnp.zeros((1, D), jnp.float32),
            'fc1_w': nrm(k[2], (D, MLP)),
            'fc1_b': jnp.zeros((1, MLP), jnp.float32),
            'fc2_w': nrm(k[3], (MLP, D)),
            'fc2_b': jnp.zeros((1, D), jnp.float32),
        })
    return params


if __name__ == "__main__":
    key = jax.random.PRNGKey(0)
    pkey, xkey = jax.random.split(key)
    params = init_params(pkey)
    x = jax.random.normal(xkey, (2, CH, IMG, IMG), dtype=jnp.float32)
    logits = jax.jit(functools.partial(vit16_forward, params=params))(x)
    jax.block_until_ready(logits)
    assert logits.shape == (2, NUM_CLASS) and logits.dtype == jnp.float32
    print("KERNEL_OK")
</pallas_src>

<mosaic_0001>
module attributes {stable_mosaic.version = 11 : i64} {
  func.func @vit_fused_kernel(%arg0: i32, %arg1: memref<128x768xbf16, #tpu.memory_space<vmem>>, %arg2: memref<128x64xf32, #tpu.memory_space<vmem>>, %arg3: memref<768x64xbf16, #tpu.memory_space<vmem>>, %arg4: memref<19x256xf32, #tpu.memory_space<vmem>>, %arg5: memref<64x192xbf16, #tpu.memory_space<vmem>>, %arg6: memref<64x64xbf16, #tpu.memory_space<vmem>>, %arg7: memref<64x256xbf16, #tpu.memory_space<vmem>>, %arg8: memref<256x64xbf16, #tpu.memory_space<vmem>>, %arg9: memref<64x192xbf16, #tpu.memory_space<vmem>>, %arg10: memref<64x64xbf16, #tpu.memory_space<vmem>>, %arg11: memref<64x256xbf16, #tpu.memory_space<vmem>>, %arg12: memref<256x64xbf16, #tpu.memory_space<vmem>>, %arg13: memref<64x128xbf16, #tpu.memory_space<vmem>>, %arg14: memref<16x128xf32, #tpu.memory_space<vmem>>) attributes {dimension_semantics = [#tpu.dimension_semantics<parallel>], iteration_bounds = array<i64: 1>, scalar_prefetch = 0 : i64, scratch_operands = 0 : i64, tpu.core_type = #tpu.core_type<tc>, window_params = [{transform_indices = @transform_0, window_bounds = array<i64: 128, 768>}, {pipeline_mode = #tpu.pipeline_mode<synchronous>, transform_indices = @transform_1, window_bounds = array<i64: 128, 64>}, {pipeline_mode = #tpu.pipeline_mode<synchronous>, transform_indices = @transform_2, window_bounds = array<i64: 768, 64>}, {pipeline_mode = #tpu.pipeline_mode<synchronous>, transform_indices = @transform_3, window_bounds = array<i64: 19, 256>}, {pipeline_mode = #tpu.pipeline_mode<synchronous>, transform_indices = @transform_4, window_bounds = array<i64: 64, 192>}, {pipeline_mode = #tpu.pipeline_mode<synchronous>, transform_indices = @transform_5, window_bounds = array<i64: 64, 64>}, {pipeline_mode = #tpu.pipeline_mode<synchronous>, transform_indices = @transform_6, window_bounds = array<i64: 64, 256>}, {pipeline_mode = #tpu.pipeline_mode<synchronous>, transform_indices = @transform_7, window_bounds = array<i64: 256, 64>}, {pipeline_mode = #tpu.pipeline_mode<synchronous>, transform_indices = @transform_8, window_bounds = array<i64: 64, 192>}, {pipeline_mode = #tpu.pipeline_mode<synchronous>, transform_indices = @transform_9, window_bounds = array<i64: 64, 64>}, {pipeline_mode = #tpu.pipeline_mode<synchronous>, transform_indices = @transform_10, window_bounds = array<i64: 64, 256>}, {pipeline_mode = #tpu.pipeline_mode<synchronous>, transform_indices = @transform_11, window_bounds = array<i64: 256, 64>}, {pipeline_mode = #tpu.pipeline_mode<synchronous>, transform_indices = @transform_12, window_bounds = array<i64: 64, 128>}, {transform_indices = @transform_13, window_bounds = array<i64: 16, 128>}]} {
    %c0 = arith.constant 0 : index
    %c0_0 = arith.constant 0 : index
    %0 = vector.load %arg1[%c0, %c0_0] : memref<128x768xbf16, #tpu.memory_space<vmem>>, vector<128x768xbf16>
    %c0_1 = arith.constant 0 : index
    %c0_2 = arith.constant 0 : index
    %1 = vector.load %arg3[%c0_1, %c0_2] : memref<768x64xbf16, #tpu.memory_space<vmem>>, vector<768x64xbf16>
    %cst = arith.constant dense<0.000000e+00> : vector<128x64xf32>
    %2 = tpu.matmul %0, %1, %cst {dimension_numbers = #tpu.dot_dimension_numbers<[1], [0], [0], [1], [0, 0, 1, 1], [], []>} : vector<128x768xbf16>, vector<768x64xbf16>, vector<128x64xf32> -> vector<128x64xf32>
    %c0_3 = arith.constant 0 : index
    %c0_4 = arith.constant 0 : index
    %3 = vector.load %arg2[%c0_3, %c0_4] : memref<128x64xf32, #tpu.memory_space<vmem>>, vector<128x64xf32>
    %4 = arith.addf %2, %3 : vector<128x64xf32>
    %5 = tpu.iota {dimensions = array<i32: 0>} : vector<128x128xi32>
    %6 = tpu.iota {dimensions = array<i32: 1>} : vector<128x128xi32>
    %c3_i32 = arith.constant 3 : i32
    %7 = vector.broadcast %c3_i32 : i32 to vector<128x128xi32>
    %8 = arith.shrsi %5, %7 : vector<128x128xi32>
    %c3_i32_5 = arith.constant 3 : i32
    %9 = vector.broadcast %c3_i32_5 : i32 to vector<128x128xi32>
    %10 = arith.shrsi %6, %9 : vector<128x128xi32>
    %11 = arith.cmpi eq, %8, %10 : vector<128x128xi32>
    %c7_i32 = arith.constant 7 : i32
    %12 = vector.broadcast %c7_i32 : i32 to vector<128x128xi32>
    %13 = arith.andi %6, %12 : vector<128x128xi32>
    %c5_i32 = arith.constant 5 : i32
    %14 = vector.broadcast %c5_i32 : i32 to vector<128x128xi32>
    %15 = arith.cmpi slt, %13, %14 : vector<128x128xi32>
    %16 = arith.andi %11, %15 : vector<128x128xi1>
    %c0_6 = arith.constant 0 : index
    %c0_7 = arith.constant 0 : index
    %17 = vector.load %arg4[%c0_6, %c0_7] : memref<19x256xf32, #tpu.memory_space<vmem>>, vector<1x64xf32>
    %c1 = arith.constant 1 : index
    %c0_8 = arith.constant 0 : index
    %18 = vector.load %arg4[%c1, %c0_8] : memref<19x256xf32, #tpu.memory_space<vmem>>, vector<1x64xf32>
    %c2 = arith.constant 2 : index
    %c0_9 = arith.constant 0 : index
    %19 = vector.load %arg4[%c2, %c0_9] : memref<19x256xf32, #tpu.memory_space<vmem>>, vector<1x64xf32>
    %c3 = arith.constant 3 : index
    %c0_10 = arith.constant 0 : index
    %20 = vector.load %arg4[%c3, %c0_10] : memref<19x256xf32, #tpu.memory_space<vmem>>, vector<1x64xf32>
    %c4 = arith.constant 4 : index
    %c0_11 = arith.constant 0 : index
    %21 = vector.load %arg4[%c4, %c0_11] : memref<19x256xf32, #tpu.memory_space<vmem>>, vector<1x192xf32>
    %c5 = arith.constant 5 : index
    %c0_12 = arith.constant 0 : index
    %22 = vector.load %arg4[%c5, %c0_12] : memref<19x256xf32, #tpu.memory_space<vmem>>, vector<1x64xf32>
    %c6 = arith.constant 6 : index
    %c0_13 = arith.constant 0 : index
    %23 = vector.load %arg4[%c6, %c0_13] : memref<19x256xf32, #tpu.memory_space<vmem>>, vector<1x256xf32>
    %c7 = arith.constant 7 : index
    %c0_14 = arith.constant 0 : index
    %24 = vector.load %arg4[%c7, %c0_14] : memref<19x256xf32, #tpu.memory_space<vmem>>, vector<1x64xf32>
    %cst_15 = arith.constant dense<0.000000e+00> : vector<128xf32>
    %25 = vector.multi_reduction <add>, %4, %cst_15 [1] : vector<128x64xf32> to vector<128xf32>
    %26 = vector.shape_cast %25 : vector<128xf32> to vector<128x1xf32>
    %cst_16 = arith.constant 6.400000e+01 : f32
    %27 = vector.broadcast %cst_16 : f32 to vector<128x1xf32>
    %28 = arith.divf %26, %27 : vector<128x1xf32>
    %29 = vector.broadcast %28 : vector<128x1xf32> to vector<128x64xf32>
    %30 = arith.subf %4, %29 : vector<128x64xf32>
    %31 = arith.mulf %30, %30 : vector<128x64xf32>
    %cst_17 = arith.constant dense<0.000000e+00> : vector<128xf32>
    %32 = vector.multi_reduction <add>, %31, %cst_17 [1] : vector<128x64xf32> to vector<128xf32>
    %33 = vector.shape_cast %32 : vector<128xf32> to vector<128x1xf32>
    %cst_18 = arith.constant 6.400000e+01 : f32
    %34 = vector.broadcast %cst_18 : f32 to vector<128x1xf32>
    %35 = arith.divf %33, %34 : vector<128x1xf32>
    %36 = vector.broadcast %28 : vector<128x1xf32> to vector<128x64xf32>
    %37 = arith.subf %4, %36 : vector<128x64xf32>
    %cst_19 = arith.constant 9.99999997E-7 : f32
    %38 = vector.broadcast %cst_19 : f32 to vector<128x1xf32>
    %39 = arith.addf %35, %38 : vector<128x1xf32>
    %40 = math.rsqrt %39 : vector<128x1xf32>
    %41 = vector.broadcast %40 : vector<128x1xf32> to vector<128x64xf32>
    %42 = arith.mulf %37, %41 : vector<128x64xf32>
    %43 = vector.broadcast %17 : vector<1x64xf32> to vector<128x64xf32>
    %44 = arith.mulf %42, %43 : vector<128x64xf32>
    %45 = vector.broadcast %18 : vector<1x64xf32> to vector<128x64xf32>
    %46 = arith.addf %44, %45 : vector<128x64xf32>
    %c0_20 = arith.constant 0 : index
    %c0_21 = arith.constant 0 : index
    %47 = vector.load %arg5[%c0_20, %c0_21] : memref<64x192xbf16, #tpu.memory_space<vmem>>, vector<64x192xbf16>
    %48 = arith.truncf %46 : vector<128x64xf32> to vector<128x64xbf16>
    %cst_22 = arith.constant dense<0.000000e+00> : vector<128x192xf32>
    %49 = tpu.matmul %48, %47, %cst_22 {dimension_numbers = #tpu.dot_dimension_numbers<[1], [0], [0], [1], [0, 0, 1, 1], [], []>} : vector<128x64xbf16>, vector<64x192xbf16>, vector<128x192xf32> -> vector<128x192xf32>
    %50 = vector.broadcast %21 : vector<1x192xf32> to vector<128x192xf32>
    %51 = arith.addf %49, %50 : vector<128x192xf32>
    %52 = vector.extract_strided_slice %51 {offsets = [0, 0], sizes = [128, 64], strides = [1, 1]} : vector<128x192xf32> to vector<128x64xf32>
    %53 = vector.extract_strided_slice %51 {offsets = [0, 64], sizes = [128, 64], strides = [1, 1]} : vector<128x192xf32> to vector<128x64xf32>
    %54 = vector.extract_strided_slice %51 {offsets = [0, 128], sizes = [128, 64], strides = [1, 1]} : vector<128x192xf32> to vector<128x64xf32>
    %55 = vector.extract_strided_slice %52 {offsets = [0, 0], sizes = [128, 16], strides = [1, 1]} : vector<128x64xf32> to vector<128x16xf32>
    %56 = vector.extract_strided_slice %53 {offsets = [0, 0], sizes = [128, 16], strides = [1, 1]} : vector<128x64xf32> to vector<128x16xf32>
    %57 = arith.truncf %55 : vector<128x16xf32> to vector<128x16xbf16>
    %58 = arith.truncf %56 : vector<128x16xf32> to vector<128x16xbf16>
    %cst_23 = arith.constant dense<0.000000e+00> : vector<128x128xf32>
    %59 = tpu.matmul %57, %58, %cst_23 {dimension_numbers = #tpu.dot_dimension_numbers<[1], [1], [0], [0], [0, 0, 1, 0], [], []>} : vector<128x16xbf16>, vector<128x16xbf16>, vector<128x128xf32> -> vector<128x128xf32>
    %cst_24 = arith.constant -1.000000e+30 : f32
    %60 = vector.broadcast %cst_24 : f32 to vector<128x128xf32>
    %61 = arith.select %16, %59, %60 : vector<128x128xi1>, vector<128x128xf32>
    %cst_25 = arith.constant dense<0xFF800000> : vector<128xf32>
    %62 = vector.multi_reduction <maximumf>, %61, %cst_25 [1] : vector<128x128xf32> to vector<128xf32>
    %63 = vector.shape_cast %62 : vector<128xf32> to vector<128x1xf32>
    %64 = vector.broadcast %63 : vector<128x1xf32> to vector<128x128xf32>
    %65 = arith.subf %61, %64 : vector<128x128xf32>
    %66 = math.exp %65 : vector<128x128xf32>
    %cst_26 = arith.constant dense<0.000000e+00> : vector<128xf32>
    %67 = vector.multi_reduction <add>, %66, %cst_26 [1] : vector<128x128xf32> to vector<128xf32>
    %68 = vector.shape_cast %67 : vector<128xf32> to vector<128x1xf32>
    %69 = tpu.reciprocal %68 {approx = true} : vector<128x1xf32> -> vector<128x1xf32>
    %70 = vector.broadcast %69 : vector<128x1xf32> to vector<128x128xf32>
    %71 = arith.mulf %66, %70 : vector<128x128xf32>
    %72 = vector.extract_strided_slice %54 {offsets = [0, 0], sizes = [128, 16], strides = [1, 1]} : vector<128x64xf32> to vector<128x16xf32>
    %73 = arith.truncf %71 : vector<128x128xf32> to vector<128x128xbf16>
    %74 = arith.truncf %72 : vector<128x16xf32> to vector<128x16xbf16>
    %cst_27 = arith.constant dense<0.000000e+00> : vector<128x16xf32>
    %75 = tpu.matmul %73, %74, %cst_27 {dimension_numbers = #tpu.dot_dimension_numbers<[1], [0], [0], [1], [0, 0, 1, 1], [], []>} : vector<128x128xbf16>, vector<128x16xbf16>, vector<128x16xf32> -> vector<128x16xf32>
    %76 = vector.extract_strided_slice %52 {offsets = [0, 16], sizes = [128, 16], strides = [1, 1]} : vector<128x64xf32> to vector<128x16xf32>
    %77 = vector.extract_strided_slice %53 {offsets = [0, 16], sizes = [128, 16], strides = [1, 1]} : vector<128x64xf32> to vector<128x16xf32>
    %78 = arith.truncf %76 : vector<128x16xf32> to vector<128x16xbf16>
    %79 = arith.truncf %77 : vector<128x16xf32> to vector<128x16xbf16>
    %cst_28 = arith.constant dense<0.000000e+00> : vector<128x128xf32>
    %80 = tpu.matmul %78, %79, %cst_28 {dimension_numbers = #tpu.dot_dimension_numbers<[1], [1], [0], [0], [0, 0, 1, 0], [], []>} : vector<128x16xbf16>, vector<128x16xbf16>, vector<128x128xf32> -> vector<128x128xf32>
    %cst_29 = arith.constant -1.000000e+30 : f32
    %81 = vector.broadcast %cst_29 : f32 to vector<128x128xf32>
    %82 = arith.select %16, %80, %81 : vector<128x128xi1>, vector<128x128xf32>
    %cst_30 = arith.constant dense<0xFF800000> : vector<128xf32>
    %83 = vector.multi_reduction <maximumf>, %82, %cst_30 [1] : vector<128x128xf32> to vector<128xf32>
    %84 = vector.shape_cast %83 : vector<128xf32> to vector<128x1xf32>
    %85 = vector.broadcast %84 : vector<128x1xf32> to vector<128x128xf32>
    %86 = arith.subf %82, %85 : vector<128x128xf32>
    %87 = math.exp %86 : vector<128x128xf32>
    %cst_31 = arith.constant dense<0.000000e+00> : vector<128xf32>
    %88 = vector.multi_reduction <add>, %87, %cst_31 [1] : vector<128x128xf32> to vector<128xf32>
    %89 = vector.shape_cast %88 : vector<128xf32> to vector<128x1xf32>
    %90 = tpu.reciprocal %89 {approx = true} : vector<128x1xf32> -> vector<128x1xf32>
    %91 = vector.broadcast %90 : vector<128x1xf32> to vector<128x128xf32>
    %92 = arith.mulf %87, %91 : vector<128x128xf32>
    %93 = vector.extract_strided_slice %54 {offsets = [0, 16], sizes = [128, 16], strides = [1, 1]} : vector<128x64xf32> to vector<128x16xf32>
    %94 = arith.truncf %92 : vector<128x128xf32> to vector<128x128xbf16>
    %95 = arith.truncf %93 : vector<128x16xf32> to vector<128x16xbf16>
    %cst_32 = arith.constant dense<0.000000e+00> : vector<128x16xf32>
    %96 = tpu.matmul %94, %95, %cst_32 {dimension_numbers = #tpu.dot_dimension_numbers<[1], [0], [0], [1], [0, 0, 1, 1], [], []>} : vector<128x128xbf16>, vector<128x16xbf16>, vector<128x16xf32> -> vector<128x16xf32>
    %97 = vector.extract_strided_slice %52 {offsets = [0, 32], sizes = [128, 16], strides = [1, 1]} : vector<128x64xf32> to vector<128x16xf32>
    %98 = vector.extract_strided_slice %53 {offsets = [0, 32], sizes = [128, 16], strides = [1, 1]} : vector<128x64xf32> to vector<128x16xf32>
    %99 = arith.truncf %97 : vector<128x16xf32> to vector<128x16xbf16>
    %100 = arith.truncf %98 : vector<128x16xf32> to vector<128x16xbf16>
    %cst_33 = arith.constant dense<0.000000e+00> : vector<128x128xf32>
    %101 = tpu.matmul %99, %100, %cst_33 {dimension_numbers = #tpu.dot_dimension_numbers<[1], [1], [0], [0], [0, 0, 1, 0], [], []>} : vector<128x16xbf16>, vector<128x16xbf16>, vector<128x128xf32> -> vector<128x128xf32>
    %cst_34 = arith.constant -1.000000e+30 : f32
    %102 = vector.broadcast %cst_34 : f32 to vector<128x128xf32>
    %103 = arith.select %16, %101, %102 : vector<128x128xi1>, vector<128x128xf32>
    %cst_35 = arith.constant dense<0xFF800000> : vector<128xf32>
    %104 = vector.multi_reduction <maximumf>, %103, %cst_35 [1] : vector<128x128xf32> to vector<128xf32>
    %105 = vector.shape_cast %104 : vector<128xf32> to vector<128x1xf32>
    %106 = vector.broadcast %105 : vector<128x1xf32> to vector<128x128xf32>
    %107 = arith.subf %103, %106 : vector<128x128xf32>
    %108 = math.exp %107 : vector<128x128xf32>
    %cst_36 = arith.constant dense<0.000000e+00> : vector<128xf32>
    %109 = vector.multi_reduction <add>, %108, %cst_36 [1] : vector<128x128xf32> to vector<128xf32>
    %110 = vector.shape_cast %109 : vector<128xf32> to vector<128x1xf32>
    %111 = tpu.reciprocal %110 {approx = true} : vector<128x1xf32> -> vector<128x1xf32>
    %112 = vector.broadcast %111 : vector<128x1xf32> to vector<128x128xf32>
    %113 = arith.mulf %108, %112 : vector<128x128xf32>
    %114 = vector.extract_strided_slice %54 {offsets = [0, 32], sizes = [128, 16], strides = [1, 1]} : vector<128x64xf32> to vector<128x16xf32>
    %115 = arith.truncf %113 : vector<128x128xf32> to vector<128x128xbf16>
    %116 = arith.truncf %114 : vector<128x16xf32> to vector<128x16xbf16>
    %cst_37 = arith.constant dense<0.000000e+00> : vector<128x16xf32>
    %117 = tpu.matmul %115, %116, %cst_37 {dimension_numbers = #tpu.dot_dimension_numbers<[1], [0], [0], [1], [0, 0, 1, 1], [], []>} : vector<128x128xbf16>, vector<128x16xbf16>, vector<128x16xf32> -> vector<128x16xf32>
    %118 = vector.extract_strided_slice %52 {offsets = [0, 48], sizes = [128, 16], strides = [1, 1]} : vector<128x64xf32> to vector<128x16xf32>
    %119 = vector.extract_strided_slice %53 {offsets = [0, 48], sizes = [128, 16], strides = [1, 1]} : vector<128x64xf32> to vector<128x16xf32>
    %120 = arith.truncf %118 : vector<128x16xf32> to vector<128x16xbf16>
    %121 = arith.truncf %119 : vector<128x16xf32> to vector<128x16xbf16>
    %cst_38 = arith.constant dense<0.000000e+00> : vector<128x128xf32>
    %122 = tpu.matmul %120, %121, %cst_38 {dimension_numbers = #tpu.dot_dimension_numbers<[1], [1], [0], [0], [0, 0, 1, 0], [], []>} : vector<128x16xbf16>, vector<128x16xbf16>, vector<128x128xf32> -> vector<128x128xf32>
    %cst_39 = arith.constant -1.000000e+30 : f32
    %123 = vector.broadcast %cst_39 : f32 to vector<128x128xf32>
    %124 = arith.select %16, %122, %123 : vector<128x128xi1>, vector<128x128xf32>
    %cst_40 = arith.constant dense<0xFF800000> : vector<128xf32>
    %125 = vector.multi_reduction <maximumf>, %124, %cst_40 [1] : vector<128x128xf32> to vector<128xf32>
    %126 = vector.shape_cast %125 : vector<128xf32> to vector<128x1xf32>
    %127 = vector.broadcast %126 : vector<128x1xf32> to vector<128x128xf32>
    %128 = arith.subf %124, %127 : vector<128x128xf32>
    %129 = math.exp %128 : vector<128x128xf32>
    %cst_41 = arith.constant dense<0.000000e+00> : vector<128xf32>
    %130 = vector.multi_reduction <add>, %129, %cst_41 [1] : vector<128x128xf32> to vector<128xf32>
    %131 = vector.shape_cast %130 : vector<128xf32> to vector<128x1xf32>
    %132 = tpu.reciprocal %131 {approx = true} : vector<128x1xf32> -> vector<128x1xf32>
    %133 = vector.broadcast %132 : vector<128x1xf32> to vector<128x128xf32>
    %134 = arith.mulf %129, %133 : vector<128x128xf32>
    %135 = vector.extract_strided_slice %54 {offsets = [0, 48], sizes = [128, 16], strides = [1, 1]} : vector<128x64xf32> to vector<128x16xf32>
    %136 = arith.truncf %134 : vector<128x128xf32> to vector<128x128xbf16>
    %137 = arith.truncf %135 : vector<128x16xf32> to vector<128x16xbf16>
    %cst_42 = arith.constant dense<0.000000e+00> : vector<128x16xf32>
    %138 = tpu.matmul %136, %137, %cst_42 {dimension_numbers = #tpu.dot_dimension_numbers<[1], [0], [0], [1], [0, 0, 1, 1], [], []>} : vector<128x128xbf16>, vector<128x16xbf16>, vector<128x16xf32> -> vector<128x16xf32>
    %139 = tpu.concatenate %75, %96, %117, %138 in 1 : vector<128x16xf32>, vector<128x16xf32>, vector<128x16xf32>, vector<128x16xf32> -> vector<128x64xf32>
    %c0_43 = arith.constant 0 : index
    %c0_44 = arith.constant 0 : index
    %140 = vector.load %arg6[%c0_43, %c0_44] : memref<64x64xbf16, #tpu.memory_space<vmem>>, vector<64x64xbf16>
    %141 = arith.truncf %139 : vector<128x64xf32> to vector<128x64xbf16>
    %cst_45 = arith.constant dense<0.000000e+00> : vector<128x64xf32>
    %142 = tpu.matmul %141, %140, %cst_45 {dimension_numbers = #tpu.dot_dimension_numbers<[1], [0], [0], [1], [0, 0, 1, 1], [], []>} : vector<128x64xbf16>, vector<64x64xbf16>, vector<128x64xf32> -> vector<128x64xf32>
    %143 = arith.addf %4, %142 : vector<128x64xf32>
    %144 = vector.broadcast %22 : vector<1x64xf32> to vector<128x64xf32>
    %145 = arith.addf %143, %144 : vector<128x64xf32>
    %cst_46 = arith.constant dense<0.000000e+00> : vector<128xf32>
    %146 = vector.multi_reduction <add>, %145, %cst_46 [1] : vector<128x64xf32> to vector<128xf32>
    %147 = vector.shape_cast %146 : vector<128xf32> to vector<128x1xf32>
    %cst_47 = arith.constant 6.400000e+01 : f32
    %148 = vector.broadcast %cst_47 : f32 to vector<128x1xf32>
    %149 = arith.divf %147, %148 : vector<128x1xf32>
    %150 = vector.broadcast %149 : vector<128x1xf32> to vector<128x64xf32>
    %151 = arith.subf %145, %150 : vector<128x64xf32>
    %152 = arith.mulf %151, %151 : vector<128x64xf32>
    %cst_48 = arith.constant dense<0.000000e+00> : vector<128xf32>
    %153 = vector.multi_reduction <add>, %152, %cst_48 [1] : vector<128x64xf32> to vector<128xf32>
    %154 = vector.shape_cast %153 : vector<128xf32> to vector<128x1xf32>
    %cst_49 = arith.constant 6.400000e+01 : f32
    %155 = vector.broadcast %cst_49 : f32 to vector<128x1xf32>
    %156 = arith.divf %154, %155 : vector<128x1xf32>
    %157 = vector.broadcast %149 : vector<128x1xf32> to vector<128x64xf32>
    %158 = arith.subf %145, %157 : vector<128x64xf32>
    %cst_50 = arith.constant 9.99999997E-7 : f32
    %159 = vector.broadcast %cst_50 : f32 to vector<128x1xf32>
    %160 = arith.addf %156, %159 : vector<128x1xf32>
    %161 = math.rsqrt %160 : vector<128x1xf32>
    %162 = vector.broadcast %161 : vector<128x1xf32> to vector<128x64xf32>
    %163 = arith.mulf %158, %162 : vector<128x64xf32>
    %164 = vector.broadcast %19 : vector<1x64xf32> to vector<128x64xf32>
    %165 = arith.mulf %163, %164 : vector<128x64xf32>
    %166 = vector.broadcast %20 : vector<1x64xf32> to vector<128x64xf32>
    %167 = arith.addf %165, %166 : vector<128x64xf32>
    %c0_51 = arith.constant 0 : index
    %c0_52 = arith.constant 0 : index
    %168 = vector.load %arg7[%c0_51, %c0_52] : memref<64x256xbf16, #tpu.memory_space<vmem>>, vector<64x256xbf16>
    %169 = arith.truncf %167 : vector<128x64xf32> to vector<128x64xbf16>
    %cst_53 = arith.constant dense<0.000000e+00> : vector<128x256xf32>
    %170 = tpu.matmul %169, %168, %cst_53 {dimension_numbers = #tpu.dot_dimension_numbers<[1], [0], [0], [1], [0, 0, 1, 1], [], []>} : vector<128x64xbf16>, vector<64x256xbf16>, vector<128x256xf32> -> vector<128x256xf32>
    %171 = vector.broadcast %23 : vector<1x256xf32> to vector<128x256xf32>
    %172 = arith.addf %170, %171 : vector<128x256xf32>
    %cst_54 = arith.constant 5.000000e-01 : f32
    %173 = vector.broadcast %cst_54 : f32 to vector<128x256xf32>
    %174 = arith.mulf %173, %172 : vector<128x256xf32>
    %cst_55 = arith.constant 0.707106769 : f32
    %175 = vector.broadcast %cst_55 : f32 to vector<128x256xf32>
    %176 = arith.mulf %172, %175 : vector<128x256xf32>
    %177 = math.erf %176 : vector<128x256xf32>
    %cst_56 = arith.constant 1.000000e+00 : f32
    %178 = vector.broadcast %cst_56 : f32 to vector<128x256xf32>
    %179 = arith.addf %178, %177 : vector<128x256xf32>
    %180 = arith.mulf %174, %179 : vector<128x256xf32>
    %c0_57 = arith.constant 0 : index
    %c0_58 = arith.constant 0 : index
    %181 = vector.load %arg8[%c0_57, %c0_58] : memref<256x64xbf16, #tpu.memory_space<vmem>>, vector<256x64xbf16>
    %182 = arith.truncf %180 : vector<128x256xf32> to vector<128x256xbf16>
    %cst_59 = arith.constant dense<0.000000e+00> : vector<128x64xf32>
    %183 = tpu.matmul %182, %181, %cst_59 {dimension_numbers = #tpu.dot_dimension_numbers<[1], [0], [0], [1], [0, 0, 1, 1], [], []>} : vector<128x256xbf16>, vector<256x64xbf16>, vector<128x64xf32> -> vector<128x64xf32>
    %184 = arith.addf %145, %183 : vector<128x64xf32>
    %185 = vector.broadcast %24 : vector<1x64xf32> to vector<128x64xf32>
    %186 = arith.addf %184, %185 : vector<128x64xf32>
    %c8 = arith.constant 8 : index
    %c0_60 = arith.constant 0 : index
    %187 = vector.load %arg4[%c8, %c0_60] : memref<19x256xf32, #tpu.memory_space<vmem>>, vector<1x64xf32>
    %c9 = arith.constant 9 : index
    %c0_61 = arith.constant 0 : index
    %188 = vector.load %arg4[%c9, %c0_61] : memref<19x256xf32, #tpu.memory_space<vmem>>, vector<1x64xf32>
    %c10 = arith.constant 10 : index
    %c0_62 = arith.constant 0 : index
    %189 = vector.load %arg4[%c10, %c0_62] : memref<19x256xf32, #tpu.memory_space<vmem>>, vector<1x64xf32>
    %c11 = arith.constant 11 : index
    %c0_63 = arith.constant 0 : index
    %190 = vector.load %arg4[%c11, %c0_63] : memref<19x256xf32, #tpu.memory_space<vmem>>, vector<1x64xf32>
    %c12 = arith.constant 12 : index
    %c0_64 = arith.constant 0 : index
    %191 = vector.load %arg4[%c12, %c0_64] : memref<19x256xf32, #tpu.memory_space<vmem>>, vector<1x192xf32>
    %c13 = arith.constant 13 : index
    %c0_65 = arith.constant 0 : index
    %192 = vector.load %arg4[%c13, %c0_65] : memref<19x256xf32, #tpu.memory_space<vmem>>, vector<1x64xf32>
    %c14 = arith.constant 14 : index
    %c0_66 = arith.constant 0 : index
    %193 = vector.load %arg4[%c14, %c0_66] : memref<19x256xf32, #tpu.memory_space<vmem>>, vector<1x256xf32>
    %c15 = arith.constant 15 : index
    %c0_67 = arith.constant 0 : index
    %194 = vector.load %arg4[%c15, %c0_67] : memref<19x256xf32, #tpu.memory_space<vmem>>, vector<1x64xf32>
    %cst_68 = arith.constant dense<0.000000e+00> : vector<128xf32>
    %195 = vector.multi_reduction <add>, %186, %cst_68 [1] : vector<128x64xf32> to vector<128xf32>
    %196 = vector.shape_cast %195 : vector<128xf32> to vector<128x1xf32>
    %cst_69 = arith.constant 6.400000e+01 : f32
    %197 = vector.broadcast %cst_69 : f32 to vector<128x1xf32>
    %198 = arith.divf %196, %197 : vector<128x1xf32>
    %199 = vector.broadcast %198 : vector<128x1xf32> to vector<128x64xf32>
    %200 = arith.subf %186, %199 : vector<128x64xf32>
    %201 = arith.mulf %200, %200 : vector<128x64xf32>
    %cst_70 = arith.constant dense<0.000000e+00> : vector<128xf32>
    %202 = vector.multi_reduction <add>, %201, %cst_70 [1] : vector<128x64xf32> to vector<128xf32>
    %203 = vector.shape_cast %202 : vector<128xf32> to vector<128x1xf32>
    %cst_71 = arith.constant 6.400000e+01 : f32
    %204 = vector.broadcast %cst_71 : f32 to vector<128x1xf32>
    %205 = arith.divf %203, %204 : vector<128x1xf32>
    %206 = vector.broadcast %198 : vector<128x1xf32> to vector<128x64xf32>
    %207 = arith.subf %186, %206 : vector<128x64xf32>
    %cst_72 = arith.constant 9.99999997E-7 : f32
    %208 = vector.broadcast %cst_72 : f32 to vector<128x1xf32>
    %209 = arith.addf %205, %208 : vector<128x1xf32>
    %210 = math.rsqrt %209 : vector<128x1xf32>
    %211 = vector.broadcast %210 : vector<128x1xf32> to vector<128x64xf32>
    %212 = arith.mulf %207, %211 : vector<128x64xf32>
    %213 = vector.broadcast %187 : vector<1x64xf32> to vector<128x64xf32>
    %214 = arith.mulf %212, %213 : vector<128x64xf32>
    %215 = vector.broadcast %188 : vector<1x64xf32> to vector<128x64xf32>
    %216 = arith.addf %214, %215 : vector<128x64xf32>
    %c0_73 = arith.constant 0 : index
    %c0_74 = arith.constant 0 : index
    %217 = vector.load %arg9[%c0_73, %c0_74] : memref<64x192xbf16, #tpu.memory_space<vmem>>, vector<64x192xbf16>
    %218 = arith.truncf %216 : vector<128x64xf32> to vector<128x64xbf16>
    %cst_75 = arith.constant dense<0.000000e+00> : vector<128x192xf32>
    %219 = tpu.matmul %218, %217, %cst_75 {dimension_numbers = #tpu.dot_dimension_numbers<[1], [0], [0], [1], [0, 0, 1, 1], [], []>} : vector<128x64xbf16>, vector<64x192xbf16>, vector<128x192xf32> -> vector<128x192xf32>
    %220 = vector.broadcast %191 : vector<1x192xf32> to vector<128x192xf32>
    %221 = arith.addf %219, %220 : vector<128x192xf32>
    %222 = vector.extract_strided_slice %221 {offsets = [0, 0], sizes = [128, 64], strides = [1, 1]} : vector<128x192xf32> to vector<128x64xf32>
    %223 = vector.extract_strided_slice %221 {offsets = [0, 64], sizes = [128, 64], strides = [1, 1]} : vector<128x192xf32> to vector<128x64xf32>
    %224 = vector.extract_strided_slice %221 {offsets = [0, 128], sizes = [128, 64], strides = [1, 1]} : vector<128x192xf32> to vector<128x64xf32>
    %225 = vector.extract_strided_slice %222 {offsets = [0, 0], sizes = [128, 16], strides = [1, 1]} : vector<128x64xf32> to vector<128x16xf32>
    %226 = vector.extract_strided_slice %223 {offsets = [0, 0], sizes = [128, 16], strides = [1, 1]} : vector<128x64xf32> to vector<128x16xf32>
    %227 = arith.truncf %225 : vector<128x16xf32> to vector<128x16xbf16>
    %228 = arith.truncf %226 : vector<128x16xf32> to vector<128x16xbf16>
    %cst_76 = arith.constant dense<0.000000e+00> : vector<128x128xf32>
    %229 = tpu.matmul %227, %228, %cst_76 {dimension_numbers = #tpu.dot_dimension_numbers<[1], [1], [0], [0], [0, 0, 1, 0], [], []>} : vector<128x16xbf16>, vector<128x16xbf16>, vector<128x128xf32> -> vector<128x128xf32>
    %cst_77 = arith.constant -1.000000e+30 : f32
    %230 = vector.broadcast %cst_77 : f32 to vector<128x128xf32>
    %231 = arith.select %16, %229, %230 : vector<128x128xi1>, vector<128x128xf32>
    %cst_78 = arith.constant dense<0xFF800000> : vector<128xf32>
    %232 = vector.multi_reduction <maximumf>, %231, %cst_78 [1] : vector<128x128xf32> to vector<128xf32>
    %233 = vector.shape_cast %232 : vector<128xf32> to vector<128x1xf32>
    %234 = vector.broadcast %233 : vector<128x1xf32> to vector<128x128xf32>
    %235 = arith.subf %231, %234 : vector<128x128xf32>
    %236 = math.exp %235 : vector<128x128xf32>
    %cst_79 = arith.constant dense<0.000000e+00> : vector<128xf32>
    %237 = vector.multi_reduction <add>, %236, %cst_79 [1] : vector<128x128xf32> to vector<128xf32>
    %238 = vector.shape_cast %237 : vector<128xf32> to vector<128x1xf32>
    %239 = tpu.reciprocal %238 {approx = true} : vector<128x1xf32> -> vector<128x1xf32>
    %240 = vector.broadcast %239 : vector<128x1xf32> to vector<128x128xf32>
    %241 = arith.mulf %236, %240 : vector<128x128xf32>
    %242 = vector.extract_strided_slice %224 {offsets = [0, 0], sizes = [128, 16], strides = [1, 1]} : vector<128x64xf32> to vector<128x16xf32>
    %243 = arith.truncf %241 : vector<128x128xf32> to vector<128x128xbf16>
    %244 = arith.truncf %242 : vector<128x16xf32> to vector<128x16xbf16>
    %cst_80 = arith.constant dense<0.000000e+00> : vector<128x16xf32>
    %245 = tpu.matmul %243, %244, %cst_80 {dimension_numbers = #tpu.dot_dimension_numbers<[1], [0], [0], [1], [0, 0, 1, 1], [], []>} : vector<128x128xbf16>, vector<128x16xbf16>, vector<128x16xf32> -> vector<128x16xf32>
    %246 = vector.extract_strided_slice %222 {offsets = [0, 16], sizes = [128, 16], strides = [1, 1]} : vector<128x64xf32> to vector<128x16xf32>
    %247 = vector.extract_strided_slice %223 {offsets = [0, 16], sizes = [128, 16], strides = [1, 1]} : vector<128x64xf32> to vector<128x16xf32>
    %248 = arith.truncf %246 : vector<128x16xf32> to vector<128x16xbf16>
    %249 = arith.truncf %247 : vector<128x16xf32> to vector<128x16xbf16>
    %cst_81 = arith.constant dense<0.000000e+00> : vector<128x128xf32>
    %250 = tpu.matmul %248, %249, %cst_81 {dimension_numbers = #tpu.dot_dimension_numbers<[1], [1], [0], [0], [0, 0, 1, 0], [], []>} : vector<128x16xbf16>, vector<128x16xbf16>, vector<128x128xf32> -> vector<128x128xf32>
    %cst_82 = arith.constant -1.000000e+30 : f32
    %251 = vector.broadcast %cst_82 : f32 to vector<128x128xf32>
    %252 = arith.select %16, %250, %251 : vector<128x128xi1>, vector<128x128xf32>
    %cst_83 = arith.constant dense<0xFF800000> : vector<128xf32>
    %253 = vector.multi_reduction <maximumf>, %252, %cst_83 [1] : vector<128x128xf32> to vector<128xf32>
    %254 = vector.shape_cast %253 : vector<128xf32> to vector<128x1xf32>
    %255 = vector.broadcast %254 : vector<128x1xf32> to vector<128x128xf32>
    %256 = arith.subf %252, %255 : vector<128x128xf32>
    %257 = math.exp %256 : vector<128x128xf32>
    %cst_84 = arith.constant dense<0.000000e+00> : vector<128xf32>
    %258 = vector.multi_reduction <add>, %257, %cst_84 [1] : vector<128x128xf32> to vector<128xf32>
    %259 = vector.shape_cast %258 : vector<128xf32> to vector<128x1xf32>
    %260 = tpu.reciprocal %259 {approx = true} : vector<128x1xf32> -> vector<128x1xf32>
    %261 = vector.broadcast %260 : vector<128x1xf32> to vector<128x128xf32>
    %262 = arith.mulf %257, %261 : vector<128x128xf32>
    %263 = vector.extract_strided_slice %224 {offsets = [0, 16], sizes = [128, 16], strides = [1, 1]} : vector<128x64xf32> to vector<128x16xf32>
    %264 = arith.truncf %262 : vector<128x128xf32> to vector<128x128xbf16>
    %265 = arith.truncf %263 : vector<128x16xf32> to vector<128x16xbf16>
    %cst_85 = arith.constant dense<0.000000e+00> : vector<128x16xf32>
    %266 = tpu.matmul %264, %265, %cst_85 {dimension_numbers = #tpu.dot_dimension_numbers<[1], [0], [0], [1], [0, 0, 1, 1], [], []>} : vector<128x128xbf16>, vector<128x16xbf16>, vector<128x16xf32> -> vector<128x16xf32>
    %267 = vector.extract_strided_slice %222 {offsets = [0, 32], sizes = [128, 16], strides = [1, 1]} : vector<128x64xf32> to vector<128x16xf32>
    %268 = vector.extract_strided_slice %223 {offsets = [0, 32], sizes = [128, 16], strides = [1, 1]} : vector<128x64xf32> to vector<128x16xf32>
    %269 = arith.truncf %267 : vector<128x16xf32> to vector<128x16xbf16>
    %270 = arith.truncf %268 : vector<128x16xf32> to vector<128x16xbf16>
    %cst_86 = arith.constant dense<0.000000e+00> : vector<128x128xf32>
    %271 = tpu.matmul %269, %270, %cst_86 {dimension_numbers = #tpu.dot_dimension_numbers<[1], [1], [0], [0], [0, 0, 1, 0], [], []>} : vector<128x16xbf16>, vector<128x16xbf16>, vector<128x128xf32> -> vector<128x128xf32>
    %cst_87 = arith.constant -1.000000e+30 : f32
    %272 = vector.broadcast %cst_87 : f32 to vector<128x128xf32>
    %273 = arith.select %16, %271, %272 : vector<128x128xi1>, vector<128x128xf32>
    %cst_88 = arith.constant dense<0xFF800000> : vector<128xf32>
    %274 = vector.multi_reduction <maximumf>, %273, %cst_88 [1] : vector<128x128xf32> to vector<128xf32>
    %275 = vector.shape_cast %274 : vector<128xf32> to vector<128x1xf32>
    %276 = vector.broadcast %275 : vector<128x1xf32> to vector<128x128xf32>
    %277 = arith.subf %273, %276 : vector<128x128xf32>
    %278 = math.exp %277 : vector<128x128xf32>
    %cst_89 = arith.constant dense<0.000000e+00> : vector<128xf32>
    %279 = vector.multi_reduction <add>, %278, %cst_89 [1] : vector<128x128xf32> to vector<128xf32>
    %280 = vector.shape_cast %279 : vector<128xf32> to vector<128x1xf32>
    %281 = tpu.reciprocal %280 {approx = true} : vector<128x1xf32> -> vector<128x1xf32>
    %282 = vector.broadcast %281 : vector<128x1xf32> to vector<128x128xf32>
    %283 = arith.mulf %278, %282 : vector<128x128xf32>
    %284 = vector.extract_strided_slice %224 {offsets = [0, 32], sizes = [128, 16], strides = [1, 1]} : vector<128x64xf32> to vector<128x16xf32>
    %285 = arith.truncf %283 : vector<128x128xf32> to vector<128x128xbf16>
    %286 = arith.truncf %284 : vector<128x16xf32> to vector<128x16xbf16>
    %cst_90 = arith.constant dense<0.000000e+00> : vector<128x16xf32>
    %287 = tpu.matmul %285, %286, %cst_90 {dimension_numbers = #tpu.dot_dimension_numbers<[1], [0], [0], [1], [0, 0, 1, 1], [], []>} : vector<128x128xbf16>, vector<128x16xbf16>, vector<128x16xf32> -> vector<128x16xf32>
    %288 = vector.extract_strided_slice %222 {offsets = [0, 48], sizes = [128, 16], strides = [1, 1]} : vector<128x64xf32> to vector<128x16xf32>
    %289 = vector.extract_strided_slice %223 {offsets = [0, 48], sizes = [128, 16], strides = [1, 1]} : vector<128x64xf32> to vector<128x16xf32>
    %290 = arith.truncf %288 : vector<128x16xf32> to vector<128x16xbf16>
    %291 = arith.truncf %289 : vector<128x16xf32> to vector<128x16xbf16>
    %cst_91 = arith.constant dense<0.000000e+00> : vector<128x128xf32>
    %292 = tpu.matmul %290, %291, %cst_91 {dimension_numbers = #tpu.dot_dimension_numbers<[1], [1], [0], [0], [0, 0, 1, 0], [], []>} : vector<128x16xbf16>, vector<128x16xbf16>, vector<128x128xf32> -> vector<128x128xf32>
    %cst_92 = arith.constant -1.000000e+30 : f32
    %293 = vector.broadcast %cst_92 : f32 to vector<128x128xf32>
    %294 = arith.select %16, %292, %293 : vector<128x128xi1>, vector<128x128xf32>
    %cst_93 = arith.constant dense<0xFF800000> : vector<128xf32>
    %295 = vector.multi_reduction <maximumf>, %294, %cst_93 [1] : vector<128x128xf32> to vector<128xf32>
    %296 = vector.shape_cast %295 : vector<128xf32> to vector<128x1xf32>
    %297 = vector.broadcast %296 : vector<128x1xf32> to vector<128x128xf32>
    %298 = arith.subf %294, %297 : vector<128x128xf32>
    %299 = math.exp %298 : vector<128x128xf32>
    %cst_94 = arith.constant dense<0.000000e+00> : vector<128xf32>
    %300 = vector.multi_reduction <add>, %299, %cst_94 [1] : vector<128x128xf32> to vector<128xf32>
    %301 = vector.shape_cast %300 : vector<128xf32> to vector<128x1xf32>
    %302 = tpu.reciprocal %301 {approx = true} : vector<128x1xf32> -> vector<128x1xf32>
    %303 = vector.broadcast %302 : vector<128x1xf32> to vector<128x128xf32>
    %304 = arith.mulf %299, %303 : vector<128x128xf32>
    %305 = vector.extract_strided_slice %224 {offsets = [0, 48], sizes = [128, 16], strides = [1, 1]} : vector<128x64xf32> to vector<128x16xf32>
    %306 = arith.truncf %304 : vector<128x128xf32> to vector<128x128xbf16>
    %307 = arith.truncf %305 : vector<128x16xf32> to vector<128x16xbf16>
    %cst_95 = arith.constant dense<0.000000e+00> : vector<128x16xf32>
    %308 = tpu.matmul %306, %307, %cst_95 {dimension_numbers = #tpu.dot_dimension_numbers<[1], [0], [0], [1], [0, 0, 1, 1], [], []>} : vector<128x128xbf16>, vector<128x16xbf16>, vector<128x16xf32> -> vector<128x16xf32>
    %309 = tpu.concatenate %245, %266, %287, %308 in 1 : vector<128x16xf32>, vector<128x16xf32>, vector<128x16xf32>, vector<128x16xf32> -> vector<128x64xf32>
    %c0_96 = arith.constant 0 : index
    %c0_97 = arith.constant 0 : index
    %310 = vector.load %arg10[%c0_96, %c0_97] : memref<64x64xbf16, #tpu.memory_space<vmem>>, vector<64x64xbf16>
    %311 = arith.truncf %309 : vector<128x64xf32> to vector<128x64xbf16>
    %cst_98 = arith.constant dense<0.000000e+00> : vector<128x64xf32>
    %312 = tpu.matmul %311, %310, %cst_98 {dimension_numbers = #tpu.dot_dimension_numbers<[1], [0], [0], [1], [0, 0, 1, 1], [], []>} : vector<128x64xbf16>, vector<64x64xbf16>, vector<128x64xf32> -> vector<128x64xf32>
    %313 = arith.addf %186, %312 : vector<128x64xf32>
    %314 = vector.broadcast %192 : vector<1x64xf32> to vector<128x64xf32>
    %315 = arith.addf %313, %314 : vector<128x64xf32>
    %cst_99 = arith.constant dense<0.000000e+00> : vector<128xf32>
    %316 = vector.multi_reduction <add>, %315, %cst_99 [1] : vector<128x64xf32> to vector<128xf32>
    %317 = vector.shape_cast %316 : vector<128xf32> to vector<128x1xf32>
    %cst_100 = arith.constant 6.400000e+01 : f32
    %318 = vector.broadcast %cst_100 : f32 to vector<128x1xf32>
    %319 = arith.divf %317, %318 : vector<128x1xf32>
    %320 = vector.broadcast %319 : vector<128x1xf32> to vector<128x64xf32>
    %321 = arith.subf %315, %320 : vector<128x64xf32>
    %322 = arith.mulf %321, %321 : vector<128x64xf32>
    %cst_101 = arith.constant dense<0.000000e+00> : vector<128xf32>
    %323 = vector.multi_reduction <add>, %322, %cst_101 [1] : vector<128x64xf32> to vector<128xf32>
    %324 = vector.shape_cast %323 : vector<128xf32> to vector<128x1xf32>
    %cst_102 = arith.constant 6.400000e+01 : f32
    %325 = vector.broadcast %cst_102 : f32 to vector<128x1xf32>
    %326 = arith.divf %324, %325 : vector<128x1xf32>
    %327 = vector.broadcast %319 : vector<128x1xf32> to vector<128x64xf32>
    %328 = arith.subf %315, %327 : vector<128x64xf32>
    %cst_103 = arith.constant 9.99999997E-7 : f32
    %329 = vector.broadcast %cst_103 : f32 to vector<128x1xf32>
    %330 = arith.addf %326, %329 : vector<128x1xf32>
    %331 = math.rsqrt %330 : vector<128x1xf32>
    %332 = vector.broadcast %331 : vector<128x1xf32> to vector<128x64xf32>
    %333 = arith.mulf %328, %332 : vector<128x64xf32>
    %334 = vector.broadcast %189 : vector<1x64xf32> to vector<128x64xf32>
    %335 = arith.mulf %333, %334 : vector<128x64xf32>
    %336 = vector.broadcast %190 : vector<1x64xf32> to vector<128x64xf32>
    %337 = arith.addf %335, %336 : vector<128x64xf32>
    %c0_104 = arith.constant 0 : index
    %c0_105 = arith.constant 0 : index
    %338 = vector.load %arg11[%c0_104, %c0_105] : memref<64x256xbf16, #tpu.memory_space<vmem>>, vector<64x256xbf16>
    %339 = arith.truncf %337 : vector<128x64xf32> to vector<128x64xbf16>
    %cst_106 = arith.constant dense<0.000000e+00> : vector<128x256xf32>
    %340 = tpu.matmul %339, %338, %cst_106 {dimension_numbers = #tpu.dot_dimension_numbers<[1], [0], [0], [1], [0, 0, 1, 1], [], []>} : vector<128x64xbf16>, vector<64x256xbf16>, vector<128x256xf32> -> vector<128x256xf32>
    %341 = vector.broadcast %193 : vector<1x256xf32> to vector<128x256xf32>
    %342 = arith.addf %340, %341 : vector<128x256xf32>
    %cst_107 = arith.constant 5.000000e-01 : f32
    %343 = vector.broadcast %cst_107 : f32 to vector<128x256xf32>
    %344 = arith.mulf %343, %342 : vector<128x256xf32>
    %cst_108 = arith.constant 0.707106769 : f32
    %345 = vector.broadcast %cst_108 : f32 to vector<128x256xf32>
    %346 = arith.mulf %342, %345 : vector<128x256xf32>
    %347 = math.erf %346 : vector<128x256xf32>
    %cst_109 = arith.constant 1.000000e+00 : f32
    %348 = vector.broadcast %cst_109 : f32 to vector<128x256xf32>
    %349 = arith.addf %348, %347 : vector<128x256xf32>
    %350 = arith.mulf %344, %349 : vector<128x256xf32>
    %c0_110 = arith.constant 0 : index
    %c0_111 = arith.constant 0 : index
    %351 = vector.load %arg12[%c0_110, %c0_111] : memref<256x64xbf16, #tpu.memory_space<vmem>>, vector<256x64xbf16>
    %352 = arith.truncf %350 : vector<128x256xf32> to vector<128x256xbf16>
    %cst_112 = arith.constant dense<0.000000e+00> : vector<128x64xf32>
    %353 = tpu.matmul %352, %351, %cst_112 {dimension_numbers = #tpu.dot_dimension_numbers<[1], [0], [0], [1], [0, 0, 1, 1], [], []>} : vector<128x256xbf16>, vector<256x64xbf16>, vector<128x64xf32> -> vector<128x64xf32>
    %354 = arith.addf %315, %353 : vector<128x64xf32>
    %355 = vector.broadcast %194 : vector<1x64xf32> to vector<128x64xf32>
    %356 = arith.addf %354, %355 : vector<128x64xf32>
    %c16 = arith.constant 16 : index
    %c0_113 = arith.constant 0 : index
    %357 = vector.load %arg4[%c16, %c0_113] : memref<19x256xf32, #tpu.memory_space<vmem>>, vector<1x64xf32>
    %c17 = arith.constant 17 : index
    %c0_114 = arith.constant 0 : index
    %358 = vector.load %arg4[%c17, %c0_114] : memref<19x256xf32, #tpu.memory_space<vmem>>, vector<1x64xf32>
    %c18 = arith.constant 18 : index
    %c0_115 = arith.constant 0 : index
    %359 = vector.load %arg4[%c18, %c0_115] : memref<19x256xf32, #tpu.memory_space<vmem>>, vector<1x128xf32>
    %cst_116 = arith.constant dense<0.000000e+00> : vector<128xf32>
    %360 = vector.multi_reduction <add>, %356, %cst_116 [1] : vector<128x64xf32> to vector<128xf32>
    %361 = vector.shape_cast %360 : vector<128xf32> to vector<128x1xf32>
    %cst_117 = arith.constant 6.400000e+01 : f32
    %362 = vector.broadcast %cst_117 : f32 to vector<128x1xf32>
    %363 = arith.divf %361, %362 : vector<128x1xf32>
    %364 = vector.broadcast %363 : vector<128x1xf32> to vector<128x64xf32>
    %365 = arith.subf %356, %364 : vector<128x64xf32>
    %366 = arith.mulf %365, %365 : vector<128x64xf32>
    %cst_118 = arith.constant dense<0.000000e+00> : vector<128xf32>
    %367 = vector.multi_reduction <add>, %366, %cst_118 [1] : vector<128x64xf32> to vector<128xf32>
    %368 = vector.shape_cast %367 : vector<128xf32> to vector<128x1xf32>
    %cst_119 = arith.constant 6.400000e+01 : f32
    %369 = vector.broadcast %cst_119 : f32 to vector<128x1xf32>
    %370 = arith.divf %368, %369 : vector<128x1xf32>
    %371 = vector.broadcast %363 : vector<128x1xf32> to vector<128x64xf32>
    %372 = arith.subf %356, %371 : vector<128x64xf32>
    %cst_120 = arith.constant 9.99999997E-7 : f32
    %373 = vector.broadcast %cst_120 : f32 to vector<128x1xf32>
    %374 = arith.addf %370, %373 : vector<128x1xf32>
    %375 = math.rsqrt %374 : vector<128x1xf32>
    %376 = vector.broadcast %375 : vector<128x1xf32> to vector<128x64xf32>
    %377 = arith.mulf %372, %376 : vector<128x64xf32>
    %378 = vector.broadcast %357 : vector<1x64xf32> to vector<128x64xf32>
    %379 = arith.mulf %377, %378 : vector<128x64xf32>
    %380 = vector.broadcast %358 : vector<1x64xf32> to vector<128x64xf32>
    %381 = arith.addf %379, %380 : vector<128x64xf32>
    %382 = tpu.iota {dimensions = array<i32: 0>} : vector<16x128xi32>
    %383 = tpu.iota {dimensions = array<i32: 1>} : vector<16x128xi32>
    %c8_i32 = arith.constant 8 : i32
    %384 = vector.broadcast %c8_i32 : i32 to vector<16x128xi32>
    %385 = arith.muli %382, %384 : vector<16x128xi32>
    %386 = arith.cmpi eq, %383, %385 : vector<16x128xi32>
    %387 = arith.extui %386 : vector<16x128xi1> to vector<16x128xi32>
    %388 = arith.sitofp %387 : vector<16x128xi32> to vector<16x128xf32>
    %389 = arith.truncf %388 : vector<16x128xf32> to vector<16x128xbf16>
    %390 = arith.truncf %381 : vector<128x64xf32> to vector<128x64xbf16>
    %cst_121 = arith.constant dense<0.000000e+00> : vector<16x64xf32>
    %391 = tpu.matmul %389, %390, %cst_121 {dimension_numbers = #tpu.dot_dimension_numbers<[1], [0], [0], [1], [0, 0, 1, 1], [], []>} : vector<16x128xbf16>, vector<128x64xbf16>, vector<16x64xf32> -> vector<16x64xf32>
    %c0_122 = arith.constant 0 : index
    %c0_123 = arith.constant 0 : index
    %392 = vector.load %arg13[%c0_122, %c0_123] : memref<64x128xbf16, #tpu.memory_space<vmem>>, vector<64x128xbf16>
    %393 = arith.truncf %391 : vector<16x64xf32> to vector<16x64xbf16>
    %cst_124 = arith.constant dense<0.000000e+00> : vector<16x128xf32>
    %394 = tpu.matmul %393, %392, %cst_124 {dimension_numbers = #tpu.dot_dimension_numbers<[1], [0], [0], [1], [0, 0, 1, 1], [], []>} : vector<16x64xbf16>, vector<64x128xbf16>, vector<16x128xf32> -> vector<16x128xf32>
    %395 = vector.broadcast %359 : vector<1x128xf32> to vector<16x128xf32>
    %396 = arith.addf %394, %395 : vector<16x128xf32>
    %c0_125 = arith.constant 0 : index
    %c0_126 = arith.constant 0 : index
    %397 = vector.load %arg14[%c0_125, %c0_126] : memref<16x128xf32, #tpu.memory_space<vmem>>, vector<16x128xf32>
    tpu.vector_store %arg14[%c0_125, %c0_126], %396 {strides = array<i32>} : memref<16x128xf32, #tpu.memory_space<vmem>>, vector<16x128xf32>,
    return
  }
  func.func @transform_0(%arg0: i32) -> (i32, i32) {
    %c0_i32 = arith.constant 0 : i32
    %c0_i32_0 = arith.constant 0 : i32
    return %arg0, %c0_i32 : i32, i32
  }
  func.func @transform_1(%arg0: i32) -> (i32, i32) {
    %c0_i32 = arith.constant 0 : i32
    %c0_i32_0 = arith.constant 0 : i32
    %c0_i32_1 = arith.constant 0 : i32
    return %c0_i32, %c0_i32_0 : i32, i32
  }
  func.func @transform_2(%arg0: i32) -> (i32, i32) {
    %c0_i32 = arith.constant 0 : i32
    %c0_i32_0 = arith.constant 0 : i32
    %c0_i32_1 = arith.constant 0 : i32
    return %c0_i32, %c0_i32_0 : i32, i32
  }
  func.func @transform_3(%arg0: i32) -> (i32, i32) {
    %c0_i32 = arith.constant 0 : i32
    %c0_i32_0 = arith.constant 0 : i32
    %c0_i32_1 = arith.constant 0 : i32
    return %c0_i32, %c0_i32_0 : i32, i32
  }
  func.func @transform_4(%arg0: i32) -> (i32, i32) {
    %c0_i32 = arith.constant 0 : i32
    %c0_i32_0 = arith.constant 0 : i32
    %c0_i32_1 = arith.constant 0 : i32
    return %c0_i32, %c0_i32_0 : i32, i32
  }
  func.func @transform_5(%arg0: i32) -> (i32, i32) {
    %c0_i32 = arith.constant 0 : i32
    %c0_i32_0 = arith.constant 0 : i32
    %c0_i32_1 = arith.constant 0 : i32
    return %c0_i32, %c0_i32_0 : i32, i32
  }
  func.func @transform_6(%arg0: i32) -> (i32, i32) {
    %c0_i32 = arith.constant 0 : i32
    %c0_i32_0 = arith.constant 0 : i32
    %c0_i32_1 = arith.constant 0 : i32
    return %c0_i32, %c0_i32_0 : i32, i32
  }
  func.func @transform_7(%arg0: i32) -> (i32, i32) {
    %c0_i32 = arith.constant 0 : i32
    %c0_i32_0 = arith.constant 0 : i32
    %c0_i32_1 = arith.constant 0 : i32
    return %c0_i32, %c0_i32_0 : i32, i32
  }
  func.func @transform_8(%arg0: i32) -> (i32, i32) {
    %c0_i32 = arith.constant 0 : i32
    %c0_i32_0 = arith.constant 0 : i32
    %c0_i32_1 = arith.constant 0 : i32
    return %c0_i32, %c0_i32_0 : i32, i32
  }
  func.func @transform_9(%arg0: i32) -> (i32, i32) {
    %c0_i32 = arith.constant 0 : i32
    %c0_i32_0 = arith.constant 0 : i32
    %c0_i32_1 = arith.constant 0 : i32
    return %c0_i32, %c0_i32_0 : i32, i32
  }
  func.func @transform_10(%arg0: i32) -> (i32, i32) {
    %c0_i32 = arith.constant 0 : i32
    %c0_i32_0 = arith.constant 0 : i32
    %c0_i32_1 = arith.constant 0 : i32
    return %c0_i32, %c0_i32_0 : i32, i32
  }
  func.func @transform_11(%arg0: i32) -> (i32, i32) {
    %c0_i32 = arith.constant 0 : i32
    %c0_i32_0 = arith.constant 0 : i32
    %c0_i32_1 = arith.constant 0 : i32
    return %c0_i32, %c0_i32_0 : i32, i32
  }
  func.func @transform_12(%arg0: i32) -> (i32, i32) {
    %c0_i32 = arith.constant 0 : i32
    %c0_i32_0 = arith.constant 0 : i32
    %c0_i32_1 = arith.constant 0 : i32
    return %c0_i32, %c0_i32_0 : i32, i32
  }
  func.func @transform_13(%arg0: i32) -> (i32, i32) {
    %c0_i32 = arith.constant 0 : i32
    %c0_i32_0 = arith.constant 0 : i32
    return %arg0, %c0_i32 : i32, i32
  }
}

</mosaic_0001>

<llo_original>
// kernel: vit16_forward.1
$region0: #{vit16_forward.1}
  #allocation0 [shape = 'u32[]', space=smem, size = 0x4, offset = 0x4, fixed_abs, tag = 'smem constant byte address 0x4 - core index']
  #allocation1 [shape = 'u32[144,128]{1,0:T(1,128)}', space=vmem, size = 0x12000, scoped, tag = 'internal scratch']
  %s0 = inlined_call_operand.vmem [shape: bf16[128,768], index: 0, kind: input, shape index: {}]
  %s1 = inlined_call_operand.vmem [shape: f32[128,64], index: 1, kind: input, shape index: {}]
  %s2 = inlined_call_operand.vmem [shape: bf16[768,64], index: 2, kind: input, shape index: {}]
  %s3 = inlined_call_operand.vmem [shape: f32[19,256], index: 3, kind: input, shape index: {}]
  %s4 = inlined_call_operand.vmem [shape: bf16[64,192], index: 4, kind: input, shape index: {}]
  %s5 = inlined_call_operand.vmem [shape: bf16[64,64], index: 5, kind: input, shape index: {}]
  %s6 = inlined_call_operand.vmem [shape: bf16[64,256], index: 6, kind: input, shape index: {}]
  %s7 = inlined_call_operand.vmem [shape: bf16[256,64], index: 7, kind: input, shape index: {}]
  %s8 = inlined_call_operand.vmem [shape: bf16[64,192], index: 8, kind: input, shape index: {}]
  %s9 = inlined_call_operand.vmem [shape: bf16[64,64], index: 9, kind: input, shape index: {}]
  %s10 = inlined_call_operand.vmem [shape: bf16[64,256], index: 10, kind: input, shape index: {}]
  %s11 = inlined_call_operand.vmem [shape: bf16[256,64], index: 11, kind: input, shape index: {}]
  %s12 = inlined_call_operand.vmem [shape: bf16[64,128], index: 12, kind: input, shape index: {}]
  %s13 = inlined_call_operand.vmem [shape: f32[16,128], index: 13, kind: output, shape index: {}]
  %s14 = sld [smem:[#allocation0]]
  $region62: #{vit16_forward.1} parent=0
    _
  %s16 = ssub.s32 1, %s14
  %s17 = scalar_select 0, %s16, %s14
  // Predicated region
  $region2: #{vit16_forward.1} parent=0 // pred_check
    _
  $region3: #{vit16_forward.1} parent=0 // pred_check_branch
    %19 = sbr.rel (0) target = $region5
  $region4: #{vit16_forward.1} parent=0 // pred_region
    _
  $region5: #{vit16_forward.1} parent=0 // pred_fallthru
    _
  // Predicated region
  $region6: #{vit16_forward.1} parent=0 // pred_check
    _
  $region7: #{vit16_forward.1} parent=0 // pred_check_branch
    %21 = sbr.rel (0) target = $region9
  $region8: #{vit16_forward.1} parent=0 // pred_region
    _
  $region9: #{vit16_forward.1} parent=0 // pred_fallthru
    _
  // Predicated region
  $region10: #{vit16_forward.1} parent=0 // pred_check
    _
  $region11: #{vit16_forward.1} parent=0 // pred_check_branch
    %23 = sbr.rel (0) target = $region13
  $region12: #{vit16_forward.1} parent=0 // pred_region
    _
  $region13: #{vit16_forward.1} parent=0 // pred_fallthru
    _
  // Predicated region
  $region14: #{vit16_forward.1} parent=0 // pred_check
    _
  $region15: #{vit16_forward.1} parent=0 // pred_check_branch
    %25 = sbr.rel (0) target = $region17
  $region16: #{vit16_forward.1} parent=0 // pred_region
    _
  $region17: #{vit16_forward.1} parent=0 // pred_fallthru
    _
  // Predicated region
  $region18: #{vit16_forward.1} parent=0 // pred_check
    _
  $region19: #{vit16_forward.1} parent=0 // pred_check_branch
    %27 = sbr.rel (0) target = $region21
  $region20: #{vit16_forward.1} parent=0 // pred_region
    _
  $region21: #{vit16_forward.1} parent=0 // pred_fallthru
    _
  // Predicated region
  $region22: #{vit16_forward.1} parent=0 // pred_check
    _
  $region23: #{vit16_forward.1} parent=0 // pred_check_branch
    %29 = sbr.rel (0) target = $region25
  $region24: #{vit16_forward.1} parent=0 // pred_region
    _
  $region25: #{vit16_forward.1} parent=0 // pred_fallthru
    _
  // Predicated region
  $region26: #{vit16_forward.1} parent=0 // pred_check
    _
  $region27: #{vit16_forward.1} parent=0 // pred_check_branch
    %31 = sbr.rel (0) target = $region29
  $region28: #{vit16_forward.1} parent=0 // pred_region
    _
  $region29: #{vit16_forward.1} parent=0 // pred_fallthru
    _
  // Predicated region
  $region30: #{vit16_forward.1} parent=0 // pred_check
    _
  $region31: #{vit16_forward.1} parent=0 // pred_check_branch
    %33 = sbr.rel (0) target = $region33
  $region32: #{vit16_forward.1} parent=0 // pred_region
    _
  $region33: #{vit16_forward.1} parent=0 // pred_fallthru
    _
  // Predicated region
  $region34: #{vit16_forward.1} parent=0 // pred_check
    _
  $region35: #{vit16_forward.1} parent=0 // pred_check_branch
    %35 = sbr.rel (0) target = $region37
  $region36: #{vit16_forward.1} parent=0 // pred_region
    _
  $region37: #{vit16_forward.1} parent=0 // pred_fallthru
    _
  // Predicated region
  $region38: #{vit16_forward.1} parent=0 // pred_check
    _
  $region39: #{vit16_forward.1} parent=0 // pred_check_branch
    %37 = sbr.rel (0) target = $region41
  $region40: #{vit16_forward.1} parent=0 // pred_region
    _
  $region41: #{vit16_forward.1} parent=0 // pred_fallthru
    _
  // Predicated region
  $region42: #{vit16_forward.1} parent=0 // pred_check
    _
  $region43: #{vit16_forward.1} parent=0 // pred_check_branch
    %39 = sbr.rel (0) target = $region45
  $region44: #{vit16_forward.1} parent=0 // pred_region
    _
  $region45: #{vit16_forward.1} parent=0 // pred_fallthru
    _
  // Predicated region
  $region46: #{vit16_forward.1} parent=0 // pred_check
    _
  $region47: #{vit16_forward.1} parent=0 // pred_check_branch
    %41 = sbr.rel (0) target = $region49
  $region48: #{vit16_forward.1} parent=0 // pred_region
    _
  $region49: #{vit16_forward.1} parent=0 // pred_fallthru
    _
  // Predicated region
  $region50: #{vit16_forward.1} parent=0 // pred_check
    _
  $region51: #{vit16_forward.1} parent=0 // pred_check_branch
    %43 = sbr.rel (0) target = $region53
  $region52: #{vit16_forward.1} parent=0 // pred_region
    _
  $region53: #{vit16_forward.1} parent=0 // pred_fallthru
    _
  %v45 = vld [vmem:[%s0] sm:$0xff]
  %v46 = vld [vmem:[%s0 + $0x8] sm:$0xff]
  %v47 = vld [vmem:[%s0 + $0x10] sm:$0xff]
  %v48 = vld [vmem:[%s0 + $0x18] sm:$0xff]
  %v49 = vld [vmem:[%s0 + $0x20] sm:$0xff]
  %v50 = vld [vmem:[%s0 + $0x28] sm:$0xff]
  %v51 = vld [vmem:[%s0 + $0x30] sm:$0xff]
  %v52 = vld [vmem:[%s0 + $0x38] sm:$0xff]
  %v53 = vld [vmem:[%s0 + $0x40] sm:$0xff]
  %v54 = vld [vmem:[%s0 + $0x48] sm:$0xff]
  %v55 = vld [vmem:[%s0 + $0x50] sm:$0xff]
  %v56 = vld [vmem:[%s0 + $0x58] sm:$0xff]
  %v57 = vld [vmem:[%s0 + $0x60] sm:$0xff]
  %v58 = vld [vmem:[%s0 + $0x68] sm:$0xff]
  %v59 = vld [vmem:[%s0 + $0x70] sm:$0xff]
  %v60 = vld [vmem:[%s0 + $0x78] sm:$0xff]
  %v61 = vld [vmem:[%s0 + $0x80] sm:$0xff]
  %v62 = vld [vmem:[%s0 + $0x88] sm:$0xff]
  %v63 = vld [vmem:[%s0 + $0x90] sm:$0xff]
  %v64 = vld [vmem:[%s0 + $0x98] sm:$0xff]
  %v65 = vld [vmem:[%s0 + $0xa0] sm:$0xff]
  %v66 = vld [vmem:[%s0 + $0xa8] sm:$0xff]
  %v67 = vld [vmem:[%s0 + $0xb0] sm:$0xff]
  %v68 = vld [vmem:[%s0 + $0xb8] sm:$0xff]
  %v69 = vld [vmem:[%s0 + $0xc0] sm:$0xff]
  %v70 = vld [vmem:[%s0 + $0xc8] sm:$0xff]
  %v71 = vld [vmem:[%s0 + $0xd0] sm:$0xff]
  %v72 = vld [vmem:[%s0 + $0xd8] sm:$0xff]
  %v73 = vld [vmem:[%s0 + $0xe0] sm:$0xff]
  %v74 = vld [vmem:[%s0 + $0xe8] sm:$0xff]
  %v75 = vld [vmem:[%s0 + $0xf0] sm:$0xff]
  %v76 = vld [vmem:[%s0 + $0xf8] sm:$0xff]
  %v77 = vld [vmem:[%s0 + $0x100] sm:$0xff]
  %v78 = vld [vmem:[%s0 + $0x108] sm:$0xff]
  %v79 = vld [vmem:[%s0 + $0x110] sm:$0xff]
  %v80 = vld [vmem:[%s0 + $0x118] sm:$0xff]
  %v81 = vld [vmem:[%s0 + $0x120] sm:$0xff]
  %v82 = vld [vmem:[%s0 + $0x128] sm:$0xff]
  %v83 = vld [vmem:[%s0 + $0x130] sm:$0xff]
  %v84 = vld [vmem:[%s0 + $0x138] sm:$0xff]
  %v85 = vld [vmem:[%s0 + $0x140] sm:$0xff]
  %v86 = vld [vmem:[%s0 + $0x148] sm:$0xff]
  %v87 = vld [vmem:[%s0 + $0x150] sm:$0xff]
  %v88 = vld [vmem:[%s0 + $0x158] sm:$0xff]
  %v89 = vld [vmem:[%s0 + $0x160] sm:$0xff]
  %v90 = vld [vmem:[%s0 + $0x168] sm:$0xff]
  %v91 = vld [vmem:[%s0 + $0x170] sm:$0xff]
  %v92 = vld [vmem:[%s0 + $0x178] sm:$0xff]
  %v93 = vld [vmem:[%s2] sm:$0xf]
  %v94 = vld [vmem:[%s2 + $0x4] sm:$0xf]
  %v95 = vld [vmem:[%s2 + $0x8] sm:$0xf]
  %v96 = vld [vmem:[%s2 + $0xc] sm:$0xf]
  %v97 = vld [vmem:[%s2 + $0x10] sm:$0xf]
  %v98 = vld [vmem:[%s2 + $0x14] sm:$0xf]
  %v99 = vld [vmem:[%s2 + $0x18] sm:$0xf]
  %v100 = vld [vmem:[%s2 + $0x1c] sm:$0xf]
  %v101 = vld [vmem:[%s2 + $0x20] sm:$0xf]
  %v102 = vld [vmem:[%s2 + $0x24] sm:$0xf]
  %v103 = vld [vmem:[%s2 + $0x28] sm:$0xf]
  %v104 = vld [vmem:[%s2 + $0x2c] sm:$0xf]
  %v105 = vld [vmem:[%s2 + $0x30] sm:$0xf]
  %v106 = vld [vmem:[%s2 + $0x34] sm:$0xf]
  %v107 = vld [vmem:[%s2 + $0x38] sm:$0xf]
  %v108 = vld [vmem:[%s2 + $0x3c] sm:$0xf]
  %v109 = vld [vmem:[%s2 + $0x40] sm:$0xf]
  %v110 = vld [vmem:[%s2 + $0x44] sm:$0xf]
  %v111 = vld [vmem:[%s2 + $0x48] sm:$0xf]
  %v112 = vld [vmem:[%s2 + $0x4c] sm:$0xf]
  %v113 = vld [vmem:[%s2 + $0x50] sm:$0xf]
  %v114 = vld [vmem:[%s2 + $0x54] sm:$0xf]
  %v115 = vld [vmem:[%s2 + $0x58] sm:$0xf]
  %v116 = vld [vmem:[%s2 + $0x5c] sm:$0xf]
  %v117 = vld [vmem:[%s2 + $0x60] sm:$0xf]
  %v118 = vld [vmem:[%s2 + $0x64] sm:$0xf]
  %v119 = vld [vmem:[%s2 + $0x68] sm:$0xf]
  %v120 = vld [vmem:[%s2 + $0x6c] sm:$0xf]
  %v121 = vld [vmem:[%s2 + $0x70] sm:$0xf]
  %v122 = vld [vmem:[%s2 + $0x74] sm:$0xf]
  %v123 = vld [vmem:[%s2 + $0x78] sm:$0xf]
  %v124 = vld [vmem:[%s2 + $0x7c] sm:$0xf]
  %v125 = vld [vmem:[%s2 + $0x80] sm:$0xf]
  %v126 = vld [vmem:[%s2 + $0x84] sm:$0xf]
  %v127 = vld [vmem:[%s2 + $0x88] sm:$0xf]
  %v128 = vld [vmem:[%s2 + $0x8c] sm:$0xf]
  %v129 = vld [vmem:[%s2 + $0x90] sm:$0xf]
  %v130 = vld [vmem:[%s2 + $0x94] sm:$0xf]
  %v131 = vld [vmem:[%s2 + $0x98] sm:$0xf]
  %v132 = vld [vmem:[%s2 + $0x9c] sm:$0xf]
  %v133 = vld [vmem:[%s2 + $0xa0] sm:$0xf]
  %v134 = vld [vmem:[%s2 + $0xa4] sm:$0xf]
  %v135 = vld [vmem:[%s2 + $0xa8] sm:$0xf]
  %v136 = vld [vmem:[%s2 + $0xac] sm:$0xf]
  %v137 = vld [vmem:[%s2 + $0xb0] sm:$0xf]
  %v138 = vld [vmem:[%s2 + $0xb4] sm:$0xf]
  %v139 = vld [vmem:[%s2 + $0xb8] sm:$0xf]
  %v140 = vld [vmem:[%s2 + $0xbc] sm:$0xf]
  %v141 = vld [vmem:[%s2 + $0xc0] sm:$0xf]
  %v142 = vld [vmem:[%s2 + $0xc4] sm:$0xf]
  %v143 = vld [vmem:[%s2 + $0xc8] sm:$0xf]
  %v144 = vld [vmem:[%s2 + $0xcc] sm:$0xf]
  %v145 = vld [vmem:[%s2 + $0xd0] sm:$0xf]
  %v146 = vld [vmem:[%s2 + $0xd4] sm:$0xf]
  %v147 = vld [vmem:[%s2 + $0xd8] sm:$0xf]
  %v148 = vld [vmem:[%s2 + $0xdc] sm:$0xf]
  %v149 = vld [vmem:[%s2 + $0xe0] sm:$0xf]
  %v150 = vld [vmem:[%s2 + $0xe4] sm:$0xf]
  %v151 = vld [vmem:[%s2 + $0xe8] sm:$0xf]
  %v152 = vld [vmem:[%s2 + $0xec] sm:$0xf]
  %v153 = vld [vmem:[%s2 + $0xf0] sm:$0xf]
  %v154 = vld [vmem:[%s2 + $0xf4] sm:$0xf]
  %v155 = vld [vmem:[%s2 + $0xf8] sm:$0xf]
  %v156 = vld [vmem:[%s2 + $0xfc] sm:$0xf]
  %v157 = vld [vmem:[%s2 + $0x100] sm:$0xf]
  %v158 = vld [vmem:[%s2 + $0x104] sm:$0xf]
  %v159 = vld [vmem:[%s2 + $0x108] sm:$0xf]
  %v160 = vld [vmem:[%s2 + $0x10c] sm:$0xf]
  %v161 = vld [vmem:[%s2 + $0x110] sm:$0xf]
  %v162 = vld [vmem:[%s2 + $0x114] sm:$0xf]
  %v163 = vld [vmem:[%s2 + $0x118] sm:$0xf]
  %v164 = vld [vmem:[%s2 + $0x11c] sm:$0xf]
  %v165 = vld [vmem:[%s2 + $0x120] sm:$0xf]
  %v166 = vld [vmem:[%s2 + $0x124] sm:$0xf]
  %v167 = vld [vmem:[%s2 + $0x128] sm:$0xf]
  %v168 = vld [vmem:[%s2 + $0x12c] sm:$0xf]
  %v169 = vld [vmem:[%s2 + $0x130] sm:$0xf]
  %v170 = vld [vmem:[%s2 + $0x134] sm:$0xf]
  %v171 = vld [vmem:[%s2 + $0x138] sm:$0xf]
  %v172 = vld [vmem:[%s2 + $0x13c] sm:$0xf]
  %v173 = vld [vmem:[%s2 + $0x140] sm:$0xf]
  %v174 = vld [vmem:[%s2 + $0x144] sm:$0xf]
  %v175 = vld [vmem:[%s2 + $0x148] sm:$0xf]
  %v176 = vld [vmem:[%s2 + $0x14c] sm:$0xf]
  %v177 = vld [vmem:[%s2 + $0x150] sm:$0xf]
  %v178 = vld [vmem:[%s2 + $0x154] sm:$0xf]
  %v179 = vld [vmem:[%s2 + $0x158] sm:$0xf]
  %v180 = vld [vmem:[%s2 + $0x15c] sm:$0xf]
  %v181 = vld [vmem:[%s2 + $0x160] sm:$0xf]
  %v182 = vld [vmem:[%s2 + $0x164] sm:$0xf]
  %v183 = vld [vmem:[%s2 + $0x168] sm:$0xf]
  %v184 = vld [vmem:[%s2 + $0x16c] sm:$0xf]
  %v185 = vld [vmem:[%s2 + $0x170] sm:$0xf]
  %v186 = vld [vmem:[%s2 + $0x174] sm:$0xf]
  %v187 = vld [vmem:[%s2 + $0x178] sm:$0xf]
  %v188 = vld [vmem:[%s2 + $0x17c] sm:$0xf]
  %v189 = vld [vmem:[%s1] sm:$0xff]
  %v190 = vld [vmem:[%s1 + $0x8] sm:$0xff]
  %v191 = vld [vmem:[%s1 + $0x10] sm:$0xff]
  %v192 = vld [vmem:[%s1 + $0x18] sm:$0xff]
  %v193 = vld [vmem:[%s1 + $0x20] sm:$0xff]
  %v194 = vld [vmem:[%s1 + $0x28] sm:$0xff]
  %v195 = vld [vmem:[%s1 + $0x30] sm:$0xff]
  %v196 = vld [vmem:[%s1 + $0x38] sm:$0xff]
  %v197 = vld [vmem:[%s1 + $0x40] sm:$0xff]
  %v198 = vld [vmem:[%s1 + $0x48] sm:$0xff]
  %v199 = vld [vmem:[%s1 + $0x50] sm:$0xff]
  %v200 = vld [vmem:[%s1 + $0x58] sm:$0xff]
  %v201 = vld [vmem:[%s1 + $0x60] sm:$0xff]
  %v202 = vld [vmem:[%s1 + $0x68] sm:$0xff]
  %v203 = vld [vmem:[%s1 + $0x70] sm:$0xff]
  %v204 = vld [vmem:[%s1 + $0x78] sm:$0xff]
  %v253 = vunpack.c.l.b16 %v45
  %v254 = vunpack.c.h.b16 %v45
  %v255 = vunpack.c.l.b16 %v46
  %v256 = vunpack.c.h.b16 %v46
  %v257 = vunpack.c.l.b16 %v47
  %v258 = vunpack.c.h.b16 %v47
  %v259 = vunpack.c.l.b16 %v48
  %v260 = vunpack.c.h.b16 %v48
  %v261 = vunpack.c.l.b16 %v49
  %v262 = vunpack.c.h.b16 %v49
  %v263 = vunpack.c.l.b16 %v50
  %v264 = vunpack.c.h.b16 %v50
  %v265 = vunpack.c.l.b16 %v51
  %v266 = vunpack.c.h.b16 %v51
  %v267 = vunpack.c.l.b16 %v52
  %v268 = vunpack.c.h.b16 %v52
  %v269 = vunpack.c.l.b16 %v53
  %v270 = vunpack.c.h.b16 %v53
  %v271 = vunpack.c.l.b16 %v54
  %v272 = vunpack.c.h.b16 %v54
  %v273 = vunpack.c.l.b16 %v55
  %v274 = vunpack.c.h.b16 %v55
  %v275 = vunpack.c.l.b16 %v56
  %v276 = vunpack.c.h.b16 %v56
  %v277 = vunpack.c.l.b16 %v57
  %v278 = vunpack.c.h.b16 %v57
  %v279 = vunpack.c.l.b16 %v58
  %v280 = vunpack.c.h.b16 %v58
  %v281 = vunpack.c.l.b16 %v59
  %v282 = vunpack.c.h.b16 %v59
  %v283 = vunpack.c.l.b16 %v60
  %v284 = vunpack.c.h.b16 %v60
  %v285 = vunpack.c.l.b16 %v61
  %v286 = vunpack.c.h.b16 %v61
  %v287 = vunpack.c.l.b16 %v62
  %v288 = vunpack.c.h.b16 %v62
  %v289 = vunpack.c.l.b16 %v63
  %v290 = vunpack.c.h.b16 %v63
  %v291 = vunpack.c.l.b16 %v64
  %v292 = vunpack.c.h.b16 %v64
  %v293 = vunpack.c.l.b16 %v65
  %v294 = vunpack.c.h.b16 %v65
  %v295 = vunpack.c.l.b16 %v66
  %v296 = vunpack.c.h.b16 %v66
  %v297 = vunpack.c.l.b16 %v67
  %v298 = vunpack.c.h.b16 %v67
  %v299 = vunpack.c.l.b16 %v68
  %v300 = vunpack.c.h.b16 %v68
  %v301 = vunpack.c.l.b16 %v69
  %v302 = vunpack.c.h.b16 %v69
  %v303 = vunpack.c.l.b16 %v70
  %v304 = vunpack.c.h.b16 %v70
  %v305 = vunpack.c.l.b16 %v71
  %v306 = vunpack.c.h.b16 %v71
  %v307 = vunpack.c.l.b16 %v72
  %v308 = vunpack.c.h.b16 %v72
  %v309 = vunpack.c.l.b16 %v73
  %v310 = vunpack.c.h.b16 %v73
  %v311 = vunpack.c.l.b16 %v74
  %v312 = vunpack.c.h.b16 %v74
  %v313 = vunpack.c.l.b16 %v75
  %v314 = vunpack.c.h.b16 %v75
  %v315 = vunpack.c.l.b16 %v76
  %v316 = vunpack.c.h.b16 %v76
  %v317 = vunpack.c.l.b16 %v77
  %v318 = vunpack.c.h.b16 %v77
  %v319 = vunpack.c.l.b16 %v78
  %v320 = vunpack.c.h.b16 %v78
  %v321 = vunpack.c.l.b16 %v79
  %v322 = vunpack.c.h.b16 %v79
  %v323 = vunpack.c.l.b16 %v80
  %v324 = vunpack.c.h.b16 %v80
  %v325 = vunpack.c.l.b16 %v81
  %v326 = vunpack.c.h.b16 %v81
  %v327 = vunpack.c.l.b16 %v82
  %v328 = vunpack.c.h.b16 %v82
  %v329 = vunpack.c.l.b16 %v83
  %v330 = vunpack.c.h.b16 %v83
  %v331 = vunpack.c.l.b16 %v84
  %v332 = vunpack.c.h.b16 %v84
  %v333 = vunpack.c.l.b16 %v85
  %v334 = vunpack.c.h.b16 %v85
  %v335 = vunpack.c.l.b16 %v86
  %v336 = vunpack.c.h.b16 %v86
  %v337 = vunpack.c.l.b16 %v87
  %v338 = vunpack.c.h.b16 %v87
  %v339 = vunpack.c.l.b16 %v88
  %v340 = vunpack.c.h.b16 %v88
  %v341 = vunpack.c.l.b16 %v89
  %v342 = vunpack.c.h.b16 %v89
  %v343 = vunpack.c.l.b16 %v90
  %v344 = vunpack.c.h.b16 %v90
  %v345 = vunpack.c.l.b16 %v91
  %v346 = vunpack.c.h.b16 %v91
  %v347 = vunpack.c.l.b16 %v92
  %v348 = vunpack.c.h.b16 %v92
  %v349 = vpack.c.b16 %v259, %v253
  %v350 = vpack.c.b16 %v260, %v254
  %v351 = vpack.c.b16 %v261, %v255
  %v352 = vpack.c.b16 %v262, %v256
  %v353 = vpack.c.b16 %v263, %v257
  %v354 = vpack.c.b16 %v264, %v258
  %v355 = vpack.c.b16 %v271, %v265
  %v356 = vpack.c.b16 %v272, %v266
  %v357 = vpack.c.b16 %v273, %v267
  %v358 = vpack.c.b16 %v274, %v268
  %v359 = vpack.c.b16 %v275, %v269
  %v360 = vpack.c.b16 %v276, %v270
  %v361 = vpack.c.b16 %v283, %v277
  %v362 = vpack.c.b16 %v284, %v278
  %v363 = vpack.c.b16 %v285, %v279
  %v364 = vpack.c.b16 %v286, %v280
  %v365 = vpack.c.b16 %v287, %v281
  %v366 = vpack.c.b16 %v288, %v282
  %v367 = vpack.c.b16 %v295, %v289
  %v368 = vpack.c.b16 %v296, %v290
  %v369 = vpack.c.b16 %v297, %v291
  %v370 = vpack.c.b16 %v298, %v292
  %v371 = vpack.c.b16 %v299, %v293
  %v372 = vpack.c.b16 %v300, %v294
  %v373 = vpack.c.b16 %v307, %v301
  %v374 = vpack.c.b16 %v308, %v302
  %v375 = vpack.c.b16 %v309, %v303
  %v376 = vpack.c.b16 %v310, %v304
  %v377 = vpack.c.b16 %v311, %v305
  %v378 = vpack.c.b16 %v312, %v306
  %v379 = vpack.c.b16 %v319, %v313
  %v380 = vpack.c.b16 %v320, %v314
  %v381 = vpack.c.b16 %v321, %v315
  %v382 = vpack.c.b16 %v322, %v316
  %v383 = vpack.c.b16 %v323, %v317
  %v384 = vpack.c.b16 %v324, %v318
  %v385 = vpack.c.b16 %v331, %v325
  %v386 = vpack.c.b16 %v332, %v326
  %v387 = vpack.c.b16 %v333, %v327
  %v388 = vpack.c.b16 %v334, %v328
  %v389 = vpack.c.b16 %v335, %v329
  %v390 = vpack.c.b16 %v336, %v330
  %v391 = vpack.c.b16 %v343, %v337
  %v392 = vpack.c.b16 %v344, %v338
  %v393 = vpack.c.b16 %v345, %v339
  %v394 = vpack.c.b16 %v346, %v340
  %v395 = vpack.c.b16 %v347, %v341
  %v396 = vpack.c.b16 %v348, %v342
  %v541 = vunpack.c.l.b16 %v93
  %v542 = vunpack.c.l.b16 %v94
  %v543 = vunpack.c.l.b16 %v95
  %v544 = vunpack.c.l.b16 %v96
  %v545 = vunpack.c.l.b16 %v97
  %v546 = vunpack.c.l.b16 %v98
  %v547 = vunpack.c.l.b16 %v99
  %v548 = vunpack.c.l.b16 %v100
  %v549 = vunpack.c.l.b16 %v101
  %v550 = vunpack.c.l.b16 %v102
  %v551 = vunpack.c.l.b16 %v103
  %v552 = vunpack.c.l.b16 %v104
  %v553 = vunpack.c.l.b16 %v105
  %v554 = vunpack.c.l.b16 %v106
  %v555 = vunpack.c.l.b16 %v107
  %v556 = vunpack.c.l.b16 %v108
  %v557 = vunpack.c.l.b16 %v109
  %v558 = vunpack.c.l.b16 %v110
  %v559 = vunpack.c.l.b16 %v111
  %v560 = vunpack.c.l.b16 %v112
  %v561 = vunpack.c.l.b16 %v113
  %v562 = vunpack.c.l.b16 %v114
  %v563 = vunpack.c.l.b16 %v115
  %v564 = vunpack.c.l.b16 %v116
  %v565 = vunpack.c.l.b16 %v117
  %v566 = vunpack.c.l.b16 %v118
  %v567 = vunpack.c.l.b16 %v119
  %v568 = vunpack.c.l.b16 %v120
  %v569 = vunpack.c.l.b16 %v121
  %v570 = vunpack.c.l.b16 %v122
  %v571 = vunpack.c.l.b16 %v123
  %v572 = vunpack.c.l.b16 %v124
  %v573 = vunpack.c.l.b16 %v125
  %v574 = vunpack.c.l.b16 %v126
  %v575 = vunpack.c.l.b16 %v127
  %v576 = vunpack.c.l.b16 %v128
  %v577 = vunpack.c.l.b16 %v129
  %v578 = vunpack.c.l.b16 %v130
  %v579 = vunpack.c.l.b16 %v131
  %v580 = vunpack.c.l.b16 %v132
  %v581 = vunpack.c.l.b16 %v133
  %v582 = vunpack.c.l.b16 %v134
  %v583 = vunpack.c.l.b16 %v135
  %v584 = vunpack.c.l.b16 %v136
  %v585 = vunpack.c.l.b16 %v137
  %v586 = vunpack.c.l.b16 %v138
  %v587 = vunpack.c.l.b16 %v139
  %v588 = vunpack.c.l.b16 %v140
  %v589 = vunpack.c.l.b16 %v141
  %v590 = vunpack.c.l.b16 %v142
  %v591 = vunpack.c.l.b16 %v143
  %v592 = vunpack.c.l.b16 %v144
  %v593 = vunpack.c.l.b16 %v145
  %v594 = vunpack.c.l.b16 %v146
  %v595 = vunpack.c.l.b16 %v147
  %v596 = vunpack.c.l.b16 %v148
  %v597 = vunpack.c.l.b16 %v149
  %v598 = vunpack.c.l.b16 %v150
  %v599 = vunpack.c.l.b16 %v151
  %v600 = vunpack.c.l.b16 %v152
  %v601 = vunpack.c.l.b16 %v153
  %v602 = vunpack.c.l.b16 %v154
  %v603 = vunpack.c.l.b16 %v155
  %v604 = vunpack.c.l.b16 %v156
  %v605 = vunpack.c.l.b16 %v157
  %v606 = vunpack.c.l.b16 %v158
  %v607 = vunpack.c.l.b16 %v159
  %v608 = vunpack.c.l.b16 %v160
  %v609 = vunpack.c.l.b16 %v161
  %v610 = vunpack.c.l.b16 %v162
  %v611 = vunpack.c.l.b16 %v163
  %v612 = vunpack.c.l.b16 %v164
  %v613 = vunpack.c.l.b16 %v165
  %v614 = vunpack.c.l.b16 %v166
  %v615 = vunpack.c.l.b16 %v167
  %v616 = vunpack.c.l.b16 %v168
  %v617 = vunpack.c.l.b16 %v169
  %v618 = vunpack.c.l.b16 %v170
  %v619 = vunpack.c.l.b16 %v171
  %v620 = vunpack.c.l.b16 %v172
  %v621 = vunpack.c.l.b16 %v173
  %v622 = vunpack.c.l.b16 %v174
  %v623 = vunpack.c.l.b16 %v175
  %v624 = vunpack.c.l.b16 %v176
  %v625 = vunpack.c.l.b16 %v177
  %v626 = vunpack.c.l.b16 %v178
  %v627 = vunpack.c.l.b16 %v179
  %v628 = vunpack.c.l.b16 %v180
  %v629 = vunpack.c.l.b16 %v181
  %v630 = vunpack.c.l.b16 %v182
  %v631 = vunpack.c.l.b16 %v183
  %v632 = vunpack.c.l.b16 %v184
  %v633 = vunpack.c.l.b16 %v185
  %v634 = vunpack.c.l.b16 %v186
  %v635 = vunpack.c.l.b16 %v187
  %v636 = vunpack.c.l.b16 %v188
  %v637 = vpack.c.b16 %v542, %v541
  %v638 = vpack.c.b16 %v544, %v543
  %v639 = vpack.c.b16 %v546, %v545
  %v640 = vpack.c.b16 %v548, %v547
  %v641 = vpack.c.b16 %v550, %v549
  %v642 = vpack.c.b16 %v552, %v551
  %v643 = vpack.c.b16 %v554, %v553
  %v644 = vpack.c.b16 %v556, %v555
  %v645 = vpack.c.b16 %v558, %v557
  %v646 = vpack.c.b16 %v560, %v559
  %v647 = vpack.c.b16 %v562, %v561
  %v648 = vpack.c.b16 %v564, %v563
  %v649 = vpack.c.b16 %v566, %v565
  %v650 = vpack.c.b16 %v568, %v567
  %v651 = vpack.c.b16 %v570, %v569
  %v652 = vpack.c.b16 %v572, %v571
  %v653 = vpack.c.b16 %v574, %v573
  %v654 = vpack.c.b16 %v576, %v575
  %v655 = vpack.c.b16 %v578, %v577
  %v656 = vpack.c.b16 %v580, %v579
  %v657 = vpack.c.b16 %v582, %v581
  %v658 = vpack.c.b16 %v584, %v583
  %v659 = vpack.c.b16 %v586, %v585
  %v660 = vpack.c.b16 %v588, %v587
  %v661 = vpack.c.b16 %v590, %v589
  %v662 = vpack.c.b16 %v592, %v591
  %v663 = vpack.c.b16 %v594, %v593
  %v664 = vpack.c.b16 %v596, %v595
  %v665 = vpack.c.b16 %v598, %v597
  %v666 = vpack.c.b16 %v600, %v599
  %v667 = vpack.c.b16 %v602, %v601
  %v668 = vpack.c.b16 %v604, %v603
  %v669 = vpack.c.b16 %v606, %v605
  %v670 = vpack.c.b16 %v608, %v607
  %v671 = vpack.c.b16 %v610, %v609
  %v672 = vpack.c.b16 %v612, %v611
  %v673 = vpack.c.b16 %v614, %v613
  %v674 = vpack.c.b16 %v616, %v615
  %v675 = vpack.c.b16 %v618, %v617
  %v676 = vpack.c.b16 %v620, %v619
  %v677 = vpack.c.b16 %v622, %v621
  %v678 = vpack.c.b16 %v624, %v623
  %v679 = vpack.c.b16 %v626, %v625
  %v680 = vpack.c.b16 %v628, %v627
  %v681 = vpack.c.b16 %v630, %v629
  %v682 = vpack.c.b16 %v632, %v631
  %v683 = vpack.c.b16 %v634, %v633
  %v684 = vpack.c.b16 %v636, %v635
  %733 = vmatprep.subr.bf16.mxu0 0
  %734 = vmatpush1.bf16.msra.mxu0 %v637
  %735 = vmatprep.subr.bf16.mxu0 0
  %736 = vmatpush1.bf16.msra.mxu0 %v638
  %737 = vmatprep.subr.bf16.mxu0 0
  %738 = vmatpush1.bf16.msra.mxu0 %v639
  %739 = vmatprep.subr.bf16.mxu0 0
  %740 = vmatpush1.bf16.msra.mxu0 %v640
  %741 = vmatprep.subr.bf16.mxu0 0
  %742 = vmatpush1.bf16.msra.mxu0 %v641
  %743 = vmatprep.subr.bf16.mxu0 0
  %744 = vmatpush1.bf16.msra.mxu0 %v642
  %745 = vmatprep.subr.bf16.mxu0 0
  %746 = vmatpush1.bf16.msra.mxu0 %v643
  %747 = vmatprep.subr.bf16.mxu0 0
  %748 = vmatpush1.bf16.msra.mxu0 %v644
  %749 = vmatprep.subr.bf16.mxu0 0
  %750 = vmatpush1.bf16.msra.mxu0 %v645
  %751 = vmatprep.subr.bf16.mxu0 0
  %752 = vmatpush1.bf16.msra.mxu0 %v646
  %753 = vmatprep.subr.bf16.mxu0 0
  %754 = vmatpush1.bf16.msra.mxu0 %v647
  %755 = vmatprep.subr.bf16.mxu0 0
  %756 = vmatpush1.bf16.msra.mxu0 %v648
  %757 = vmatprep.subr.bf16.mxu0 0
  %758 = vmatpush1.bf16.msra.mxu0 %v649
  %759 = vmatprep.subr.bf16.mxu0 0
  %760 = vmatpush1.bf16.msra.mxu0 %v650
  %761 = vmatprep.subr.bf16.mxu0 0
  %762 = vmatpush1.bf16.msra.mxu0 %v651
  %763 = vmatprep.subr.bf16.mxu0 0
  %764 = vmatpush1.bf16.msra.mxu0 %v652
  %765 = vmatprep.mubr.bf16.mxu0 %v350
  %766 = vmatmul.mubr.bf16.gmra.mrb[0].mxu0 %v349
  %v767 = vpop.f32.mrb[0].mxu0
  %v768 = vadd.f32 %v189, %v767
  %v769 = vpop.f32.mrb[0].mxu0
  %v770 = vpop.f32.mrb[0].mxu0
  %v771 = vadd.f32 %v190, %v770
  %v772 = vpop.f32.mrb[0].mxu0
  %773 = vmatprep.mubr.bf16.mxu0 %v356
  %774 = vmatmul.mubr.bf16.gmra.mrb[0].mxu0 %v355
  %v775 = vpop.f32.mrb[0].mxu0
  %v776 = vadd.f32 %v191, %v775
  %v777 = vpop.f32.mrb[0].mxu0
  %v778 = vpop.f32.mrb[0].mxu0
  %v779 = vadd.f32 %v192, %v778
  %v780 = vpop.f32.mrb[0].mxu0
  %781 = vmatprep.mubr.bf16.mxu0 %v362
  %782 = vmatmul.mubr.bf16.gmra.mrb[0].mxu0 %v361
  %v783 = vpop.f32.mrb[0].mxu0
  %v784 = vadd.f32 %v193, %v783
  %v785 = vpop.f32.mrb[0].mxu0
  %v786 = vpop.f32.mrb[0].mxu0
  %v787 = vadd.f32 %v194, %v786
  %v788 = vpop.f32.mrb[0].mxu0
  %789 = vmatprep.mubr.bf16.mxu0 %v368
  %790 = vmatmul.mubr.bf16.gmra.mrb[0].mxu0 %v367
  %v791 = vpop.f32.mrb[0].mxu0
  %v792 = vadd.f32 %v195, %v791
  %v793 = vpop.f32.mrb[0].mxu0
  %v794 = vpop.f32.mrb[0].mxu0
  %v795 = vadd.f32 %v196, %v794
  %v796 = vpop.f32.mrb[0].mxu0
  %797 = vmatprep.mubr.bf16.mxu0 %v374
  %798 = vmatmul.mubr.bf16.gmra.mrb[0].mxu0 %v373
  %v799 = vpop.f32.mrb[0].mxu0
  %v800 = vadd.f32 %v197, %v799
  %v801 = vpop.f32.mrb[0].mxu0
  %v802 = vpop.f32.mrb[0].mxu0
  %v803 = vadd.f32 %v198, %v802
  %v804 = vpop.f32.mrb[0].mxu0
  %805 = vmatprep.mubr.bf16.mxu0 %v380
  %806 = vmatmul.mubr.bf16.gmra.mrb[0].mxu0 %v379
  %v807 = vpop.f32.mrb[0].mxu0
  %v808 = vadd.f32 %v199, %v807
  %v809 = vpop.f32.mrb[0].mxu0
  %v810 = vpop.f32.mrb[0].mxu0
  %v811 = vadd.f32 %v200, %v810
  %v812 = vpop.f32.mrb[0].mxu0
  %813 = vmatprep.mubr.bf16.mxu0 %v386
  %814 = vmatmul.mubr.bf16.gmra.mrb[0].mxu0 %v385
  %v815 = vpop.f32.mrb[0].mxu0
  %v816 = vadd.f32 %v201, %v815
  %v817 = vpop.f32.mrb[0].mxu0
  %v818 = vpop.f32.mrb[0].mxu0
  %v819 = vadd.f32 %v202, %v818
  %v820 = vpop.f32.mrb[0].mxu0
  %821 = vmatprep.mubr.bf16.mxu0 %v392
  %822 = vmatmul.mubr.bf16.gmra.mrb[0].mxu0 %v391
  %v823 = vpop.f32.mrb[0].mxu0
  %v824 = vadd.f32 %v203, %v823
  %v825 = vpop.f32.mrb[0].mxu0
  %v826 = vpop.f32.mrb[0].mxu0
  %v827 = vadd.f32 %v204, %v826
  %v828 = vpop.f32.mrb[0].mxu0
  %829 = vdwg.mxu0
  %830 = vmatprep.subr.bf16.mxu0 0
  %831 = vmatpush1.bf16.msra.mxu0 %v653
  %832 = vmatprep.subr.bf16.mxu0 0
  %833 = vmatpush1.bf16.msra.mxu0 %v654
  %834 = vmatprep.subr.bf16.mxu0 0
  %835 = vmatpush1.bf16.msra.mxu0 %v655
  %836 = vmatprep.subr.bf16.mxu0 0
  %837 = vmatpush1.bf16.msra.mxu0 %v656
  %838 = vmatprep.subr.bf16.mxu0 0
  %839 = vmatpush1.bf16.msra.mxu0 %v657
  %840 = vmatprep.subr.bf16.mxu0 0
  %841 = vmatpush1.bf16.msra.mxu0 %v658
  %842 = vmatprep.subr.bf16.mxu0 0
  %843 = vmatpush1.bf16.msra.mxu0 %v659
  %844 = vmatprep.subr.bf16.mxu0 0
  %845 = vmatpush1.bf16.msra.mxu0 %v660
  %846 = vmatprep.subr.bf16.mxu0 0
  %847 = vmatpush1.bf16.msra.mxu0 %v661
  %848 = vmatprep.subr.bf16.mxu0 0
  %849 = vmatpush1.bf16.msra.mxu0 %v662
  %850 = vmatprep.subr.bf16.mxu0 0
  %851 = vmatpush1.bf16.msra.mxu0 %v663
  %852 = vmatprep.subr.bf16.mxu0 0
  %853 = vmatpush1.bf16.msra.mxu0 %v664
  %854 = vmatprep.subr.bf16.mxu0 0
  %855 = vmatpush1.bf16.msra.mxu0 %v665
  %856 = vmatprep.subr.bf16.mxu0 0
  %857 = vmatpush1.bf16.msra.mxu0 %v666
  %858 = vmatprep.subr.bf16.mxu0 0
  %859 = vmatpush1.bf16.msra.mxu0 %v667
  %860 = vmatprep.subr.bf16.mxu0 0
  %861 = vmatpush1.bf16.msra.mxu0 %v668
  %862 = vmatprep.mubr.bf16.mxu0 %v352
  %863 = vmatmul.mubr.bf16.gmra.mrb[0].mxu0 %v351
  %v864 = vpop.f32.mrb[0].mxu0
  %v865 = vadd.f32 %v768, %v864
  %v866 = vpop.f32.mrb[0].mxu0
  %v867 = vpop.f32.mrb[0].mxu0
  %v868 = vadd.f32 %v771, %v867
  %v869 = vpop.f32.mrb[0].mxu0
  %870 = vmatprep.mubr.bf16.mxu0 %v358
  %871 = vmatmul.mubr.bf16.gmra.mrb[0].mxu0 %v357
  %v872 = vpop.f32.mrb[0].mxu0
  %v873 = vadd.f32 %v776, %v872
  %v874 = vpop.f32.mrb[0].mxu0
  %v875 = vpop.f32.mrb[0].mxu0
  %v876 = vadd.f32 %v779, %v875
  %v877 = vpop.f32.mrb[0].mxu0
  %878 = vmatprep.mubr.bf16.mxu0 %v364
  %879 = vmatmul.mubr.bf16.gmra.mrb[0].mxu0 %v363
  %v880 = vpop.f32.mrb[0].mxu0
  %v881 = vadd.f32 %v784, %v880
  %v882 = vpop.f32.mrb[0].mxu0
  %v883 = vpop.f32.mrb[0].mxu0
  %v884 = vadd.f32 %v787, %v883
  %v885 = vpop.f32.mrb[0].mxu0
  %886 = vmatprep.mubr.bf16.mxu0 %v370
  %887 = vmatmul.mubr.bf16.gmra.mrb[0].mxu0 %v369
  %v888 = vpop.f32.mrb[0].mxu0
  %v889 = vadd.f32 %v792, %v888
  %v890 = vpop.f32.mrb[0].mxu0
  %v891 = vpop.f32.mrb[0].mxu0
  %v892 = vadd.f32 %v795, %v891
  %v893 = vpop.f32.mrb[0].mxu0
  %894 = vmatprep.mubr.bf16.mxu0 %v376
  %895 = vmatmul.mubr.bf16.gmra.mrb[0].mxu0 %v375
  %v896 = vpop.f32.mrb[0].mxu0
  %v897 = vadd.f32 %v800, %v896
  %v898 = vpop.f32.mrb[0].mxu0
  %v899 = vpop.f32.mrb[0].mxu0
  %v900 = vadd.f32 %v803, %v899
  %v901 = vpop.f32.mrb[0].mxu0
  %902 = vmatprep.mubr.bf16.mxu0 %v382
  %903 = vmatmul.mubr.bf16.gmra.mrb[0].mxu0 %v381
  %v904 = vpop.f32.mrb[0].mxu0
  %v905 = vadd.f32 %v808, %v904
  %v906 = vpop.f32.mrb[0].mxu0
  %v907 = vpop.f32.mrb[0].mxu0
  %v908 = vadd.f32 %v811, %v907
  %v909 = vpop.f32.mrb[0].mxu0
  %910 = vmatprep.mubr.bf16.mxu0 %v388
  %911 = vmatmul.mubr.bf16.gmra.mrb[0].mxu0 %v387
  %v912 = vpop.f32.mrb[0].mxu0
  %v913 = vadd.f32 %v816, %v912
  %v914 = vpop.f32.mrb[0].mxu0
  %v915 = vpop.f32.mrb[0].mxu0
  %v916 = vadd.f32 %v819, %v915
  %v917 = vpop.f32.mrb[0].mxu0
  %918 = vmatprep.mubr.bf16.mxu0 %v394
  %919 = vmatmul.mubr.bf16.gmra.mrb[0].mxu0 %v393
  %v920 = vpop.f32.mrb[0].mxu0
  %v921 = vadd.f32 %v824, %v920
  %v922 = vpop.f32.mrb[0].mxu0
  %v923 = vpop.f32.mrb[0].mxu0
  %v924 = vadd.f32 %v827, %v923
  %v925 = vpop.f32.mrb[0].mxu0
  %926 = vdwg.mxu0
  %927 = vmatprep.subr.bf16.mxu0 0
  %928 = vmatpush1.bf16.msra.mxu0 %v669
  %929 = vmatprep.subr.bf16.mxu0 0
  %930 = vmatpush1.bf16.msra.mxu0 %v670
  %931 = vmatprep.subr.bf16.mxu0 0
  %932 = vmatpush1.bf16.msra.mxu0 %v671
  %933 = vmatprep.subr.bf16.mxu0 0
  %934 = vmatpush1.bf16.msra.mxu0 %v672
  %935 = vmatprep.subr.bf16.mxu0 0
  %936 = vmatpush1.bf16.msra.mxu0 %v673
  %937 = vmatprep.subr.bf16.mxu0 0
  %938 = vmatpush1.bf16.msra.mxu0 %v674
  %939 = vmatprep.subr.bf16.mxu0 0
  %940 = vmatpush1.bf16.msra.mxu0 %v675
  %941 = vmatprep.subr.bf16.mxu0 0
  %942 = vmatpush1.bf16.msra.mxu0 %v676
  %943 = vmatprep.subr.bf16.mxu0 0
  %944 = vmatpush1.bf16.msra.mxu0 %v677
  %945 = vmatprep.subr.bf16.mxu0 0
  %946 = vmatpush1.bf16.msra.mxu0 %v678
  %947 = vmatprep.subr.bf16.mxu0 0
  %948 = vmatpush1.bf16.msra.mxu0 %v679
  %949 = vmatprep.subr.bf16.mxu0 0
  %950 = vmatpush1.bf16.msra.mxu0 %v680
  %951 = vmatprep.subr.bf16.mxu0 0
  %952 = vmatpush1.bf16.msra.mxu0 %v681
  %953 = vmatprep.subr.bf16.mxu0 0
  %954 = vmatpush1.bf16.msra.mxu0 %v682
  %955 = vmatprep.subr.bf16.mxu0 0
  %956 = vmatpush1.bf16.msra.mxu0 %v683
  %957 = vmatprep.subr.bf16.mxu0 0
  %958 = vmatpush1.bf16.msra.mxu0 %v684
  %959 = vmatprep.mubr.bf16.mxu0 %v354
  %960 = vmatmul.mubr.bf16.gmra.mrb[0].mxu0 %v353
  %v961 = vpop.f32.mrb[0].mxu0
  %v962 = vadd.f32 %v865, %v961
  %v963 = vpop.f32.mrb[0].mxu0
  %v964 = vpop.f32.mrb[0].mxu0
  %v965 = vadd.f32 %v868, %v964
  %v966 = vpop.f32.mrb[0].mxu0
  %967 = vmatprep.mubr.bf16.mxu0 %v360
  %968 = vmatmul.mubr.bf16.gmra.mrb[0].mxu0 %v359
  %v969 = vpop.f32.mrb[0].mxu0
  %v970 = vadd.f32 %v873, %v969
  %v971 = vpop.f32.mrb[0].mxu0
  %v972 = vpop.f32.mrb[0].mxu0
  %v973 = vadd.f32 %v876, %v972
  %v974 = vpop.f32.mrb[0].mxu0
  %975 = vmatprep.mubr.bf16.mxu0 %v366
  %976 = vmatmul.mubr.bf16.gmra.mrb[0].mxu0 %v365
  %v977 = vpop.f32.mrb[0].mxu0
  %v978 = vadd.f32 %v881, %v977
  %v979 = vpop.f32.mrb[0].mxu0
  %v980 = vpop.f32.mrb[0].mxu0
  %v981 = vadd.f32 %v884, %v980
  %v982 = vpop.f32.mrb[0].mxu0
  %983 = vmatprep.mubr.bf16.mxu0 %v372
  %984 = vmatmul.mubr.bf16.gmra.mrb[0].mxu0 %v371
  %v985 = vpop.f32.mrb[0].mxu0
  %v986 = vadd.f32 %v889, %v985
  %v987 = vpop.f32.mrb[0].mxu0
  %v988 = vpop.f32.mrb[0].mxu0
  %v989 = vadd.f32 %v892, %v988
  %v990 = vpop.f32.mrb[0].mxu0
  %991 = vmatprep.mubr.bf16.mxu0 %v378
  %992 = vmatmul.mubr.bf16.gmra.mrb[0].mxu0 %v377
  %v993 = vpop.f32.mrb[0].mxu0
  %v994 = vadd.f32 %v897, %v993
  %v995 = vpop.f32.mrb[0].mxu0
  %v996 = vpop.f32.mrb[0].mxu0
  %v997 = vadd.f32 %v900, %v996
  %v998 = vpop.f32.mrb[0].mxu0
  %999 = vmatprep.mubr.bf16.mxu0 %v384
  %1000 = vmatmul.mubr.bf16.gmra.mrb[0].mxu0 %v383
  %v1001 = vpop.f32.mrb[0].mxu0
  %v1002 = vadd.f32 %v905, %v1001
  %v1003 = vpop.f32.mrb[0].mxu0
  %v1004 = vpop.f32.mrb[0].mxu0
  %v1005 = vadd.f32 %v908, %v1004
  %v1006 = vpop.f32.mrb[0].mxu0
  %1007 = vmatprep.mubr.bf16.mxu0 %v390
  %1008 = vmatmul.mubr.bf16.gmra.mrb[0].mxu0 %v389
  %v1009 = vpop.f32.mrb[0].mxu0
  %v1010 = vadd.f32 %v913, %v1009
  %v1011 = vpop.f32.mrb[0].mxu0
  %v1012 = vpop.f32.mrb[0].mxu0
  %v1013 = vadd.f32 %v916, %v1012
  %v1014 = vpop.f32.mrb[0].mxu0
  %1015 = vmatprep.mubr.bf16.mxu0 %v396
  %1016 = vmatmul.mubr.bf16.gmra.mrb[0].mxu0 %v395
  %v1017 = vpop.f32.mrb[0].mxu0
  %v1018 = vadd.f32 %v921, %v1017
  %v1019 = vpop.f32.mrb[0].mxu0
  %v1020 = vpop.f32.mrb[0].mxu0
  %v1021 = vadd.f32 %v924, %v1020
  %v1022 = vpop.f32.mrb[0].mxu0
  %1023 = vdwg.mxu0
  %v1024 = vlaneseq
  %v1025 = vshrl.u32 %v1024, 7
  %v1026 = vadd.s32 %v1025, 8
  %v1027 = vadd.s32 %v1025, 16
  %v1028 = vadd.s32 %v1025, 24
  %v1029 = vadd.s32 %v1025, 32
  %v1030 = vadd.s32 %v1025, 40
  %v1031 = vadd.s32 %v1025, 48
  %v1032 = vadd.s32 %v1025, 56
  %v1033 = vadd.s32 %v1025, 64
  %v1034 = vadd.s32 %v1025, 72
  %v1035 = vadd.s32 %v1025, 80
  %v1036 = vadd.s32 %v1025, 88
  %v1037 = vadd.s32 %v1025, 96
  %v1038 = vadd.s32 %v1025, 104
  %v1039 = vadd.s32 %v1025, 112
  %v1040 = vadd.s32 %v1025, 120
  %v1041 = vlaneseq
  %v1042 = vand.u32 %v1041, 127
  %v1043 = vshra.s32 %v1025, 3
  %v1044 = vshra.s32 %v1026, 3
  %v1045 = vshra.s32 %v1027, 3
  %v1046 = vshra.s32 %v1028, 3
  %v1047 = vshra.s32 %v1029, 3
  %v1048 = vshra.s32 %v1030, 3
  %v1049 = vshra.s32 %v1031, 3
  %v1050 = vshra.s32 %v1032, 3
  %v1051 = vshra.s32 %v1033, 3
  %v1052 = vshra.s32 %v1034, 3
  %v1053 = vshra.s32 %v1035, 3
  %v1054 = vshra.s32 %v1036, 3
  %v1055 = vshra.s32 %v1037, 3
  %v1056 = vshra.s32 %v1038, 3
  %v1057 = vshra.s32 %v1039, 3
  %v1058 = vshra.s32 %v1040, 3
  %v1059 = vshra.s32 %v1042, 3
  %vm1060 = vcmp.eq.s32.totalorder %v1043, %v1059
  %vm1061 = vcmp.eq.s32.totalorder %v1044, %v1059
  %vm1062 = vcmp.eq.s32.totalorder %v1045, %v1059
  %vm1063 = vcmp.eq.s32.totalorder %v1046, %v1059
  %vm1064 = vcmp.eq.s32.totalorder %v1047, %v1059
  %vm1065 = vcmp.eq.s32.totalorder %v1048, %v1059
  %vm1066 = vcmp.eq.s32.totalorder %v1049, %v1059
  %vm1067 = vcmp.eq.s32.totalorder %v1050, %v1059
  %vm1068 = vcmp.eq.s32.totalorder %v1051, %v1059
  %vm1069 = vcmp.eq.s32.totalorder %v1052, %v1059
  %vm1070 = vcmp.eq.s32.totalorder %v1053, %v1059
  %vm1071 = vcmp.eq.s32.totalorder %v1054, %v1059
  %vm1072 = vcmp.eq.s32.totalorder %v1055, %v1059
  %vm1073 = vcmp.eq.s32.totalorder %v1056, %v1059
  %vm1074 = vcmp.eq.s32.totalorder %v1057, %v1059
  %vm1075 = vcmp.eq.s32.totalorder %v1058, %v1059
  %v1076 = vand.u32 %v1042, 7
  %vm1077 = vcmp.lt.s32.totalorder %v1076, 5
  %vm1078 = vmand %vm1060, %vm1077
  %vm1079 = vmand %vm1061, %vm1077
  %vm1080 = vmand %vm1062, %vm1077
  %vm1081 = vmand %vm1063, %vm1077
  %vm1082 = vmand %vm1064, %vm1077
  %vm1083 = vmand %vm1065, %vm1077
  %vm1084 = vmand %vm1066, %vm1077
  %vm1085 = vmand %vm1067, %vm1077
  %vm1086 = vmand %vm1068, %vm1077
  %vm1087 = vmand %vm1069, %vm1077
  %vm1088 = vmand %vm1070, %vm1077
  %vm1089 = vmand %vm1071, %vm1077
  %vm1090 = vmand %vm1072, %vm1077
  %vm1091 = vmand %vm1073, %vm1077
  %vm1092 = vmand %vm1074, %vm1077
  %vm1093 = vmand %vm1075, %vm1077
  %v1094 = vld [vmem:[%s3] ss:$0 sm:$0xff]
  %v1095 = vld [vmem:[%s3 + $0x1] ss:$0 sm:$0xff]
  %v1096 = vld [vmem:[%s3 + $0x2] ss:$0 sm:$0xff]
  %v1097 = vld [vmem:[%s3 + $0x3] ss:$0 sm:$0xff]
  %s1098 = scalar_lea.vmem %s3, 4
  %v1099 = vld [vmem:[%s1098] ss:$8 sm:$0x3]
  %v1100 = vld [vmem:[%s3 + $0x5] ss:$0 sm:$0xff]
  %s1101 = scalar_lea.vmem %s3, 6
  %v1102 = vld [vmem:[%s1101] ss:$8 sm:$0x3]
  %v1103 = vld [vmem:[%s3 + $0x7] ss:$0 sm:$0xff]
  %vm1104 = vcmask 523264
  %v1105 = vsel %vm1104, %v962, 0.0
  %1106 = vadd.xlane.f32.xlu0 %v1105
  %v1107 = vpop.xlane.xlu0 %1106
  %v1108 = vsel %vm1104, %v965, 0.0
  %1109 = vadd.xlane.f32.xlu0 %v1108
  %v1110 = vpop.xlane.xlu0 %1109
  %v1111 = vsel %vm1104, %v970, 0.0
  %1112 = vadd.xlane.f32.xlu0 %v1111
  %v1113 = vpop.xlane.xlu0 %1112
  %v1114 = vsel %vm1104, %v973, 0.0
  %1115 = vadd.xlane.f32.xlu0 %v1114
  %v1116 = vpop.xlane.xlu0 %1115
  %v1117 = vsel %vm1104, %v978, 0.0
  %1118 = vadd.xlane.f32.xlu0 %v1117
  %v1119 = vpop.xlane.xlu0 %1118
  %v1120 = vsel %vm1104, %v981, 0.0
  %1121 = vadd.xlane.f32.xlu0 %v1120
  %v1122 = vpop.xlane.xlu0 %1121
  %v1123 = vsel %vm1104, %v986, 0.0
  %1124 = vadd.xlane.f32.xlu0 %v1123
  %v1125 = vpop.xlane.xlu0 %1124
  %v1126 = vsel %vm1104, %v989, 0.0
  %1127 = vadd.xlane.f32.xlu0 %v1126
  %v1128 = vpop.xlane.xlu0 %1127
  %v1129 = vsel %vm1104, %v994, 0.0
  %1130 = vadd.xlane.f32.xlu0 %v1129
  %v1131 = vpop.xlane.xlu0 %1130
  %v1132 = vsel %vm1104, %v997, 0.0
  %1133 = vadd.xlane.f32.xlu0 %v1132
  %v1134 = vpop.xlane.xlu0 %1133
  %v1135 = vsel %vm1104, %v1002, 0.0
  %1136 = vadd.xlane.f32.xlu0 %v1135
  %v1137 = vpop.xlane.xlu0 %1136
  %v1138 = vsel %vm1104, %v1005, 0.0
  %1139 = vadd.xlane.f32.xlu0 %v1138
  %v1140 = vpop.xlane.xlu0 %1139
  %v1141 = vsel %vm1104, %v1010, 0.0
  %1142 = vadd.xlane.f32.xlu0 %v1141
  %v1143 = vpop.xlane.xlu0 %1142
  %v1144 = vsel %vm1104, %v1013, 0.0
  %1145 = vadd.xlane.f32.xlu0 %v1144
  %v1146 = vpop.xlane.xlu0 %1145
  %v1147 = vsel %vm1104, %v1018, 0.0
  %1148 = vadd.xlane.f32.xlu0 %v1147
  %v1149 = vpop.xlane.xlu0 %1148
  %v1150 = vsel %vm1104, %v1021, 0.0
  %1151 = vadd.xlane.f32.xlu0 %v1150
  %v1152 = vpop.xlane.xlu0 %1151
  %v1153 = vrcp.pop 64.0
  %v1154 = vmul.f32 %v1107, %v1153
  %v1155 = vmul.f32 %v1110, %v1153
  %v1156 = vmul.f32 %v1113, %v1153
  %v1157 = vmul.f32 %v1116, %v1153
  %v1158 = vmul.f32 %v1119, %v1153
  %v1159 = vmul.f32 %v1122, %v1153
  %v1160 = vmul.f32 %v1125, %v1153
  %v1161 = vmul.f32 %v1128, %v1153
  %v1162 = vmul.f32 %v1131, %v1153
  %v1163 = vmul.f32 %v1134, %v1153
  %v1164 = vmul.f32 %v1137, %v1153
  %v1165 = vmul.f32 %v1140, %v1153
  %v1166 = vmul.f32 %v1143, %v1153
  %v1167 = vmul.f32 %v1146, %v1153
  %v1168 = vmul.f32 %v1149, %v1153
  %v1169 = vmul.f32 %v1152, %v1153
  %v1170 = vsub.f32 %v962, %v1154
  %v1171 = vsub.f32 %v965, %v1155
  %v1172 = vsub.f32 %v970, %v1156
  %v1173 = vsub.f32 %v973, %v1157
  %v1174 = vsub.f32 %v978, %v1158
  %v1175 = vsub.f32 %v981, %v1159
  %v1176 = vsub.f32 %v986, %v1160
  %v1177 = vsub.f32 %v989, %v1161
  %v1178 = vsub.f32 %v994, %v1162
  %v1179 = vsub.f32 %v997, %v1163
  %v1180 = vsub.f32 %v1002, %v1164
  %v1181 = vsub.f32 %v1005, %v1165
  %v1182 = vsub.f32 %v1010, %v1166
  %v1183 = vsub.f32 %v1013, %v1167
  %v1184 = vsub.f32 %v1018, %v1168
  %v1185 = vsub.f32 %v1021, %v1169
  %v1186 = vmul.f32 %v1170, %v1170
  %v1187 = vmul.f32 %v1171, %v1171
  %v1188 = vmul.f32 %v1172, %v1172
  %v1189 = vmul.f32 %v1173, %v1173
  %v1190 = vmul.f32 %v1174, %v1174
  %v1191 = vmul.f32 %v1175, %v1175
  %v1192 = vmul.f32 %v1176, %v1176
  %v1193 = vmul.f32 %v1177, %v1177
  %v1194 = vmul.f32 %v1178, %v1178
  %v1195 = vmul.f32 %v1179, %v1179
  %v1196 = vmul.f32 %v1180, %v1180
  %v1197 = vmul.f32 %v1181, %v1181
  %v1198 = vmul.f32 %v1182, %v1182
  %v1199 = vmul.f32 %v1183, %v1183
  %v1200 = vmul.f32 %v1184, %v1184
  %v1201 = vmul.f32 %v1185, %v1185
  %v1202 = vsel %vm1104, %v1186, 0.0
  %1203 = vadd.xlane.f32.xlu0 %v1202
  %v1204 = vpop.xlane.xlu0 %1203
  %v1205 = vsel %vm1104, %v1187, 0.0
  %1206 = vadd.xlane.f32.xlu0 %v1205
  %v1207 = vpop.xlane.xlu0 %1206
  %v1208 = vsel %vm1104, %v1188, 0.0
  %1209 = vadd.xlane.f32.xlu0 %v1208
  %v1210 = vpop.xlane.xlu0 %1209
  %v1211 = vsel %vm1104, %v1189, 0.0
  %1212 = vadd.xlane.f32.xlu0 %v1211
  %v1213 = vpop.xlane.xlu0 %1212
  %v1214 = vsel %vm1104, %v1190, 0.0
  %1215 = vadd.xlane.f32.xlu0 %v1214
  %v1216 = vpop.xlane.xlu0 %1215
  %v1217 = vsel %vm1104, %v1191, 0.0
  %1218 = vadd.xlane.f32.xlu0 %v1217
  %v1219 = vpop.xlane.xlu0 %1218
  %v1220 = vsel %vm1104, %v1192, 0.0
  %1221 = vadd.xlane.f32.xlu0 %v1220
  %v1222 = vpop.xlane.xlu0 %1221
  %v1223 = vsel %vm1104, %v1193, 0.0
  %1224 = vadd.xlane.f32.xlu0 %v1223
  %v1225 = vpop.xlane.xlu0 %1224
  %v1226 = vsel %vm1104, %v1194, 0.0
  %1227 = vadd.xlane.f32.xlu0 %v1226
  %v1228 = vpop.xlane.xlu0 %1227
  %v1229 = vsel %vm1104, %v1195, 0.0
  %1230 = vadd.xlane.f32.xlu0 %v1229
  %v1231 = vpop.xlane.xlu0 %1230
  %v1232 = vsel %vm1104, %v1196, 0.0
  %1233 = vadd.xlane.f32.xlu0 %v1232
  %v1234 = vpop.xlane.xlu0 %1233
  %v1235 = vsel %vm1104, %v1197, 0.0
  %1236 = vadd.xlane.f32.xlu0 %v1235
  %v1237 = vpop.xlane.xlu0 %1236
  %v1238 = vsel %vm1104, %v1198, 0.0
  %1239 = vadd.xlane.f32.xlu0 %v1238
  %v1240 = vpop.xlane.xlu0 %1239
  %v1241 = vsel %vm1104, %v1199, 0.0
  %1242 = vadd.xlane.f32.xlu0 %v1241
  %v1243 = vpop.xlane.xlu0 %1242
  %v1244 = vsel %vm1104, %v1200, 0.0
  %1245 = vadd.xlane.f32.xlu0 %v1244
  %v1246 = vpop.xlane.xlu0 %1245
  %v1247 = vsel %vm1104, %v1201, 0.0
  %1248 = vadd.xlane.f32.xlu0 %v1247
  %v1249 = vpop.xlane.xlu0 %1248
  %v1250 = vmul.f32 %v1204, %v1153
  %v1251 = vmul.f32 %v1207, %v1153
  %v1252 = vmul.f32 %v1210, %v1153
  %v1253 = vmul.f32 %v1213, %v1153
  %v1254 = vmul.f32 %v1216, %v1153
  %v1255 = vmul.f32 %v1219, %v1153
  %v1256 = vmul.f32 %v1222, %v1153
  %v1257 = vmul.f32 %v1225, %v1153
  %v1258 = vmul.f32 %v1228, %v1153
  %v1259 = vmul.f32 %v1231, %v1153
  %v1260 = vmul.f32 %v1234, %v1153
  %v1261 = vmul.f32 %v1237, %v1153
  %v1262 = vmul.f32 %v1240, %v1153
  %v1263 = vmul.f32 %v1243, %v1153
  %v1264 = vmul.f32 %v1246, %v1153
  %v1265 = vmul.f32 %v1249, %v1153
  %v1266 = vadd.f32 %v1250, 1e-06
  %v1267 = vadd.f32 %v1251, 1e-06
  %v1268 = vadd.f32 %v1252, 1e-06
  %v1269 = vadd.f32 %v1253, 1e-06
  %v1270 = vadd.f32 %v1254, 1e-06
  %v1271 = vadd.f32 %v1255, 1e-06
  %v1272 = vadd.f32 %v1256, 1e-06
  %v1273 = vadd.f32 %v1257, 1e-06
  %v1274 = vadd.f32 %v1258, 1e-06
  %v1275 = vadd.f32 %v1259, 1e-06
  %v1276 = vadd.f32 %v1260, 1e-06
  %v1277 = vadd.f32 %v1261, 1e-06
  %v1278 = vadd.f32 %v1262, 1e-06
  %v1279 = vadd.f32 %v1263, 1e-06
  %v1280 = vadd.f32 %v1264, 1e-06
  %v1281 = vadd.f32 %v1265, 1e-06
  %v1282 = vrsqrt.pop %v1266
  %v1283 = vrsqrt.pop %v1267
  %v1284 = vrsqrt.pop %v1268
  %v1285 = vrsqrt.pop %v1269
  %v1286 = vrsqrt.pop %v1270
  %v1287 = vrsqrt.pop %v1271
  %v1288 = vrsqrt.pop %v1272
  %v1289 = vrsqrt.pop %v1273
  %v1290 = vrsqrt.pop %v1274
  %v1291 = vrsqrt.pop %v1275
  %v1292 = vrsqrt.pop %v1276
  %v1293 = vrsqrt.pop %v1277
  %v1294 = vrsqrt.pop %v1278
  %v1295 = vrsqrt.pop %v1279
  %v1296 = vrsqrt.pop %v1280
  %v1297 = vrsqrt.pop %v1281
  %v1298 = vmul.f32 %v1170, %v1282
  %v1299 = vmul.f32 %v1171, %v1283
  %v1300 = vmul.f32 %v1172, %v1284
  %v1301 = vmul.f32 %v1173, %v1285
  %v1302 = vmul.f32 %v1174, %v1286
  %v1303 = vmul.f32 %v1175, %v1287
  %v1304 = vmul.f32 %v1176, %v1288
  %v1305 = vmul.f32 %v1177, %v1289
  %v1306 = vmul.f32 %v1178, %v1290
  %v1307 = vmul.f32 %v1179, %v1291
  %v1308 = vmul.f32 %v1180, %v1292
  %v1309 = vmul.f32 %v1181, %v1293
  %v1310 = vmul.f32 %v1182, %v1294
  %v1311 = vmul.f32 %v1183, %v1295
  %v1312 = vmul.f32 %v1184, %v1296
  %v1313 = vmul.f32 %v1185, %v1297
  %v1314 = vmul.f32 %v1298, %v1094
  %v1315 = vmul.f32 %v1299, %v1094
  %v1316 = vmul.f32 %v1300, %v1094
  %v1317 = vmul.f32 %v1301, %v1094
  %v1318 = vmul.f32 %v1302, %v1094
  %v1319 = vmul.f32 %v1303, %v1094
  %v1320 = vmul.f32 %v1304, %v1094
  %v1321 = vmul.f32 %v1305, %v1094
  %v1322 = vmul.f32 %v1306, %v1094
  %v1323 = vmul.f32 %v1307, %v1094
  %v1324 = vmul.f32 %v1308, %v1094
  %v1325 = vmul.f32 %v1309, %v1094
  %v1326 = vmul.f32 %v1310, %v1094
  %v1327 = vmul.f32 %v1311, %v1094
  %v1328 = vmul.f32 %v1312, %v1094
  %v1329 = vmul.f32 %v1313, %v1094
  %v1330 = vadd.f32 %v1314, %v1095
  %v1331 = vadd.f32 %v1315, %v1095
  %v1332 = vadd.f32 %v1316, %v1095
  %v1333 = vadd.f32 %v1317, %v1095
  %v1334 = vadd.f32 %v1318, %v1095
  %v1335 = vadd.f32 %v1319, %v1095
  %v1336 = vadd.f32 %v1320, %v1095
  %v1337 = vadd.f32 %v1321, %v1095
  %v1338 = vadd.f32 %v1322, %v1095
  %v1339 = vadd.f32 %v1323, %v1095
  %v1340 = vadd.f32 %v1324, %v1095
  %v1341 = vadd.f32 %v1325, %v1095
  %v1342 = vadd.f32 %v1326, %v1095
  %v1343 = vadd.f32 %v1327, %v1095
  %v1344 = vadd.f32 %v1328, %v1095
  %v1345 = vadd.f32 %v1329, %v1095
  %v1346 = vld [vmem:[%s4] sm:$0xff]
  %v1347 = vld [vmem:[%s4 + $0x8] sm:$0xff]
  %v1348 = vld [vmem:[%s4 + $0x10] sm:$0xff]
  %v1349 = vld [vmem:[%s4 + $0x18] sm:$0xff]
  %v1350 = vld [vmem:[%s4 + $0x20] sm:$0xff]
  %v1351 = vld [vmem:[%s4 + $0x28] sm:$0xff]
  %v1352 = vld [vmem:[%s4 + $0x30] sm:$0xff]
  %v1353 = vld [vmem:[%s4 + $0x38] sm:$0xff]
  %v1354 = vpack.c.bf16 %v1331, %v1330
  %v1355 = vpack.c.bf16 %v1333, %v1332
  %v1356 = vpack.c.bf16 %v1335, %v1334
  %v1357 = vpack.c.bf16 %v1337, %v1336
  %v1358 = vpack.c.bf16 %v1339, %v1338
  %v1359 = vpack.c.bf16 %v1341, %v1340
  %v1360 = vpack.c.bf16 %v1343, %v1342
  %v1361 = vpack.c.bf16 %v1345, %v1344
  %v1363 = vlaneseq
  %v1364 = vshrl.u32 %v1363, 7
  %v1365 = vsub.s32 0, %v1364
  %v1366 = vrot.slane %v1099, %v1365
  %v1367 = vlaneseq
  %v1368 = vshrl.u32 %v1367, 7
  %v1369 = vsub.s32 1, %v1368
  %v1370 = vrot.slane %v1099, %v1369
  %v1381 = vunpack.c.l.b16 %v1346
  %v1382 = vunpack.c.h.b16 %v1346
  %v1383 = vunpack.c.l.b16 %v1347
  %v1384 = vunpack.c.h.b16 %v1347
  %v1385 = vunpack.c.l.b16 %v1348
  %v1386 = vunpack.c.h.b16 %v1348
  %v1387 = vunpack.c.l.b16 %v1349
  %v1388 = vunpack.c.h.b16 %v1349
  %v1389 = vunpack.c.l.b16 %v1350
  %v1390 = vunpack.c.h.b16 %v1350
  %v1391 = vunpack.c.l.b16 %v1351
  %v1392 = vunpack.c.h.b16 %v1351
  %v1393 = vunpack.c.l.b16 %v1352
  %v1394 = vunpack.c.h.b16 %v1352
  %v1395 = vunpack.c.l.b16 %v1353
  %v1396 = vunpack.c.h.b16 %v1353
  %v1397 = vpack.c.b16 %v1383, %v1381
  %v1398 = vpack.c.b16 %v1384, %v1382
  %v1399 = vpack.c.b16 %v1387, %v1385
  %v1400 = vpack.c.b16 %v1388, %v1386
  %v1401 = vpack.c.b16 %v1391, %v1389
  %v1402 = vpack.c.b16 %v1392, %v1390
  %v1403 = vpack.c.b16 %v1395, %v1393
  %v1404 = vpack.c.b16 %v1396, %v1394
  %v1414 = vsel %vm1104, %v1354, 0
  %v1417 = vsel %vm1104, %v1355, 0
  %v1420 = vsel %vm1104, %v1356, 0
  %v1423 = vsel %vm1104, %v1357, 0
  %v1426 = vsel %vm1104, %v1358, 0
  %v1429 = vsel %vm1104, %v1359, 0
  %v1432 = vsel %vm1104, %v1360, 0
  %v1435 = vsel %vm1104, %v1361, 0
  %1437 = vmatprep.subr.bf16.mxu0 %v1398
  %1438 = vmatpush1.bf16.msra.mxu0 %v1397
  %1439 = vmatprep.subr.bf16.mxu0 %v1400
  %1440 = vmatpush1.bf16.msra.mxu0 %v1399
  %1441 = vmatprep.subr.bf16.mxu0 %v1402
  %1442 = vmatpush1.bf16.msra.mxu0 %v1401
  %1443 = vmatprep.subr.bf16.mxu0 %v1404
  %1444 = vmatpush1.bf16.msra.mxu0 %v1403
  %1445 = vmatprep.subr.bf16.mxu0 0
  %1446 = vmatpush1.bf16.msra.mxu0 0
  %1447 = vmatprep.subr.bf16.mxu0 0
  %1448 = vmatpush1.bf16.msra.mxu0 0
  %1449 = vmatprep.subr.bf16.mxu0 0
  %1450 = vmatpush1.bf16.msra.mxu0 0
  %1451 = vmatprep.subr.bf16.mxu0 0
  %1452 = vmatpush1.bf16.msra.mxu0 0
  %1453 = vmatprep.subr.bf16.mxu0 0
  %1454 = vmatpush1.bf16.msra.mxu0 0
  %1455 = vmatprep.subr.bf16.mxu0 0
  %1456 = vmatpush1.bf16.msra.mxu0 0
  %1457 = vmatprep.subr.bf16.mxu0 0
  %1458 = vmatpush1.bf16.msra.mxu0 0
  %1459 = vmatprep.subr.bf16.mxu0 0
  %1460 = vmatpush1.bf16.msra.mxu0 0
  %1461 = vmatprep.subr.bf16.mxu0 0
  %1462 = vmatpush1.bf16.msra.mxu0 0
  %1463 = vmatprep.subr.bf16.mxu0 0
  %1464 = vmatpush1.bf16.msra.mxu0 0
  %1465 = vmatprep.subr.bf16.mxu0 0
  %1466 = vmatpush1.bf16.msra.mxu0 0
  %1467 = vmatprep.subr.bf16.mxu0 0
  %1468 = vmatpush1.bf16.msra.mxu0 0
  %1469 = vmatprep.mubr.bf16.mxu0 0
  %1470 = vmatmul.mubr.bf16.gmra.mrb[0].mxu0 %v1414
  %v1471 = vpop.f32.mrb[0].mxu0
  %v1472 = vadd.f32 %v1366, %v1471
  %v1473 = vpop.f32.mrb[0].mxu0
  %v1474 = vadd.f32 %v1370, %v1473
  %v1475 = vpop.f32.mrb[0].mxu0
  %v1476 = vadd.f32 %v1366, %v1475
  %v1477 = vpop.f32.mrb[0].mxu0
  %v1478 = vadd.f32 %v1370, %v1477
  %1479 = vmatprep.mubr.bf16.mxu0 0
  %1480 = vmatmul.mubr.bf16.gmra.mrb[0].mxu0 %v1417
  %v1481 = vpop.f32.mrb[0].mxu0
  %v1482 = vadd.f32 %v1366, %v1481
  %v1483 = vpop.f32.mrb[0].mxu0
  %v1484 = vadd.f32 %v1370, %v1483
  %v1485 = vpop.f32.mrb[0].mxu0
  %v1486 = vadd.f32 %v1366, %v1485
  %v1487 = vpop.f32.mrb[0].mxu0
  %v1488 = vadd.f32 %v1370, %v1487
  %1489 = vmatprep.mubr.bf16.mxu0 0
  %1490 = vmatmul.mubr.bf16.gmra.mrb[0].mxu0 %v1420
  %v1491 = vpop.f32.mrb[0].mxu0
  %v1492 = vadd.f32 %v1366, %v1491
  %v1493 = vpop.f32.mrb[0].mxu0
  %v1494 = vadd.f32 %v1370, %v1493
  %v1495 = vpop.f32.mrb[0].mxu0
  %v1496 = vadd.f32 %v1366, %v1495
  %v1497 = vpop.f32.mrb[0].mxu0
  %v1498 = vadd.f32 %v1370, %v1497
  %1499 = vmatprep.mubr.bf16.mxu0 0
  %1500 = vmatmul.mubr.bf16.gmra.mrb[0].mxu0 %v1423
  %v1501 = vpop.f32.mrb[0].mxu0
  %v1502 = vadd.f32 %v1366, %v1501
  %v1503 = vpop.f32.mrb[0].mxu0
  %v1504 = vadd.f32 %v1370, %v1503
  %v1505 = vpop.f32.mrb[0].mxu0
  %v1506 = vadd.f32 %v1366, %v1505
  %v1507 = vpop.f32.mrb[0].mxu0
  %v1508 = vadd.f32 %v1370, %v1507
  %1509 = vmatprep.mubr.bf16.mxu0 0
  %1510 = vmatmul.mubr.bf16.gmra.mrb[0].mxu0 %v1426
  %v1511 = vpop.f32.mrb[0].mxu0
  %v1512 = vadd.f32 %v1366, %v1511
  %v1513 = vpop.f32.mrb[0].mxu0
  %v1514 = vadd.f32 %v1370, %v1513
  %v1515 = vpop.f32.mrb[0].mxu0
  %v1516 = vadd.f32 %v1366, %v1515
  %v1517 = vpop.f32.mrb[0].mxu0
  %v1518 = vadd.f32 %v1370, %v1517
  %1519 = vmatprep.mubr.bf16.mxu0 0
  %1520 = vmatmul.mubr.bf16.gmra.mrb[0].mxu0 %v1429
  %v1521 = vpop.f32.mrb[0].mxu0
  %v1522 = vadd.f32 %v1366, %v1521
  %v1523 = vpop.f32.mrb[0].mxu0
  %v1524 = vadd.f32 %v1370, %v1523
  %v1525 = vpop.f32.mrb[0].mxu0
  %v1526 = vadd.f32 %v1366, %v1525
  %v1527 = vpop.f32.mrb[0].mxu0
  %v1528 = vadd.f32 %v1370, %v1527
  %1529 = vmatprep.mubr.bf16.mxu0 0
  %1530 = vmatmul.mubr.bf16.gmra.mrb[0].mxu0 %v1432
  %v1531 = vpop.f32.mrb[0].mxu0
  %v1532 = vadd.f32 %v1366, %v1531
  %v1533 = vpop.f32.mrb[0].mxu0
  %v1534 = vadd.f32 %v1370, %v1533
  %v1535 = vpop.f32.mrb[0].mxu0
  %v1536 = vadd.f32 %v1366, %v1535
  %v1537 = vpop.f32.mrb[0].mxu0
  %v1538 = vadd.f32 %v1370, %v1537
  %1539 = vmatprep.mubr.bf16.mxu0 0
  %1540 = vmatmul.mubr.bf16.gmra.mrb[0].mxu0 %v1435
  %v1541 = vpop.f32.mrb[0].mxu0
  %v1542 = vadd.f32 %v1366, %v1541
  %v1543 = vpop.f32.mrb[0].mxu0
  %v1544 = vadd.f32 %v1370, %v1543
  %v1545 = vpop.f32.mrb[0].mxu0
  %v1546 = vadd.f32 %v1366, %v1545
  %v1547 = vpop.f32.mrb[0].mxu0
  %v1548 = vadd.f32 %v1370, %v1547
  %1549 = vdwg.mxu0
  %v1550 = vpack.c.bf16 %v1476, %v1472
  %v1551 = vpack.c.bf16 %v1486, %v1482
  %v1552 = vpack.c.bf16 %v1496, %v1492
  %v1553 = vpack.c.bf16 %v1506, %v1502
  %v1554 = vpack.c.bf16 %v1516, %v1512
  %v1555 = vpack.c.bf16 %v1526, %v1522
  %v1556 = vpack.c.bf16 %v1536, %v1532
  %v1557 = vpack.c.bf16 %v1546, %v1542
  %1566 = vrot.lane.b32.xlu0 %v1550, 64
  %v1567 = vpop.permute.xlu0 %1566
  %1568 = vrot.lane.b32.xlu0 %v1551, 64
  %v1569 = vpop.permute.xlu0 %1568
  %1570 = vrot.lane.b32.xlu0 %v1552, 64
  %v1571 = vpop.permute.xlu0 %1570
  %1572 = vrot.lane.b32.xlu0 %v1553, 64
  %v1573 = vpop.permute.xlu0 %1572
  %1574 = vrot.lane.b32.xlu0 %v1554, 64
  %v1575 = vpop.permute.xlu0 %1574
  %1576 = vrot.lane.b32.xlu0 %v1555, 64
  %v1577 = vpop.permute.xlu0 %1576
  %1578 = vrot.lane.b32.xlu0 %v1556, 64
  %v1579 = vpop.permute.xlu0 %1578
  %1580 = vrot.lane.b32.xlu0 %v1557, 64
  %v1581 = vpop.permute.xlu0 %1580
  %vm1582 = vcmask 130048
  %v1584 = vsel %vm1582, %v1550, 0
  %v1587 = vsel %vm1582, %v1551, 0
  %v1590 = vsel %vm1582, %v1552, 0
  %v1593 = vsel %vm1582, %v1553, 0
  %v1596 = vsel %vm1582, %v1554, 0
  %v1599 = vsel %vm1582, %v1555, 0
  %v1602 = vsel %vm1582, %v1556, 0
  %v1605 = vsel %vm1582, %v1557, 0
  %v1608 = vsel %vm1582, %v1567, 0
  %v1611 = vsel %vm1582, %v1569, 0
  %v1614 = vsel %vm1582, %v1571, 0
  %v1617 = vsel %vm1582, %v1573, 0
  %v1620 = vsel %vm1582, %v1575, 0
  %v1623 = vsel %vm1582, %v1577, 0
  %v1626 = vsel %vm1582, %v1579, 0
  %v1629 = vsel %vm1582, %v1581, 0
  %1631 = vmatprep.subr.bf16.mxu0 0
  %1632 = vmatpush1.bf16.xpose.msra.mxu0 %v1608
  %1633 = vmatprep.subr.bf16.mxu0 0
  %1634 = vmatpush1.bf16.xpose.msra.mxu0 %v1611
  %1635 = vmatprep.subr.bf16.mxu0 0
  %1636 = vmatpush1.bf16.xpose.msra.mxu0 %v1614
  %1637 = vmatprep.subr.bf16.mxu0 0
  %1638 = vmatpush1.bf16.xpose.msra.mxu0 %v1617
  %1639 = vmatprep.subr.bf16.mxu0 0
  %1640 = vmatpush1.bf16.xpose.msra.mxu0 %v1620
  %1641 = vmatprep.subr.bf16.mxu0 0
  %1642 = vmatpush1.bf16.xpose.msra.mxu0 %v1623
  %1643 = vmatprep.subr.bf16.mxu0 0
  %1644 = vmatpush1.bf16.xpose.msra.mxu0 %v1626
  %1645 = vmatprep.subr.bf16.mxu0 0
  %1646 = vmatpush1.bf16.xpose.msra.mxu0 %v1629
  %1647 = vmatprep.subr.bf16.mxu0 0
  %1648 = vmatpush1.bf16.xpose.msra.mxu0 0
  %1649 = vmatprep.subr.bf16.mxu0 0
  %1650 = vmatpush1.bf16.xpose.msra.mxu0 0
  %1651 = vmatprep.subr.bf16.mxu0 0
  %1652 = vmatpush1.bf16.xpose.msra.mxu0 0
  %1653 = vmatprep.subr.bf16.mxu0 0
  %1654 = vmatpush1.bf16.xpose.msra.mxu0 0
  %1655 = vmatprep.subr.bf16.mxu0 0
  %1656 = vmatpush1.bf16.xpose.msra.mxu0 0
  %1657 = vmatprep.subr.bf16.mxu0 0
  %1658 = vmatpush1.bf16.xpose.msra.mxu0 0
  %1659 = vmatprep.subr.bf16.mxu0 0
  %1660 = vmatpush1.bf16.xpose.msra.mxu0 0
  %1661 = vmatprep.subr.bf16.mxu0 0
  %1662 = vmatpush1.bf16.xpose.msra.mxu0 0
  %1663 = vmatprep.mubr.bf16.mxu0 0
  %1664 = vmatmul.mubr.bf16.gmra.mrb[0].mxu0 %v1584
  %v1665 = vpop.f32.mrb[0].mxu0
  %v1666 = vadd.f32 0.0, %v1665
  %v1667 = vpop.f32.mrb[0].mxu0
  %v1668 = vpop.f32.mrb[0].mxu0
  %v1669 = vadd.f32 0.0, %v1668
  %v1670 = vpop.f32.mrb[0].mxu0
  %1671 = vmatprep.mubr.bf16.mxu0 0
  %1672 = vmatmul.mubr.bf16.gmra.mrb[0].mxu0 %v1587
  %v1673 = vpop.f32.mrb[0].mxu0
  %v1674 = vadd.f32 0.0, %v1673
  %v1675 = vpop.f32.mrb[0].mxu0
  %v1676 = vpop.f32.mrb[0].mxu0
  %v1677 = vadd.f32 0.0, %v1676
  %v1678 = vpop.f32.mrb[0].mxu0
  %1679 = vmatprep.mubr.bf16.mxu0 0
  %1680 = vmatmul.mubr.bf16.gmra.mrb[0].mxu0 %v1590
  %v1681 = vpop.f32.mrb[0].mxu0
  %v1682 = vadd.f32 0.0, %v1681
  %v1683 = vpop.f32.mrb[0].mxu0
  %v1684 = vpop.f32.mrb[0].mxu0
  %v1685 = vadd.f32 0.0, %v1684
  %v1686 = vpop.f32.mrb[0].mxu0
  %1687 = vmatprep.mubr.bf16.mxu0 0
  %1688 = vmatmul.mubr.bf16.gmra.mrb[0].mxu0 %v1593
  %v1689 = vpop.f32.mrb[0].mxu0
  %v1690 = vadd.f32 0.0, %v1689
  %v1691 = vpop.f32.mrb[0].mxu0
  %v1692 = vpop.f32.mrb[0].mxu0
  %v1693 = vadd.f32 0.0, %v1692
  %v1694 = vpop.f32.mrb[0].mxu0
  %1695 = vmatprep.mubr.bf16.mxu0 0
  %1696 = vmatmul.mubr.bf16.gmra.mrb[0].mxu0 %v1596
  %v1697 = vpop.f32.mrb[0].mxu0
  %v1698 = vadd.f32 0.0, %v1697
  %v1699 = vpop.f32.mrb[0].mxu0
  %v1700 = vpop.f32.mrb[0].mxu0
  %v1701 = vadd.f32 0.0, %v1700
  %v1702 = vpop.f32.mrb[0].mxu0
  %1703 = vmatprep.mubr.bf16.mxu0 0
  %1704 = vmatmul.mubr.bf16.gmra.mrb[0].mxu0 %v1599
  %v1705 = vpop.f32.mrb[0].mxu0
  %v1706 = vadd.f32 0.0, %v1705
  %v1707 = vpop.f32.mrb[0].mxu0
  %v1708 = vpop.f32.mrb[0].mxu0
  %v1709 = vadd.f32 0.0, %v1708
  %v1710 = vpop.f32.mrb[0].mxu0
  %1711 = vmatprep.mubr.bf16.mxu0 0
  %1712 = vmatmul.mubr.bf16.gmra.mrb[0].mxu0 %v1602
  %v1713 = vpop.f32.mrb[0].mxu0
  %v1714 = vadd.f32 0.0, %v1713
  %v1715 = vpop.f32.mrb[0].mxu0
  %v1716 = vpop.f32.mrb[0].mxu0
  %v1717 = vadd.f32 0.0, %v1716
  %v1718 = vpop.f32.mrb[0].mxu0
  %1719 = vmatprep.mubr.bf16.mxu0 0
  %1720 = vmatmul.mubr.bf16.gmra.mrb[0].mxu0 %v1605
  %v1721 = vpop.f32.mrb[0].mxu0
  %v1722 = vadd.f32 0.0, %v1721
  %v1723 = vpop.f32.mrb[0].mxu0
  %v1724 = vpop.f32.mrb[0].mxu0
  %v1725 = vadd.f32 0.0, %v1724
  %v1726 = vpop.f32.mrb[0].mxu0
  %1727 = vdwg.mxu0
  %v1728 = vsel %vm1078, %v1666, -1e+30
  %v1729 = vsel %vm1079, %v1669, -1e+30
  %v1730 = vsel %vm1080, %v1674, -1e+30
  %v1731 = vsel %vm1081, %v1677, -1e+30
  %v1732 = vsel %vm1082, %v1682, -1e+30
  %v1733 = vsel %vm1083, %v1685, -1e+30
  %v1734 = vsel %vm1084, %v1690, -1e+30
  %v1735 = vsel %vm1085, %v1693, -1e+30
  %v1736 = vsel %vm1086, %v1698, -1e+30
  %v1737 = vsel %vm1087, %v1701, -1e+30
  %v1738 = vsel %vm1088, %v1706, -1e+30
  %v1739 = vsel %vm1089, %v1709, -1e+30
  %v1740 = vsel %vm1090, %v1714, -1e+30
  %v1741 = vsel %vm1091, %v1717, -1e+30
  %v1742 = vsel %vm1092, %v1722, -1e+30
  %v1743 = vsel %vm1093, %v1725, -1e+30
  %1744 = vmax.xlane.f32.xlu0 %v1728
  %v1745 = vpop.xlane.xlu0 %1744
  %1746 = vmax.xlane.f32.xlu0 %v1729
  %v1747 = vpop.xlane.xlu0 %1746
  %1748 = vmax.xlane.f32.xlu0 %v1730
  %v1749 = vpop.xlane.xlu0 %1748
  %1750 = vmax.xlane.f32.xlu0 %v1731
  %v1751 = vpop.xlane.xlu0 %1750
  %1752 = vmax.xlane.f32.xlu0 %v1732
  %v1753 = vpop.xlane.xlu0 %1752
  %1754 = vmax.xlane.f32.xlu0 %v1733
  %v1755 = vpop.xlane.xlu0 %1754
  %1756 = vmax.xlane.f32.xlu0 %v1734
  %v1757 = vpop.xlane.xlu0 %1756
  %1758 = vmax.xlane.f32.xlu0 %v1735
  %v1759 = vpop.xlane.xlu0 %1758
  %1760 = vmax.xlane.f32.xlu0 %v1736
  %v1761 = vpop.xlane.xlu0 %1760
  %1762 = vmax.xlane.f32.xlu0 %v1737
  %v1763 = vpop.xlane.xlu0 %1762
  %1764 = vmax.xlane.f32.xlu0 %v1738
  %v1765 = vpop.xlane.xlu0 %1764
  %1766 = vmax.xlane.f32.xlu0 %v1739
  %v1767 = vpop.xlane.xlu0 %1766
  %1768 = vmax.xlane.f32.xlu0 %v1740
  %v1769 = vpop.xlane.xlu0 %1768
  %1770 = vmax.xlane.f32.xlu0 %v1741
  %v1771 = vpop.xlane.xlu0 %1770
  %1772 = vmax.xlane.f32.xlu0 %v1742
  %v1773 = vpop.xlane.xlu0 %1772
  %1774 = vmax.xlane.f32.xlu0 %v1743
  %v1775 = vpop.xlane.xlu0 %1774
  %v1776 = vsub.f32 %v1728, %v1745
  %v1777 = vsub.f32 %v1729, %v1747
  %v1778 = vsub.f32 %v1730, %v1749
  %v1779 = vsub.f32 %v1731, %v1751
  %v1780 = vsub.f32 %v1732, %v1753
  %v1781 = vsub.f32 %v1733, %v1755
  %v1782 = vsub.f32 %v1734, %v1757
  %v1783 = vsub.f32 %v1735, %v1759
  %v1784 = vsub.f32 %v1736, %v1761
  %v1785 = vsub.f32 %v1737, %v1763
  %v1786 = vsub.f32 %v1738, %v1765
  %v1787 = vsub.f32 %v1739, %v1767
  %v1788 = vsub.f32 %v1740, %v1769
  %v1789 = vsub.f32 %v1741, %v1771
  %v1790 = vsub.f32 %v1742, %v1773
  %v1791 = vsub.f32 %v1743, %v1775
  %v1792 = vmul.f32 %v1776, 1.442695
  %v1793 = vpow.pop %v1792
  %v1794 = vmul.f32 %v1777, 1.442695
  %v1795 = vpow.pop %v1794
  %v1796 = vmul.f32 %v1778, 1.442695
  %v1797 = vpow.pop %v1796
  %v1798 = vmul.f32 %v1779, 1.442695
  %v1799 = vpow.pop %v1798
  %v1800 = vmul.f32 %v1780, 1.442695
  %v1801 = vpow.pop %v1800
  %v1802 = vmul.f32 %v1781, 1.442695
  %v1803 = vpow.pop %v1802
  %v1804 = vmul.f32 %v1782, 1.442695
  %v1805 = vpow.pop %v1804
  %v1806 = vmul.f32 %v1783, 1.442695
  %v1807 = vpow.pop %v1806
  %v1808 = vmul.f32 %v1784, 1.442695
  %v1809 = vpow.pop %v1808
  %v1810 = vmul.f32 %v1785, 1.442695
  %v1811 = vpow.pop %v1810
  %v1812 = vmul.f32 %v1786, 1.442695
  %v1813 = vpow.pop %v1812
  %v1814 = vmul.f32 %v1787, 1.442695
  %v1815 = vpow.pop %v1814
  %v1816 = vmul.f32 %v1788, 1.442695
  %v1817 = vpow.pop %v1816
  %v1818 = vmul.f32 %v1789, 1.442695
  %v1819 = vpow.pop %v1818
  %v1820 = vmul.f32 %v1790, 1.442695
  %v1821 = vpow.pop %v1820
  %v1822 = vmul.f32 %v1791, 1.442695
  %v1823 = vpow.pop %v1822
  %1824 = vadd.xlane.f32.xlu0 %v1793
  %v1825 = vpop.xlane.xlu0 %1824
  %1826 = vadd.xlane.f32.xlu0 %v1795
  %v1827 = vpop.xlane.xlu0 %1826
  %1828 = vadd.xlane.f32.xlu0 %v1797
  %v1829 = vpop.xlane.xlu0 %1828
  %1830 = vadd.xlane.f32.xlu0 %v1799
  %v1831 = vpop.xlane.xlu0 %1830
  %1832 = vadd.xlane.f32.xlu0 %v1801
  %v1833 = vpop.xlane.xlu0 %1832
  %1834 = vadd.xlane.f32.xlu0 %v1803
  %v1835 = vpop.xlane.xlu0 %1834
  %1836 = vadd.xlane.f32.xlu0 %v1805
  %v1837 = vpop.xlane.xlu0 %1836
  %1838 = vadd.xlane.f32.xlu0 %v1807
  %v1839 = vpop.xlane.xlu0 %1838
  %1840 = vadd.xlane.f32.xlu0 %v1809
  %v1841 = vpop.xlane.xlu0 %1840
  %1842 = vadd.xlane.f32.xlu0 %v1811
  %v1843 = vpop.xlane.xlu0 %1842
  %1844 = vadd.xlane.f32.xlu0 %v1813
  %v1845 = vpop.xlane.xlu0 %1844
  %1846 = vadd.xlane.f32.xlu0 %v1815
  %v1847 = vpop.xlane.xlu0 %1846
  %1848 = vadd.xlane.f32.xlu0 %v1817
  %v1849 = vpop.xlane.xlu0 %1848
  %1850 = vadd.xlane.f32.xlu0 %v1819
  %v1851 = vpop.xlane.xlu0 %1850
  %1852 = vadd.xlane.f32.xlu0 %v1821
  %v1853 = vpop.xlane.xlu0 %1852
  %1854 = vadd.xlane.f32.xlu0 %v1823
  %v1855 = vpop.xlane.xlu0 %1854
  %v1856 = vrcp.pop %v1825
  %v1857 = vrcp.pop %v1827
  %v1858 = vrcp.pop %v1829
  %v1859 = vrcp.pop %v1831
  %v1860 = vrcp.pop %v1833
  %v1861 = vrcp.pop %v1835
  %v1862 = vrcp.pop %v1837
  %v1863 = vrcp.pop %v1839
  %v1864 = vrcp.pop %v1841
  %v1865 = vrcp.pop %v1843
  %v1866 = vrcp.pop %v1845
  %v1867 = vrcp.pop %v1847
  %v1868 = vrcp.pop %v1849
  %v1869 = vrcp.pop %v1851
  %v1870 = vrcp.pop %v1853
  %v1871 = vrcp.pop %v1855
  %v1872 = vmul.f32 %v1793, %v1856
  %v1873 = vmul.f32 %v1795, %v1857
  %v1874 = vmul.f32 %v1797, %v1858
  %v1875 = vmul.f32 %v1799, %v1859
  %v1876 = vmul.f32 %v1801, %v1860
  %v1877 = vmul.f32 %v1803, %v1861
  %v1878 = vmul.f32 %v1805, %v1862
  %v1879 = vmul.f32 %v1807, %v1863
  %v1880 = vmul.f32 %v1809, %v1864
  %v1881 = vmul.f32 %v1811, %v1865
  %v1882 = vmul.f32 %v1813, %v1866
  %v1883 = vmul.f32 %v1815, %v1867
  %v1884 = vmul.f32 %v1817, %v1868
  %v1885 = vmul.f32 %v1819, %v1869
  %v1886 = vmul.f32 %v1821, %v1870
  %v1887 = vmul.f32 %v1823, %v1871
  %v1888 = vpack.c.bf16 %v1873, %v1872
  %v1889 = vpack.c.bf16 %v1875, %v1874
  %v1890 = vpack.c.bf16 %v1877, %v1876
  %v1891 = vpack.c.bf16 %v1879, %v1878
  %v1892 = vpack.c.bf16 %v1881, %v1880
  %v1893 = vpack.c.bf16 %v1883, %v1882
  %v1894 = vpack.c.bf16 %v1885, %v1884
  %v1895 = vpack.c.bf16 %v1887, %v1886
  %v1896 = vpack.c.bf16 %v1478, %v1474
  %v1897 = vpack.c.bf16 %v1488, %v1484
  %v1898 = vpack.c.bf16 %v1498, %v1494
  %v1899 = vpack.c.bf16 %v1508, %v1504
  %v1900 = vpack.c.bf16 %v1518, %v1514
  %v1901 = vpack.c.bf16 %v1528, %v1524
  %v1902 = vpack.c.bf16 %v1538, %v1534
  %v1903 = vpack.c.bf16 %v1548, %v1544
  %1904 = vmatprep.subr.bf16.mxu0 0
  %1905 = vmatpush1.bf16.msra.mxu0 %v1896
  %1906 = vmatprep.subr.bf16.mxu0 0
  %1907 = vmatpush1.bf16.msra.mxu0 %v1897
  %1908 = vmatprep.subr.bf16.mxu0 0
  %1909 = vmatpush1.bf16.msra.mxu0 %v1898
  %1910 = vmatprep.subr.bf16.mxu0 0
  %1911 = vmatpush1.bf16.msra.mxu0 %v1899
  %1912 = vmatprep.subr.bf16.mxu0 0
  %1913 = vmatpush1.bf16.msra.mxu0 %v1900
  %1914 = vmatprep.subr.bf16.mxu0 0
  %1915 = vmatpush1.bf16.msra.mxu0 %v1901
  %1916 = vmatprep.subr.bf16.mxu0 0
  %1917 = vmatpush1.bf16.msra.mxu0 %v1902
  %1918 = vmatprep.subr.bf16.mxu0 0
  %1919 = vmatpush1.bf16.msra.mxu0 %v1903
  %1920 = vmatprep.subr.bf16.mxu0 0
  %1921 = vmatpush1.bf16.msra.mxu0 0
  %1922 = vmatprep.subr.bf16.mxu0 0
  %1923 = vmatpush1.bf16.msra.mxu0 0
  %1924 = vmatprep.subr.bf16.mxu0 0
  %1925 = vmatpush1.bf16.msra.mxu0 0
  %1926 = vmatprep.subr.bf16.mxu0 0
  %1927 = vmatpush1.bf16.msra.mxu0 0
  %1928 = vmatprep.subr.bf16.mxu0 0
  %1929 = vmatpush1.bf16.msra.mxu0 0
  %1930 = vmatprep.subr.bf16.mxu0 0
  %1931 = vmatpush1.bf16.msra.mxu0 0
  %1932 = vmatprep.subr.bf16.mxu0 0
  %1933 = vmatpush1.bf16.msra.mxu0 0
  %1934 = vmatprep.subr.bf16.mxu0 0
  %1935 = vmatpush1.bf16.msra.mxu0 0
  %1936 = vmatprep.mubr.bf16.mxu0 0
  %1937 = vmatmul.mubr.bf16.gmra.mrb[0].mxu0 %v1888
  %v1938 = vpop.f32.mrb[0].mxu0
  %v1939 = vadd.f32 0.0, %v1938
  %v1940 = vpop.f32.mrb[0].mxu0
  %v1941 = vpop.f32.mrb[0].mxu0
  %v1942 = vadd.f32 0.0, %v1941
  %v1943 = vpop.f32.mrb[0].mxu0
  %1944 = vmatprep.mubr.bf16.mxu0 0
  %1945 = vmatmul.mubr.bf16.gmra.mrb[0].mxu0 %v1889
  %v1946 = vpop.f32.mrb[0].mxu0
  %v1947 = vadd.f32 0.0, %v1946
  %v1948 = vpop.f32.mrb[0].mxu0
  %v1949 = vpop.f32.mrb[0].mxu0
  %v1950 = vadd.f32 0.0, %v1949
  %v1951 = vpop.f32.mrb[0].mxu0
  %1952 = vmatprep.mubr.bf16.mxu0 0
  %1953 = vmatmul.mubr.bf16.gmra.mrb[0].mxu0 %v1890
  %v1954 = vpop.f32.mrb[0].mxu0
  %v1955 = vadd.f32 0.0, %v1954
  %v1956 = vpop.f32.mrb[0].mxu0
  %v1957 = vpop.f32.mrb[0].mxu0
  %v1958 = vadd.f32 0.0, %v1957
  %v1959 = vpop.f32.mrb[0].mxu0
  %1960 = vmatprep.mubr.bf16.mxu0 0
  %1961 = vmatmul.mubr.bf16.gmra.mrb[0].mxu0 %v1891
  %v1962 = vpop.f32.mrb[0].mxu0
  %v1963 = vadd.f32 0.0, %v1962
  %v1964 = vpop.f32.mrb[0].mxu0
  %v1965 = vpop.f32.mrb[0].mxu0
  %v1966 = vadd.f32 0.0, %v1965
  %v1967 = vpop.f32.mrb[0].mxu0
  %1968 = vmatprep.mubr.bf16.mxu0 0
  %1969 = vmatmul.mubr.bf16.gmra.mrb[0].mxu0 %v1892
  %v1970 = vpop.f32.mrb[0].mxu0
  %v1971 = vadd.f32 0.0, %v1970
  %v1972 = vpop.f32.mrb[0].mxu0
  %v1973 = vpop.f32.mrb[0].mxu0
  %v1974 = vadd.f32 0.0, %v1973
  %v1975 = vpop.f32.mrb[0].mxu0
  %1976 = vmatprep.mubr.bf16.mxu0 0
  %1977 = vmatmul.mubr.bf16.gmra.mrb[0].mxu0 %v1893
  %v1978 = vpop.f32.mrb[0].mxu0
  %v1979 = vadd.f32 0.0, %v1978
  %v1980 = vpop.f32.mrb[0].mxu0
  %v1981 = vpop.f32.mrb[0].mxu0
  %v1982 = vadd.f32 0.0, %v1981
  %v1983 = vpop.f32.mrb[0].mxu0
  %1984 = vmatprep.mubr.bf16.mxu0 0
  %1985 = vmatmul.mubr.bf16.gmra.mrb[0].mxu0 %v1894
  %v1986 = vpop.f32.mrb[0].mxu0
  %v1987 = vadd.f32 0.0, %v1986
  %v1988 = vpop.f32.mrb[0].mxu0
  %v1989 = vpop.f32.mrb[0].mxu0
  %v1990 = vadd.f32 0.0, %v1989
  %v1991 = vpop.f32.mrb[0].mxu0
  %1992 = vmatprep.mubr.bf16.mxu0 0
  %1993 = vmatmul.mubr.bf16.gmra.mrb[0].mxu0 %v1895
  %v1994 = vpop.f32.mrb[0].mxu0
  %v1995 = vadd.f32 0.0, %v1994
  %v1996 = vpop.f32.mrb[0].mxu0
  %v1997 = vpop.f32.mrb[0].mxu0
  %v1998 = vadd.f32 0.0, %v1997
  %v1999 = vpop.f32.mrb[0].mxu0
  %2000 = vdwg.mxu0
  %2001 = vrot.lane.b32.xlu0 %v1550, 112
  %v2002 = vpop.permute.xlu0 %2001
  %2003 = vrot.lane.b32.xlu0 %v1551, 112
  %v2004 = vpop.permute.xlu0 %2003
  %2005 = vrot.lane.b32.xlu0 %v1552, 112
  %v2006 = vpop.permute.xlu0 %2005
  %2007 = vrot.lane.b32.xlu0 %v1553, 112
  %v2008 = vpop.permute.xlu0 %2007
  %2009 = vrot.lane.b32.xlu0 %v1554, 112
  %v2010 = vpop.permute.xlu0 %2009
  %2011 = vrot.lane.b32.xlu0 %v1555, 112
  %v2012 = vpop.permute.xlu0 %2011
  %2013 = vrot.lane.b32.xlu0 %v1556, 112
  %v2014 = vpop.permute.xlu0 %2013
  %2015 = vrot.lane.b32.xlu0 %v1557, 112
  %v2016 = vpop.permute.xlu0 %2015
  %2017 = vrot.lane.b32.xlu0 %v1550, 48
  %v2018 = vpop.permute.xlu0 %2017
  %2019 = vrot.lane.b32.xlu0 %v1551, 48
  %v2020 = vpop.permute.xlu0 %2019
  %2021 = vrot.lane.b32.xlu0 %v1552, 48
  %v2022 = vpop.permute.xlu0 %2021
  %2023 = vrot.lane.b32.xlu0 %v1553, 48
  %v2024 = vpop.permute.xlu0 %2023
  %2025 = vrot.lane.b32.xlu0 %v1554, 48
  %v2026 = vpop.permute.xlu0 %2025
  %2027 = vrot.lane.b32.xlu0 %v1555, 48
  %v2028 = vpop.permute.xlu0 %2027
  %2029 = vrot.lane.b32.xlu0 %v1556, 48
  %v2030 = vpop.permute.xlu0 %2029
  %2031 = vrot.lane.b32.xlu0 %v1557, 48
  %v2032 = vpop.permute.xlu0 %2031
  %v2034 = vsel %vm1582, %v2002, 0
  %v2037 = vsel %vm1582, %v2004, 0
  %v2040 = vsel %vm1582, %v2006, 0
  %v2043 = vsel %vm1582, %v2008, 0
  %v2046 = vsel %vm1582, %v2010, 0
  %v2049 = vsel %vm1582, %v2012, 0
  %v2052 = vsel %vm1582, %v2014, 0
  %v2055 = vsel %vm1582, %v2016, 0
  %v2058 = vsel %vm1582, %v2018, 0
  %v2061 = vsel %vm1582, %v2020, 0
  %v2064 = vsel %vm1582, %v2022, 0
  %v2067 = vsel %vm1582, %v2024, 0
  %v2070 = vsel %vm1582, %v2026, 0
  %v2073 = vsel %vm1582, %v2028, 0
  %v2076 = vsel %vm1582, %v2030, 0
  %v2079 = vsel %vm1582, %v2032, 0
  %2081 = vmatprep.subr.bf16.mxu0 0
  %2082 = vmatpush1.bf16.xpose.msra.mxu0 %v2058
  %2083 = vmatprep.subr.bf16.mxu0 0
  %2084 = vmatpush1.bf16.xpose.msra.mxu0 %v2061
  %2085 = vmatprep.subr.bf16.mxu0 0
  %2086 = vmatpush1.bf16.xpose.msra.mxu0 %v2064
  %2087 = vmatprep.subr.bf16.mxu0 0
  %2088 = vmatpush1.bf16.xpose.msra.mxu0 %v2067
  %2089 = vmatprep.subr.bf16.mxu0 0
  %2090 = vmatpush1.bf16.xpose.msra.mxu0 %v2070
  %2091 = vmatprep.subr.bf16.mxu0 0
  %2092 = vmatpush1.bf16.xpose.msra.mxu0 %v2073
  %2093 = vmatprep.subr.bf16.mxu0 0
  %2094 = vmatpush1.bf16.xpose.msra.mxu0 %v2076
  %2095 = vmatprep.subr.bf16.mxu0 0
  %2096 = vmatpush1.bf16.xpose.msra.mxu0 %v2079
  %2097 = vmatprep.subr.bf16.mxu0 0
  %2098 = vmatpush1.bf16.xpose.msra.mxu0 0
  %2099 = vmatprep.subr.bf16.mxu0 0
  %2100 = vmatpush1.bf16.xpose.msra.mxu0 0
  %2101 = vmatprep.subr.bf16.mxu0 0
  %2102 = vmatpush1.bf16.xpose.msra.mxu0 0
  %2103 = vmatprep.subr.bf16.mxu0 0
  %2104 = vmatpush1.bf16.xpose.msra.mxu0 0
  %2105 = vmatprep.subr.bf16.mxu0 0
  %2106 = vmatpush1.bf16.xpose.msra.mxu0 0
  %2107 = vmatprep.subr.bf16.mxu0 0
  %2108 = vmatpush1.bf16.xpose.msra.mxu0 0
  %2109 = vmatprep.subr.bf16.mxu0 0
  %2110 = vmatpush1.bf16.xpose.msra.mxu0 0
  %2111 = vmatprep.subr.bf16.mxu0 0
  %2112 = vmatpush1.bf16.xpose.msra.mxu0 0
  %2113 = vmatprep.mubr.bf16.mxu0 0
  %2114 = vmatmul.mubr.bf16.gmra.mrb[0].mxu0 %v2034
  %v2115 = vpop.f32.mrb[0].mxu0
  %v2116 = vadd.f32 0.0, %v2115
  %v2117 = vpop.f32.mrb[0].mxu0
  %v2118 = vpop.f32.mrb[0].mxu0
  %v2119 = vadd.f32 0.0, %v2118
  %v2120 = vpop.f32.mrb[0].mxu0
  %2121 = vmatprep.mubr.bf16.mxu0 0
  %2122 = vmatmul.mubr.bf16.gmra.mrb[0].mxu0 %v2037
  %v2123 = vpop.f32.mrb[0].mxu0
  %v2124 = vadd.f32 0.0, %v2123
  %v2125 = vpop.f32.mrb[0].mxu0
  %v2126 = vpop.f32.mrb[0].mxu0
  %v2127 = vadd.f32 0.0, %v2126
  %v2128 = vpop.f32.mrb[0].mxu0
  %2129 = vmatprep.mubr.bf16.mxu0 0
  %2130 = vmatmul.mubr.bf16.gmra.mrb[0].mxu0 %v2040
  %v2131 = vpop.f32.mrb[0].mxu0
  %v2132 = vadd.f32 0.0, %v2131
  %v2133 = vpop.f32.mrb[0].mxu0
  %v2134 = vpop.f32.mrb[0].mxu0
  %v2135 = vadd.f32 0.0, %v2134
  %v2136 = vpop.f32.mrb[0].mxu0
  %2137 = vmatprep.mubr.bf16.mxu0 0
  %2138 = vmatmul.mubr.bf16.gmra.mrb[0].mxu0 %v2043
  %v2139 = vpop.f32.mrb[0].mxu0
  %v2140 = vadd.f32 0.0, %v2139
  %v2141 = vpop.f32.mrb[0].mxu0
  %v2142 = vpop.f32.mrb[0].mxu0
  %v2143 = vadd.f32 0.0, %v2142
  %v2144 = vpop.f32.mrb[0].mxu0
  %2145 = vmatprep.mubr.bf16.mxu0 0
  %2146 = vmatmul.mubr.bf16.gmra.mrb[0].mxu0 %v2046
  %v2147 = vpop.f32.mrb[0].mxu0
  %v2148 = vadd.f32 0.0, %v2147
  %v2149 = vpop.f32.mrb[0].mxu0
  %v2150 = vpop.f32.mrb[0].mxu0
  %v2151 = vadd.f32 0.0, %v2150
  %v2152 = vpop.f32.mrb[0].mxu0
  %2153 = vmatprep.mubr.bf16.mxu0 0
  %2154 = vmatmul.mubr.bf16.gmra.mrb[0].mxu0 %v2049
  %v2155 = vpop.f32.mrb[0].mxu0
  %v2156 = vadd.f32 0.0, %v2155
  %v2157 = vpop.f32.mrb[0].mxu0
  %v2158 = vpop.f32.mrb[0].mxu0
  %v2159 = vadd.f32 0.0, %v2158
  %v2160 = vpop.f32.mrb[0].mxu0
  %2161 = vmatprep.mubr.bf16.mxu0 0
  %2162 = vmatmul.mubr.bf16.gmra.mrb[0].mxu0 %v2052
  %v2163 = vpop.f32.mrb[0].mxu0
  %v2164 = vadd.f32 0.0, %v2163
  %v2165 = vpop.f32.mrb[0].mxu0
  %v2166 = vpop.f32.mrb[0].mxu0
  %v2167 = vadd.f32 0.0, %v2166
  %v2168 = vpop.f32.mrb[0].mxu0
  %2169 = vmatprep.mubr.bf16.mxu0 0
  %2170 = vmatmul.mubr.bf16.gmra.mrb[0].mxu0 %v2055
  %v2171 = vpop.f32.mrb[0].mxu0
  %v2172 = vadd.f32 0.0, %v2171
  %v2173 = vpop.f32.mrb[0].mxu0
  %v2174 = vpop.f32.mrb[0].mxu0
  %v2175 = vadd.f32 0.0, %v2174
  %v2176 = vpop.f32.mrb[0].mxu0
  %2177 = vdwg.mxu0
  %v2178 = vsel %vm1078, %v2116, -1e+30
  %v2179 = vsel %vm1079, %v2119, -1e+30
  %v2180 = vsel %vm1080, %v2124, -1e+30
  %v2181 = vsel %vm1081, %v2127, -1e+30
  %v2182 = vsel %vm1082, %v2132, -1e+30
  %v2183 = vsel %vm1083, %v2135, -1e+30
  %v2184 = vsel %vm1084, %v2140, -1e+30
  %v2185 = vsel %vm1085, %v2143, -1e+30
  %v2186 = vsel %vm1086, %v2148, -1e+30
  %v2187 = vsel %vm1087, %v2151, -1e+30
  %v2188 = vsel %vm1088, %v2156, -1e+30
  %v2189 = vsel %vm1089, %v2159, -1e+30
  %v2190 = vsel %vm1090, %v2164, -1e+30
  %v2191 = vsel %vm1091, %v2167, -1e+30
  %v2192 = vsel %vm1092, %v2172, -1e+30
  %v2193 = vsel %vm1093, %v2175, -1e+30
  %2194 = vmax.xlane.f32.xlu0 %v2178
  %v2195 = vpop.xlane.xlu0 %2194
  %2196 = vmax.xlane.f32.xlu0 %v2179
  %v2197 = vpop.xlane.xlu0 %2196
  %2198 = vmax.xlane.f32.xlu0 %v2180
  %v2199 = vpop.xlane.xlu0 %2198
  %2200 = vmax.xlane.f32.xlu0 %v2181
  %v2201 = vpop.xlane.xlu0 %2200
  %2202 = vmax.xlane.f32.xlu0 %v2182
  %v2203 = vpop.xlane.xlu0 %2202
  %2204 = vmax.xlane.f32.xlu0 %v2183
  %v2205 = vpop.xlane.xlu0 %2204
  %2206 = vmax.xlane.f32.xlu0 %v2184
  %v2207 = vpop.xlane.xlu0 %2206
  %2208 = vmax.xlane.f32.xlu0 %v2185
  %v2209 = vpop.xlane.xlu0 %2208
  %2210 = vmax.xlane.f32.xlu0 %v2186
  %v2211 = vpop.xlane.xlu0 %2210
  %2212 = vmax.xlane.f32.xlu0 %v2187
  %v2213 = vpop.xlane.xlu0 %2212
  %2214 = vmax.xlane.f32.xlu0 %v2188
  %v2215 = vpop.xlane.xlu0 %2214
  %2216 = vmax.xlane.f32.xlu0 %v2189
  %v2217 = vpop.xlane.xlu0 %2216
  %2218 = vmax.xlane.f32.xlu0 %v2190
  %v2219 = vpop.xlane.xlu0 %2218
  %2220 = vmax.xlane.f32.xlu0 %v2191
  %v2221 = vpop.xlane.xlu0 %2220
  %2222 = vmax.xlane.f32.xlu0 %v2192
  %v2223 = vpop.xlane.xlu0 %2222
  %2224 = vmax.xlane.f32.xlu0 %v2193
  %v2225 = vpop.xlane.xlu0 %2224
  %v2226 = vsub.f32 %v2178, %v2195
  %v2227 = vsub.f32 %v2179, %v2197
  %v2228 = vsub.f32 %v2180, %v2199
  %v2229 = vsub.f32 %v2181, %v2201
  %v2230 = vsub.f32 %v2182, %v2203
  %v2231 = vsub.f32 %v2183, %v2205
  %v2232 = vsub.f32 %v2184, %v2207
  %v2233 = vsub.f32 %v2185, %v2209
  %v2234 = vsub.f32 %v2186, %v2211
  %v2235 = vsub.f32 %v2187, %v2213
  %v2236 = vsub.f32 %v2188, %v2215
  %v2237 = vsub.f32 %v2189, %v2217
  %v2238 = vsub.f32 %v2190, %v2219
  %v2239 = vsub.f32 %v2191, %v2221
  %v2240 = vsub.f32 %v2192, %v2223
  %v2241 = vsub.f32 %v2193, %v2225
  %v2242 = vmul.f32 %v2226, 1.442695
  %v2243 = vpow.pop %v2242
  %v2244 = vmul.f32 %v2227, 1.442695
  %v2245 = vpow.pop %v2244
  %v2246 = vmul.f32 %v2228, 1.442695
  %v2247 = vpow.pop %v2246
  %v2248 = vmul.f32 %v2229, 1.442695
  %v2249 = vpow.pop %v2248
  %v2250 = vmul.f32 %v2230, 1.442695
  %v2251 = vpow.pop %v2250
  %v2252 = vmul.f32 %v2231, 1.442695
  %v2253 = vpow.pop %v2252
  %v2254 = vmul.f32 %v2232, 1.442695
  %v2255 = vpow.pop %v2254
  %v2256 = vmul.f32 %v2233, 1.442695
  %v2257 = vpow.pop %v2256
  %v2258 = vmul.f32 %v2234, 1.442695
  %v2259 = vpow.pop %v2258
  %v2260 = vmul.f32 %v2235, 1.442695
  %v2261 = vpow.pop %v2260
  %v2262 = vmul.f32 %v2236, 1.442695
  %v2263 = vpow.pop %v2262
  %v2264 = vmul.f32 %v2237, 1.442695
  %v2265 = vpow.pop %v2264
  %v2266 = vmul.f32 %v2238, 1.442695
  %v2267 = vpow.pop %v2266
  %v2268 = vmul.f32 %v2239, 1.442695
  %v2269 = vpow.pop %v2268
  %v2270 = vmul.f32 %v2240, 1.442695
  %v2271 = vpow.pop %v2270
  %v2272 = vmul.f32 %v2241, 1.442695
  %v2273 = vpow.pop %v2272
  %2274 = vadd.xlane.f32.xlu0 %v2243
  %v2275 = vpop.xlane.xlu0 %2274
  %2276 = vadd.xlane.f32.xlu0 %v2245
  %v2277 = vpop.xlane.xlu0 %2276
  %2278 = vadd.xlane.f32.xlu0 %v2247
  %v2279 = vpop.xlane.xlu0 %2278
  %2280 = vadd.xlane.f32.xlu0 %v2249
  %v2281 = vpop.xlane.xlu0 %2280
  %2282 = vadd.xlane.f32.xlu0 %v2251
  %v2283 = vpop.xlane.xlu0 %2282
  %2284 = vadd.xlane.f32.xlu0 %v2253
  %v2285 = vpop.xlane.xlu0 %2284
  %2286 = vadd.xlane.f32.xlu0 %v2255
  %v2287 = vpop.xlane.xlu0 %2286
  %2288 = vadd.xlane.f32.xlu0 %v2257
  %v2289 = vpop.xlane.xlu0 %2288
  %2290 = vadd.xlane.f32.xlu0 %v2259
  %v2291 = vpop.xlane.xlu0 %2290
  %2292 = vadd.xlane.f32.xlu0 %v2261
  %v2293 = vpop.xlane.xlu0 %2292
  %2294 = vadd.xlane.f32.xlu0 %v2263
  %v2295 = vpop.xlane.xlu0 %2294
  %2296 = vadd.xlane.f32.xlu0 %v2265
  %v2297 = vpop.xlane.xlu0 %2296
  %2298 = vadd.xlane.f32.xlu0 %v2267
  %v2299 = vpop.xlane.xlu0 %2298
  %2300 = vadd.xlane.f32.xlu0 %v2269
  %v2301 = vpop.xlane.xlu0 %2300
  %2302 = vadd.xlane.f32.xlu0 %v2271
  %v2303 = vpop.xlane.xlu0 %2302
  %2304 = vadd.xlane.f32.xlu0 %v2273
  %v2305 = vpop.xlane.xlu0 %2304
  %v2306 = vrcp.pop %v2275
  %v2307 = vrcp.pop %v2277
  %v2308 = vrcp.pop %v2279
  %v2309 = vrcp.pop %v2281
  %v2310 = vrcp.pop %v2283
  %v2311 = vrcp.pop %v2285
  %v2312 = vrcp.pop %v2287
  %v2313 = vrcp.pop %v2289
  %v2314 = vrcp.pop %v2291
  %v2315 = vrcp.pop %v2293
  %v2316 = vrcp.pop %v2295
  %v2317 = vrcp.pop %v2297
  %v2318 = vrcp.pop %v2299
  %v2319 = vrcp.pop %v2301
  %v2320 = vrcp.pop %v2303
  %v2321 = vrcp.pop %v2305
  %v2322 = vmul.f32 %v2243, %v2306
  %v2323 = vmul.f32 %v2245, %v2307
  %v2324 = vmul.f32 %v2247, %v2308
  %v2325 = vmul.f32 %v2249, %v2309
  %v2326 = vmul.f32 %v2251, %v2310
  %v2327 = vmul.f32 %v2253, %v2311
  %v2328 = vmul.f32 %v2255, %v2312
  %v2329 = vmul.f32 %v2257, %v2313
  %v2330 = vmul.f32 %v2259, %v2314
  %v2331 = vmul.f32 %v2261, %v2315
  %v2332 = vmul.f32 %v2263, %v2316
  %v2333 = vmul.f32 %v2265, %v2317
  %v2334 = vmul.f32 %v2267, %v2318
  %v2335 = vmul.f32 %v2269, %v2319
  %v2336 = vmul.f32 %v2271, %v2320
  %v2337 = vmul.f32 %v2273, %v2321
  %v2338 = vpack.c.bf16 %v2323, %v2322
  %v2339 = vpack.c.bf16 %v2325, %v2324
  %v2340 = vpack.c.bf16 %v2327, %v2326
  %v2341 = vpack.c.bf16 %v2329, %v2328
  %v2342 = vpack.c.bf16 %v2331, %v2330
  %v2343 = vpack.c.bf16 %v2333, %v2332
  %v2344 = vpack.c.bf16 %v2335, %v2334
  %v2345 = vpack.c.bf16 %v2337, %v2336
  %2354 = vrot.lane.b32.xlu0 %v1896, 112
  %v2355 = vpop.permute.xlu0 %2354
  %2356 = vrot.lane.b32.xlu0 %v1897, 112
  %v2357 = vpop.permute.xlu0 %2356
  %2358 = vrot.lane.b32.xlu0 %v1898, 112
  %v2359 = vpop.permute.xlu0 %2358
  %2360 = vrot.lane.b32.xlu0 %v1899, 112
  %v2361 = vpop.permute.xlu0 %2360
  %2362 = vrot.lane.b32.xlu0 %v1900, 112
  %v2363 = vpop.permute.xlu0 %2362
  %2364 = vrot.lane.b32.xlu0 %v1901, 112
  %v2365 = vpop.permute.xlu0 %2364
  %2366 = vrot.lane.b32.xlu0 %v1902, 112
  %v2367 = vpop.permute.xlu0 %2366
  %2368 = vrot.lane.b32.xlu0 %v1903, 112
  %v2369 = vpop.permute.xlu0 %2368
  %2378 = vmatprep.subr.bf16.mxu0 0
  %2379 = vmatpush1.bf16.msra.mxu0 %v2355
  %2380 = vmatprep.subr.bf16.mxu0 0
  %2381 = vmatpush1.bf16.msra.mxu0 %v2357
  %2382 = vmatprep.subr.bf16.mxu0 0
  %2383 = vmatpush1.bf16.msra.mxu0 %v2359
  %2384 = vmatprep.subr.bf16.mxu0 0
  %2385 = vmatpush1.bf16.msra.mxu0 %v2361
  %2386 = vmatprep.subr.bf16.mxu0 0
  %2387 = vmatpush1.bf16.msra.mxu0 %v2363
  %2388 = vmatprep.subr.bf16.mxu0 0
  %2389 = vmatpush1.bf16.msra.mxu0 %v2365
  %2390 = vmatprep.subr.bf16.mxu0 0
  %2391 = vmatpush1.bf16.msra.mxu0 %v2367
  %2392 = vmatprep.subr.bf16.mxu0 0
  %2393 = vmatpush1.bf16.msra.mxu0 %v2369
  %2394 = vmatprep.subr.bf16.mxu0 0
  %2395 = vmatpush1.bf16.msra.mxu0 0
  %2396 = vmatprep.subr.bf16.mxu0 0
  %2397 = vmatpush1.bf16.msra.mxu0 0
  %2398 = vmatprep.subr.bf16.mxu0 0
  %2399 = vmatpush1.bf16.msra.mxu0 0
  %2400 = vmatprep.subr.bf16.mxu0 0
  %2401 = vmatpush1.bf16.msra.mxu0 0
  %2402 = vmatprep.subr.bf16.mxu0 0
  %2403 = vmatpush1.bf16.msra.mxu0 0
  %2404 = vmatprep.subr.bf16.mxu0 0
  %2405 = vmatpush1.bf16.msra.mxu0 0
  %2406 = vmatprep.subr.bf16.mxu0 0
  %2407 = vmatpush1.bf16.msra.mxu0 0
  %2408 = vmatprep.subr.bf16.mxu0 0
  %2409 = vmatpush1.bf16.msra.mxu0 0
  %2410 = vmatprep.mubr.bf16.mxu0 0
  %2411 = vmatmul.mubr.bf16.gmra.mrb[0].mxu0 %v2338
  %v2412 = vpop.f32.mrb[0].mxu0
  %v2413 = vadd.f32 0.0, %v2412
  %v2414 = vpop.f32.mrb[0].mxu0
  %v2415 = vpop.f32.mrb[0].mxu0
  %v2416 = vadd.f32 0.0, %v2415
  %v2417 = vpop.f32.mrb[0].mxu0
  %2418 = vmatprep.mubr.bf16.mxu0 0
  %2419 = vmatmul.mubr.bf16.gmra.mrb[0].mxu0 %v2339
  %v2420 = vpop.f32.mrb[0].mxu0
  %v2421 = vadd.f32 0.0, %v2420
  %v2422 = vpop.f32.mrb[0].mxu0
  %v2423 = vpop.f32.mrb[0].mxu0
  %v2424 = vadd.f32 0.0, %v2423
  %v2425 = vpop.f32.mrb[0].mxu0
  %2426 = vmatprep.mubr.bf16.mxu0 0
  %2427 = vmatmul.mubr.bf16.gmra.mrb[0].mxu0 %v2340
  %v2428 = vpop.f32.mrb[0].mxu0
  %v2429 = vadd.f32 0.0, %v2428
  %v2430 = vpop.f32.mrb[0].mxu0
  %v2431 = vpop.f32.mrb[0].mxu0
  %v2432 = vadd.f32 0.0, %v2431
  %v2433 = vpop.f32.mrb[0].mxu0
  %2434 = vmatprep.mubr.bf16.mxu0 0
  %2435 = vmatmul.mubr.bf16.gmra.mrb[0].mxu0 %v2341
  %v2436 = vpop.f32.mrb[0].mxu0
  %v2437 = vadd.f32 0.0, %v2436
  %v2438 = vpop.f32.mrb[0].mxu0
  %v2439 = vpop.f32.mrb[0].mxu0
  %v2440 = vadd.f32 0.0, %v2439
  %v2441 = vpop.f32.mrb[0].mxu0
  %2442 = vmatprep.mubr.bf16.mxu0 0
  %2443 = vmatmul.mubr.bf16.gmra.mrb[0].mxu0 %v2342
  %v2444 = vpop.f32.mrb[0].mxu0
  %v2445 = vadd.f32 0.0, %v2444
  %v2446 = vpop.f32.mrb[0].mxu0
  %v2447 = vpop.f32.mrb[0].mxu0
  %v2448 = vadd.f32 0.0, %v2447
  %v2449 = vpop.f32.mrb[0].mxu0
  %2450 = vmatprep.mubr.bf16.mxu0 0
  %2451 = vmatmul.mubr.bf16.gmra.mrb[0].mxu0 %v2343
  %v2452 = vpop.f32.mrb[0].mxu0
  %v2453 = vadd.f32 0.0, %v2452
  %v2454 = vpop.f32.mrb[0].mxu0
  %v2455 = vpop.f32.mrb[0].mxu0
  %v2456 = vadd.f32 0.0, %v2455
  %v2457 = vpop.f32.mrb[0].mxu0
  %2458 = vmatprep.mubr.bf16.mxu0 0
  %2459 = vmatmul.mubr.bf16.gmra.mrb[0].mxu0 %v2344
  %v2460 = vpop.f32.mrb[0].mxu0
  %v2461 = vadd.f32 0.0, %v2460
  %v2462 = vpop.f32.mrb[0].mxu0
  %v2463 = vpop.f32.mrb[0].mxu0
  %v2464 = vadd.f32 0.0, %v2463
  %v2465 = vpop.f32.mrb[0].mxu0
  %2466 = vmatprep.mubr.bf16.mxu0 0
  %2467 = vmatmul.mubr.bf16.gmra.mrb[0].mxu0 %v2345
  %v2468 = vpop.f32.mrb[0].mxu0
  %v2469 = vadd.f32 0.0, %v2468
  %v2470 = vpop.f32.mrb[0].mxu0
  %v2471 = vpop.f32.mrb[0].mxu0
  %v2472 = vadd.f32 0.0, %v2471
  %v2473 = vpop.f32.mrb[0].mxu0
  %2474 = vdwg.mxu0
  %2475 = vrot.lane.b32.xlu0 %v1550, 96
  %v2476 = vpop.permute.xlu0 %2475
  %2477 = vrot.lane.b32.xlu0 %v1551, 96
  %v2478 = vpop.permute.xlu0 %2477
  %2479 = vrot.lane.b32.xlu0 %v1552, 96
  %v2480 = vpop.permute.xlu0 %2479
  %2481 = vrot.lane.b32.xlu0 %v1553, 96
  %v2482 = vpop.permute.xlu0 %2481
  %2483 = vrot.lane.b32.xlu0 %v1554, 96
  %v2484 = vpop.permute.xlu0 %2483
  %2485 = vrot.lane.b32.xlu0 %v1555, 96
  %v2486 = vpop.permute.xlu0 %2485
  %2487 = vrot.lane.b32.xlu0 %v1556, 96
  %v2488 = vpop.permute.xlu0 %2487
  %2489 = vrot.lane.b32.xlu0 %v1557, 96
  %v2490 = vpop.permute.xlu0 %2489
  %2491 = vrot.lane.b32.xlu0 %v1550, 32
  %v2492 = vpop.permute.xlu0 %2491
  %2493 = vrot.lane.b32.xlu0 %v1551, 32
  %v2494 = vpop.permute.xlu0 %2493
  %2495 = vrot.lane.b32.xlu0 %v1552, 32
  %v2496 = vpop.permute.xlu0 %2495
  %2497 = vrot.lane.b32.xlu0 %v1553, 32
  %v2498 = vpop.permute.xlu0 %2497
  %2499 = vrot.lane.b32.xlu0 %v1554, 32
  %v2500 = vpop.permute.xlu0 %2499
  %2501 = vrot.lane.b32.xlu0 %v1555, 32
  %v2502 = vpop.permute.xlu0 %2501
  %2503 = vrot.lane.b32.xlu0 %v1556, 32
  %v2504 = vpop.permute.xlu0 %2503
  %2505 = vrot.lane.b32.xlu0 %v1557, 32
  %v2506 = vpop.permute.xlu0 %2505
  %v2508 = vsel %vm1582, %v2476, 0
  %v2511 = vsel %vm1582, %v2478, 0
  %v2514 = vsel %vm1582, %v2480, 0
  %v2517 = vsel %vm1582, %v2482, 0
  %v2520 = vsel %vm1582, %v2484, 0
  %v2523 = vsel %vm1582, %v2486, 0
  %v2526 = vsel %vm1582, %v2488, 0
  %v2529 = vsel %vm1582, %v2490, 0
  %v2532 = vsel %vm1582, %v2492, 0
  %v2535 = vsel %vm1582, %v2494, 0
  %v2538 = vsel %vm1582, %v2496, 0
  %v2541 = vsel %vm1582, %v2498, 0
  %v2544 = vsel %vm1582, %v2500, 0
  %v2547 = vsel %vm1582, %v2502, 0
  %v2550 = vsel %vm1582, %v2504, 0
  %v2553 = vsel %vm1582, %v2506, 0
  %2555 = vmatprep.subr.bf16.mxu0 0
  %2556 = vmatpush1.bf16.xpose.msra.mxu0 %v2532
  %2557 = vmatprep.subr.bf16.mxu0 0
  %2558 = vmatpush1.bf16.xpose.msra.mxu0 %v2535
  %2559 = vmatprep.subr.bf16.mxu0 0
  %2560 = vmatpush1.bf16.xpose.msra.mxu0 %v2538
  %2561 = vmatprep.subr.bf16.mxu0 0
  %2562 = vmatpush1.bf16.xpose.msra.mxu0 %v2541
  %2563 = vmatprep.subr.bf16.mxu0 0
  %2564 = vmatpush1.bf16.xpose.msra.mxu0 %v2544
  %2565 = vmatprep.subr.bf16.mxu0 0
  %2566 = vmatpush1.bf16.xpose.msra.mxu0 %v2547
  %2567 = vmatprep.subr.bf16.mxu0 0
  %2568 = vmatpush1.bf16.xpose.msra.mxu0 %v2550
  %2569 = vmatprep.subr.bf16.mxu0 0
  %2570 = vmatpush1.bf16.xpose.msra.mxu0 %v2553
  %2571 = vmatprep.subr.bf16.mxu0 0
  %2572 = vmatpush1.bf16.xpose.msra.mxu0 0
  %2573 = vmatprep.subr.bf16.mxu0 0
  %2574 = vmatpush1.bf16.xpose.msra.mxu0 0
  %2575 = vmatprep.subr.bf16.mxu0 0
  %2576 = vmatpush1.bf16.xpose.msra.mxu0 0
  %2577 = vmatprep.subr.bf16.mxu0 0
  %2578 = vmatpush1.bf16.xpose.msra.mxu0 0
  %2579 = vmatprep.subr.bf16.mxu0 0
  %2580 = vmatpush1.bf16.xpose.msra.mxu0 0
  %2581 = vmatprep.subr.bf16.mxu0 0
  %2582 = vmatpush1.bf16.xpose.msra.mxu0 0
  %2583 = vmatprep.subr.bf16.mxu0 0
  %2584 = vmatpush1.bf16.xpose.msra.mxu0 0
  %2585 = vmatprep.subr.bf16.mxu0 0
  %2586 = vmatpush1.bf16.xpose.msra.mxu0 0
  %2587 = vmatprep.mubr.bf16.mxu0 0
  %2588 = vmatmul.mubr.bf16.gmra.mrb[0].mxu0 %v2508
  %v2589 = vpop.f32.mrb[0].mxu0
  %v2590 = vadd.f32 0.0, %v2589
  %v2591 = vpop.f32.mrb[0].mxu0
  %v2592 = vpop.f32.mrb[0].mxu0
  %v2593 = vadd.f32 0.0, %v2592
  %v2594 = vpop.f32.mrb[0].mxu0
  %2595 = vmatprep.mubr.bf16.mxu0 0
  %2596 = vmatmul.mubr.bf16.gmra.mrb[0].mxu0 %v2511
  %v2597 = vpop.f32.mrb[0].mxu0
  %v2598 = vadd.f32 0.0, %v2597
  %v2599 = vpop.f32.mrb[0].mxu0
  %v2600 = vpop.f32.mrb[0].mxu0
  %v2601 = vadd.f32 0.0, %v2600
  %v2602 = vpop.f32.mrb[0].mxu0
  %2603 = vmatprep.mubr.bf16.mxu0 0
  %2604 = vmatmul.mubr.bf16.gmra.mrb[0].mxu0 %v2514
  %v2605 = vpop.f32.mrb[0].mxu0
  %v2606 = vadd.f32 0.0, %v2605
  %v2607 = vpop.f32.mrb[0].mxu0
  %v2608 = vpop.f32.mrb[0].mxu0
  %v2609 = vadd.f32 0.0, %v2608
  %v2610 = vpop.f32.mrb[0].mxu0
  %2611 = vmatprep.mubr.bf16.mxu0 0
  %2612 = vmatmul.mubr.bf16.gmra.mrb[0].mxu0 %v2517
  %v2613 = vpop.f32.mrb[0].mxu0
  %v2614 = vadd.f32 0.0, %v2613
  %v2615 = vpop.f32.mrb[0].mxu0
  %v2616 = vpop.f32.mrb[0].mxu0
  %v2617 = vadd.f32 0.0, %v2616
  %v2618 = vpop.f32.mrb[0].mxu0
  %2619 = vmatprep.mubr.bf16.mxu0 0
  %2620 = vmatmul.mubr.bf16.gmra.mrb[0].mxu0 %v2520
  %v2621 = vpop.f32.mrb[0].mxu0
  %v2622 = vadd.f32 0.0, %v2621
  %v2623 = vpop.f32.mrb[0].mxu0
  %v2624 = vpop.f32.mrb[0].mxu0
  %v2625 = vadd.f32 0.0, %v2624
  %v2626 = vpop.f32.mrb[0].mxu0
  %2627 = vmatprep.mubr.bf16.mxu0 0
  %2628 = vmatmul.mubr.bf16.gmra.mrb[0].mxu0 %v2523
  %v2629 = vpop.f32.mrb[0].mxu0
  %v2630 = vadd.f32 0.0, %v2629
  %v2631 = vpop.f32.mrb[0].mxu0
  %v2632 = vpop.f32.mrb[0].mxu0
  %v2633 = vadd.f32 0.0, %v2632
  %v2634 = vpop.f32.mrb[0].mxu0
  %2635 = vmatprep.mubr.bf16.mxu0 0
  %2636 = vmatmul.mubr.bf16.gmra.mrb[0].mxu0 %v2526
  %v2637 = vpop.f32.mrb[0].mxu0
  %v2638 = vadd.f32 0.0, %v2637
  %v2639 = vpop.f32.mrb[0].mxu0
  %v2640 = vpop.f32.mrb[0].mxu0
  %v2641 = vadd.f32 0.0, %v2640
  %v2642 = vpop.f32.mrb[0].mxu0
  %2643 = vmatprep.mubr.bf16.mxu0 0
  %2644 = vmatmul.mubr.bf16.gmra.mrb[0].mxu0 %v2529
  %v2645 = vpop.f32.mrb[0].mxu0
  %v2646 = vadd.f32 0.0, %v2645
  %v2647 = vpop.f32.mrb[0].mxu0
  %v2648 = vpop.f32.mrb[0].mxu0
  %v2649 = vadd.f32 0.0, %v2648
  %v2650 = vpop.f32.mrb[0].mxu0
  %2651 = vdwg.mxu0
  %v2652 = vsel %vm1078, %v2590, -1e+30
  %v2653 = vsel %vm1079, %v2593, -1e+30
  %v2654 = vsel %vm1080, %v2598, -1e+30
  %v2655 = vsel %vm1081, %v2601, -1e+30
  %v2656 = vsel %vm1082, %v2606, -1e+30
  %v2657 = vsel %vm1083, %v2609, -1e+30
  %v2658 = vsel %vm1084, %v2614, -1e+30
  %v2659 = vsel %vm1085, %v2617, -1e+30
  %v2660 = vsel %vm1086, %v2622, -1e+30
  %v2661 = vsel %vm1087, %v2625, -1e+30
  %v2662 = vsel %vm1088, %v2630, -1e+30
  %v2663 = vsel %vm1089, %v2633, -1e+30
  %v2664 = vsel %vm1090, %v2638, -1e+30
  %v2665 = vsel %vm1091, %v2641, -1e+30
  %v2666 = vsel %vm1092, %v2646, -1e+30
  %v2667 = vsel %vm1093, %v2649, -1e+30
  %2668 = vmax.xlane.f32.xlu0 %v2652
  %v2669 = vpop.xlane.xlu0 %2668
  %2670 = vmax.xlane.f32.xlu0 %v2653
  %v2671 = vpop.xlane.xlu0 %2670
  %2672 = vmax.xlane.f32.xlu0 %v2654
  %v2673 = vpop.xlane.xlu0 %2672
  %2674 = vmax.xlane.f32.xlu0 %v2655
  %v2675 = vpop.xlane.xlu0 %2674
  %2676 = vmax.xlane.f32.xlu0 %v2656
  %v2677 = vpop.xlane.xlu0 %2676
  %2678 = vmax.xlane.f32.xlu0 %v2657
  %v2679 = vpop.xlane.xlu0 %2678
  %2680 = vmax.xlane.f32.xlu0 %v2658
  %v2681 = vpop.xlane.xlu0 %2680
  %2682 = vmax.xlane.f32.xlu0 %v2659
  %v2683 = vpop.xlane.xlu0 %2682
  %2684 = vmax.xlane.f32.xlu0 %v2660
  %v2685 = vpop.xlane.xlu0 %2684
  %2686 = vmax.xlane.f32.xlu0 %v2661
  %v2687 = vpop.xlane.xlu0 %2686
  %2688 = vmax.xlane.f32.xlu0 %v2662
  %v2689 = vpop.xlane.xlu0 %2688
  %2690 = vmax.xlane.f32.xlu0 %v2663
  %v2691 = vpop.xlane.xlu0 %2690
  %2692 = vmax.xlane.f32.xlu0 %v2664
  %v2693 = vpop.xlane.xlu0 %2692
  %2694 = vmax.xlane.f32.xlu0 %v2665
  %v2695 = vpop.xlane.xlu0 %2694
  %2696 = vmax.xlane.f32.xlu0 %v2666
  %v2697 = vpop.xlane.xlu0 %2696
  %2698 = vmax.xlane.f32.xlu0 %v2667
  %v2699 = vpop.xlane.xlu0 %2698
  %v2700 = vsub.f32 %v2652, %v2669
  %v2701 = vsub.f32 %v2653, %v2671
  %v2702 = vsub.f32 %v2654, %v2673
  %v2703 = vsub.f32 %v2655, %v2675
  %v2704 = vsub.f32 %v2656, %v2677
  %v2705 = vsub.f32 %v2657, %v2679
  %v2706 = vsub.f32 %v2658, %v2681
  %v2707 = vsub.f32 %v2659, %v2683
  %v2708 = vsub.f32 %v2660, %v2685
  %v2709 = vsub.f32 %v2661, %v2687
  %v2710 = vsub.f32 %v2662, %v2689
  %v2711 = vsub.f32 %v2663, %v2691
  %v2712 = vsub.f32 %v2664, %v2693
  %v2713 = vsub.f32 %v2665, %v2695
  %v2714 = vsub.f32 %v2666, %v2697
  %v2715 = vsub.f32 %v2667, %v2699
  %v2716 = vmul.f32 %v2700, 1.442695
  %v2717 = vpow.pop %v2716
  %v2718 = vmul.f32 %v2701, 1.442695
  %v2719 = vpow.pop %v2718
  %v2720 = vmul.f32 %v2702, 1.442695
  %v2721 = vpow.pop %v2720
  %v2722 = vmul.f32 %v2703, 1.442695
  %v2723 = vpow.pop %v2722
  %v2724 = vmul.f32 %v2704, 1.442695
  %v2725 = vpow.pop %v2724
  %v2726 = vmul.f32 %v2705, 1.442695
  %v2727 = vpow.pop %v2726
  %v2728 = vmul.f32 %v2706, 1.442695
  %v2729 = vpow.pop %v2728
  %v2730 = vmul.f32 %v2707, 1.442695
  %v2731 = vpow.pop %v2730
  %v2732 = vmul.f32 %v2708, 1.442695
  %v2733 = vpow.pop %v2732
  %v2734 = vmul.f32 %v2709, 1.442695
  %v2735 = vpow.pop %v2734
  %v2736 = vmul.f32 %v2710, 1.442695
  %v2737 = vpow.pop %v2736
  %v2738 = vmul.f32 %v2711, 1.442695
  %v2739 = vpow.pop %v2738
  %v2740 = vmul.f32 %v2712, 1.442695
  %v2741 = vpow.pop %v2740
  %v2742 = vmul.f32 %v2713, 1.442695
  %v2743 = vpow.pop %v2742
  %v2744 = vmul.f32 %v2714, 1.442695
  %v2745 = vpow.pop %v2744
  %v2746 = vmul.f32 %v2715, 1.442695
  %v2747 = vpow.pop %v2746
  %2748 = vadd.xlane.f32.xlu0 %v2717
  %v2749 = vpop.xlane.xlu0 %2748
  %2750 = vadd.xlane.f32.xlu0 %v2719
  %v2751 = vpop.xlane.xlu0 %2750
  %2752 = vadd.xlane.f32.xlu0 %v2721
  %v2753 = vpop.xlane.xlu0 %2752
  %2754 = vadd.xlane.f32.xlu0 %v2723
  %v2755 = vpop.xlane.xlu0 %2754
  %2756 = vadd.xlane.f32.xlu0 %v2725
  %v2757 = vpop.xlane.xlu0 %2756
  %2758 = vadd.xlane.f32.xlu0 %v2727
  %v2759 = vpop.xlane.xlu0 %2758
  %2760 = vadd.xlane.f32.xlu0 %v2729
  %v2761 = vpop.xlane.xlu0 %2760
  %2762 = vadd.xlane.f32.xlu0 %v2731
  %v2763 = vpop.xlane.xlu0 %2762
  %2764 = vadd.xlane.f32.xlu0 %v2733
  %v2765 = vpop.xlane.xlu0 %2764
  %2766 = vadd.xlane.f32.xlu0 %v2735
  %v2767 = vpop.xlane.xlu0 %2766
  %2768 = vadd.xlane.f32.xlu0 %v2737
  %v2769 = vpop.xlane.xlu0 %2768
  %2770 = vadd.xlane.f32.xlu0 %v2739
  %v2771 = vpop.xlane.xlu0 %2770
  %2772 = vadd.xlane.f32.xlu0 %v2741
  %v2773 = vpop.xlane.xlu0 %2772
  %2774 = vadd.xlane.f32.xlu0 %v2743
  %v2775 = vpop.xlane.xlu0 %2774
  %2776 = vadd.xlane.f32.xlu0 %v2745
  %v2777 = vpop.xlane.xlu0 %2776
  %2778 = vadd.xlane.f32.xlu0 %v2747
  %v2779 = vpop.xlane.xlu0 %2778
  %v2780 = vrcp.pop %v2749
  %v2781 = vrcp.pop %v2751
  %v2782 = vrcp.pop %v2753
  %v2783 = vrcp.pop %v2755
  %v2784 = vrcp.pop %v2757
  %v2785 = vrcp.pop %v2759
  %v2786 = vrcp.pop %v2761
  %v2787 = vrcp.pop %v2763
  %v2788 = vrcp.pop %v2765
  %v2789 = vrcp.pop %v2767
  %v2790 = vrcp.pop %v2769
  %v2791 = vrcp.pop %v2771
  %v2792 = vrcp.pop %v2773
  %v2793 = vrcp.pop %v2775
  %v2794 = vrcp.pop %v2777
  %v2795 = vrcp.pop %v2779
  %v2796 = vmul.f32 %v2717, %v2780
  %v2797 = vmul.f32 %v2719, %v2781
  %v2798 = vmul.f32 %v2721, %v2782
  %v2799 = vmul.f32 %v2723, %v2783
  %v2800 = vmul.f32 %v2725, %v2784
  %v2801 = vmul.f32 %v2727, %v2785
  %v2802 = vmul.f32 %v2729, %v2786
  %v2803 = vmul.f32 %v2731, %v2787
  %v2804 = vmul.f32 %v2733, %v2788
  %v2805 = vmul.f32 %v2735, %v2789
  %v2806 = vmul.f32 %v2737, %v2790
  %v2807 = vmul.f32 %v2739, %v2791
  %v2808 = vmul.f32 %v2741, %v2792
  %v2809 = vmul.f32 %v2743, %v2793
  %v2810 = vmul.f32 %v2745, %v2794
  %v2811 = vmul.f32 %v2747, %v2795
  %v2812 = vpack.c.bf16 %v2797, %v2796
  %v2813 = vpack.c.bf16 %v2799, %v2798
  %v2814 = vpack.c.bf16 %v2801, %v2800
  %v2815 = vpack.c.bf16 %v2803, %v2802
  %v2816 = vpack.c.bf16 %v2805, %v2804
  %v2817 = vpack.c.bf16 %v2807, %v2806
  %v2818 = vpack.c.bf16 %v2809, %v2808
  %v2819 = vpack.c.bf16 %v2811, %v2810
  %2820 = vrot.lane.b32.xlu0 %v1896, 96
  %v2821 = vpop.permute.xlu0 %2820
  %2822 = vrot.lane.b32.xlu0 %v1897, 96
  %v2823 = vpop.permute.xlu0 %2822
  %2824 = vrot.lane.b32.xlu0 %v1898, 96
  %v2825 = vpop.permute.xlu0 %2824
  %2826 = vrot.lane.b32.xlu0 %v1899, 96
  %v2827 = vpop.permute.xlu0 %2826
  %2828 = vrot.lane.b32.xlu0 %v1900, 96
  %v2829 = vpop.permute.xlu0 %2828
  %2830 = vrot.lane.b32.xlu0 %v1901, 96
  %v2831 = vpop.permute.xlu0 %2830
  %2832 = vrot.lane.b32.xlu0 %v1902, 96
  %v2833 = vpop.permute.xlu0 %2832
  %2834 = vrot.lane.b32.xlu0 %v1903, 96
  %v2835 = vpop.permute.xlu0 %2834
  %2844 = vmatprep.subr.bf16.mxu0 0
  %2845 = vmatpush1.bf16.msra.mxu0 %v2821
  %2846 = vmatprep.subr.bf16.mxu0 0
  %2847 = vmatpush1.bf16.msra.mxu0 %v2823
  %2848 = vmatprep.subr.bf16.mxu0 0
  %2849 = vmatpush1.bf16.msra.mxu0 %v2825
  %2850 = vmatprep.subr.bf16.mxu0 0
  %2851 = vmatpush1.bf16.msra.mxu0 %v2827
  %2852 = vmatprep.subr.bf16.mxu0 0
  %2853 = vmatpush1.bf16.msra.mxu0 %v2829
  %2854 = vmatprep.subr.bf16.mxu0 0
  %2855 = vmatpush1.bf16.msra.mxu0 %v2831
  %2856 = vmatprep.subr.bf16.mxu0 0
  %2857 = vmatpush1.bf16.msra.mxu0 %v2833
  %2858 = vmatprep.subr.bf16.mxu0 0
  %2859 = vmatpush1.bf16.msra.mxu0 %v2835
  %2860 = vmatprep.subr.bf16.mxu0 0
  %2861 = vmatpush1.bf16.msra.mxu0 0
  %2862 = vmatprep.subr.bf16.mxu0 0
  %2863 = vmatpush1.bf16.msra.mxu0 0
  %2864 = vmatprep.subr.bf16.mxu0 0
  %2865 = vmatpush1.bf16.msra.mxu0 0
  %2866 = vmatprep.subr.bf16.mxu0 0
  %2867 = vmatpush1.bf16.msra.mxu0 0
  %2868 = vmatprep.subr.bf16.mxu0 0
  %2869 = vmatpush1.bf16.msra.mxu0 0
  %2870 = vmatprep.subr.bf16.mxu0 0
  %2871 = vmatpush1.bf16.msra.mxu0 0
  %2872 = vmatprep.subr.bf16.mxu0 0
  %2873 = vmatpush1.bf16.msra.mxu0 0
  %2874 = vmatprep.subr.bf16.mxu0 0
  %2875 = vmatpush1.bf16.msra.mxu0 0
  %2876 = vmatprep.mubr.bf16.mxu0 0
  %2877 = vmatmul.mubr.bf16.gmra.mrb[0].mxu0 %v2812
  %v2878 = vpop.f32.mrb[0].mxu0
  %v2879 = vadd.f32 0.0, %v2878
  %v2880 = vpop.f32.mrb[0].mxu0
  %v2881 = vpop.f32.mrb[0].mxu0
  %v2882 = vadd.f32 0.0, %v2881
  %v2883 = vpop.f32.mrb[0].mxu0
  %2884 = vmatprep.mubr.bf16.mxu0 0
  %2885 = vmatmul.mubr.bf16.gmra.mrb[0].mxu0 %v2813
  %v2886 = vpop.f32.mrb[0].mxu0
  %v2887 = vadd.f32 0.0, %v2886
  %v2888 = vpop.f32.mrb[0].mxu0
  %v2889 = vpop.f32.mrb[0].mxu0
  %v2890 = vadd.f32 0.0, %v2889
  %v2891 = vpop.f32.mrb[0].mxu0
  %2892 = vmatprep.mubr.bf16.mxu0 0
  %2893 = vmatmul.mubr.bf16.gmra.mrb[0].mxu0 %v2814
  %v2894 = vpop.f32.mrb[0].mxu0
  %v2895 = vadd.f32 0.0, %v2894
  %v2896 = vpop.f32.mrb[0].mxu0
  %v2897 = vpop.f32.mrb[0].mxu0
  %v2898 = vadd.f32 0.0, %v2897
  %v2899 = vpop.f32.mrb[0].mxu0
  %2900 = vmatprep.mubr.bf16.mxu0 0
  %2901 = vmatmul.mubr.bf16.gmra.mrb[0].mxu0 %v2815
  %v2902 = vpop.f32.mrb[0].mxu0
  %v2903 = vadd.f32 0.0, %v2902
  %v2904 = vpop.f32.mrb[0].mxu0
  %v2905 = vpop.f32.mrb[0].mxu0
  %v2906 = vadd.f32 0.0, %v2905
  %v2907 = vpop.f32.mrb[0].mxu0
  %2908 = vmatprep.mubr.bf16.mxu0 0
  %2909 = vmatmul.mubr.bf16.gmra.mrb[0].mxu0 %v2816
  %v2910 = vpop.f32.mrb[0].mxu0
  %v2911 = vadd.f32 0.0, %v2910
  %v2912 = vpop.f32.mrb[0].mxu0
  %v2913 = vpop.f32.mrb[0].mxu0
  %v2914 = vadd.f32 0.0, %v2913
  %v2915 = vpop.f32.mrb[0].mxu0
  %2916 = vmatprep.mubr.bf16.mxu0 0
  %2917 = vmatmul.mubr.bf16.gmra.mrb[0].mxu0 %v2817
  %v2918 = vpop.f32.mrb[0].mxu0
  %v2919 = vadd.f32 0.0, %v2918
  %v2920 = vpop.f32.mrb[0].mxu0
  %v2921 = vpop.f32.mrb[0].mxu0
  %v2922 = vadd.f32 0.0, %v2921
  %v2923 = vpop.f32.mrb[0].mxu0
  %2924 = vmatprep.mubr.bf16.mxu0 0
  %2925 = vmatmul.mubr.bf16.gmra.mrb[0].mxu0 %v2818
  %v2926 = vpop.f32.mrb[0].mxu0
  %v2927 = vadd.f32 0.0, %v2926
  %v2928 = vpop.f32.mrb[0].mxu0
  %v2929 = vpop.f32.mrb[0].mxu0
  %v2930 = vadd.f32 0.0, %v2929
  %v2931 = vpop.f32.mrb[0].mxu0
  %2932 = vmatprep.mubr.bf16.mxu0 0
  %2933 = vmatmul.mubr.bf16.gmra.mrb[0].mxu0 %v2819
  %v2934 = vpop.f32.mrb[0].mxu0
  %v2935 = vadd.f32 0.0, %v2934
  %v2936 = vpop.f32.mrb[0].mxu0
  %v2937 = vpop.f32.mrb[0].mxu0
  %v2938 = vadd.f32 0.0, %v2937
  %v2939 = vpop.f32.mrb[0].mxu0
  %2940 = vdwg.mxu0
  %2941 = vrot.lane.b32.xlu0 %v1550, 80
  %v2942 = vpop.permute.xlu0 %2941
  %2943 = vrot.lane.b32.xlu0 %v1551, 80
  %v2944 = vpop.permute.xlu0 %2943
  %2945 = vrot.lane.b32.xlu0 %v1552, 80
  %v2946 = vpop.permute.xlu0 %2945
  %2947 = vrot.lane.b32.xlu0 %v1553, 80
  %v2948 = vpop.permute.xlu0 %2947
  %2949 = vrot.lane.b32.xlu0 %v1554, 80
  %v2950 = vpop.permute.xlu0 %2949
  %2951 = vrot.lane.b32.xlu0 %v1555, 80
  %v2952 = vpop.permute.xlu0 %2951
  %2953 = vrot.lane.b32.xlu0 %v1556, 80
  %v2954 = vpop.permute.xlu0 %2953
  %2955 = vrot.lane.b32.xlu0 %v1557, 80
  %v2956 = vpop.permute.xlu0 %2955
  %2957 = vrot.lane.b32.xlu0 %v1550, 16
  %v2958 = vpop.permute.xlu0 %2957
  %2959 = vrot.lane.b32.xlu0 %v1551, 16
  %v2960 = vpop.permute.xlu0 %2959
  %2961 = vrot.lane.b32.xlu0 %v1552, 16
  %v2962 = vpop.permute.xlu0 %2961
  %2963 = vrot.lane.b32.xlu0 %v1553, 16
  %v2964 = vpop.permute.xlu0 %2963
  %2965 = vrot.lane.b32.xlu0 %v1554, 16
  %v2966 = vpop.permute.xlu0 %2965
  %2967 = vrot.lane.b32.xlu0 %v1555, 16
  %v2968 = vpop.permute.xlu0 %2967
  %2969 = vrot.lane.b32.xlu0 %v1556, 16
  %v2970 = vpop.permute.xlu0 %2969
  %2971 = vrot.lane.b32.xlu0 %v1557, 16
  %v2972 = vpop.permute.xlu0 %2971
  %v2974 = vsel %vm1582, %v2942, 0
  %v2977 = vsel %vm1582, %v2944, 0
  %v2980 = vsel %vm1582, %v2946, 0
  %v2983 = vsel %vm1582, %v2948, 0
  %v2986 = vsel %vm1582, %v2950, 0
  %v2989 = vsel %vm1582, %v2952, 0
  %v2992 = vsel %vm1582, %v2954, 0
  %v2995 = vsel %vm1582, %v2956, 0
  %v2998 = vsel %vm1582, %v2958, 0
  %v3001 = vsel %vm1582, %v2960, 0
  %v3004 = vsel %vm1582, %v2962, 0
  %v3007 = vsel %vm1582, %v2964, 0
  %v3010 = vsel %vm1582, %v2966, 0
  %v3013 = vsel %vm1582, %v2968, 0
  %v3016 = vsel %vm1582, %v2970, 0
  %v3019 = vsel %vm1582, %v2972, 0
  %3021 = vmatprep.subr.bf16.mxu0 0
  %3022 = vmatpush1.bf16.xpose.msra.mxu0 %v2998
  %3023 = vmatprep.subr.bf16.mxu0 0
  %3024 = vmatpush1.bf16.xpose.msra.mxu0 %v3001
  %3025 = vmatprep.subr.bf16.mxu0 0
  %3026 = vmatpush1.bf16.xpose.msra.mxu0 %v3004
  %3027 = vmatprep.subr.bf16.mxu0 0
  %3028 = vmatpush1.bf16.xpose.msra.mxu0 %v3007
  %3029 = vmatprep.subr.bf16.mxu0 0
  %3030 = vmatpush1.bf16.xpose.msra.mxu0 %v3010
  %3031 = vmatprep.subr.bf16.mxu0 0
  %3032 = vmatpush1.bf16.xpose.msra.mxu0 %v3013
  %3033 = vmatprep.subr.bf16.mxu0 0
  %3034 = vmatpush1.bf16.xpose.msra.mxu0 %v3016
  %3035 = vmatprep.subr.bf16.mxu0 0
  %3036 = vmatpush1.bf16.xpose.msra.mxu0 %v3019
  %3037 = vmatprep.subr.bf16.mxu0 0
  %3038 = vmatpush1.bf16.xpose.msra.mxu0 0
  %3039 = vmatprep.subr.bf16.mxu0 0
  %3040 = vmatpush1.bf16.xpose.msra.mxu0 0
  %3041 = vmatprep.subr.bf16.mxu0 0
  %3042 = vmatpush1.bf16.xpose.msra.mxu0 0
  %3043 = vmatprep.subr.bf16.mxu0 0
  %3044 = vmatpush1.bf16.xpose.msra.mxu0 0
  %3045 = vmatprep.subr.bf16.mxu0 0
  %3046 = vmatpush1.bf16.xpose.msra.mxu0 0
  %3047 = vmatprep.subr.bf16.mxu0 0
  %3048 = vmatpush1.bf16.xpose.msra.mxu0 0
  %3049 = vmatprep.subr.bf16.mxu0 0
  %3050 = vmatpush1.bf16.xpose.msra.mxu0 0
  %3051 = vmatprep.subr.bf16.mxu0 0
  %3052 = vmatpush1.bf16.xpose.msra.mxu0 0
  %3053 = vmatprep.mubr.bf16.mxu0 0
  %3054 = vmatmul.mubr.bf16.gmra.mrb[0].mxu0 %v2974
  %v3055 = vpop.f32.mrb[0].mxu0
  %v3056 = vadd.f32 0.0, %v3055
  %v3057 = vpop.f32.mrb[0].mxu0
  %v3058 = vpop.f32.mrb[0].mxu0
  %v3059 = vadd.f32 0.0, %v3058
  %v3060 = vpop.f32.mrb[0].mxu0
  %3061 = vmatprep.mubr.bf16.mxu0 0
  %3062 = vmatmul.mubr.bf16.gmra.mrb[0].mxu0 %v2977
  %v3063 = vpop.f32.mrb[0].mxu0
  %v3064 = vadd.f32 0.0, %v3063
  %v3065 = vpop.f32.mrb[0].mxu0
  %v3066 = vpop.f32.mrb[0].mxu0
  %v3067 = vadd.f32 0.0, %v3066
  %v3068 = vpop.f32.mrb[0].mxu0
  %3069 = vmatprep.mubr.bf16.mxu0 0
  %3070 = vmatmul.mubr.bf16.gmra.mrb[0].mxu0 %v2980
  %v3071 = vpop.f32.mrb[0].mxu0
  %v3072 = vadd.f32 0.0, %v3071
  %v3073 = vpop.f32.mrb[0].mxu0
  %v3074 = vpop.f32.mrb[0].mxu0
  %v3075 = vadd.f32 0.0, %v3074
  %v3076 = vpop.f32.mrb[0].mxu0
  %3077 = vmatprep.mubr.bf16.mxu0 0
  %3078 = vmatmul.mubr.bf16.gmra.mrb[0].mxu0 %v2983
  %v3079 = vpop.f32.mrb[0].mxu0
  %v3080 = vadd.f32 0.0, %v3079
  %v3081 = vpop.f32.mrb[0].mxu0
  %v3082 = vpop.f32.mrb[0].mxu0
  %v3083 = vadd.f32 0.0, %v3082
  %v3084 = vpop.f32.mrb[0].mxu0
  %3085 = vmatprep.mubr.bf16.mxu0 0
  %3086 = vmatmul.mubr.bf16.gmra.mrb[0].mxu0 %v2986
  %v3087 = vpop.f32.mrb[0].mxu0
  %v3088 = vadd.f32 0.0, %v3087
  %v3089 = vpop.f32.mrb[0].mxu0
  %v3090 = vpop.f32.mrb[0].mxu0
  %v3091 = vadd.f32 0.0, %v3090
  %v3092 = vpop.f32.mrb[0].mxu0
  %3093 = vmatprep.mubr.bf16.mxu0 0
  %3094 = vmatmul.mubr.bf16.gmra.mrb[0].mxu0 %v2989
  %v3095 = vpop.f32.mrb[0].mxu0
  %v3096 = vadd.f32 0.0, %v3095
  %v3097 = vpop.f32.mrb[0].mxu0
  %v3098 = vpop.f32.mrb[0].mxu0
  %v3099 = vadd.f32 0.0, %v3098
  %v3100 = vpop.f32.mrb[0].mxu0
  %3101 = vmatprep.mubr.bf16.mxu0 0
  %3102 = vmatmul.mubr.bf16.gmra.mrb[0].mxu0 %v2992
  %v3103 = vpop.f32.mrb[0].mxu0
  %v3104 = vadd.f32 0.0, %v3103
  %v3105 = vpop.f32.mrb[0].mxu0
  %v3106 = vpop.f32.mrb[0].mxu0
  %v3107 = vadd.f32 0.0, %v3106
  %v3108 = vpop.f32.mrb[0].mxu0
  %3109 = vmatprep.mubr.bf16.mxu0 0
  %3110 = vmatmul.mubr.bf16.gmra.mrb[0].mxu0 %v2995
  %v3111 = vpop.f32.mrb[0].mxu0
  %v3112 = vadd.f32 0.0, %v3111
  %v3113 = vpop.f32.mrb[0].mxu0
  %v3114 = vpop.f32.mrb[0].mxu0
  %v3115 = vadd.f32 0.0, %v3114
  %v3116 = vpop.f32.mrb[0].mxu0
  %3117 = vdwg.mxu0
  %v3118 = vsel %vm1078, %v3056, -1e+30
  %v3119 = vsel %vm1079, %v3059, -1e+30
  %v3120 = vsel %vm1080, %v3064, -1e+30
  %v3121 = vsel %vm1081, %v3067, -1e+30
  %v3122 = vsel %vm1082, %v3072, -1e+30
  %v3123 = vsel %vm1083, %v3075, -1e+30
  %v3124 = vsel %vm1084, %v3080, -1e+30
  %v3125 = vsel %vm1085, %v3083, -1e+30
  %v3126 = vsel %vm1086, %v3088, -1e+30
  %v3127 = vsel %vm1087, %v3091, -1e+30
  %v3128 = vsel %vm1088, %v3096, -1e+30
  %v3129 = vsel %vm1089, %v3099, -1e+30
  %v3130 = vsel %vm1090, %v3104, -1e+30
  %v3131 = vsel %vm1091, %v3107, -1e+30
  %v3132 = vsel %vm1092, %v3112, -1e+30
  %v3133 = vsel %vm1093, %v3115, -1e+30
  %3134 = vmax.xlane.f32.xlu0 %v3118
  %v3135 = vpop.xlane.xlu0 %3134
  %3136 = vmax.xlane.f32.xlu0 %v3119
  %v3137 = vpop.xlane.xlu0 %3136
  %3138 = vmax.xlane.f32.xlu0 %v3120
  %v3139 = vpop.xlane.xlu0 %3138
  %3140 = vmax.xlane.f32.xlu0 %v3121
  %v3141 = vpop.xlane.xlu0 %3140
  %3142 = vmax.xlane.f32.xlu0 %v3122
  %v3143 = vpop.xlane.xlu0 %3142
  %3144 = vmax.xlane.f32.xlu0 %v3123
  %v3145 = vpop.xlane.xlu0 %3144
  %3146 = vmax.xlane.f32.xlu0 %v3124
  %v3147 = vpop.xlane.xlu0 %3146
  %3148 = vmax.xlane.f32.xlu0 %v3125
  %v3149 = vpop.xlane.xlu0 %3148
  %3150 = vmax.xlane.f32.xlu0 %v3126
  %v3151 = vpop.xlane.xlu0 %3150
  %3152 = vmax.xlane.f32.xlu0 %v3127
  %v3153 = vpop.xlane.xlu0 %3152
  %3154 = vmax.xlane.f32.xlu0 %v3128
  %v3155 = vpop.xlane.xlu0 %3154
  %3156 = vmax.xlane.f32.xlu0 %v3129
  %v3157 = vpop.xlane.xlu0 %3156
  %3158 = vmax.xlane.f32.xlu0 %v3130
  %v3159 = vpop.xlane.xlu0 %3158
  %3160 = vmax.xlane.f32.xlu0 %v3131
  %v3161 = vpop.xlane.xlu0 %3160
  %3162 = vmax.xlane.f32.xlu0 %v3132
  %v3163 = vpop.xlane.xlu0 %3162
  %3164 = vmax.xlane.f32.xlu0 %v3133
  %v3165 = vpop.xlane.xlu0 %3164
  %v3166 = vsub.f32 %v3118, %v3135
  %v3167 = vsub.f32 %v3119, %v3137
  %v3168 = vsub.f32 %v3120, %v3139
  %v3169 = vsub.f32 %v3121, %v3141
  %v3170 = vsub.f32 %v3122, %v3143
  %v3171 = vsub.f32 %v3123, %v3145
  %v3172 = vsub.f32 %v3124, %v3147
  %v3173 = vsub.f32 %v3125, %v3149
  %v3174 = vsub.f32 %v3126, %v3151
  %v3175 = vsub.f32 %v3127, %v3153
  %v3176 = vsub.f32 %v3128, %v3155
  %v3177 = vsub.f32 %v3129, %v3157
  %v3178 = vsub.f32 %v3130, %v3159
  %v3179 = vsub.f32 %v3131, %v3161
  %v3180 = vsub.f32 %v3132, %v3163
  %v3181 = vsub.f32 %v3133, %v3165
  %v3182 = vmul.f32 %v3166, 1.442695
  %v3183 = vpow.pop %v3182
  %v3184 = vmul.f32 %v3167, 1.442695
  %v3185 = vpow.pop %v3184
  %v3186 = vmul.f32 %v3168, 1.442695
  %v3187 = vpow.pop %v3186
  %v3188 = vmul.f32 %v3169, 1.442695
  %v3189 = vpow.pop %v3188
  %v3190 = vmul.f32 %v3170, 1.442695
  %v3191 = vpow.pop %v3190
  %v3192 = vmul.f32 %v3171, 1.442695
  %v3193 = vpow.pop %v3192
  %v3194 = vmul.f32 %v3172, 1.442695
  %v3195 = vpow.pop %v3194
  %v3196 = vmul.f32 %v3173, 1.442695
  %v3197 = vpow.pop %v3196
  %v3198 = vmul.f32 %v3174, 1.442695
  %v3199 = vpow.pop %v3198
  %v3200 = vmul.f32 %v3175, 1.442695
  %v3201 = vpow.pop %v3200
  %v3202 = vmul.f32 %v3176, 1.442695
  %v3203 = vpow.pop %v3202
  %v3204 = vmul.f32 %v3177, 1.442695
  %v3205 = vpow.pop %v3204
  %v3206 = vmul.f32 %v3178, 1.442695
  %v3207 = vpow.pop %v3206
  %v3208 = vmul.f32 %v3179, 1.442695
  %v3209 = vpow.pop %v3208
  %v3210 = vmul.f32 %v3180, 1.442695
  %v3211 = vpow.pop %v3210
  %v3212 = vmul.f32 %v3181, 1.442695
  %v3213 = vpow.pop %v3212
  %3214 = vadd.xlane.f32.xlu0 %v3183
  %v3215 = vpop.xlane.xlu0 %3214
  %3216 = vadd.xlane.f32.xlu0 %v3185
  %v3217 = vpop.xlane.xlu0 %3216
  %3218 = vadd.xlane.f32.xlu0 %v3187
  %v3219 = vpop.xlane.xlu0 %3218
  %3220 = vadd.xlane.f32.xlu0 %v3189
  %v3221 = vpop.xlane.xlu0 %3220
  %3222 = vadd.xlane.f32.xlu0 %v3191
  %v3223 = vpop.xlane.xlu0 %3222
  %3224 = vadd.xlane.f32.xlu0 %v3193
  %v3225 = vpop.xlane.xlu0 %3224
  %3226 = vadd.xlane.f32.xlu0 %v3195
  %v3227 = vpop.xlane.xlu0 %3226
  %3228 = vadd.xlane.f32.xlu0 %v3197
  %v3229 = vpop.xlane.xlu0 %3228
  %3230 = vadd.xlane.f32.xlu0 %v3199
  %v3231 = vpop.xlane.xlu0 %3230
  %3232 = vadd.xlane.f32.xlu0 %v3201
  %v3233 = vpop.xlane.xlu0 %3232
  %3234 = vadd.xlane.f32.xlu0 %v3203
  %v3235 = vpop.xlane.xlu0 %3234
  %3236 = vadd.xlane.f32.xlu0 %v3205
  %v3237 = vpop.xlane.xlu0 %3236
  %3238 = vadd.xlane.f32.xlu0 %v3207
  %v3239 = vpop.xlane.xlu0 %3238
  %3240 = vadd.xlane.f32.xlu0 %v3209
  %v3241 = vpop.xlane.xlu0 %3240
  %3242 = vadd.xlane.f32.xlu0 %v3211
  %v3243 = vpop.xlane.xlu0 %3242
  %3244 = vadd.xlane.f32.xlu0 %v3213
  %v3245 = vpop.xlane.xlu0 %3244
  %v3246 = vrcp.pop %v3215
  %v3247 = vrcp.pop %v3217
  %v3248 = vrcp.pop %v3219
  %v3249 = vrcp.pop %v3221
  %v3250 = vrcp.pop %v3223
  %v3251 = vrcp.pop %v3225
  %v3252 = vrcp.pop %v3227
  %v3253 = vrcp.pop %v3229
  %v3254 = vrcp.pop %v3231
  %v3255 = vrcp.pop %v3233
  %v3256 = vrcp.pop %v3235
  %v3257 = vrcp.pop %v3237
  %v3258 = vrcp.pop %v3239
  %v3259 = vrcp.pop %v3241
  %v3260 = vrcp.pop %v3243
  %v3261 = vrcp.pop %v3245
  %v3262 = vmul.f32 %v3183, %v3246
  %v3263 = vmul.f32 %v3185, %v3247
  %v3264 = vmul.f32 %v3187, %v3248
  %v3265 = vmul.f32 %v3189, %v3249
  %v3266 = vmul.f32 %v3191, %v3250
  %v3267 = vmul.f32 %v3193, %v3251
  %v3268 = vmul.f32 %v3195, %v3252
  %v3269 = vmul.f32 %v3197, %v3253
  %v3270 = vmul.f32 %v3199, %v3254
  %v3271 = vmul.f32 %v3201, %v3255
  %v3272 = vmul.f32 %v3203, %v3256
  %v3273 = vmul.f32 %v3205, %v3257
  %v3274 = vmul.f32 %v3207, %v3258
  %v3275 = vmul.f32 %v3209, %v3259
  %v3276 = vmul.f32 %v3211, %v3260
  %v3277 = vmul.f32 %v3213, %v3261
  %v3278 = vpack.c.bf16 %v3263, %v3262
  %v3279 = vpack.c.bf16 %v3265, %v3264
  %v3280 = vpack.c.bf16 %v3267, %v3266
  %v3281 = vpack.c.bf16 %v3269, %v3268
  %v3282 = vpack.c.bf16 %v3271, %v3270
  %v3283 = vpack.c.bf16 %v3273, %v3272
  %v3284 = vpack.c.bf16 %v3275, %v3274
  %v3285 = vpack.c.bf16 %v3277, %v3276
  %3286 = vrot.lane.b32.xlu0 %v1896, 80
  %v3287 = vpop.permute.xlu0 %3286
  %3288 = vrot.lane.b32.xlu0 %v1897, 80
  %v3289 = vpop.permute.xlu0 %3288
  %3290 = vrot.lane.b32.xlu0 %v1898, 80
  %v3291 = vpop.permute.xlu0 %3290
  %3292 = vrot.lane.b32.xlu0 %v1899, 80
  %v3293 = vpop.permute.xlu0 %3292
  %3294 = vrot.lane.b32.xlu0 %v1900, 80
  %v3295 = vpop.permute.xlu0 %3294
  %3296 = vrot.lane.b32.xlu0 %v1901, 80
  %v3297 = vpop.permute.xlu0 %3296
  %3298 = vrot.lane.b32.xlu0 %v1902, 80
  %v3299 = vpop.permute.xlu0 %3298
  %3300 = vrot.lane.b32.xlu0 %v1903, 80
  %v3301 = vpop.permute.xlu0 %3300
  %3310 = vmatprep.subr.bf16.mxu0 0
  %3311 = vmatpush1.bf16.msra.mxu0 %v3287
  %3312 = vmatprep.subr.bf16.mxu0 0
  %3313 = vmatpush1.bf16.msra.mxu0 %v3289
  %3314 = vmatprep.subr.bf16.mxu0 0
  %3315 = vmatpush1.bf16.msra.mxu0 %v3291
  %3316 = vmatprep.subr.bf16.mxu0 0
  %3317 = vmatpush1.bf16.msra.mxu0 %v3293
  %3318 = vmatprep.subr.bf16.mxu0 0
  %3319 = vmatpush1.bf16.msra.mxu0 %v3295
  %3320 = vmatprep.subr.bf16.mxu0 0
  %3321 = vmatpush1.bf16.msra.mxu0 %v3297
  %3322 = vmatprep.subr.bf16.mxu0 0
  %3323 = vmatpush1.bf16.msra.mxu0 %v3299
  %3324 = vmatprep.subr.bf16.mxu0 0
  %3325 = vmatpush1.bf16.msra.mxu0 %v3301
  %3326 = vmatprep.subr.bf16.mxu0 0
  %3327 = vmatpush1.bf16.msra.mxu0 0
  %3328 = vmatprep.subr.bf16.mxu0 0
  %3329 = vmatpush1.bf16.msra.mxu0 0
  %3330 = vmatprep.subr.bf16.mxu0 0
  %3331 = vmatpush1.bf16.msra.mxu0 0
  %3332 = vmatprep.subr.bf16.mxu0 0
  %3333 = vmatpush1.bf16.msra.mxu0 0
  %3334 = vmatprep.subr.bf16.mxu0 0
  %3335 = vmatpush1.bf16.msra.mxu0 0
  %3336 = vmatprep.subr.bf16.mxu0 0
  %3337 = vmatpush1.bf16.msra.mxu0 0
  %3338 = vmatprep.subr.bf16.mxu0 0
  %3339 = vmatpush1.bf16.msra.mxu0 0
  %3340 = vmatprep.subr.bf16.mxu0 0
  %3341 = vmatpush1.bf16.msra.mxu0 0
  %3342 = vmatprep.mubr.bf16.mxu0 0
  %3343 = vmatmul.mubr.bf16.gmra.mrb[0].mxu0 %v3278
  %v3344 = vpop.f32.mrb[0].mxu0
  %v3345 = vadd.f32 0.0, %v3344
  %v3346 = vpop.f32.mrb[0].mxu0
  %v3347 = vpop.f32.mrb[0].mxu0
  %v3348 = vadd.f32 0.0, %v3347
  %v3349 = vpop.f32.mrb[0].mxu0
  %3350 = vmatprep.mubr.bf16.mxu0 0
  %3351 = vmatmul.mubr.bf16.gmra.mrb[0].mxu0 %v3279
  %v3352 = vpop.f32.mrb[0].mxu0
  %v3353 = vadd.f32 0.0, %v3352
  %v3354 = vpop.f32.mrb[0].mxu0
  %v3355 = vpop.f32.mrb[0].mxu0
  %v3356 = vadd.f32 0.0, %v3355
  %v3357 = vpop.f32.mrb[0].mxu0
  %3358 = vmatprep.mubr.bf16.mxu0 0
  %3359 = vmatmul.mubr.bf16.gmra.mrb[0].mxu0 %v3280
  %v3360 = vpop.f32.mrb[0].mxu0
  %v3361 = vadd.f32 0.0, %v3360
  %v3362 = vpop.f32.mrb[0].mxu0
  %v3363 = vpop.f32.mrb[0].mxu0
  %v3364 = vadd.f32 0.0, %v3363
  %v3365 = vpop.f32.mrb[0].mxu0
  %3366 = vmatprep.mubr.bf16.mxu0 0
  %3367 = vmatmul.mubr.bf16.gmra.mrb[0].mxu0 %v3281
  %v3368 = vpop.f32.mrb[0].mxu0
  %v3369 = vadd.f32 0.0, %v3368
  %v3370 = vpop.f32.mrb[0].mxu0
  %v3371 = vpop.f32.mrb[0].mxu0
  %v3372 = vadd.f32 0.0, %v3371
  %v3373 = vpop.f32.mrb[0].mxu0
  %3374 = vmatprep.mubr.bf16.mxu0 0
  %3375 = vmatmul.mubr.bf16.gmra.mrb[0].mxu0 %v3282
  %v3376 = vpop.f32.mrb[0].mxu0
  %v3377 = vadd.f32 0.0, %v3376
  %v3378 = vpop.f32.mrb[0].mxu0
  %v3379 = vpop.f32.mrb[0].mxu0
  %v3380 = vadd.f32 0.0, %v3379
  %v3381 = vpop.f32.mrb[0].mxu0
  %3382 = vmatprep.mubr.bf16.mxu0 0
  %3383 = vmatmul.mubr.bf16.gmra.mrb[0].mxu0 %v3283
  %v3384 = vpop.f32.mrb[0].mxu0
  %v3385 = vadd.f32 0.0, %v3384
  %v3386 = vpop.f32.mrb[0].mxu0
  %v3387 = vpop.f32.mrb[0].mxu0
  %v3388 = vadd.f32 0.0, %v3387
  %v3389 = vpop.f32.mrb[0].mxu0
  %3390 = vmatprep.mubr.bf16.mxu0 0
  %3391 = vmatmul.mubr.bf16.gmra.mrb[0].mxu0 %v3284
  %v3392 = vpop.f32.mrb[0].mxu0
  %v3393 = vadd.f32 0.0, %v3392
  %v3394 = vpop.f32.mrb[0].mxu0
  %v3395 = vpop.f32.mrb[0].mxu0
  %v3396 = vadd.f32 0.0, %v3395
  %v3397 = vpop.f32.mrb[0].mxu0
  %3398 = vmatprep.mubr.bf16.mxu0 0
  %3399 = vmatmul.mubr.bf16.gmra.mrb[0].mxu0 %v3285
  %v3400 = vpop.f32.mrb[0].mxu0
  %v3401 = vadd.f32 0.0, %v3400
  %v3402 = vpop.f32.mrb[0].mxu0
  %v3403 = vpop.f32.mrb[0].mxu0
  %v3404 = vadd.f32 0.0, %v3403
  %v3405 = vpop.f32.mrb[0].mxu0
  %3406 = vdwg.mxu0
  %3423 = vrot.lane.b32.xlu0 %v2413, 16
  %v3424 = vpop.permute.xlu0 %3423
  %3425 = vrot.lane.b32.xlu0 %v2416, 16
  %v3426 = vpop.permute.xlu0 %3425
  %3427 = vrot.lane.b32.xlu0 %v2421, 16
  %v3428 = vpop.permute.xlu0 %3427
  %3429 = vrot.lane.b32.xlu0 %v2424, 16
  %v3430 = vpop.permute.xlu0 %3429
  %3431 = vrot.lane.b32.xlu0 %v2429, 16
  %v3432 = vpop.permute.xlu0 %3431
  %3433 = vrot.lane.b32.xlu0 %v2432, 16
  %v3434 = vpop.permute.xlu0 %3433
  %3435 = vrot.lane.b32.xlu0 %v2437, 16
  %v3436 = vpop.permute.xlu0 %3435
  %3437 = vrot.lane.b32.xlu0 %v2440, 16
  %v3438 = vpop.permute.xlu0 %3437
  %3439 = vrot.lane.b32.xlu0 %v2445, 16
  %v3440 = vpop.permute.xlu0 %3439
  %3441 = vrot.lane.b32.xlu0 %v2448, 16
  %v3442 = vpop.permute.xlu0 %3441
  %3443 = vrot.lane.b32.xlu0 %v2453, 16
  %v3444 = vpop.permute.xlu0 %3443
  %3445 = vrot.lane.b32.xlu0 %v2456, 16
  %v3446 = vpop.permute.xlu0 %3445
  %3447 = vrot.lane.b32.xlu0 %v2461, 16
  %v3448 = vpop.permute.xlu0 %3447
  %3449 = vrot.lane.b32.xlu0 %v2464, 16
  %v3450 = vpop.permute.xlu0 %3449
  %3451 = vrot.lane.b32.xlu0 %v2469, 16
  %v3452 = vpop.permute.xlu0 %3451
  %3453 = vrot.lane.b32.xlu0 %v2472, 16
  %v3454 = vpop.permute.xlu0 %3453
  %3487 = vrot.lane.b32.xlu0 %v2879, 32
  %v3488 = vpop.permute.xlu0 %3487
  %3489 = vrot.lane.b32.xlu0 %v2882, 32
  %v3490 = vpop.permute.xlu0 %3489
  %3491 = vrot.lane.b32.xlu0 %v2887, 32
  %v3492 = vpop.permute.xlu0 %3491
  %3493 = vrot.lane.b32.xlu0 %v2890, 32
  %v3494 = vpop.permute.xlu0 %3493
  %3495 = vrot.lane.b32.xlu0 %v2895, 32
  %v3496 = vpop.permute.xlu0 %3495
  %3497 = vrot.lane.b32.xlu0 %v2898, 32
  %v3498 = vpop.permute.xlu0 %3497
  %3499 = vrot.lane.b32.xlu0 %v2903, 32
  %v3500 = vpop.permute.xlu0 %3499
  %3501 = vrot.lane.b32.xlu0 %v2906, 32
  %v3502 = vpop.permute.xlu0 %3501
  %3503 = vrot.lane.b32.xlu0 %v2911, 32
  %v3504 = vpop.permute.xlu0 %3503
  %3505 = vrot.lane.b32.xlu0 %v2914, 32
  %v3506 = vpop.permute.xlu0 %3505
  %3507 = vrot.lane.b32.xlu0 %v2919, 32
  %v3508 = vpop.permute.xlu0 %3507
  %3509 = vrot.lane.b32.xlu0 %v2922, 32
  %v3510 = vpop.permute.xlu0 %3509
  %3511 = vrot.lane.b32.xlu0 %v2927, 32
  %v3512 = vpop.permute.xlu0 %3511
  %3513 = vrot.lane.b32.xlu0 %v2930, 32
  %v3514 = vpop.permute.xlu0 %3513
  %3515 = vrot.lane.b32.xlu0 %v2935, 32
  %v3516 = vpop.permute.xlu0 %3515
  %3517 = vrot.lane.b32.xlu0 %v2938, 32
  %v3518 = vpop.permute.xlu0 %3517
  %3551 = vrot.lane.b32.xlu0 %v3345, 48
  %v3552 = vpop.permute.xlu0 %3551
  %3553 = vrot.lane.b32.xlu0 %v3348, 48
  %v3554 = vpop.permute.xlu0 %3553
  %3555 = vrot.lane.b32.xlu0 %v3353, 48
  %v3556 = vpop.permute.xlu0 %3555
  %3557 = vrot.lane.b32.xlu0 %v3356, 48
  %v3558 = vpop.permute.xlu0 %3557
  %3559 = vrot.lane.b32.xlu0 %v3361, 48
  %v3560 = vpop.permute.xlu0 %3559
  %3561 = vrot.lane.b32.xlu0 %v3364, 48
  %v3562 = vpop.permute.xlu0 %3561
  %3563 = vrot.lane.b32.xlu0 %v3369, 48
  %v3564 = vpop.permute.xlu0 %3563
  %3565 = vrot.lane.b32.xlu0 %v3372, 48
  %v3566 = vpop.permute.xlu0 %3565
  %3567 = vrot.lane.b32.xlu0 %v3377, 48
  %v3568 = vpop.permute.xlu0 %3567
  %3569 = vrot.lane.b32.xlu0 %v3380, 48
  %v3570 = vpop.permute.xlu0 %3569
  %3571 = vrot.lane.b32.xlu0 %v3385, 48
  %v3572 = vpop.permute.xlu0 %3571
  %3573 = vrot.lane.b32.xlu0 %v3388, 48
  %v3574 = vpop.permute.xlu0 %3573
  %3575 = vrot.lane.b32.xlu0 %v3393, 48
  %v3576 = vpop.permute.xlu0 %3575
  %3577 = vrot.lane.b32.xlu0 %v3396, 48
  %v3578 = vpop.permute.xlu0 %3577
  %3579 = vrot.lane.b32.xlu0 %v3401, 48
  %v3580 = vpop.permute.xlu0 %3579
  %3581 = vrot.lane.b32.xlu0 %v3404, 48
  %v3582 = vpop.permute.xlu0 %3581
  %v3599 = vsel %vm1582, %v1939, %v3424
  %v3600 = vsel %vm1582, %v1942, %v3426
  %v3601 = vsel %vm1582, %v1947, %v3428
  %v3602 = vsel %vm1582, %v1950, %v3430
  %v3603 = vsel %vm1582, %v1955, %v3432
  %v3604 = vsel %vm1582, %v1958, %v3434
  %v3605 = vsel %vm1582, %v1963, %v3436
  %v3606 = vsel %vm1582, %v1966, %v3438
  %v3607 = vsel %vm1582, %v1971, %v3440
  %v3608 = vsel %vm1582, %v1974, %v3442
  %v3609 = vsel %vm1582, %v1979, %v3444
  %v3610 = vsel %vm1582, %v1982, %v3446
  %v3611 = vsel %vm1582, %v1987, %v3448
  %v3612 = vsel %vm1582, %v1990, %v3450
  %v3613 = vsel %vm1582, %v1995, %v3452
  %v3614 = vsel %vm1582, %v1998, %v3454
  %vm3615 = vcmask 261120
  %v3616 = vsel %vm3615, %v3599, %v3488
  %v3617 = vsel %vm3615, %v3600, %v3490
  %v3618 = vsel %vm3615, %v3601, %v3492
  %v3619 = vsel %vm3615, %v3602, %v3494
  %v3620 = vsel %vm3615, %v3603, %v3496
  %v3621 = vsel %vm3615, %v3604, %v3498
  %v3622 = vsel %vm3615, %v3605, %v3500
  %v3623 = vsel %vm3615, %v3606, %v3502
  %v3624 = vsel %vm3615, %v3607, %v3504
  %v3625 = vsel %vm3615, %v3608, %v3506
  %v3626 = vsel %vm3615, %v3609, %v3508
  %v3627 = vsel %vm3615, %v3610, %v3510
  %v3628 = vsel %vm3615, %v3611, %v3512
  %v3629 = vsel %vm3615, %v3612, %v3514
  %v3630 = vsel %vm3615, %v3613, %v3516
  %v3631 = vsel %vm3615, %v3614, %v3518
  %vm3632 = vcmask 392192
  %v3633 = vsel %vm3632, %v3616, %v3552
  %v3634 = vsel %vm3632, %v3617, %v3554
  %v3635 = vsel %vm3632, %v3618, %v3556
  %v3636 = vsel %vm3632, %v3619, %v3558
  %v3637 = vsel %vm3632, %v3620, %v3560
  %v3638 = vsel %vm3632, %v3621, %v3562
  %v3639 = vsel %vm3632, %v3622, %v3564
  %v3640 = vsel %vm3632, %v3623, %v3566
  %v3641 = vsel %vm3632, %v3624, %v3568
  %v3642 = vsel %vm3632, %v3625, %v3570
  %v3643 = vsel %vm3632, %v3626, %v3572
  %v3644 = vsel %vm3632, %v3627, %v3574
  %v3645 = vsel %vm3632, %v3628, %v3576
  %v3646 = vsel %vm3632, %v3629, %v3578
  %v3647 = vsel %vm3632, %v3630, %v3580
  %v3648 = vsel %vm3632, %v3631, %v3582
  %v3649 = vld [vmem:[%s5] sm:$0xf]
  %v3650 = vld [vmem:[%s5 + $0x4] sm:$0xf]
  %v3651 = vld [vmem:[%s5 + $0x8] sm:$0xf]
  %v3652 = vld [vmem:[%s5 + $0xc] sm:$0xf]
  %v3653 = vld [vmem:[%s5 + $0x10] sm:$0xf]
  %v3654 = vld [vmem:[%s5 + $0x14] sm:$0xf]
  %v3655 = vld [vmem:[%s5 + $0x18] sm:$0xf]
  %v3656 = vld [vmem:[%s5 + $0x1c] sm:$0xf]
  %v3657 = vpack.c.bf16 %v3634, %v3633
  %v3658 = vpack.c.bf16 %v3636, %v3635
  %v3659 = vpack.c.bf16 %v3638, %v3637
  %v3660 = vpack.c.bf16 %v3640, %v3639
  %v3661 = vpack.c.bf16 %v3642, %v3641
  %v3662 = vpack.c.bf16 %v3644, %v3643
  %v3663 = vpack.c.bf16 %v3646, %v3645
  %v3664 = vpack.c.bf16 %v3648, %v3647
  %v3673 = vunpack.c.l.b16 %v3649
  %v3674 = vunpack.c.l.b16 %v3650
  %v3675 = vunpack.c.l.b16 %v3651
  %v3676 = vunpack.c.l.b16 %v3652
  %v3677 = vunpack.c.l.b16 %v3653
  %v3678 = vunpack.c.l.b16 %v3654
  %v3679 = vunpack.c.l.b16 %v3655
  %v3680 = vunpack.c.l.b16 %v3656
  %v3681 = vpack.c.b16 %v3674, %v3673
  %v3682 = vpack.c.b16 %v3676, %v3675
  %v3683 = vpack.c.b16 %v3678, %v3677
  %v3684 = vpack.c.b16 %v3680, %v3679
  %v3690 = vsel %vm1104, %v3657, 0
  %v3693 = vsel %vm1104, %v3658, 0
  %v3696 = vsel %vm1104, %v3659, 0
  %v3699 = vsel %vm1104, %v3660, 0
  %v3702 = vsel %vm1104, %v3661, 0
  %v3705 = vsel %vm1104, %v3662, 0
  %v3708 = vsel %vm1104, %v3663, 0
  %v3711 = vsel %vm1104, %v3664, 0
  %3713 = vmatprep.subr.bf16.mxu0 0
  %3714 = vmatpush1.bf16.msra.mxu0 %v3681
  %3715 = vmatprep.subr.bf16.mxu0 0
  %3716 = vmatpush1.bf16.msra.mxu0 %v3682
  %3717 = vmatprep.subr.bf16.mxu0 0
  %3718 = vmatpush1.bf16.msra.mxu0 %v3683
  %3719 = vmatprep.subr.bf16.mxu0 0
  %3720 = vmatpush1.bf16.msra.mxu0 %v3684
  %3721 = vmatprep.subr.bf16.mxu0 0
  %3722 = vmatpush1.bf16.msra.mxu0 0
  %3723 = vmatprep.subr.bf16.mxu0 0
  %3724 = vmatpush1.bf16.msra.mxu0 0
  %3725 = vmatprep.subr.bf16.mxu0 0
  %3726 = vmatpush1.bf16.msra.mxu0 0
  %3727 = vmatprep.subr.bf16.mxu0 0
  %3728 = vmatpush1.bf16.msra.mxu0 0
  %3729 = vmatprep.subr.bf16.mxu0 0
  %3730 = vmatpush1.bf16.msra.mxu0 0
  %3731 = vmatprep.subr.bf16.mxu0 0
  %3732 = vmatpush1.bf16.msra.mxu0 0
  %3733 = vmatprep.subr.bf16.mxu0 0
  %3734 = vmatpush1.bf16.msra.mxu0 0
  %3735 = vmatprep.subr.bf16.mxu0 0
  %3736 = vmatpush1.bf16.msra.mxu0 0
  %3737 = vmatprep.subr.bf16.mxu0 0
  %3738 = vmatpush1.bf16.msra.mxu0 0
  %3739 = vmatprep.subr.bf16.mxu0 0
  %3740 = vmatpush1.bf16.msra.mxu0 0
  %3741 = vmatprep.subr.bf16.mxu0 0
  %3742 = vmatpush1.bf16.msra.mxu0 0
  %3743 = vmatprep.subr.bf16.mxu0 0
  %3744 = vmatpush1.bf16.msra.mxu0 0
  %3745 = vmatprep.mubr.bf16.mxu0 0
  %3746 = vmatmul.mubr.bf16.gmra.mrb[0].mxu0 %v3690
  %v3747 = vpop.f32.mrb[0].mxu0
  %v3748 = vadd.f32 0.0, %v3747
  %v3749 = vpop.f32.mrb[0].mxu0
  %v3750 = vpop.f32.mrb[0].mxu0
  %v3751 = vadd.f32 0.0, %v3750
  %v3752 = vpop.f32.mrb[0].mxu0
  %3753 = vmatprep.mubr.bf16.mxu0 0
  %3754 = vmatmul.mubr.bf16.gmra.mrb[0].mxu0 %v3693
  %v3755 = vpop.f32.mrb[0].mxu0
  %v3756 = vadd.f32 0.0, %v3755
  %v3757 = vpop.f32.mrb[0].mxu0
  %v3758 = vpop.f32.mrb[0].mxu0
  %v3759 = vadd.f32 0.0, %v3758
  %v3760 = vpop.f32.mrb[0].mxu0
  %3761 = vmatprep.mubr.bf16.mxu0 0
  %3762 = vmatmul.mubr.bf16.gmra.mrb[0].mxu0 %v3696
  %v3763 = vpop.f32.mrb[0].mxu0
  %v3764 = vadd.f32 0.0, %v3763
  %v3765 = vpop.f32.mrb[0].mxu0
  %v3766 = vpop.f32.mrb[0].mxu0
  %v3767 = vadd.f32 0.0, %v3766
  %v3768 = vpop.f32.mrb[0].mxu0
  %3769 = vmatprep.mubr.bf16.mxu0 0
  %3770 = vmatmul.mubr.bf16.gmra.mrb[0].mxu0 %v3699
  %v3771 = vpop.f32.mrb[0].mxu0
  %v3772 = vadd.f32 0.0, %v3771
  %v3773 = vpop.f32.mrb[0].mxu0
  %v3774 = vpop.f32.mrb[0].mxu0
  %v3775 = vadd.f32 0.0, %v3774
  %v3776 = vpop.f32.mrb[0].mxu0
  %3777 = vmatprep.mubr.bf16.mxu0 0
  %3778 = vmatmul.mubr.bf16.gmra.mrb[0].mxu0 %v3702
  %v3779 = vpop.f32.mrb[0].mxu0
  %v3780 = vadd.f32 0.0, %v3779
  %v3781 = vpop.f32.mrb[0].mxu0
  %v3782 = vpop.f32.mrb[0].mxu0
  %v3783 = vadd.f32 0.0, %v3782
  %v3784 = vpop.f32.mrb[0].mxu0
  %3785 = vmatprep.mubr.bf16.mxu0 0
  %3786 = vmatmul.mubr.bf16.gmra.mrb[0].mxu0 %v3705
  %v3787 = vpop.f32.mrb[0].mxu0
  %v3788 = vadd.f32 0.0, %v3787
  %v3789 = vpop.f32.mrb[0].mxu0
  %v3790 = vpop.f32.mrb[0].mxu0
  %v3791 = vadd.f32 0.0, %v3790
  %v3792 = vpop.f32.mrb[0].mxu0
  %3793 = vmatprep.mubr.bf16.mxu0 0
  %3794 = vmatmul.mubr.bf16.gmra.mrb[0].mxu0 %v3708
  %v3795 = vpop.f32.mrb[0].mxu0
  %v3796 = vadd.f32 0.0, %v3795
  %v3797 = vpop.f32.mrb[0].mxu0
  %v3798 = vpop.f32.mrb[0].mxu0
  %v3799 = vadd.f32 0.0, %v3798
  %v3800 = vpop.f32.mrb[0].mxu0
  %3801 = vmatprep.mubr.bf16.mxu0 0
  %3802 = vmatmul.mubr.bf16.gmra.mrb[0].mxu0 %v3711
  %v3803 = vpop.f32.mrb[0].mxu0
  %v3804 = vadd.f32 0.0, %v3803
  %v3805 = vpop.f32.mrb[0].mxu0
  %v3806 = vpop.f32.mrb[0].mxu0
  %v3807 = vadd.f32 0.0, %v3806
  %v3808 = vpop.f32.mrb[0].mxu0
  %3809 = vdwg.mxu0
  %v3810 = vadd.f32 %v962, %v3748
  %v3811 = vadd.f32 %v965, %v3751
  %v3812 = vadd.f32 %v970, %v3756
  %v3813 = vadd.f32 %v973, %v3759
  %v3814 = vadd.f32 %v978, %v3764
  %v3815 = vadd.f32 %v981, %v3767
  %v3816 = vadd.f32 %v986, %v3772
  %v3817 = vadd.f32 %v989, %v3775
  %v3818 = vadd.f32 %v994, %v3780
  %v3819 = vadd.f32 %v997, %v3783
  %v3820 = vadd.f32 %v1002, %v3788
  %v3821 = vadd.f32 %v1005, %v3791
  %v3822 = vadd.f32 %v1010, %v3796
  %v3823 = vadd.f32 %v1013, %v3799
  %v3824 = vadd.f32 %v1018, %v3804
  %v3825 = vadd.f32 %v1021, %v3807
  %v3826 = vadd.f32 %v3810, %v1100
  %v3827 = vadd.f32 %v3811, %v1100
  %v3828 = vadd.f32 %v3812, %v1100
  %v3829 = vadd.f32 %v3813, %v1100
  %v3830 = vadd.f32 %v3814, %v1100
  %v3831 = vadd.f32 %v3815, %v1100
  %v3832 = vadd.f32 %v3816, %v1100
  %v3833 = vadd.f32 %v3817, %v1100
  %v3834 = vadd.f32 %v3818, %v1100
  %v3835 = vadd.f32 %v3819, %v1100
  %v3836 = vadd.f32 %v3820, %v1100
  %v3837 = vadd.f32 %v3821, %v1100
  %v3838 = vadd.f32 %v3822, %v1100
  %v3839 = vadd.f32 %v3823, %v1100
  %v3840 = vadd.f32 %v3824, %v1100
  %v3841 = vadd.f32 %v3825, %v1100
  %v3842 = vsel %vm1104, %v3826, 0.0
  %3843 = vadd.xlane.f32.xlu0 %v3842
  %v3844 = vpop.xlane.xlu0 %3843
  %v3845 = vsel %vm1104, %v3827, 0.0
  %3846 = vadd.xlane.f32.xlu0 %v3845
  %v3847 = vpop.xlane.xlu0 %3846
  %v3848 = vsel %vm1104, %v3828, 0.0
  %3849 = vadd.xlane.f32.xlu0 %v3848
  %v3850 = vpop.xlane.xlu0 %3849
  %v3851 = vsel %vm1104, %v3829, 0.0
  %3852 = vadd.xlane.f32.xlu0 %v3851
  %v3853 = vpop.xlane.xlu0 %3852
  %v3854 = vsel %vm1104, %v3830, 0.0
  %3855 = vadd.xlane.f32.xlu0 %v3854
  %v3856 = vpop.xlane.xlu0 %3855
  %v3857 = vsel %vm1104, %v3831, 0.0
  %3858 = vadd.xlane.f32.xlu0 %v3857
  %v3859 = vpop.xlane.xlu0 %3858
  %v3860 = vsel %vm1104, %v3832, 0.0
  %3861 = vadd.xlane.f32.xlu0 %v3860
  %v3862 = vpop.xlane.xlu0 %3861
  %v3863 = vsel %vm1104, %v3833, 0.0
  %3864 = vadd.xlane.f32.xlu0 %v3863
  %v3865 = vpop.xlane.xlu0 %3864
  %v3866 = vsel %vm1104, %v3834, 0.0
  %3867 = vadd.xlane.f32.xlu0 %v3866
  %v3868 = vpop.xlane.xlu0 %3867
  %v3869 = vsel %vm1104, %v3835, 0.0
  %3870 = vadd.xlane.f32.xlu0 %v3869
  %v3871 = vpop.xlane.xlu0 %3870
  %v3872 = vsel %vm1104, %v3836, 0.0
  %3873 = vadd.xlane.f32.xlu0 %v3872
  %v3874 = vpop.xlane.xlu0 %3873
  %v3875 = vsel %vm1104, %v3837, 0.0
  %3876 = vadd.xlane.f32.xlu0 %v3875
  %v3877 = vpop.xlane.xlu0 %3876
  %v3878 = vsel %vm1104, %v3838, 0.0
  %3879 = vadd.xlane.f32.xlu0 %v3878
  %v3880 = vpop.xlane.xlu0 %3879
  %v3881 = vsel %vm1104, %v3839, 0.0
  %3882 = vadd.xlane.f32.xlu0 %v3881
  %v3883 = vpop.xlane.xlu0 %3882
  %v3884 = vsel %vm1104, %v3840, 0.0
  %3885 = vadd.xlane.f32.xlu0 %v3884
  %v3886 = vpop.xlane.xlu0 %3885
  %v3887 = vsel %vm1104, %v3841, 0.0
  %3888 = vadd.xlane.f32.xlu0 %v3887
  %v3889 = vpop.xlane.xlu0 %3888
  %v3890 = vmul.f32 %v3844, %v1153
  %v3891 = vmul.f32 %v3847, %v1153
  %v3892 = vmul.f32 %v3850, %v1153
  %v3893 = vmul.f32 %v3853, %v1153
  %v3894 = vmul.f32 %v3856, %v1153
  %v3895 = vmul.f32 %v3859, %v1153
  %v3896 = vmul.f32 %v3862, %v1153
  %v3897 = vmul.f32 %v3865, %v1153
  %v3898 = vmul.f32 %v3868, %v1153
  %v3899 = vmul.f32 %v3871, %v1153
  %v3900 = vmul.f32 %v3874, %v1153
  %v3901 = vmul.f32 %v3877, %v1153
  %v3902 = vmul.f32 %v3880, %v1153
  %v3903 = vmul.f32 %v3883, %v1153
  %v3904 = vmul.f32 %v3886, %v1153
  %v3905 = vmul.f32 %v3889, %v1153
  %v3906 = vsub.f32 %v3826, %v3890
  %v3907 = vsub.f32 %v3827, %v3891
  %v3908 = vsub.f32 %v3828, %v3892
  %v3909 = vsub.f32 %v3829, %v3893
  %v3910 = vsub.f32 %v3830, %v3894
  %v3911 = vsub.f32 %v3831, %v3895
  %v3912 = vsub.f32 %v3832, %v3896
  %v3913 = vsub.f32 %v3833, %v3897
  %v3914 = vsub.f32 %v3834, %v3898
  %v3915 = vsub.f32 %v3835, %v3899
  %v3916 = vsub.f32 %v3836, %v3900
  %v3917 = vsub.f32 %v3837, %v3901
  %v3918 = vsub.f32 %v3838, %v3902
  %v3919 = vsub.f32 %v3839, %v3903
  %v3920 = vsub.f32 %v3840, %v3904
  %v3921 = vsub.f32 %v3841, %v3905
  %v3922 = vmul.f32 %v3906, %v3906
  %v3923 = vmul.f32 %v3907, %v3907
  %v3924 = vmul.f32 %v3908, %v3908
  %v3925 = vmul.f32 %v3909, %v3909
  %v3926 = vmul.f32 %v3910, %v3910
  %v3927 = vmul.f32 %v3911, %v3911
  %v3928 = vmul.f32 %v3912, %v3912
  %v3929 = vmul.f32 %v3913, %v3913
  %v3930 = vmul.f32 %v3914, %v3914
  %v3931 = vmul.f32 %v3915, %v3915
  %v3932 = vmul.f32 %v3916, %v3916
  %v3933 = vmul.f32 %v3917, %v3917
  %v3934 = vmul.f32 %v3918, %v3918
  %v3935 = vmul.f32 %v3919, %v3919
  %v3936 = vmul.f32 %v3920, %v3920
  %v3937 = vmul.f32 %v3921, %v3921
  %v3938 = vsel %vm1104, %v3922, 0.0
  %3939 = vadd.xlane.f32.xlu0 %v3938
  %v3940 = vpop.xlane.xlu0 %3939
  %v3941 = vsel %vm1104, %v3923, 0.0
  %3942 = vadd.xlane.f32.xlu0 %v3941
  %v3943 = vpop.xlane.xlu0 %3942
  %v3944 = vsel %vm1104, %v3924, 0.0
  %3945 = vadd.xlane.f32.xlu0 %v3944
  %v3946 = vpop.xlane.xlu0 %3945
  %v3947 = vsel %vm1104, %v3925, 0.0
  %3948 = vadd.xlane.f32.xlu0 %v3947
  %v3949 = vpop.xlane.xlu0 %3948
  %v3950 = vsel %vm1104, %v3926, 0.0
  %3951 = vadd.xlane.f32.xlu0 %v3950
  %v3952 = vpop.xlane.xlu0 %3951
  %v3953 = vsel %vm1104, %v3927, 0.0
  %3954 = vadd.xlane.f32.xlu0 %v3953
  %v3955 = vpop.xlane.xlu0 %3954
  %v3956 = vsel %vm1104, %v3928, 0.0
  %3957 = vadd.xlane.f32.xlu0 %v3956
  %v3958 = vpop.xlane.xlu0 %3957
  %v3959 = vsel %vm1104, %v3929, 0.0
  %3960 = vadd.xlane.f32.xlu0 %v3959
  %v3961 = vpop.xlane.xlu0 %3960
  %v3962 = vsel %vm1104, %v3930, 0.0
  %3963 = vadd.xlane.f32.xlu0 %v3962
  %v3964 = vpop.xlane.xlu0 %3963
  %v3965 = vsel %vm1104, %v3931, 0.0
  %3966 = vadd.xlane.f32.xlu0 %v3965
  %v3967 = vpop.xlane.xlu0 %3966
  %v3968 = vsel %vm1104, %v3932, 0.0
  %3969 = vadd.xlane.f32.xlu0 %v3968
  %v3970 = vpop.xlane.xlu0 %3969
  %v3971 = vsel %vm1104, %v3933, 0.0
  %3972 = vadd.xlane.f32.xlu0 %v3971
  %v3973 = vpop.xlane.xlu0 %3972
  %v3974 = vsel %vm1104, %v3934, 0.0
  %3975 = vadd.xlane.f32.xlu0 %v3974
  %v3976 = vpop.xlane.xlu0 %3975
  %v3977 = vsel %vm1104, %v3935, 0.0
  %3978 = vadd.xlane.f32.xlu0 %v3977
  %v3979 = vpop.xlane.xlu0 %3978
  %v3980 = vsel %vm1104, %v3936, 0.0
  %3981 = vadd.xlane.f32.xlu0 %v3980
  %v3982 = vpop.xlane.xlu0 %3981
  %v3983 = vsel %vm1104, %v3937, 0.0
  %3984 = vadd.xlane.f32.xlu0 %v3983
  %v3985 = vpop.xlane.xlu0 %3984
  %v3986 = vmul.f32 %v3940, %v1153
  %v3987 = vmul.f32 %v3943, %v1153
  %v3988 = vmul.f32 %v3946, %v1153
  %v3989 = vmul.f32 %v3949, %v1153
  %v3990 = vmul.f32 %v3952, %v1153
  %v3991 = vmul.f32 %v3955, %v1153
  %v3992 = vmul.f32 %v3958, %v1153
  %v3993 = vmul.f32 %v3961, %v1153
  %v3994 = vmul.f32 %v3964, %v1153
  %v3995 = vmul.f32 %v3967, %v1153
  %v3996 = vmul.f32 %v3970, %v1153
  %v3997 = vmul.f32 %v3973, %v1153
  %v3998 = vmul.f32 %v3976, %v1153
  %v3999 = vmul.f32 %v3979, %v1153
  %v4000 = vmul.f32 %v3982, %v1153
  %v4001 = vmul.f32 %v3985, %v1153
  %v4002 = vadd.f32 %v3986, 1e-06
  %v4003 = vadd.f32 %v3987, 1e-06
  %v4004 = vadd.f32 %v3988, 1e-06
  %v4005 = vadd.f32 %v3989, 1e-06
  %v4006 = vadd.f32 %v3990, 1e-06
  %v4007 = vadd.f32 %v3991, 1e-06
  %v4008 = vadd.f32 %v3992, 1e-06
  %v4009 = vadd.f32 %v3993, 1e-06
  %v4010 = vadd.f32 %v3994, 1e-06
  %v4011 = vadd.f32 %v3995, 1e-06
  %v4012 = vadd.f32 %v3996, 1e-06
  %v4013 = vadd.f32 %v3997, 1e-06
  %v4014 = vadd.f32 %v3998, 1e-06
  %v4015 = vadd.f32 %v3999, 1e-06
  %v4016 = vadd.f32 %v4000, 1e-06
  %v4017 = vadd.f32 %v4001, 1e-06
  %v4018 = vrsqrt.pop %v4002
  %v4019 = vrsqrt.pop %v4003
  %v4020 = vrsqrt.pop %v4004
  %v4021 = vrsqrt.pop %v4005
  %v4022 = vrsqrt.pop %v4006
  %v4023 = vrsqrt.pop %v4007
  %v4024 = vrsqrt.pop %v4008
  %v4025 = vrsqrt.pop %v4009
  %v4026 = vrsqrt.pop %v4010
  %v4027 = vrsqrt.pop %v4011
  %v4028 = vrsqrt.pop %v4012
  %v4029 = vrsqrt.pop %v4013
  %v4030 = vrsqrt.pop %v4014
  %v4031 = vrsqrt.pop %v4015
  %v4032 = vrsqrt.pop %v4016
  %v4033 = vrsqrt.pop %v4017
  %v4034 = vmul.f32 %v3906, %v4018
  %v4035 = vmul.f32 %v3907, %v4019
  %v4036 = vmul.f32 %v3908, %v4020
  %v4037 = vmul.f32 %v3909, %v4021
  %v4038 = vmul.f32 %v3910, %v4022
  %v4039 = vmul.f32 %v3911, %v4023
  %v4040 = vmul.f32 %v3912, %v4024
  %v4041 = vmul.f32 %v3913, %v4025
  %v4042 = vmul.f32 %v3914, %v4026
  %v4043 = vmul.f32 %v3915, %v4027
  %v4044 = vmul.f32 %v3916, %v4028
  %v4045 = vmul.f32 %v3917, %v4029
  %v4046 = vmul.f32 %v3918, %v4030
  %v4047 = vmul.f32 %v3919, %v4031
  %v4048 = vmul.f32 %v3920, %v4032
  %v4049 = vmul.f32 %v3921, %v4033
  %v4050 = vmul.f32 %v4034, %v1096
  %v4051 = vmul.f32 %v4035, %v1096
  %v4052 = vmul.f32 %v4036, %v1096
  %v4053 = vmul.f32 %v4037, %v1096
  %v4054 = vmul.f32 %v4038, %v1096
  %v4055 = vmul.f32 %v4039, %v1096
  %v4056 = vmul.f32 %v4040, %v1096
  %v4057 = vmul.f32 %v4041, %v1096
  %v4058 = vmul.f32 %v4042, %v1096
  %v4059 = vmul.f32 %v4043, %v1096
  %v4060 = vmul.f32 %v4044, %v1096
  %v4061 = vmul.f32 %v4045, %v1096
  %v4062 = vmul.f32 %v4046, %v1096
  %v4063 = vmul.f32 %v4047, %v1096
  %v4064 = vmul.f32 %v4048, %v1096
  %v4065 = vmul.f32 %v4049, %v1096
  %v4066 = vadd.f32 %v4050, %v1097
  %v4067 = vadd.f32 %v4051, %v1097
  %v4068 = vadd.f32 %v4052, %v1097
  %v4069 = vadd.f32 %v4053, %v1097
  %v4070 = vadd.f32 %v4054, %v1097
  %v4071 = vadd.f32 %v4055, %v1097
  %v4072 = vadd.f32 %v4056, %v1097
  %v4073 = vadd.f32 %v4057, %v1097
  %v4074 = vadd.f32 %v4058, %v1097
  %v4075 = vadd.f32 %v4059, %v1097
  %v4076 = vadd.f32 %v4060, %v1097
  %v4077 = vadd.f32 %v4061, %v1097
  %v4078 = vadd.f32 %v4062, %v1097
  %v4079 = vadd.f32 %v4063, %v1097
  %v4080 = vadd.f32 %v4064, %v1097
  %v4081 = vadd.f32 %v4065, %v1097
  %v4082 = vld [vmem:[%s6] sm:$0xff]
  %v4083 = vld [vmem:[%s6 + $0x8] sm:$0xff]
  %v4084 = vld [vmem:[%s6 + $0x10] sm:$0xff]
  %v4085 = vld [vmem:[%s6 + $0x18] sm:$0xff]
  %v4086 = vld [vmem:[%s6 + $0x20] sm:$0xff]
  %v4087 = vld [vmem:[%s6 + $0x28] sm:$0xff]
  %v4088 = vld [vmem:[%s6 + $0x30] sm:$0xff]
  %v4089 = vld [vmem:[%s6 + $0x38] sm:$0xff]
  %v4090 = vpack.c.bf16 %v4067, %v4066
  %v4091 = vpack.c.bf16 %v4069, %v4068
  %v4092 = vpack.c.bf16 %v4071, %v4070
  %v4093 = vpack.c.bf16 %v4073, %v4072
  %v4094 = vpack.c.bf16 %v4075, %v4074
  %v4095 = vpack.c.bf16 %v4077, %v4076
  %v4096 = vpack.c.bf16 %v4079, %v4078
  %v4097 = vpack.c.bf16 %v4081, %v4080
  %v4099 = vlaneseq
  %v4100 = vshrl.u32 %v4099, 7
  %v4101 = vsub.s32 0, %v4100
  %v4102 = vrot.slane %v1102, %v4101
  %v4103 = vlaneseq
  %v4104 = vshrl.u32 %v4103, 7
  %v4105 = vsub.s32 1, %v4104
  %v4106 = vrot.slane %v1102, %v4105
  %v4117 = vunpack.c.l.b16 %v4082
  %v4118 = vunpack.c.h.b16 %v4082
  %v4119 = vunpack.c.l.b16 %v4083
  %v4120 = vunpack.c.h.b16 %v4083
  %v4121 = vunpack.c.l.b16 %v4084
  %v4122 = vunpack.c.h.b16 %v4084
  %v4123 = vunpack.c.l.b16 %v4085
  %v4124 = vunpack.c.h.b16 %v4085
  %v4125 = vunpack.c.l.b16 %v4086
  %v4126 = vunpack.c.h.b16 %v4086
  %v4127 = vunpack.c.l.b16 %v4087
  %v4128 = vunpack.c.h.b16 %v4087
  %v4129 = vunpack.c.l.b16 %v4088
  %v4130 = vunpack.c.h.b16 %v4088
  %v4131 = vunpack.c.l.b16 %v4089
  %v4132 = vunpack.c.h.b16 %v4089
  %v4133 = vpack.c.b16 %v4119, %v4117
  %v4134 = vpack.c.b16 %v4120, %v4118
  %v4135 = vpack.c.b16 %v4123, %v4121
  %v4136 = vpack.c.b16 %v4124, %v4122
  %v4137 = vpack.c.b16 %v4127, %v4125
  %v4138 = vpack.c.b16 %v4128, %v4126
  %v4139 = vpack.c.b16 %v4131, %v4129
  %v4140 = vpack.c.b16 %v4132, %v4130
  %v4150 = vsel %vm1104, %v4090, 0
  %v4153 = vsel %vm1104, %v4091, 0
  %v4156 = vsel %vm1104, %v4092, 0
  %v4159 = vsel %vm1104, %v4093, 0
  %v4162 = vsel %vm1104, %v4094, 0
  %v4165 = vsel %vm1104, %v4095, 0
  %v4168 = vsel %vm1104, %v4096, 0
  %v4171 = vsel %vm1104, %v4097, 0
  %4173 = vmatprep.subr.bf16.mxu0 %v4134
  %4174 = vmatpush1.bf16.msra.mxu0 %v4133
  %4175 = vmatprep.subr.bf16.mxu0 %v4136
  %4176 = vmatpush1.bf16.msra.mxu0 %v4135
  %4177 = vmatprep.subr.bf16.mxu0 %v4138
  %4178 = vmatpush1.bf16.msra.mxu0 %v4137
  %4179 = vmatprep.subr.bf16.mxu0 %v4140
  %4180 = vmatpush1.bf16.msra.mxu0 %v4139
  %4181 = vmatprep.subr.bf16.mxu0 0
  %4182 = vmatpush1.bf16.msra.mxu0 0
  %4183 = vmatprep.subr.bf16.mxu0 0
  %4184 = vmatpush1.bf16.msra.mxu0 0
  %4185 = vmatprep.subr.bf16.mxu0 0
  %4186 = vmatpush1.bf16.msra.mxu0 0
  %4187 = vmatprep.subr.bf16.mxu0 0
  %4188 = vmatpush1.bf16.msra.mxu0 0
  %4189 = vmatprep.subr.bf16.mxu0 0
  %4190 = vmatpush1.bf16.msra.mxu0 0
  %4191 = vmatprep.subr.bf16.mxu0 0
  %4192 = vmatpush1.bf16.msra.mxu0 0
  %4193 = vmatprep.subr.bf16.mxu0 0
  %4194 = vmatpush1.bf16.msra.mxu0 0
  %4195 = vmatprep.subr.bf16.mxu0 0
  %4196 = vmatpush1.bf16.msra.mxu0 0
  %4197 = vmatprep.subr.bf16.mxu0 0
  %4198 = vmatpush1.bf16.msra.mxu0 0
  %4199 = vmatprep.subr.bf16.mxu0 0
  %4200 = vmatpush1.bf16.msra.mxu0 0
  %4201 = vmatprep.subr.bf16.mxu0 0
  %4202 = vmatpush1.bf16.msra.mxu0 0
  %4203 = vmatprep.subr.bf16.mxu0 0
  %4204 = vmatpush1.bf16.msra.mxu0 0
  %4205 = vmatprep.mubr.bf16.mxu0 0
  %4206 = vmatmul.mubr.bf16.gmra.mrb[0].mxu0 %v4150
  %v4207 = vpop.f32.mrb[0].mxu0
  %v4208 = vadd.f32 %v4102, %v4207
  %v4209 = vpop.f32.mrb[0].mxu0
  %v4210 = vadd.f32 %v4106, %v4209
  %v4211 = vpop.f32.mrb[0].mxu0
  %v4212 = vadd.f32 %v4102, %v4211
  %v4213 = vpop.f32.mrb[0].mxu0
  %v4214 = vadd.f32 %v4106, %v4213
  %4215 = vmatprep.mubr.bf16.mxu0 0
  %4216 = vmatmul.mubr.bf16.gmra.mrb[0].mxu0 %v4153
  %v4217 = vpop.f32.mrb[0].mxu0
  %v4218 = vadd.f32 %v4102, %v4217
  %v4219 = vpop.f32.mrb[0].mxu0
  %v4220 = vadd.f32 %v4106, %v4219
  %v4221 = vpop.f32.mrb[0].mxu0
  %v4222 = vadd.f32 %v4102, %v4221
  %v4223 = vpop.f32.mrb[0].mxu0
  %v4224 = vadd.f32 %v4106, %v4223
  %4225 = vmatprep.mubr.bf16.mxu0 0
  %4226 = vmatmul.mubr.bf16.gmra.mrb[0].mxu0 %v4156
  %v4227 = vpop.f32.mrb[0].mxu0
  %v4228 = vadd.f32 %v4102, %v4227
  %v4229 = vpop.f32.mrb[0].mxu0
  %v4230 = vadd.f32 %v4106, %v4229
  %v4231 = vpop.f32.mrb[0].mxu0
  %v4232 = vadd.f32 %v4102, %v4231
  %v4233 = vpop.f32.mrb[0].mxu0
  %v4234 = vadd.f32 %v4106, %v4233
  %4235 = vmatprep.mubr.bf16.mxu0 0
  %4236 = vmatmul.mubr.bf16.gmra.mrb[0].mxu0 %v4159
  %v4237 = vpop.f32.mrb[0].mxu0
  %v4238 = vadd.f32 %v4102, %v4237
  %v4239 = vpop.f32.mrb[0].mxu0
  %v4240 = vadd.f32 %v4106, %v4239
  %v4241 = vpop.f32.mrb[0].mxu0
  %v4242 = vadd.f32 %v4102, %v4241
  %v4243 = vpop.f32.mrb[0].mxu0
  %v4244 = vadd.f32 %v4106, %v4243
  %4245 = vmatprep.mubr.bf16.mxu0 0
  %4246 = vmatmul.mubr.bf16.gmra.mrb[0].mxu0 %v4162
  %v4247 = vpop.f32.mrb[0].mxu0
  %v4248 = vadd.f32 %v4102, %v4247
  %v4249 = vpop.f32.mrb[0].mxu0
  %v4250 = vadd.f32 %v4106, %v4249
  %v4251 = vpop.f32.mrb[0].mxu0
  %v4252 = vadd.f32 %v4102, %v4251
  %v4253 = vpop.f32.mrb[0].mxu0
  %v4254 = vadd.f32 %v4106, %v4253
  %4255 = vmatprep.mubr.bf16.mxu0 0
  %4256 = vmatmul.mubr.bf16.gmra.mrb[0].mxu0 %v4165
  %v4257 = vpop.f32.mrb[0].mxu0
  %v4258 = vadd.f32 %v4102, %v4257
  %v4259 = vpop.f32.mrb[0].mxu0
  %v4260 = vadd.f32 %v4106, %v4259
  %v4261 = vpop.f32.mrb[0].mxu0
  %v4262 = vadd.f32 %v4102, %v4261
  %v4263 = vpop.f32.mrb[0].mxu0
  %v4264 = vadd.f32 %v4106, %v4263
  %4265 = vmatprep.mubr.bf16.mxu0 0
  %4266 = vmatmul.mubr.bf16.gmra.mrb[0].mxu0 %v4168
  %v4267 = vpop.f32.mrb[0].mxu0
  %v4268 = vadd.f32 %v4102, %v4267
  %v4269 = vpop.f32.mrb[0].mxu0
  %v4270 = vadd.f32 %v4106, %v4269
  %v4271 = vpop.f32.mrb[0].mxu0
  %v4272 = vadd.f32 %v4102, %v4271
  %v4273 = vpop.f32.mrb[0].mxu0
  %v4274 = vadd.f32 %v4106, %v4273
  %4275 = vmatprep.mubr.bf16.mxu0 0
  %4276 = vmatmul.mubr.bf16.gmra.mrb[0].mxu0 %v4171
  %v4277 = vpop.f32.mrb[0].mxu0
  %v4278 = vadd.f32 %v4102, %v4277
  %v4279 = vpop.f32.mrb[0].mxu0
  %v4280 = vadd.f32 %v4106, %v4279
  %v4281 = vpop.f32.mrb[0].mxu0
  %v4282 = vadd.f32 %v4102, %v4281
  %v4283 = vpop.f32.mrb[0].mxu0
  %v4284 = vadd.f32 %v4106, %v4283
  %4285 = vdwg.mxu0
  %v4286 = vmul.f32 %v4208, 0.5
  %v4287 = vmul.f32 %v4210, 0.5
  %v4288 = vmul.f32 %v4212, 0.5
  %v4289 = vmul.f32 %v4214, 0.5
  %v4290 = vmul.f32 %v4218, 0.5
  %v4291 = vmul.f32 %v4220, 0.5
  %v4292 = vmul.f32 %v4222, 0.5
  %v4293 = vmul.f32 %v4224, 0.5
  %v4294 = vmul.f32 %v4228, 0.5
  %v4295 = vmul.f32 %v4230, 0.5
  %v4296 = vmul.f32 %v4232, 0.5
  %v4297 = vmul.f32 %v4234, 0.5
  %v4298 = vmul.f32 %v4238, 0.5
  %v4299 = vmul.f32 %v4240, 0.5
  %v4300 = vmul.f32 %v4242, 0.5
  %v4301 = vmul.f32 %v4244, 0.5
  %v4302 = vmul.f32 %v4248, 0.5
  %v4303 = vmul.f32 %v4250, 0.5
  %v4304 = vmul.f32 %v4252, 0.5
  %v4305 = vmul.f32 %v4254, 0.5
  %v4306 = vmul.f32 %v4258, 0.5
  %v4307 = vmul.f32 %v4260, 0.5
  %v4308 = vmul.f32 %v4262, 0.5
  %v4309 = vmul.f32 %v4264, 0.5
  %v4310 = vmul.f32 %v4268, 0.5
  %v4311 = vmul.f32 %v4270, 0.5
  %v4312 = vmul.f32 %v4272, 0.5
  %v4313 = vmul.f32 %v4274, 0.5
  %v4314 = vmul.f32 %v4278, 0.5
  %v4315 = vmul.f32 %v4280, 0.5
  %v4316 = vmul.f32 %v4282, 0.5
  %v4317 = vmul.f32 %v4284, 0.5
  %v4318 = vmul.f32 %v4208, 0.70710677
  %v4319 = vmul.f32 %v4210, 0.70710677
  %v4320 = vmul.f32 %v4212, 0.70710677
  %v4321 = vmul.f32 %v4214, 0.70710677
  %v4322 = vmul.f32 %v4218, 0.70710677
  %v4323 = vmul.f32 %v4220, 0.70710677
  %v4324 = vmul.f32 %v4222, 0.70710677
  %v4325 = vmul.f32 %v4224, 0.70710677
  %v4326 = vmul.f32 %v4228, 0.70710677
  %v4327 = vmul.f32 %v4230, 0.70710677
  %v4328 = vmul.f32 %v4232, 0.70710677
  %v4329 = vmul.f32 %v4234, 0.70710677
  %v4330 = vmul.f32 %v4238, 0.70710677
  %v4331 = vmul.f32 %v4240, 0.70710677
  %v4332 = vmul.f32 %v4242, 0.70710677
  %v4333 = vmul.f32 %v4244, 0.70710677
  %v4334 = vmul.f32 %v4248, 0.70710677
  %v4335 = vmul.f32 %v4250, 0.70710677
  %v4336 = vmul.f32 %v4252, 0.70710677
  %v4337 = vmul.f32 %v4254, 0.70710677
  %v4338 = vmul.f32 %v4258, 0.70710677
  %v4339 = vmul.f32 %v4260, 0.70710677
  %v4340 = vmul.f32 %v4262, 0.70710677
  %v4341 = vmul.f32 %v4264, 0.70710677
  %v4342 = vmul.f32 %v4268, 0.70710677
  %v4343 = vmul.f32 %v4270, 0.70710677
  %v4344 = vmul.f32 %v4272, 0.70710677
  %v4345 = vmul.f32 %v4274, 0.70710677
  %v4346 = vmul.f32 %v4278, 0.70710677
  %v4347 = vmul.f32 %v4280, 0.70710677
  %v4348 = vmul.f32 %v4282, 0.70710677
  %v4349 = vmul.f32 %v4284, 0.70710677
  %v4350 = verf.f32.pop %v4318
  %v4351 = verf.f32.pop %v4319
  %v4352 = verf.f32.pop %v4320
  %v4353 = verf.f32.pop %v4321
  %v4354 = verf.f32.pop %v4322
  %v4355 = verf.f32.pop %v4323
  %v4356 = verf.f32.pop %v4324
  %v4357 = verf.f32.pop %v4325
  %v4358 = verf.f32.pop %v4326
  %v4359 = verf.f32.pop %v4327
  %v4360 = verf.f32.pop %v4328
  %v4361 = verf.f32.pop %v4329
  %v4362 = verf.f32.pop %v4330
  %v4363 = verf.f32.pop %v4331
  %v4364 = verf.f32.pop %v4332
  %v4365 = verf.f32.pop %v4333
  %v4366 = verf.f32.pop %v4334
  %v4367 = verf.f32.pop %v4335
  %v4368 = verf.f32.pop %v4336
  %v4369 = verf.f32.pop %v4337
  %v4370 = verf.f32.pop %v4338
  %v4371 = verf.f32.pop %v4339
  %v4372 = verf.f32.pop %v4340
  %v4373 = verf.f32.pop %v4341
  %v4374 = verf.f32.pop %v4342
  %v4375 = verf.f32.pop %v4343
  %v4376 = verf.f32.pop %v4344
  %v4377 = verf.f32.pop %v4345
  %v4378 = verf.f32.pop %v4346
  %v4379 = verf.f32.pop %v4347
  %v4380 = verf.f32.pop %v4348
  %v4381 = verf.f32.pop %v4349
  %v4382 = vadd.f32 %v4350, 1.0
  %v4383 = vadd.f32 %v4351, 1.0
  %v4384 = vadd.f32 %v4352, 1.0
  %v4385 = vadd.f32 %v4353, 1.0
  %v4386 = vadd.f32 %v4354, 1.0
  %v4387 = vadd.f32 %v4355, 1.0
  %v4388 = vadd.f32 %v4356, 1.0
  %v4389 = vadd.f32 %v4357, 1.0
  %v4390 = vadd.f32 %v4358, 1.0
  %v4391 = vadd.f32 %v4359, 1.0
  %v4392 = vadd.f32 %v4360, 1.0
  %v4393 = vadd.f32 %v4361, 1.0
  %v4394 = vadd.f32 %v4362, 1.0
  %v4395 = vadd.f32 %v4363, 1.0
  %v4396 = vadd.f32 %v4364, 1.0
  %v4397 = vadd.f32 %v4365, 1.0
  %v4398 = vadd.f32 %v4366, 1.0
  %v4399 = vadd.f32 %v4367, 1.0
  %v4400 = vadd.f32 %v4368, 1.0
  %v4401 = vadd.f32 %v4369, 1.0
  %v4402 = vadd.f32 %v4370, 1.0
  %v4403 = vadd.f32 %v4371, 1.0
  %v4404 = vadd.f32 %v4372, 1.0
  %v4405 = vadd.f32 %v4373, 1.0
  %v4406 = vadd.f32 %v4374, 1.0
  %v4407 = vadd.f32 %v4375, 1.0
  %v4408 = vadd.f32 %v4376, 1.0
  %v4409 = vadd.f32 %v4377, 1.0
  %v4410 = vadd.f32 %v4378, 1.0
  %v4411 = vadd.f32 %v4379, 1.0
  %v4412 = vadd.f32 %v4380, 1.0
  %v4413 = vadd.f32 %v4381, 1.0
  %v4414 = vmul.f32 %v4286, %v4382
  %v4415 = vmul.f32 %v4287, %v4383
  %v4416 = vmul.f32 %v4288, %v4384
  %v4417 = vmul.f32 %v4289, %v4385
  %v4418 = vmul.f32 %v4290, %v4386
  %v4419 = vmul.f32 %v4291, %v4387
  %v4420 = vmul.f32 %v4292, %v4388
  %v4421 = vmul.f32 %v4293, %v4389
  %v4422 = vmul.f32 %v4294, %v4390
  %v4423 = vmul.f32 %v4295, %v4391
  %v4424 = vmul.f32 %v4296, %v4392
  %v4425 = vmul.f32 %v4297, %v4393
  %v4426 = vmul.f32 %v4298, %v4394
  %v4427 = vmul.f32 %v4299, %v4395
  %v4428 = vmul.f32 %v4300, %v4396
  %v4429 = vmul.f32 %v4301, %v4397
  %v4430 = vmul.f32 %v4302, %v4398
  %v4431 = vmul.f32 %v4303, %v4399
  %v4432 = vmul.f32 %v4304, %v4400
  %v4433 = vmul.f32 %v4305, %v4401
  %v4434 = vmul.f32 %v4306, %v4402
  %v4435 = vmul.f32 %v4307, %v4403
  %v4436 = vmul.f32 %v4308, %v4404
  %v4437 = vmul.f32 %v4309, %v4405
  %v4438 = vmul.f32 %v4310, %v4406
  %v4439 = vmul.f32 %v4311, %v4407
  %v4440 = vmul.f32 %v4312, %v4408
  %v4441 = vmul.f32 %v4313, %v4409
  %v4442 = vmul.f32 %v4314, %v4410
  %v4443 = vmul.f32 %v4315, %v4411
  %v4444 = vmul.f32 %v4316, %v4412
  %v4445 = vmul.f32 %v4317, %v4413
  %v4446 = vld [vmem:[%s7] sm:$0xf]
  %v4447 = vld [vmem:[%s7 + $0x4] sm:$0xf]
  %v4448 = vld [vmem:[%s7 + $0x8] sm:$0xf]
  %v4449 = vld [vmem:[%s7 + $0xc] sm:$0xf]
  %v4450 = vld [vmem:[%s7 + $0x10] sm:$0xf]
  %v4451 = vld [vmem:[%s7 + $0x14] sm:$0xf]
  %v4452 = vld [vmem:[%s7 + $0x18] sm:$0xf]
  %v4453 = vld [vmem:[%s7 + $0x1c] sm:$0xf]
  %v4454 = vld [vmem:[%s7 + $0x20] sm:$0xf]
  %v4455 = vld [vmem:[%s7 + $0x24] sm:$0xf]
  %v4456 = vld [vmem:[%s7 + $0x28] sm:$0xf]
  %v4457 = vld [vmem:[%s7 + $0x2c] sm:$0xf]
  %v4458 = vld [vmem:[%s7 + $0x30] sm:$0xf]
  %v4459 = vld [vmem:[%s7 + $0x34] sm:$0xf]
  %v4460 = vld [vmem:[%s7 + $0x38] sm:$0xf]
  %v4461 = vld [vmem:[%s7 + $0x3c] sm:$0xf]
  %v4462 = vld [vmem:[%s7 + $0x40] sm:$0xf]
  %v4463 = vld [vmem:[%s7 + $0x44] sm:$0xf]
  %v4464 = vld [vmem:[%s7 + $0x48] sm:$0xf]
  %v4465 = vld [vmem:[%s7 + $0x4c] sm:$0xf]
  %v4466 = vld [vmem:[%s7 + $0x50] sm:$0xf]
  %v4467 = vld [vmem:[%s7 + $0x54] sm:$0xf]
  %v4468 = vld [vmem:[%s7 + $0x58] sm:$0xf]
  %v4469 = vld [vmem:[%s7 + $0x5c] sm:$0xf]
  %v4470 = vld [vmem:[%s7 + $0x60] sm:$0xf]
  %v4471 = vld [vmem:[%s7 + $0x64] sm:$0xf]
  %v4472 = vld [vmem:[%s7 + $0x68] sm:$0xf]
  %v4473 = vld [vmem:[%s7 + $0x6c] sm:$0xf]
  %v4474 = vld [vmem:[%s7 + $0x70] sm:$0xf]
  %v4475 = vld [vmem:[%s7 + $0x74] sm:$0xf]
  %v4476 = vld [vmem:[%s7 + $0x78] sm:$0xf]
  %v4477 = vld [vmem:[%s7 + $0x7c] sm:$0xf]
  %v4478 = vpack.c.bf16 %v4416, %v4414
  %v4479 = vpack.c.bf16 %v4417, %v4415
  %v4480 = vpack.c.bf16 %v4420, %v4418
  %v4481 = vpack.c.bf16 %v4421, %v4419
  %v4482 = vpack.c.bf16 %v4424, %v4422
  %v4483 = vpack.c.bf16 %v4425, %v4423
  %v4484 = vpack.c.bf16 %v4428, %v4426
  %v4485 = vpack.c.bf16 %v4429, %v4427
  %v4486 = vpack.c.bf16 %v4432, %v4430
  %v4487 = vpack.c.bf16 %v4433, %v4431
  %v4488 = vpack.c.bf16 %v4436, %v4434
  %v4489 = vpack.c.bf16 %v4437, %v4435
  %v4490 = vpack.c.bf16 %v4440, %v4438
  %v4491 = vpack.c.bf16 %v4441, %v4439
  %v4492 = vpack.c.bf16 %v4444, %v4442
  %v4493 = vpack.c.bf16 %v4445, %v4443
  %v4526 = vunpack.c.l.b16 %v4446
  %v4527 = vunpack.c.l.b16 %v4447
  %v4528 = vunpack.c.l.b16 %v4448
  %v4529 = vunpack.c.l.b16 %v4449
  %v4530 = vunpack.c.l.b16 %v4450
  %v4531 = vunpack.c.l.b16 %v4451
  %v4532 = vunpack.c.l.b16 %v4452
  %v4533 = vunpack.c.l.b16 %v4453
  %v4534 = vunpack.c.l.b16 %v4454
  %v4535 = vunpack.c.l.b16 %v4455
  %v4536 = vunpack.c.l.b16 %v4456
  %v4537 = vunpack.c.l.b16 %v4457
  %v4538 = vunpack.c.l.b16 %v4458
  %v4539 = vunpack.c.l.b16 %v4459
  %v4540 = vunpack.c.l.b16 %v4460
  %v4541 = vunpack.c.l.b16 %v4461
  %v4542 = vunpack.c.l.b16 %v4462
  %v4543 = vunpack.c.l.b16 %v4463
  %v4544 = vunpack.c.l.b16 %v4464
  %v4545 = vunpack.c.l.b16 %v4465
  %v4546 = vunpack.c.l.b16 %v4466
  %v4547 = vunpack.c.l.b16 %v4467
  %v4548 = vunpack.c.l.b16 %v4468
  %v4549 = vunpack.c.l.b16 %v4469
  %v4550 = vunpack.c.l.b16 %v4470
  %v4551 = vunpack.c.l.b16 %v4471
  %v4552 = vunpack.c.l.b16 %v4472
  %v4553 = vunpack.c.l.b16 %v4473
  %v4554 = vunpack.c.l.b16 %v4474
  %v4555 = vunpack.c.l.b16 %v4475
  %v4556 = vunpack.c.l.b16 %v4476
  %v4557 = vunpack.c.l.b16 %v4477
  %v4558 = vpack.c.b16 %v4527, %v4526
  %v4559 = vpack.c.b16 %v4529, %v4528
  %v4560 = vpack.c.b16 %v4531, %v4530
  %v4561 = vpack.c.b16 %v4533, %v4532
  %v4562 = vpack.c.b16 %v4535, %v4534
  %v4563 = vpack.c.b16 %v4537, %v4536
  %v4564 = vpack.c.b16 %v4539, %v4538
  %v4565 = vpack.c.b16 %v4541, %v4540
  %v4566 = vpack.c.b16 %v4543, %v4542
  %v4567 = vpack.c.b16 %v4545, %v4544
  %v4568 = vpack.c.b16 %v4547, %v4546
  %v4569 = vpack.c.b16 %v4549, %v4548
  %v4570 = vpack.c.b16 %v4551, %v4550
  %v4571 = vpack.c.b16 %v4553, %v4552
  %v4572 = vpack.c.b16 %v4555, %v4554
  %v4573 = vpack.c.b16 %v4557, %v4556
  %4590 = vmatprep.subr.bf16.mxu0 0
  %4591 = vmatpush1.bf16.msra.mxu0 %v4558
  %4592 = vmatprep.subr.bf16.mxu0 0
  %4593 = vmatpush1.bf16.msra.mxu0 %v4559
  %4594 = vmatprep.subr.bf16.mxu0 0
  %4595 = vmatpush1.bf16.msra.mxu0 %v4560
  %4596 = vmatprep.subr.bf16.mxu0 0
  %4597 = vmatpush1.bf16.msra.mxu0 %v4561
  %4598 = vmatprep.subr.bf16.mxu0 0
  %4599 = vmatpush1.bf16.msra.mxu0 %v4562
  %4600 = vmatprep.subr.bf16.mxu0 0
  %4601 = vmatpush1.bf16.msra.mxu0 %v4563
  %4602 = vmatprep.subr.bf16.mxu0 0
  %4603 = vmatpush1.bf16.msra.mxu0 %v4564
  %4604 = vmatprep.subr.bf16.mxu0 0
  %4605 = vmatpush1.bf16.msra.mxu0 %v4565
  %4606 = vmatprep.subr.bf16.mxu0 0
  %4607 = vmatpush1.bf16.msra.mxu0 %v4566
  %4608 = vmatprep.subr.bf16.mxu0 0
  %4609 = vmatpush1.bf16.msra.mxu0 %v4567
  %4610 = vmatprep.subr.bf16.mxu0 0
  %4611 = vmatpush1.bf16.msra.mxu0 %v4568
  %4612 = vmatprep.subr.bf16.mxu0 0
  %4613 = vmatpush1.bf16.msra.mxu0 %v4569
  %4614 = vmatprep.subr.bf16.mxu0 0
  %4615 = vmatpush1.bf16.msra.mxu0 %v4570
  %4616 = vmatprep.subr.bf16.mxu0 0
  %4617 = vmatpush1.bf16.msra.mxu0 %v4571
  %4618 = vmatprep.subr.bf16.mxu0 0
  %4619 = vmatpush1.bf16.msra.mxu0 %v4572
  %4620 = vmatprep.subr.bf16.mxu0 0
  %4621 = vmatpush1.bf16.msra.mxu0 %v4573
  %4622 = vmatprep.mubr.bf16.mxu0 %v4479
  %4623 = vmatmul.mubr.bf16.gmra.mrb[0].mxu0 %v4478
  %v4624 = vpop.f32.mrb[0].mxu0
  %v4625 = vadd.f32 0.0, %v4624
  %v4626 = vpop.f32.mrb[0].mxu0
  %v4627 = vpop.f32.mrb[0].mxu0
  %v4628 = vadd.f32 0.0, %v4627
  %v4629 = vpop.f32.mrb[0].mxu0
  %4630 = vmatprep.mubr.bf16.mxu0 %v4481
  %4631 = vmatmul.mubr.bf16.gmra.mrb[0].mxu0 %v4480
  %v4632 = vpop.f32.mrb[0].mxu0
  %v4633 = vadd.f32 0.0, %v4632
  %v4634 = vpop.f32.mrb[0].mxu0
  %v4635 = vpop.f32.mrb[0].mxu0
  %v4636 = vadd.f32 0.0, %v4635
  %v4637 = vpop.f32.mrb[0].mxu0
  %4638 = vmatprep.mubr.bf16.mxu0 %v4483
  %4639 = vmatmul.mubr.bf16.gmra.mrb[0].mxu0 %v4482
  %v4640 = vpop.f32.mrb[0].mxu0
  %v4641 = vadd.f32 0.0, %v4640
  %v4642 = vpop.f32.mrb[0].mxu0
  %v4643 = vpop.f32.mrb[0].mxu0
  %v4644 = vadd.f32 0.0, %v4643
  %v4645 = vpop.f32.mrb[0].mxu0
  %4646 = vmatprep.mubr.bf16.mxu0 %v4485
  %4647 = vmatmul.mubr.bf16.gmra.mrb[0].mxu0 %v4484
  %v4648 = vpop.f32.mrb[0].mxu0
  %v4649 = vadd.f32 0.0, %v4648
  %v4650 = vpop.f32.mrb[0].mxu0
  %v4651 = vpop.f32.mrb[0].mxu0
  %v4652 = vadd.f32 0.0, %v4651
  %v4653 = vpop.f32.mrb[0].mxu0
  %4654 = vmatprep.mubr.bf16.mxu0 %v4487
  %4655 = vmatmul.mubr.bf16.gmra.mrb[0].mxu0 %v4486
  %v4656 = vpop.f32.mrb[0].mxu0
  %v4657 = vadd.f32 0.0, %v4656
  %v4658 = vpop.f32.mrb[0].mxu0
  %v4659 = vpop.f32.mrb[0].mxu0
  %v4660 = vadd.f32 0.0, %v4659
  %v4661 = vpop.f32.mrb[0].mxu0
  %4662 = vmatprep.mubr.bf16.mxu0 %v4489
  %4663 = vmatmul.mubr.bf16.gmra.mrb[0].mxu0 %v4488
  %v4664 = vpop.f32.mrb[0].mxu0
  %v4665 = vadd.f32 0.0, %v4664
  %v4666 = vpop.f32.mrb[0].mxu0
  %v4667 = vpop.f32.mrb[0].mxu0
  %v4668 = vadd.f32 0.0, %v4667
  %v4669 = vpop.f32.mrb[0].mxu0
  %4670 = vmatprep.mubr.bf16.mxu0 %v4491
  %4671 = vmatmul.mubr.bf16.gmra.mrb[0].mxu0 %v4490
  %v4672 = vpop.f32.mrb[0].mxu0
  %v4673 = vadd.f32 0.0, %v4672
  %v4674 = vpop.f32.mrb[0].mxu0
  %v4675 = vpop.f32.mrb[0].mxu0
  %v4676 = vadd.f32 0.0, %v4675
  %v4677 = vpop.f32.mrb[0].mxu0
  %4678 = vmatprep.mubr.bf16.mxu0 %v4493
  %4679 = vmatmul.mubr.bf16.gmra.mrb[0].mxu0 %v4492
  %v4680 = vpop.f32.mrb[0].mxu0
  %v4681 = vadd.f32 0.0, %v4680
  %v4682 = vpop.f32.mrb[0].mxu0
  %v4683 = vpop.f32.mrb[0].mxu0
  %v4684 = vadd.f32 0.0, %v4683
  %v4685 = vpop.f32.mrb[0].mxu0
  %4686 = vdwg.mxu0
  %v4687 = vadd.f32 %v3826, %v4625
  %v4688 = vadd.f32 %v3827, %v4628
  %v4689 = vadd.f32 %v3828, %v4633
  %v4690 = vadd.f32 %v3829, %v4636
  %v4691 = vadd.f32 %v3830, %v4641
  %v4692 = vadd.f32 %v3831, %v4644
  %v4693 = vadd.f32 %v3832, %v4649
  %v4694 = vadd.f32 %v3833, %v4652
  %v4695 = vadd.f32 %v3834, %v4657
  %v4696 = vadd.f32 %v3835, %v4660
  %v4697 = vadd.f32 %v3836, %v4665
  %v4698 = vadd.f32 %v3837, %v4668
  %v4699 = vadd.f32 %v3838, %v4673
  %v4700 = vadd.f32 %v3839, %v4676
  %v4701 = vadd.f32 %v3840, %v4681
  %v4702 = vadd.f32 %v3841, %v4684
  %v4703 = vadd.f32 %v4687, %v1103
  %v4704 = vadd.f32 %v4688, %v1103
  %v4705 = vadd.f32 %v4689, %v1103
  %v4706 = vadd.f32 %v4690, %v1103
  %v4707 = vadd.f32 %v4691, %v1103
  %v4708 = vadd.f32 %v4692, %v1103
  %v4709 = vadd.f32 %v4693, %v1103
  %v4710 = vadd.f32 %v4694, %v1103
  %v4711 = vadd.f32 %v4695, %v1103
  %v4712 = vadd.f32 %v4696, %v1103
  %v4713 = vadd.f32 %v4697, %v1103
  %v4714 = vadd.f32 %v4698, %v1103
  %v4715 = vadd.f32 %v4699, %v1103
  %v4716 = vadd.f32 %v4700, %v1103
  %v4717 = vadd.f32 %v4701, %v1103
  %v4718 = vadd.f32 %v4702, %v1103
  %v4719 = vld [vmem:[%s3 + $0x10] ss:$0 sm:$0xff]
  %v4720 = vld [vmem:[%s3 + $0x11] ss:$0 sm:$0xff]
  %v4721 = vld [vmem:[%s3 + $0x12] ss:$0 sm:$0xff]
  %v4722 = vld [vmem:[%s3 + $0x13] ss:$0 sm:$0xff]
  %s4723 = scalar_lea.vmem %s3, 20
  %v4724 = vld [vmem:[%s4723] ss:$8 sm:$0x3]
  %v4725 = vld [vmem:[%s3 + $0x15] ss:$0 sm:$0xff]
  %s4726 = scalar_lea.vmem %s3, 22
  %v4727 = vld [vmem:[%s4726] ss:$8 sm:$0x3]
  %v4728 = vld [vmem:[%s3 + $0x17] ss:$0 sm:$0xff]
  %v4729 = vsel %vm1104, %v4703, 0.0
  %4730 = vadd.xlane.f32.xlu0 %v4729
  %v4731 = vpop.xlane.xlu0 %4730
  %v4732 = vsel %vm1104, %v4704, 0.0
  %4733 = vadd.xlane.f32.xlu0 %v4732
  %v4734 = vpop.xlane.xlu0 %4733
  %v4735 = vsel %vm1104, %v4705, 0.0
  %4736 = vadd.xlane.f32.xlu0 %v4735
  %v4737 = vpop.xlane.xlu0 %4736
  %v4738 = vsel %vm1104, %v4706, 0.0
  %4739 = vadd.xlane.f32.xlu0 %v4738
  %v4740 = vpop.xlane.xlu0 %4739
  %v4741 = vsel %vm1104, %v4707, 0.0
  %4742 = vadd.xlane.f32.xlu0 %v4741
  %v4743 = vpop.xlane.xlu0 %4742
  %v4744 = vsel %vm1104, %v4708, 0.0
  %4745 = vadd.xlane.f32.xlu0 %v4744
  %v4746 = vpop.xlane.xlu0 %4745
  %v4747 = vsel %vm1104, %v4709, 0.0
  %4748 = vadd.xlane.f32.xlu0 %v4747
  %v4749 = vpop.xlane.xlu0 %4748
  %v4750 = vsel %vm1104, %v4710, 0.0
  %4751 = vadd.xlane.f32.xlu0 %v4750
  %v4752 = vpop.xlane.xlu0 %4751
  %v4753 = vsel %vm1104, %v4711, 0.0
  %4754 = vadd.xlane.f32.xlu0 %v4753
  %v4755 = vpop.xlane.xlu0 %4754
  %v4756 = vsel %vm1104, %v4712, 0.0
  %4757 = vadd.xlane.f32.xlu0 %v4756
  %v4758 = vpop.xlane.xlu0 %4757
  %v4759 = vsel %vm1104, %v4713, 0.0
  %4760 = vadd.xlane.f32.xlu0 %v4759
  %v4761 = vpop.xlane.xlu0 %4760
  %v4762 = vsel %vm1104, %v4714, 0.0
  %4763 = vadd.xlane.f32.xlu0 %v4762
  %v4764 = vpop.xlane.xlu0 %4763
  %v4765 = vsel %vm1104, %v4715, 0.0
  %4766 = vadd.xlane.f32.xlu0 %v4765
  %v4767 = vpop.xlane.xlu0 %4766
  %v4768 = vsel %vm1104, %v4716, 0.0
  %4769 = vadd.xlane.f32.xlu0 %v4768
  %v4770 = vpop.xlane.xlu0 %4769
  %v4771 = vsel %vm1104, %v4717, 0.0
  %4772 = vadd.xlane.f32.xlu0 %v4771
  %v4773 = vpop.xlane.xlu0 %4772
  %v4774 = vsel %vm1104, %v4718, 0.0
  %4775 = vadd.xlane.f32.xlu0 %v4774
  %v4776 = vpop.xlane.xlu0 %4775
  %v4777 = vmul.f32 %v4731, %v1153
  %v4778 = vmul.f32 %v4734, %v1153
  %v4779 = vmul.f32 %v4737, %v1153
  %v4780 = vmul.f32 %v4740, %v1153
  %v4781 = vmul.f32 %v4743, %v1153
  %v4782 = vmul.f32 %v4746, %v1153
  %v4783 = vmul.f32 %v4749, %v1153
  %v4784 = vmul.f32 %v4752, %v1153
  %v4785 = vmul.f32 %v4755, %v1153
  %v4786 = vmul.f32 %v4758, %v1153
  %v4787 = vmul.f32 %v4761, %v1153
  %v4788 = vmul.f32 %v4764, %v1153
  %v4789 = vmul.f32 %v4767, %v1153
  %v4790 = vmul.f32 %v4770, %v1153
  %v4791 = vmul.f32 %v4773, %v1153
  %v4792 = vmul.f32 %v4776, %v1153
  %v4793 = vsub.f32 %v4703, %v4777
  %v4794 = vsub.f32 %v4704, %v4778
  %v4795 = vsub.f32 %v4705, %v4779
  %v4796 = vsub.f32 %v4706, %v4780
  %v4797 = vsub.f32 %v4707, %v4781
  %v4798 = vsub.f32 %v4708, %v4782
  %v4799 = vsub.f32 %v4709, %v4783
  %v4800 = vsub.f32 %v4710, %v4784
  %v4801 = vsub.f32 %v4711, %v4785
  %v4802 = vsub.f32 %v4712, %v4786
  %v4803 = vsub.f32 %v4713, %v4787
  %v4804 = vsub.f32 %v4714, %v4788
  %v4805 = vsub.f32 %v4715, %v4789
  %v4806 = vsub.f32 %v4716, %v4790
  %v4807 = vsub.f32 %v4717, %v4791
  %v4808 = vsub.f32 %v4718, %v4792
  %v4809 = vmul.f32 %v4793, %v4793
  %v4810 = vmul.f32 %v4794, %v4794
  %v4811 = vmul.f32 %v4795, %v4795
  %v4812 = vmul.f32 %v4796, %v4796
  %v4813 = vmul.f32 %v4797, %v4797
  %v4814 = vmul.f32 %v4798, %v4798
  %v4815 = vmul.f32 %v4799, %v4799
  %v4816 = vmul.f32 %v4800, %v4800
  %v4817 = vmul.f32 %v4801, %v4801
  %v4818 = vmul.f32 %v4802, %v4802
  %v4819 = vmul.f32 %v4803, %v4803
  %v4820 = vmul.f32 %v4804, %v4804
  %v4821 = vmul.f32 %v4805, %v4805
  %v4822 = vmul.f32 %v4806, %v4806
  %v4823 = vmul.f32 %v4807, %v4807
  %v4824 = vmul.f32 %v4808, %v4808
  %v4825 = vsel %vm1104, %v4809, 0.0
  %4826 = vadd.xlane.f32.xlu0 %v4825
  %v4827 = vpop.xlane.xlu0 %4826
  %v4828 = vsel %vm1104, %v4810, 0.0
  %4829 = vadd.xlane.f32.xlu0 %v4828
  %v4830 = vpop.xlane.xlu0 %4829
  %v4831 = vsel %vm1104, %v4811, 0.0
  %4832 = vadd.xlane.f32.xlu0 %v4831
  %v4833 = vpop.xlane.xlu0 %4832
  %v4834 = vsel %vm1104, %v4812, 0.0
  %4835 = vadd.xlane.f32.xlu0 %v4834
  %v4836 = vpop.xlane.xlu0 %4835
  %v4837 = vsel %vm1104, %v4813, 0.0
  %4838 = vadd.xlane.f32.xlu0 %v4837
  %v4839 = vpop.xlane.xlu0 %4838
  %v4840 = vsel %vm1104, %v4814, 0.0
  %4841 = vadd.xlane.f32.xlu0 %v4840
  %v4842 = vpop.xlane.xlu0 %4841
  %v4843 = vsel %vm1104, %v4815, 0.0
  %4844 = vadd.xlane.f32.xlu0 %v4843
  %v4845 = vpop.xlane.xlu0 %4844
  %v4846 = vsel %vm1104, %v4816, 0.0
  %4847 = vadd.xlane.f32.xlu0 %v4846
  %v4848 = vpop.xlane.xlu0 %4847
  %v4849 = vsel %vm1104, %v4817, 0.0
  %4850 = vadd.xlane.f32.xlu0 %v4849
  %v4851 = vpop.xlane.xlu0 %4850
  %v4852 = vsel %vm1104, %v4818, 0.0
  %4853 = vadd.xlane.f32.xlu0 %v4852
  %v4854 = vpop.xlane.xlu0 %4853
  %v4855 = vsel %vm1104, %v4819, 0.0
  %4856 = vadd.xlane.f32.xlu0 %v4855
  %v4857 = vpop.xlane.xlu0 %4856
  %v4858 = vsel %vm1104, %v4820, 0.0
  %4859 = vadd.xlane.f32.xlu0 %v4858
  %v4860 = vpop.xlane.xlu0 %4859
  %v4861 = vsel %vm1104, %v4821, 0.0
  %4862 = vadd.xlane.f32.xlu0 %v4861
  %v4863 = vpop.xlane.xlu0 %4862
  %v4864 = vsel %vm1104, %v4822, 0.0
  %4865 = vadd.xlane.f32.xlu0 %v4864
  %v4866 = vpop.xlane.xlu0 %4865
  %v4867 = vsel %vm1104, %v4823, 0.0
  %4868 = vadd.xlane.f32.xlu0 %v4867
  %v4869 = vpop.xlane.xlu0 %4868
  %v4870 = vsel %vm1104, %v4824, 0.0
  %4871 = vadd.xlane.f32.xlu0 %v4870
  %v4872 = vpop.xlane.xlu0 %4871
  %v4873 = vmul.f32 %v4827, %v1153
  %v4874 = vmul.f32 %v4830, %v1153
  %v4875 = vmul.f32 %v4833, %v1153
  %v4876 = vmul.f32 %v4836, %v1153
  %v4877 = vmul.f32 %v4839, %v1153
  %v4878 = vmul.f32 %v4842, %v1153
  %v4879 = vmul.f32 %v4845, %v1153
  %v4880 = vmul.f32 %v4848, %v1153
  %v4881 = vmul.f32 %v4851, %v1153
  %v4882 = vmul.f32 %v4854, %v1153
  %v4883 = vmul.f32 %v4857, %v1153
  %v4884 = vmul.f32 %v4860, %v1153
  %v4885 = vmul.f32 %v4863, %v1153
  %v4886 = vmul.f32 %v4866, %v1153
  %v4887 = vmul.f32 %v4869, %v1153
  %v4888 = vmul.f32 %v4872, %v1153
  %v4889 = vadd.f32 %v4873, 1e-06
  %v4890 = vadd.f32 %v4874, 1e-06
  %v4891 = vadd.f32 %v4875, 1e-06
  %v4892 = vadd.f32 %v4876, 1e-06
  %v4893 = vadd.f32 %v4877, 1e-06
  %v4894 = vadd.f32 %v4878, 1e-06
  %v4895 = vadd.f32 %v4879, 1e-06
  %v4896 = vadd.f32 %v4880, 1e-06
  %v4897 = vadd.f32 %v4881, 1e-06
  %v4898 = vadd.f32 %v4882, 1e-06
  %v4899 = vadd.f32 %v4883, 1e-06
  %v4900 = vadd.f32 %v4884, 1e-06
  %v4901 = vadd.f32 %v4885, 1e-06
  %v4902 = vadd.f32 %v4886, 1e-06
  %v4903 = vadd.f32 %v4887, 1e-06
  %v4904 = vadd.f32 %v4888, 1e-06
  %v4905 = vrsqrt.pop %v4889
  %v4906 = vrsqrt.pop %v4890
  %v4907 = vrsqrt.pop %v4891
  %v4908 = vrsqrt.pop %v4892
  %v4909 = vrsqrt.pop %v4893
  %v4910 = vrsqrt.pop %v4894
  %v4911 = vrsqrt.pop %v4895
  %v4912 = vrsqrt.pop %v4896
  %v4913 = vrsqrt.pop %v4897
  %v4914 = vrsqrt.pop %v4898
  %v4915 = vrsqrt.pop %v4899
  %v4916 = vrsqrt.pop %v4900
  %v4917 = vrsqrt.pop %v4901
  %v4918 = vrsqrt.pop %v4902
  %v4919 = vrsqrt.pop %v4903
  %v4920 = vrsqrt.pop %v4904
  %v4921 = vmul.f32 %v4793, %v4905
  %v4922 = vmul.f32 %v4794, %v4906
  %v4923 = vmul.f32 %v4795, %v4907
  %v4924 = vmul.f32 %v4796, %v4908
  %v4925 = vmul.f32 %v4797, %v4909
  %v4926 = vmul.f32 %v4798, %v4910
  %v4927 = vmul.f32 %v4799, %v4911
  %v4928 = vmul.f32 %v4800, %v4912
  %v4929 = vmul.f32 %v4801, %v4913
  %v4930 = vmul.f32 %v4802, %v4914
  %v4931 = vmul.f32 %v4803, %v4915
  %v4932 = vmul.f32 %v4804, %v4916
  %v4933 = vmul.f32 %v4805, %v4917
  %v4934 = vmul.f32 %v4806, %v4918
  %v4935 = vmul.f32 %v4807, %v4919
  %v4936 = vmul.f32 %v4808, %v4920
  %v4937 = vmul.f32 %v4921, %v4719
  %v4938 = vmul.f32 %v4922, %v4719
  %v4939 = vmul.f32 %v4923, %v4719
  %v4940 = vmul.f32 %v4924, %v4719
  %v4941 = vmul.f32 %v4925, %v4719
  %v4942 = vmul.f32 %v4926, %v4719
  %v4943 = vmul.f32 %v4927, %v4719
  %v4944 = vmul.f32 %v4928, %v4719
  %v4945 = vmul.f32 %v4929, %v4719
  %v4946 = vmul.f32 %v4930, %v4719
  %v4947 = vmul.f32 %v4931, %v4719
  %v4948 = vmul.f32 %v4932, %v4719
  %v4949 = vmul.f32 %v4933, %v4719
  %v4950 = vmul.f32 %v4934, %v4719
  %v4951 = vmul.f32 %v4935, %v4719
  %v4952 = vmul.f32 %v4936, %v4719
  %v4953 = vadd.f32 %v4937, %v4720
  %v4954 = vadd.f32 %v4938, %v4720
  %v4955 = vadd.f32 %v4939, %v4720
  %v4956 = vadd.f32 %v4940, %v4720
  %v4957 = vadd.f32 %v4941, %v4720
  %v4958 = vadd.f32 %v4942, %v4720
  %v4959 = vadd.f32 %v4943, %v4720
  %v4960 = vadd.f32 %v4944, %v4720
  %v4961 = vadd.f32 %v4945, %v4720
  %v4962 = vadd.f32 %v4946, %v4720
  %v4963 = vadd.f32 %v4947, %v4720
  %v4964 = vadd.f32 %v4948, %v4720
  %v4965 = vadd.f32 %v4949, %v4720
  %v4966 = vadd.f32 %v4950, %v4720
  %v4967 = vadd.f32 %v4951, %v4720
  %v4968 = vadd.f32 %v4952, %v4720
  %v4969 = vld [vmem:[%s8] sm:$0xff]
  %v4970 = vld [vmem:[%s8 + $0x8] sm:$0xff]
  %v4971 = vld [vmem:[%s8 + $0x10] sm:$0xff]
  %v4972 = vld [vmem:[%s8 + $0x18] sm:$0xff]
  %v4973 = vld [vmem:[%s8 + $0x20] sm:$0xff]
  %v4974 = vld [vmem:[%s8 + $0x28] sm:$0xff]
  %v4975 = vld [vmem:[%s8 + $0x30] sm:$0xff]
  %v4976 = vld [vmem:[%s8 + $0x38] sm:$0xff]
  %v4977 = vpack.c.bf16 %v4954, %v4953
  %v4978 = vpack.c.bf16 %v4956, %v4955
  %v4979 = vpack.c.bf16 %v4958, %v4957
  %v4980 = vpack.c.bf16 %v4960, %v4959
  %v4981 = vpack.c.bf16 %v4962, %v4961
  %v4982 = vpack.c.bf16 %v4964, %v4963
  %v4983 = vpack.c.bf16 %v4966, %v4965
  %v4984 = vpack.c.bf16 %v4968, %v4967
  %v4986 = vlaneseq
  %v4987 = vshrl.u32 %v4986, 7
  %v4988 = vsub.s32 0, %v4987
  %v4989 = vrot.slane %v4724, %v4988
  %v4990 = vlaneseq
  %v4991 = vshrl.u32 %v4990, 7
  %v4992 = vsub.s32 1, %v4991
  %v4993 = vrot.slane %v4724, %v4992
  %v5004 = vunpack.c.l.b16 %v4969
  %v5005 = vunpack.c.h.b16 %v4969
  %v5006 = vunpack.c.l.b16 %v4970
  %v5007 = vunpack.c.h.b16 %v4970
  %v5008 = vunpack.c.l.b16 %v4971
  %v5009 = vunpack.c.h.b16 %v4971
  %v5010 = vunpack.c.l.b16 %v4972
  %v5011 = vunpack.c.h.b16 %v4972
  %v5012 = vunpack.c.l.b16 %v4973
  %v5013 = vunpack.c.h.b16 %v4973
  %v5014 = vunpack.c.l.b16 %v4974
  %v5015 = vunpack.c.h.b16 %v4974
  %v5016 = vunpack.c.l.b16 %v4975
  %v5017 = vunpack.c.h.b16 %v4975
  %v5018 = vunpack.c.l.b16 %v4976
  %v5019 = vunpack.c.h.b16 %v4976
  %v5020 = vpack.c.b16 %v5006, %v5004
  %v5021 = vpack.c.b16 %v5007, %v5005
  %v5022 = vpack.c.b16 %v5010, %v5008
  %v5023 = vpack.c.b16 %v5011, %v5009
  %v5024 = vpack.c.b16 %v5014, %v5012
  %v5025 = vpack.c.b16 %v5015, %v5013
  %v5026 = vpack.c.b16 %v5018, %v5016
  %v5027 = vpack.c.b16 %v5019, %v5017
  %v5037 = vsel %vm1104, %v4977, 0
  %v5040 = vsel %vm1104, %v4978, 0
  %v5043 = vsel %vm1104, %v4979, 0
  %v5046 = vsel %vm1104, %v4980, 0
  %v5049 = vsel %vm1104, %v4981, 0
  %v5052 = vsel %vm1104, %v4982, 0
  %v5055 = vsel %vm1104, %v4983, 0
  %v5058 = vsel %vm1104, %v4984, 0
  %5060 = vmatprep.subr.bf16.mxu0 %v5021
  %5061 = vmatpush1.bf16.msra.mxu0 %v5020
  %5062 = vmatprep.subr.bf16.mxu0 %v5023
  %5063 = vmatpush1.bf16.msra.mxu0 %v5022
  %5064 = vmatprep.subr.bf16.mxu0 %v5025
  %5065 = vmatpush1.bf16.msra.mxu0 %v5024
  %5066 = vmatprep.subr.bf16.mxu0 %v5027
  %5067 = vmatpush1.bf16.msra.mxu0 %v5026
  %5068 = vmatprep.subr.bf16.mxu0 0
  %5069 = vmatpush1.bf16.msra.mxu0 0
  %5070 = vmatprep.subr.bf16.mxu0 0
  %5071 = vmatpush1.bf16.msra.mxu0 0
  %5072 = vmatprep.subr.bf16.mxu0 0
  %5073 = vmatpush1.bf16.msra.mxu0 0
  %5074 = vmatprep.subr.bf16.mxu0 0
  %5075 = vmatpush1.bf16.msra.mxu0 0
  %5076 = vmatprep.subr.bf16.mxu0 0
  %5077 = vmatpush1.bf16.msra.mxu0 0
  %5078 = vmatprep.subr.bf16.mxu0 0
  %5079 = vmatpush1.bf16.msra.mxu0 0
  %5080 = vmatprep.subr.bf16.mxu0 0
  %5081 = vmatpush1.bf16.msra.mxu0 0
  %5082 = vmatprep.subr.bf16.mxu0 0
  %5083 = vmatpush1.bf16.msra.mxu0 0
  %5084 = vmatprep.subr.bf16.mxu0 0
  %5085 = vmatpush1.bf16.msra.mxu0 0
  %5086 = vmatprep.subr.bf16.mxu0 0
  %5087 = vmatpush1.bf16.msra.mxu0 0
  %5088 = vmatprep.subr.bf16.mxu0 0
  %5089 = vmatpush1.bf16.msra.mxu0 0
  %5090 = vmatprep.subr.bf16.mxu0 0
  %5091 = vmatpush1.bf16.msra.mxu0 0
  %5092 = vmatprep.mubr.bf16.mxu0 0
  %5093 = vmatmul.mubr.bf16.gmra.mrb[0].mxu0 %v5037
  %v5094 = vpop.f32.mrb[0].mxu0
  %v5095 = vadd.f32 %v4989, %v5094
  %v5096 = vpop.f32.mrb[0].mxu0
  %v5097 = vadd.f32 %v4993, %v5096
  %v5098 = vpop.f32.mrb[0].mxu0
  %v5099 = vadd.f32 %v4989, %v5098
  %v5100 = vpop.f32.mrb[0].mxu0
  %v5101 = vadd.f32 %v4993, %v5100
  %5102 = vmatprep.mubr.bf16.mxu0 0
  %5103 = vmatmul.mubr.bf16.gmra.mrb[0].mxu0 %v5040
  %v5104 = vpop.f32.mrb[0].mxu0
  %v5105 = vadd.f32 %v4989, %v5104
  %v5106 = vpop.f32.mrb[0].mxu0
  %v5107 = vadd.f32 %v4993, %v5106
  %v5108 = vpop.f32.mrb[0].mxu0
  %v5109 = vadd.f32 %v4989, %v5108
  %v5110 = vpop.f32.mrb[0].mxu0
  %v5111 = vadd.f32 %v4993, %v5110
  %5112 = vmatprep.mubr.bf16.mxu0 0
  %5113 = vmatmul.mubr.bf16.gmra.mrb[0].mxu0 %v5043
  %v5114 = vpop.f32.mrb[0].mxu0
  %v5115 = vadd.f32 %v4989, %v5114
  %v5116 = vpop.f32.mrb[0].mxu0
  %v5117 = vadd.f32 %v4993, %v5116
  %v5118 = vpop.f32.mrb[0].mxu0
  %v5119 = vadd.f32 %v4989, %v5118
  %v5120 = vpop.f32.mrb[0].mxu0
  %v5121 = vadd.f32 %v4993, %v5120
  %5122 = vmatprep.mubr.bf16.mxu0 0
  %5123 = vmatmul.mubr.bf16.gmra.mrb[0].mxu0 %v5046
  %v5124 = vpop.f32.mrb[0].mxu0
  %v5125 = vadd.f32 %v4989, %v5124
  %v5126 = vpop.f32.mrb[0].mxu0
  %v5127 = vadd.f32 %v4993, %v5126
  %v5128 = vpop.f32.mrb[0].mxu0
  %v5129 = vadd.f32 %v4989, %v5128
  %v5130 = vpop.f32.mrb[0].mxu0
  %v5131 = vadd.f32 %v4993, %v5130
  %5132 = vmatprep.mubr.bf16.mxu0 0
  %5133 = vmatmul.mubr.bf16.gmra.mrb[0].mxu0 %v5049
  %v5134 = vpop.f32.mrb[0].mxu0
  %v5135 = vadd.f32 %v4989, %v5134
  %v5136 = vpop.f32.mrb[0].mxu0
  %v5137 = vadd.f32 %v4993, %v5136
  %v5138 = vpop.f32.mrb[0].mxu0
  %v5139 = vadd.f32 %v4989, %v5138
  %v5140 = vpop.f32.mrb[0].mxu0
  %v5141 = vadd.f32 %v4993, %v5140
  %5142 = vmatprep.mubr.bf16.mxu0 0
  %5143 = vmatmul.mubr.bf16.gmra.mrb[0].mxu0 %v5052
  %v5144 = vpop.f32.mrb[0].mxu0
  %v5145 = vadd.f32 %v4989, %v5144
  %v5146 = vpop.f32.mrb[0].mxu0
  %v5147 = vadd.f32 %v4993, %v5146
  %v5148 = vpop.f32.mrb[0].mxu0
  %v5149 = vadd.f32 %v4989, %v5148
  %v5150 = vpop.f32.mrb[0].mxu0
  %v5151 = vadd.f32 %v4993, %v5150
  %5152 = vmatprep.mubr.bf16.mxu0 0
  %5153 = vmatmul.mubr.bf16.gmra.mrb[0].mxu0 %v5055
  %v5154 = vpop.f32.mrb[0].mxu0
  %v5155 = vadd.f32 %v4989, %v5154
  %v5156 = vpop.f32.mrb[0].mxu0
  %v5157 = vadd.f32 %v4993, %v5156
  %v5158 = vpop.f32.mrb[0].mxu0
  %v5159 = vadd.f32 %v4989, %v5158
  %v5160 = vpop.f32.mrb[0].mxu0
  %v5161 = vadd.f32 %v4993, %v5160
  %5162 = vmatprep.mubr.bf16.mxu0 0
  %5163 = vmatmul.mubr.bf16.gmra.mrb[0].mxu0 %v5058
  %v5164 = vpop.f32.mrb[0].mxu0
  %v5165 = vadd.f32 %v4989, %v5164
  %v5166 = vpop.f32.mrb[0].mxu0
  %v5167 = vadd.f32 %v4993, %v5166
  %v5168 = vpop.f32.mrb[0].mxu0
  %v5169 = vadd.f32 %v4989, %v5168
  %v5170 = vpop.f32.mrb[0].mxu0
  %v5171 = vadd.f32 %v4993, %v5170
  %5172 = vdwg.mxu0
  %v5173 = vpack.c.bf16 %v5099, %v5095
  %v5174 = vpack.c.bf16 %v5109, %v5105
  %v5175 = vpack.c.bf16 %v5119, %v5115
  %v5176 = vpack.c.bf16 %v5129, %v5125
  %v5177 = vpack.c.bf16 %v5139, %v5135
  %v5178 = vpack.c.bf16 %v5149, %v5145
  %v5179 = vpack.c.bf16 %v5159, %v5155
  %v5180 = vpack.c.bf16 %v5169, %v5165
  %5189 = vrot.lane.b32.xlu0 %v5173, 64
  %v5190 = vpop.permute.xlu0 %5189
  %5191 = vrot.lane.b32.xlu0 %v5174, 64
  %v5192 = vpop.permute.xlu0 %5191
  %5193 = vrot.lane.b32.xlu0 %v5175, 64
  %v5194 = vpop.permute.xlu0 %5193
  %5195 = vrot.lane.b32.xlu0 %v5176, 64
  %v5196 = vpop.permute.xlu0 %5195
  %5197 = vrot.lane.b32.xlu0 %v5177, 64
  %v5198 = vpop.permute.xlu0 %5197
  %5199 = vrot.lane.b32.xlu0 %v5178, 64
  %v5200 = vpop.permute.xlu0 %5199
  %5201 = vrot.lane.b32.xlu0 %v5179, 64
  %v5202 = vpop.permute.xlu0 %5201
  %5203 = vrot.lane.b32.xlu0 %v5180, 64
  %v5204 = vpop.permute.xlu0 %5203
  %v5206 = vsel %vm1582, %v5173, 0
  %v5209 = vsel %vm1582, %v5174, 0
  %v5212 = vsel %vm1582, %v5175, 0
  %v5215 = vsel %vm1582, %v5176, 0
  %v5218 = vsel %vm1582, %v5177, 0
  %v5221 = vsel %vm1582, %v5178, 0
  %v5224 = vsel %vm1582, %v5179, 0
  %v5227 = vsel %vm1582, %v5180, 0
  %v5230 = vsel %vm1582, %v5190, 0
  %v5233 = vsel %vm1582, %v5192, 0
  %v5236 = vsel %vm1582, %v5194, 0
  %v5239 = vsel %vm1582, %v5196, 0
  %v5242 = vsel %vm1582, %v5198, 0
  %v5245 = vsel %vm1582, %v5200, 0
  %v5248 = vsel %vm1582, %v5202, 0
  %v5251 = vsel %vm1582, %v5204, 0
  %5253 = vmatprep.subr.bf16.mxu0 0
  %5254 = vmatpush1.bf16.xpose.msra.mxu0 %v5230
  %5255 = vmatprep.subr.bf16.mxu0 0
  %5256 = vmatpush1.bf16.xpose.msra.mxu0 %v5233
  %5257 = vmatprep.subr.bf16.mxu0 0
  %5258 = vmatpush1.bf16.xpose.msra.mxu0 %v5236
  %5259 = vmatprep.subr.bf16.mxu0 0
  %5260 = vmatpush1.bf16.xpose.msra.mxu0 %v5239
  %5261 = vmatprep.subr.bf16.mxu0 0
  %5262 = vmatpush1.bf16.xpose.msra.mxu0 %v5242
  %5263 = vmatprep.subr.bf16.mxu0 0
  %5264 = vmatpush1.bf16.xpose.msra.mxu0 %v5245
  %5265 = vmatprep.subr.bf16.mxu0 0
  %5266 = vmatpush1.bf16.xpose.msra.mxu0 %v5248
  %5267 = vmatprep.subr.bf16.mxu0 0
  %5268 = vmatpush1.bf16.xpose.msra.mxu0 %v5251
  %5269 = vmatprep.subr.bf16.mxu0 0
  %5270 = vmatpush1.bf16.xpose.msra.mxu0 0
  %5271 = vmatprep.subr.bf16.mxu0 0
  %5272 = vmatpush1.bf16.xpose.msra.mxu0 0
  %5273 = vmatprep.subr.bf16.mxu0 0
  %5274 = vmatpush1.bf16.xpose.msra.mxu0 0
  %5275 = vmatprep.subr.bf16.mxu0 0
  %5276 = vmatpush1.bf16.xpose.msra.mxu0 0
  %5277 = vmatprep.subr.bf16.mxu0 0
  %5278 = vmatpush1.bf16.xpose.msra.mxu0 0
  %5279 = vmatprep.subr.bf16.mxu0 0
  %5280 = vmatpush1.bf16.xpose.msra.mxu0 0
  %5281 = vmatprep.subr.bf16.mxu0 0
  %5282 = vmatpush1.bf16.xpose.msra.mxu0 0
  %5283 = vmatprep.subr.bf16.mxu0 0
  %5284 = vmatpush1.bf16.xpose.msra.mxu0 0
  %5285 = vmatprep.mubr.bf16.mxu0 0
  %5286 = vmatmul.mubr.bf16.gmra.mrb[0].mxu0 %v5206
  %v5287 = vpop.f32.mrb[0].mxu0
  %v5288 = vadd.f32 0.0, %v5287
  %v5289 = vpop.f32.mrb[0].mxu0
  %v5290 = vpop.f32.mrb[0].mxu0
  %v5291 = vadd.f32 0.0, %v5290
  %v5292 = vpop.f32.mrb[0].mxu0
  %5293 = vmatprep.mubr.bf16.mxu0 0
  %5294 = vmatmul.mubr.bf16.gmra.mrb[0].mxu0 %v5209
  %v5295 = vpop.f32.mrb[0].mxu0
  %v5296 = vadd.f32 0.0, %v5295
  %v5297 = vpop.f32.mrb[0].mxu0
  %v5298 = vpop.f32.mrb[0].mxu0
  %v5299 = vadd.f32 0.0, %v5298
  %v5300 = vpop.f32.mrb[0].mxu0
  %5301 = vmatprep.mubr.bf16.mxu0 0
  %5302 = vmatmul.mubr.bf16.gmra.mrb[0].mxu0 %v5212
  %v5303 = vpop.f32.mrb[0].mxu0
  %v5304 = vadd.f32 0.0, %v5303
  %v5305 = vpop.f32.mrb[0].mxu0
  %v5306 = vpop.f32.mrb[0].mxu0
  %v5307 = vadd.f32 0.0, %v5306
  %v5308 = vpop.f32.mrb[0].mxu0
  %5309 = vmatprep.mubr.bf16.mxu0 0
  %5310 = vmatmul.mubr.bf16.gmra.mrb[0].mxu0 %v5215
  %v5311 = vpop.f32.mrb[0].mxu0
  %v5312 = vadd.f32 0.0, %v5311
  %v5313 = vpop.f32.mrb[0].mxu0
  %v5314 = vpop.f32.mrb[0].mxu0
  %v5315 = vadd.f32 0.0, %v5314
  %v5316 = vpop.f32.mrb[0].mxu0
  %5317 = vmatprep.mubr.bf16.mxu0 0
  %5318 = vmatmul.mubr.bf16.gmra.mrb[0].mxu0 %v5218
  %v5319 = vpop.f32.mrb[0].mxu0
  %v5320 = vadd.f32 0.0, %v5319
  %v5321 = vpop.f32.mrb[0].mxu0
  %v5322 = vpop.f32.mrb[0].mxu0
  %v5323 = vadd.f32 0.0, %v5322
  %v5324 = vpop.f32.mrb[0].mxu0
  %5325 = vmatprep.mubr.bf16.mxu0 0
  %5326 = vmatmul.mubr.bf16.gmra.mrb[0].mxu0 %v5221
  %v5327 = vpop.f32.mrb[0].mxu0
  %v5328 = vadd.f32 0.0, %v5327
  %v5329 = vpop.f32.mrb[0].mxu0
  %v5330 = vpop.f32.mrb[0].mxu0
  %v5331 = vadd.f32 0.0, %v5330
  %v5332 = vpop.f32.mrb[0].mxu0
  %5333 = vmatprep.mubr.bf16.mxu0 0
  %5334 = vmatmul.mubr.bf16.gmra.mrb[0].mxu0 %v5224
  %v5335 = vpop.f32.mrb[0].mxu0
  %v5336 = vadd.f32 0.0, %v5335
  %v5337 = vpop.f32.mrb[0].mxu0
  %v5338 = vpop.f32.mrb[0].mxu0
  %v5339 = vadd.f32 0.0, %v5338
  %v5340 = vpop.f32.mrb[0].mxu0
  %5341 = vmatprep.mubr.bf16.mxu0 0
  %5342 = vmatmul.mubr.bf16.gmra.mrb[0].mxu0 %v5227
  %v5343 = vpop.f32.mrb[0].mxu0
  %v5344 = vadd.f32 0.0, %v5343
  %v5345 = vpop.f32.mrb[0].mxu0
  %v5346 = vpop.f32.mrb[0].mxu0
  %v5347 = vadd.f32 0.0, %v5346
  %v5348 = vpop.f32.mrb[0].mxu0
  %5349 = vdwg.mxu0
  %v5350 = vsel %vm1078, %v5288, -1e+30
  %v5351 = vsel %vm1079, %v5291, -1e+30
  %v5352 = vsel %vm1080, %v5296, -1e+30
  %v5353 = vsel %vm1081, %v5299, -1e+30
  %v5354 = vsel %vm1082, %v5304, -1e+30
  %v5355 = vsel %vm1083, %v5307, -1e+30
  %v5356 = vsel %vm1084, %v5312, -1e+30
  %v5357 = vsel %vm1085, %v5315, -1e+30
  %v5358 = vsel %vm1086, %v5320, -1e+30
  %v5359 = vsel %vm1087, %v5323, -1e+30
  %v5360 = vsel %vm1088, %v5328, -1e+30
  %v5361 = vsel %vm1089, %v5331, -1e+30
  %v5362 = vsel %vm1090, %v5336, -1e+30
  %v5363 = vsel %vm1091, %v5339, -1e+30
  %v5364 = vsel %vm1092, %v5344, -1e+30
  %v5365 = vsel %vm1093, %v5347, -1e+30
  %5366 = vmax.xlane.f32.xlu0 %v5350
  %v5367 = vpop.xlane.xlu0 %5366
  %5368 = vmax.xlane.f32.xlu0 %v5351
  %v5369 = vpop.xlane.xlu0 %5368
  %5370 = vmax.xlane.f32.xlu0 %v5352
  %v5371 = vpop.xlane.xlu0 %5370
  %5372 = vmax.xlane.f32.xlu0 %v5353
  %v5373 = vpop.xlane.xlu0 %5372
  %5374 = vmax.xlane.f32.xlu0 %v5354
  %v5375 = vpop.xlane.xlu0 %5374
  %5376 = vmax.xlane.f32.xlu0 %v5355
  %v5377 = vpop.xlane.xlu0 %5376
  %5378 = vmax.xlane.f32.xlu0 %v5356
  %v5379 = vpop.xlane.xlu0 %5378
  %5380 = vmax.xlane.f32.xlu0 %v5357
  %v5381 = vpop.xlane.xlu0 %5380
  %5382 = vmax.xlane.f32.xlu0 %v5358
  %v5383 = vpop.xlane.xlu0 %5382
  %5384 = vmax.xlane.f32.xlu0 %v5359
  %v5385 = vpop.xlane.xlu0 %5384
  %5386 = vmax.xlane.f32.xlu0 %v5360
  %v5387 = vpop.xlane.xlu0 %5386
  %5388 = vmax.xlane.f32.xlu0 %v5361
  %v5389 = vpop.xlane.xlu0 %5388
  %5390 = vmax.xlane.f32.xlu0 %v5362
  %v5391 = vpop.xlane.xlu0 %5390
  %5392 = vmax.xlane.f32.xlu0 %v5363
  %v5393 = vpop.xlane.xlu0 %5392
  %5394 = vmax.xlane.f32.xlu0 %v5364
  %v5395 = vpop.xlane.xlu0 %5394
  %5396 = vmax.xlane.f32.xlu0 %v5365
  %v5397 = vpop.xlane.xlu0 %5396
  %v5398 = vsub.f32 %v5350, %v5367
  %v5399 = vsub.f32 %v5351, %v5369
  %v5400 = vsub.f32 %v5352, %v5371
  %v5401 = vsub.f32 %v5353, %v5373
  %v5402 = vsub.f32 %v5354, %v5375
  %v5403 = vsub.f32 %v5355, %v5377
  %v5404 = vsub.f32 %v5356, %v5379
  %v5405 = vsub.f32 %v5357, %v5381
  %v5406 = vsub.f32 %v5358, %v5383
  %v5407 = vsub.f32 %v5359, %v5385
  %v5408 = vsub.f32 %v5360, %v5387
  %v5409 = vsub.f32 %v5361, %v5389
  %v5410 = vsub.f32 %v5362, %v5391
  %v5411 = vsub.f32 %v5363, %v5393
  %v5412 = vsub.f32 %v5364, %v5395
  %v5413 = vsub.f32 %v5365, %v5397
  %v5414 = vmul.f32 %v5398, 1.442695
  %v5415 = vpow.pop %v5414
  %v5416 = vmul.f32 %v5399, 1.442695
  %v5417 = vpow.pop %v5416
  %v5418 = vmul.f32 %v5400, 1.442695
  %v5419 = vpow.pop %v5418
  %v5420 = vmul.f32 %v5401, 1.442695
  %v5421 = vpow.pop %v5420
  %v5422 = vmul.f32 %v5402, 1.442695
  %v5423 = vpow.pop %v5422
  %v5424 = vmul.f32 %v5403, 1.442695
  %v5425 = vpow.pop %v5424
  %v5426 = vmul.f32 %v5404, 1.442695
  %v5427 = vpow.pop %v5426
  %v5428 = vmul.f32 %v5405, 1.442695
  %v5429 = vpow.pop %v5428
  %v5430 = vmul.f32 %v5406, 1.442695
  %v5431 = vpow.pop %v5430
  %v5432 = vmul.f32 %v5407, 1.442695
  %v5433 = vpow.pop %v5432
  %v5434 = vmul.f32 %v5408, 1.442695
  %v5435 = vpow.pop %v5434
  %v5436 = vmul.f32 %v5409, 1.442695
  %v5437 = vpow.pop %v5436
  %v5438 = vmul.f32 %v5410, 1.442695
  %v5439 = vpow.pop %v5438
  %v5440 = vmul.f32 %v5411, 1.442695
  %v5441 = vpow.pop %v5440
  %v5442 = vmul.f32 %v5412, 1.442695
  %v5443 = vpow.pop %v5442
  %v5444 = vmul.f32 %v5413, 1.442695
  %v5445 = vpow.pop %v5444
  %5446 = vadd.xlane.f32.xlu0 %v5415
  %v5447 = vpop.xlane.xlu0 %5446
  %5448 = vadd.xlane.f32.xlu0 %v5417
  %v5449 = vpop.xlane.xlu0 %5448
  %5450 = vadd.xlane.f32.xlu0 %v5419
  %v5451 = vpop.xlane.xlu0 %5450
  %5452 = vadd.xlane.f32.xlu0 %v5421
  %v5453 = vpop.xlane.xlu0 %5452
  %5454 = vadd.xlane.f32.xlu0 %v5423
  %v5455 = vpop.xlane.xlu0 %5454
  %5456 = vadd.xlane.f32.xlu0 %v5425
  %v5457 = vpop.xlane.xlu0 %5456
  %5458 = vadd.xlane.f32.xlu0 %v5427
  %v5459 = vpop.xlane.xlu0 %5458
  %5460 = vadd.xlane.f32.xlu0 %v5429
  %v5461 = vpop.xlane.xlu0 %5460
  %5462 = vadd.xlane.f32.xlu0 %v5431
  %v5463 = vpop.xlane.xlu0 %5462
  %5464 = vadd.xlane.f32.xlu0 %v5433
  %v5465 = vpop.xlane.xlu0 %5464
  %5466 = vadd.xlane.f32.xlu0 %v5435
  %v5467 = vpop.xlane.xlu0 %5466
  %5468 = vadd.xlane.f32.xlu0 %v5437
  %v5469 = vpop.xlane.xlu0 %5468
  %5470 = vadd.xlane.f32.xlu0 %v5439
  %v5471 = vpop.xlane.xlu0 %5470
  %5472 = vadd.xlane.f32.xlu0 %v5441
  %v5473 = vpop.xlane.xlu0 %5472
  %5474 = vadd.xlane.f32.xlu0 %v5443
  %v5475 = vpop.xlane.xlu0 %5474
  %5476 = vadd.xlane.f32.xlu0 %v5445
  %v5477 = vpop.xlane.xlu0 %5476
  %v5478 = vrcp.pop %v5447
  %v5479 = vrcp.pop %v5449
  %v5480 = vrcp.pop %v5451
  %v5481 = vrcp.pop %v5453
  %v5482 = vrcp.pop %v5455
  %v5483 = vrcp.pop %v5457
  %v5484 = vrcp.pop %v5459
  %v5485 = vrcp.pop %v5461
  %v5486 = vrcp.pop %v5463
  %v5487 = vrcp.pop %v5465
  %v5488 = vrcp.pop %v5467
  %v5489 = vrcp.pop %v5469
  %v5490 = vrcp.pop %v5471
  %v5491 = vrcp.pop %v5473
  %v5492 = vrcp.pop %v5475
  %v5493 = vrcp.pop %v5477
  %v5494 = vmul.f32 %v5415, %v5478
  %v5495 = vmul.f32 %v5417, %v5479
  %v5496 = vmul.f32 %v5419, %v5480
  %v5497 = vmul.f32 %v5421, %v5481
  %v5498 = vmul.f32 %v5423, %v5482
  %v5499 = vmul.f32 %v5425, %v5483
  %v5500 = vmul.f32 %v5427, %v5484
  %v5501 = vmul.f32 %v5429, %v5485
  %v5502 = vmul.f32 %v5431, %v5486
  %v5503 = vmul.f32 %v5433, %v5487
  %v5504 = vmul.f32 %v5435, %v5488
  %v5505 = vmul.f32 %v5437, %v5489
  %v5506 = vmul.f32 %v5439, %v5490
  %v5507 = vmul.f32 %v5441, %v5491
  %v5508 = vmul.f32 %v5443, %v5492
  %v5509 = vmul.f32 %v5445, %v5493
  %v5510 = vpack.c.bf16 %v5495, %v5494
  %v5511 = vpack.c.bf16 %v5497, %v5496
  %v5512 = vpack.c.bf16 %v5499, %v5498
  %v5513 = vpack.c.bf16 %v5501, %v5500
  %v5514 = vpack.c.bf16 %v5503, %v5502
  %v5515 = vpack.c.bf16 %v5505, %v5504
  %v5516 = vpack.c.bf16 %v5507, %v5506
  %v5517 = vpack.c.bf16 %v5509, %v5508
  %v5518 = vpack.c.bf16 %v5101, %v5097
  %v5519 = vpack.c.bf16 %v5111, %v5107
  %v5520 = vpack.c.bf16 %v5121, %v5117
  %v5521 = vpack.c.bf16 %v5131, %v5127
  %v5522 = vpack.c.bf16 %v5141, %v5137
  %v5523 = vpack.c.bf16 %v5151, %v5147
  %v5524 = vpack.c.bf16 %v5161, %v5157
  %v5525 = vpack.c.bf16 %v5171, %v5167
  %5526 = vmatprep.subr.bf16.mxu0 0
  %5527 = vmatpush1.bf16.msra.mxu0 %v5518
  %5528 = vmatprep.subr.bf16.mxu0 0
  %5529 = vmatpush1.bf16.msra.mxu0 %v5519
  %5530 = vmatprep.subr.bf16.mxu0 0
  %5531 = vmatpush1.bf16.msra.mxu0 %v5520
  %5532 = vmatprep.subr.bf16.mxu0 0
  %5533 = vmatpush1.bf16.msra.mxu0 %v5521
  %5534 = vmatprep.subr.bf16.mxu0 0
  %5535 = vmatpush1.bf16.msra.mxu0 %v5522
  %5536 = vmatprep.subr.bf16.mxu0 0
  %5537 = vmatpush1.bf16.msra.mxu0 %v5523
  %5538 = vmatprep.subr.bf16.mxu0 0
  %5539 = vmatpush1.bf16.msra.mxu0 %v5524
  %5540 = vmatprep.subr.bf16.mxu0 0
  %5541 = vmatpush1.bf16.msra.mxu0 %v5525
  %5542 = vmatprep.subr.bf16.mxu0 0
  %5543 = vmatpush1.bf16.msra.mxu0 0
  %5544 = vmatprep.subr.bf16.mxu0 0
  %5545 = vmatpush1.bf16.msra.mxu0 0
  %5546 = vmatprep.subr.bf16.mxu0 0
  %5547 = vmatpush1.bf16.msra.mxu0 0
  %5548 = vmatprep.subr.bf16.mxu0 0
  %5549 = vmatpush1.bf16.msra.mxu0 0
  %5550 = vmatprep.subr.bf16.mxu0 0
  %5551 = vmatpush1.bf16.msra.mxu0 0
  %5552 = vmatprep.subr.bf16.mxu0 0
  %5553 = vmatpush1.bf16.msra.mxu0 0
  %5554 = vmatprep.subr.bf16.mxu0 0
  %5555 = vmatpush1.bf16.msra.mxu0 0
  %5556 = vmatprep.subr.bf16.mxu0 0
  %5557 = vmatpush1.bf16.msra.mxu0 0
  %5558 = vmatprep.mubr.bf16.mxu0 0
  %5559 = vmatmul.mubr.bf16.gmra.mrb[0].mxu0 %v5510
  %v5560 = vpop.f32.mrb[0].mxu0
  %v5561 = vadd.f32 0.0, %v5560
  %v5562 = vpop.f32.mrb[0].mxu0
  %v5563 = vpop.f32.mrb[0].mxu0
  %v5564 = vadd.f32 0.0, %v5563
  %v5565 = vpop.f32.mrb[0].mxu0
  %5566 = vmatprep.mubr.bf16.mxu0 0
  %5567 = vmatmul.mubr.bf16.gmra.mrb[0].mxu0 %v5511
  %v5568 = vpop.f32.mrb[0].mxu0
  %v5569 = vadd.f32 0.0, %v5568
  %v5570 = vpop.f32.mrb[0].mxu0
  %v5571 = vpop.f32.mrb[0].mxu0
  %v5572 = vadd.f32 0.0, %v5571
  %v5573 = vpop.f32.mrb[0].mxu0
  %5574 = vmatprep.mubr.bf16.mxu0 0
  %5575 = vmatmul.mubr.bf16.gmra.mrb[0].mxu0 %v5512
  %v5576 = vpop.f32.mrb[0].mxu0
  %v5577 = vadd.f32 0.0, %v5576
  %v5578 = vpop.f32.mrb[0].mxu0
  %v5579 = vpop.f32.mrb[0].mxu0
  %v5580 = vadd.f32 0.0, %v5579
  %v5581 = vpop.f32.mrb[0].mxu0
  %5582 = vmatprep.mubr.bf16.mxu0 0
  %5583 = vmatmul.mubr.bf16.gmra.mrb[0].mxu0 %v5513
  %v5584 = vpop.f32.mrb[0].mxu0
  %v5585 = vadd.f32 0.0, %v5584
  %v5586 = vpop.f32.mrb[0].mxu0
  %v5587 = vpop.f32.mrb[0].mxu0
  %v5588 = vadd.f32 0.0, %v5587
  %v5589 = vpop.f32.mrb[0].mxu0
  %5590 = vmatprep.mubr.bf16.mxu0 0
  %5591 = vmatmul.mubr.bf16.gmra.mrb[0].mxu0 %v5514
  %v5592 = vpop.f32.mrb[0].mxu0
  %v5593 = vadd.f32 0.0, %v5592
  %v5594 = vpop.f32.mrb[0].mxu0
  %v5595 = vpop.f32.mrb[0].mxu0
  %v5596 = vadd.f32 0.0, %v5595
  %v5597 = vpop.f32.mrb[0].mxu0
  %5598 = vmatprep.mubr.bf16.mxu0 0
  %5599 = vmatmul.mubr.bf16.gmra.mrb[0].mxu0 %v5515
  %v5600 = vpop.f32.mrb[0].mxu0
  %v5601 = vadd.f32 0.0, %v5600
  %v5602 = vpop.f32.mrb[0].mxu0
  %v5603 = vpop.f32.mrb[0].mxu0
  %v5604 = vadd.f32 0.0, %v5603
  %v5605 = vpop.f32.mrb[0].mxu0
  %5606 = vmatprep.mubr.bf16.mxu0 0
  %5607 = vmatmul.mubr.bf16.gmra.mrb[0].mxu0 %v5516
  %v5608 = vpop.f32.mrb[0].mxu0
  %v5609 = vadd.f32 0.0, %v5608
  %v5610 = vpop.f32.mrb[0].mxu0
  %v5611 = vpop.f32.mrb[0].mxu0
  %v5612 = vadd.f32 0.0, %v5611
  %v5613 = vpop.f32.mrb[0].mxu0
  %5614 = vmatprep.mubr.bf16.mxu0 0
  %5615 = vmatmul.mubr.bf16.gmra.mrb[0].mxu0 %v5517
  %v5616 = vpop.f32.mrb[0].mxu0
  %v5617 = vadd.f32 0.0, %v5616
  %v5618 = vpop.f32.mrb[0].mxu0
  %v5619 = vpop.f32.mrb[0].mxu0
  %v5620 = vadd.f32 0.0, %v5619
  %v5621 = vpop.f32.mrb[0].mxu0
  %5622 = vdwg.mxu0
  %5623 = vrot.lane.b32.xlu0 %v5173, 112
  %v5624 = vpop.permute.xlu0 %5623
  %5625 = vrot.lane.b32.xlu0 %v5174, 112
  %v5626 = vpop.permute.xlu0 %5625
  %5627 = vrot.lane.b32.xlu0 %v5175, 112
  %v5628 = vpop.permute.xlu0 %5627
  %5629 = vrot.lane.b32.xlu0 %v5176, 112
  %v5630 = vpop.permute.xlu0 %5629
  %5631 = vrot.lane.b32.xlu0 %v5177, 112
  %v5632 = vpop.permute.xlu0 %5631
  %5633 = vrot.lane.b32.xlu0 %v5178, 112
  %v5634 = vpop.permute.xlu0 %5633
  %5635 = vrot.lane.b32.xlu0 %v5179, 112
  %v5636 = vpop.permute.xlu0 %5635
  %5637 = vrot.lane.b32.xlu0 %v5180, 112
  %v5638 = vpop.permute.xlu0 %5637
  %5639 = vrot.lane.b32.xlu0 %v5173, 48
  %v5640 = vpop.permute.xlu0 %5639
  %5641 = vrot.lane.b32.xlu0 %v5174, 48
  %v5642 = vpop.permute.xlu0 %5641
  %5643 = vrot.lane.b32.xlu0 %v5175, 48
  %v5644 = vpop.permute.xlu0 %5643
  %5645 = vrot.lane.b32.xlu0 %v5176, 48
  %v5646 = vpop.permute.xlu0 %5645
  %5647 = vrot.lane.b32.xlu0 %v5177, 48
  %v5648 = vpop.permute.xlu0 %5647
  %5649 = vrot.lane.b32.xlu0 %v5178, 48
  %v5650 = vpop.permute.xlu0 %5649
  %5651 = vrot.lane.b32.xlu0 %v5179, 48
  %v5652 = vpop.permute.xlu0 %5651
  %5653 = vrot.lane.b32.xlu0 %v5180, 48
  %v5654 = vpop.permute.xlu0 %5653
  %v5656 = vsel %vm1582, %v5624, 0
  %v5659 = vsel %vm1582, %v5626, 0
  %v5662 = vsel %vm1582, %v5628, 0
  %v5665 = vsel %vm1582, %v5630, 0
  %v5668 = vsel %vm1582, %v5632, 0
  %v5671 = vsel %vm1582, %v5634, 0
  %v5674 = vsel %vm1582, %v5636, 0
  %v5677 = vsel %vm1582, %v5638, 0
  %v5680 = vsel %vm1582, %v5640, 0
  %v5683 = vsel %vm1582, %v5642, 0
  %v5686 = vsel %vm1582, %v5644, 0
  %v5689 = vsel %vm1582, %v5646, 0
  %v5692 = vsel %vm1582, %v5648, 0
  %v5695 = vsel %vm1582, %v5650, 0
  %v5698 = vsel %vm1582, %v5652, 0
  %v5701 = vsel %vm1582, %v5654, 0
  %5703 = vmatprep.subr.bf16.mxu0 0
  %5704 = vmatpush1.bf16.xpose.msra.mxu0 %v5680
  %5705 = vmatprep.subr.bf16.mxu0 0
  %5706 = vmatpush1.bf16.xpose.msra.mxu0 %v5683
  %5707 = vmatprep.subr.bf16.mxu0 0
  %5708 = vmatpush1.bf16.xpose.msra.mxu0 %v5686
  %5709 = vmatprep.subr.bf16.mxu0 0
  %5710 = vmatpush1.bf16.xpose.msra.mxu0 %v5689
  %5711 = vmatprep.subr.bf16.mxu0 0
  %5712 = vmatpush1.bf16.xpose.msra.mxu0 %v5692
  %5713 = vmatprep.subr.bf16.mxu0 0
  %5714 = vmatpush1.bf16.xpose.msra.mxu0 %v5695
  %5715 = vmatprep.subr.bf16.mxu0 0
  %5716 = vmatpush1.bf16.xpose.msra.mxu0 %v5698
  %5717 = vmatprep.subr.bf16.mxu0 0
  %5718 = vmatpush1.bf16.xpose.msra.mxu0 %v5701
  %5719 = vmatprep.subr.bf16.mxu0 0
  %5720 = vmatpush1.bf16.xpose.msra.mxu0 0
  %5721 = vmatprep.subr.bf16.mxu0 0
  %5722 = vmatpush1.bf16.xpose.msra.mxu0 0
  %5723 = vmatprep.subr.bf16.mxu0 0
  %5724 = vmatpush1.bf16.xpose.msra.mxu0 0
  %5725 = vmatprep.subr.bf16.mxu0 0
  %5726 = vmatpush1.bf16.xpose.msra.mxu0 0
  %5727 = vmatprep.subr.bf16.mxu0 0
  %5728 = vmatpush1.bf16.xpose.msra.mxu0 0
  %5729 = vmatprep.subr.bf16.mxu0 0
  %5730 = vmatpush1.bf16.xpose.msra.mxu0 0
  %5731 = vmatprep.subr.bf16.mxu0 0
  %5732 = vmatpush1.bf16.xpose.msra.mxu0 0
  %5733 = vmatprep.subr.bf16.mxu0 0
  %5734 = vmatpush1.bf16.xpose.msra.mxu0 0
  %5735 = vmatprep.mubr.bf16.mxu0 0
  %5736 = vmatmul.mubr.bf16.gmra.mrb[0].mxu0 %v5656
  %v5737 = vpop.f32.mrb[0].mxu0
  %v5738 = vadd.f32 0.0, %v5737
  %v5739 = vpop.f32.mrb[0].mxu0
  %v5740 = vpop.f32.mrb[0].mxu0
  %v5741 = vadd.f32 0.0, %v5740
  %v5742 = vpop.f32.mrb[0].mxu0
  %5743 = vmatprep.mubr.bf16.mxu0 0
  %5744 = vmatmul.mubr.bf16.gmra.mrb[0].mxu0 %v5659
  %v5745 = vpop.f32.mrb[0].mxu0
  %v5746 = vadd.f32 0.0, %v5745
  %v5747 = vpop.f32.mrb[0].mxu0
  %v5748 = vpop.f32.mrb[0].mxu0
  %v5749 = vadd.f32 0.0, %v5748
  %v5750 = vpop.f32.mrb[0].mxu0
  %5751 = vmatprep.mubr.bf16.mxu0 0
  %5752 = vmatmul.mubr.bf16.gmra.mrb[0].mxu0 %v5662
  %v5753 = vpop.f32.mrb[0].mxu0
  %v5754 = vadd.f32 0.0, %v5753
  %v5755 = vpop.f32.mrb[0].mxu0
  %v5756 = vpop.f32.mrb[0].mxu0
  %v5757 = vadd.f32 0.0, %v5756
  %v5758 = vpop.f32.mrb[0].mxu0
  %5759 = vmatprep.mubr.bf16.mxu0 0
  %5760 = vmatmul.mubr.bf16.gmra.mrb[0].mxu0 %v5665
  %v5761 = vpop.f32.mrb[0].mxu0
  %v5762 = vadd.f32 0.0, %v5761
  %v5763 = vpop.f32.mrb[0].mxu0
  %v5764 = vpop.f32.mrb[0].mxu0
  %v5765 = vadd.f32 0.0, %v5764
  %v5766 = vpop.f32.mrb[0].mxu0
  %5767 = vmatprep.mubr.bf16.mxu0 0
  %5768 = vmatmul.mubr.bf16.gmra.mrb[0].mxu0 %v5668
  %v5769 = vpop.f32.mrb[0].mxu0
  %v5770 = vadd.f32 0.0, %v5769
  %v5771 = vpop.f32.mrb[0].mxu0
  %v5772 = vpop.f32.mrb[0].mxu0
  %v5773 = vadd.f32 0.0, %v5772
  %v5774 = vpop.f32.mrb[0].mxu0
  %5775 = vmatprep.mubr.bf16.mxu0 0
  %5776 = vmatmul.mubr.bf16.gmra.mrb[0].mxu0 %v5671
  %v5777 = vpop.f32.mrb[0].mxu0
  %v5778 = vadd.f32 0.0, %v5777
  %v5779 = vpop.f32.mrb[0].mxu0
  %v5780 = vpop.f32.mrb[0].mxu0
  %v5781 = vadd.f32 0.0, %v5780
  %v5782 = vpop.f32.mrb[0].mxu0
  %5783 = vmatprep.mubr.bf16.mxu0 0
  %5784 = vmatmul.mubr.bf16.gmra.mrb[0].mxu0 %v5674
  %v5785 = vpop.f32.mrb[0].mxu0
  %v5786 = vadd.f32 0.0, %v5785
  %v5787 = vpop.f32.mrb[0].mxu0
  %v5788 = vpop.f32.mrb[0].mxu0
  %v5789 = vadd.f32 0.0, %v5788
  %v5790 = vpop.f32.mrb[0].mxu0
  %5791 = vmatprep.mubr.bf16.mxu0 0
  %5792 = vmatmul.mubr.bf16.gmra.mrb[0].mxu0 %v5677
  %v5793 = vpop.f32.mrb[0].mxu0
  %v5794 = vadd.f32 0.0, %v5793
  %v5795 = vpop.f32.mrb[0].mxu0
  %v5796 = vpop.f32.mrb[0].mxu0
  %v5797 = vadd.f32 0.0, %v5796
  %v5798 = vpop.f32.mrb[0].mxu0
  %5799 = vdwg.mxu0
  %v5800 = vsel %vm1078, %v5738, -1e+30
  %v5801 = vsel %vm1079, %v5741, -1e+30
  %v5802 = vsel %vm1080, %v5746, -1e+30
  %v5803 = vsel %vm1081, %v5749, -1e+30
  %v5804 = vsel %vm1082, %v5754, -1e+30
  %v5805 = vsel %vm1083, %v5757, -1e+30
  %v5806 = vsel %vm1084, %v5762, -1e+30
  %v5807 = vsel %vm1085, %v5765, -1e+30
  %v5808 = vsel %vm1086, %v5770, -1e+30
  %v5809 = vsel %vm1087, %v5773, -1e+30
  %v5810 = vsel %vm1088, %v5778, -1e+30
  %v5811 = vsel %vm1089, %v5781, -1e+30
  %v5812 = vsel %vm1090, %v5786, -1e+30
  %v5813 = vsel %vm1091, %v5789, -1e+30
  %v5814 = vsel %vm1092, %v5794, -1e+30
  %v5815 = vsel %vm1093, %v5797, -1e+30
  %5816 = vmax.xlane.f32.xlu0 %v5800
  %v5817 = vpop.xlane.xlu0 %5816
  %5818 = vmax.xlane.f32.xlu0 %v5801
  %v5819 = vpop.xlane.xlu0 %5818
  %5820 = vmax.xlane.f32.xlu0 %v5802
  %v5821 = vpop.xlane.xlu0 %5820
  %5822 = vmax.xlane.f32.xlu0 %v5803
  %v5823 = vpop.xlane.xlu0 %5822
  %5824 = vmax.xlane.f32.xlu0 %v5804
  %v5825 = vpop.xlane.xlu0 %5824
  %5826 = vmax.xlane.f32.xlu0 %v5805
  %v5827 = vpop.xlane.xlu0 %5826
  %5828 = vmax.xlane.f32.xlu0 %v5806
  %v5829 = vpop.xlane.xlu0 %5828
  %5830 = vmax.xlane.f32.xlu0 %v5807
  %v5831 = vpop.xlane.xlu0 %5830
  %5832 = vmax.xlane.f32.xlu0 %v5808
  %v5833 = vpop.xlane.xlu0 %5832
  %5834 = vmax.xlane.f32.xlu0 %v5809
  %v5835 = vpop.xlane.xlu0 %5834
  %5836 = vmax.xlane.f32.xlu0 %v5810
  %v5837 = vpop.xlane.xlu0 %5836
  %5838 = vmax.xlane.f32.xlu0 %v5811
  %v5839 = vpop.xlane.xlu0 %5838
  %5840 = vmax.xlane.f32.xlu0 %v5812
  %v5841 = vpop.xlane.xlu0 %5840
  %5842 = vmax.xlane.f32.xlu0 %v5813
  %v5843 = vpop.xlane.xlu0 %5842
  %5844 = vmax.xlane.f32.xlu0 %v5814
  %v5845 = vpop.xlane.xlu0 %5844
  %5846 = vmax.xlane.f32.xlu0 %v5815
  %v5847 = vpop.xlane.xlu0 %5846
  %v5848 = vsub.f32 %v5800, %v5817
  %v5849 = vsub.f32 %v5801, %v5819
  %v5850 = vsub.f32 %v5802, %v5821
  %v5851 = vsub.f32 %v5803, %v5823
  %v5852 = vsub.f32 %v5804, %v5825
  %v5853 = vsub.f32 %v5805, %v5827
  %v5854 = vsub.f32 %v5806, %v5829
  %v5855 = vsub.f32 %v5807, %v5831
  %v5856 = vsub.f32 %v5808, %v5833
  %v5857 = vsub.f32 %v5809, %v5835
  %v5858 = vsub.f32 %v5810, %v5837
  %v5859 = vsub.f32 %v5811, %v5839
  %v5860 = vsub.f32 %v5812, %v5841
  %v5861 = vsub.f32 %v5813, %v5843
  %v5862 = vsub.f32 %v5814, %v5845
  %v5863 = vsub.f32 %v5815, %v5847
  %v5864 = vmul.f32 %v5848, 1.442695
  %v5865 = vpow.pop %v5864
  %v5866 = vmul.f32 %v5849, 1.442695
  %v5867 = vpow.pop %v5866
  %v5868 = vmul.f32 %v5850, 1.442695
  %v5869 = vpow.pop %v5868
  %v5870 = vmul.f32 %v5851, 1.442695
  %v5871 = vpow.pop %v5870
  %v5872 = vmul.f32 %v5852, 1.442695
  %v5873 = vpow.pop %v5872
  %v5874 = vmul.f32 %v5853, 1.442695
  %v5875 = vpow.pop %v5874
  %v5876 = vmul.f32 %v5854, 1.442695
  %v5877 = vpow.pop %v5876
  %v5878 = vmul.f32 %v5855, 1.442695
  %v5879 = vpow.pop %v5878
  %v5880 = vmul.f32 %v5856, 1.442695
  %v5881 = vpow.pop %v5880
  %v5882 = vmul.f32 %v5857, 1.442695
  %v5883 = vpow.pop %v5882
  %v5884 = vmul.f32 %v5858, 1.442695
  %v5885 = vpow.pop %v5884
  %v5886 = vmul.f32 %v5859, 1.442695
  %v5887 = vpow.pop %v5886
  %v5888 = vmul.f32 %v5860, 1.442695
  %v5889 = vpow.pop %v5888
  %v5890 = vmul.f32 %v5861, 1.442695
  %v5891 = vpow.pop %v5890
  %v5892 = vmul.f32 %v5862, 1.442695
  %v5893 = vpow.pop %v5892
  %v5894 = vmul.f32 %v5863, 1.442695
  %v5895 = vpow.pop %v5894
  %5896 = vadd.xlane.f32.xlu0 %v5865
  %v5897 = vpop.xlane.xlu0 %5896
  %5898 = vadd.xlane.f32.xlu0 %v5867
  %v5899 = vpop.xlane.xlu0 %5898
  %5900 = vadd.xlane.f32.xlu0 %v5869
  %v5901 = vpop.xlane.xlu0 %5900
  %5902 = vadd.xlane.f32.xlu0 %v5871
  %v5903 = vpop.xlane.xlu0 %5902
  %5904 = vadd.xlane.f32.xlu0 %v5873
  %v5905 = vpop.xlane.xlu0 %5904
  %5906 = vadd.xlane.f32.xlu0 %v5875
  %v5907 = vpop.xlane.xlu0 %5906
  %5908 = vadd.xlane.f32.xlu0 %v5877
  %v5909 = vpop.xlane.xlu0 %5908
  %5910 = vadd.xlane.f32.xlu0 %v5879
  %v5911 = vpop.xlane.xlu0 %5910
  %5912 = vadd.xlane.f32.xlu0 %v5881
  %v5913 = vpop.xlane.xlu0 %5912
  %5914 = vadd.xlane.f32.xlu0 %v5883
  %v5915 = vpop.xlane.xlu0 %5914
  %5916 = vadd.xlane.f32.xlu0 %v5885
  %v5917 = vpop.xlane.xlu0 %5916
  %5918 = vadd.xlane.f32.xlu0 %v5887
  %v5919 = vpop.xlane.xlu0 %5918
  %5920 = vadd.xlane.f32.xlu0 %v5889
  %v5921 = vpop.xlane.xlu0 %5920
  %5922 = vadd.xlane.f32.xlu0 %v5891
  %v5923 = vpop.xlane.xlu0 %5922
  %5924 = vadd.xlane.f32.xlu0 %v5893
  %v5925 = vpop.xlane.xlu0 %5924
  %5926 = vadd.xlane.f32.xlu0 %v5895
  %v5927 = vpop.xlane.xlu0 %5926
  %v5928 = vrcp.pop %v5897
  %v5929 = vrcp.pop %v5899
  %v5930 = vrcp.pop %v5901
  %v5931 = vrcp.pop %v5903
  %v5932 = vrcp.pop %v5905
  %v5933 = vrcp.pop %v5907
  %v5934 = vrcp.pop %v5909
  %v5935 = vrcp.pop %v5911
  %v5936 = vrcp.pop %v5913
  %v5937 = vrcp.pop %v5915
  %v5938 = vrcp.pop %v5917
  %v5939 = vrcp.pop %v5919
  %v5940 = vrcp.pop %v5921
  %v5941 = vrcp.pop %v5923
  %v5942 = vrcp.pop %v5925
  %v5943 = vrcp.pop %v5927
  %v5944 = vmul.f32 %v5865, %v5928
  %v5945 = vmul.f32 %v5867, %v5929
  %v5946 = vmul.f32 %v5869, %v5930
  %v5947 = vmul.f32 %v5871, %v5931
  %v5948 = vmul.f32 %v5873, %v5932
  %v5949 = vmul.f32 %v5875, %v5933
  %v5950 = vmul.f32 %v5877, %v5934
  %v5951 = vmul.f32 %v5879, %v5935
  %v5952 = vmul.f32 %v5881, %v5936
  %v5953 = vmul.f32 %v5883, %v5937
  %v5954 = vmul.f32 %v5885, %v5938
  %v5955 = vmul.f32 %v5887, %v5939
  %v5956 = vmul.f32 %v5889, %v5940
  %v5957 = vmul.f32 %v5891, %v5941
  %v5958 = vmul.f32 %v5893, %v5942
  %v5959 = vmul.f32 %v5895, %v5943
  %v5960 = vpack.c.bf16 %v5945, %v5944
  %v5961 = vpack.c.bf16 %v5947, %v5946
  %v5962 = vpack.c.bf16 %v5949, %v5948
  %v5963 = vpack.c.bf16 %v5951, %v5950
  %v5964 = vpack.c.bf16 %v5953, %v5952
  %v5965 = vpack.c.bf16 %v5955, %v5954
  %v5966 = vpack.c.bf16 %v5957, %v5956
  %v5967 = vpack.c.bf16 %v5959, %v5958
  %5976 = vrot.lane.b32.xlu0 %v5518, 112
  %v5977 = vpop.permute.xlu0 %5976
  %5978 = vrot.lane.b32.xlu0 %v5519, 112
  %v5979 = vpop.permute.xlu0 %5978
  %5980 = vrot.lane.b32.xlu0 %v5520, 112
  %v5981 = vpop.permute.xlu0 %5980
  %5982 = vrot.lane.b32.xlu0 %v5521, 112
  %v5983 = vpop.permute.xlu0 %5982
  %5984 = vrot.lane.b32.xlu0 %v5522, 112
  %v5985 = vpop.permute.xlu0 %5984
  %5986 = vrot.lane.b32.xlu0 %v5523, 112
  %v5987 = vpop.permute.xlu0 %5986
  %5988 = vrot.lane.b32.xlu0 %v5524, 112
  %v5989 = vpop.permute.xlu0 %5988
  %5990 = vrot.lane.b32.xlu0 %v5525, 112
  %v5991 = vpop.permute.xlu0 %5990
  %6000 = vmatprep.subr.bf16.mxu0 0
  %6001 = vmatpush1.bf16.msra.mxu0 %v5977
  %6002 = vmatprep.subr.bf16.mxu0 0
  %6003 = vmatpush1.bf16.msra.mxu0 %v5979
  %6004 = vmatprep.subr.bf16.mxu0 0
  %6005 = vmatpush1.bf16.msra.mxu0 %v5981
  %6006 = vmatprep.subr.bf16.mxu0 0
  %6007 = vmatpush1.bf16.msra.mxu0 %v5983
  %6008 = vmatprep.subr.bf16.mxu0 0
  %6009 = vmatpush1.bf16.msra.mxu0 %v5985
  %6010 = vmatprep.subr.bf16.mxu0 0
  %6011 = vmatpush1.bf16.msra.mxu0 %v5987
  %6012 = vmatprep.subr.bf16.mxu0 0
  %6013 = vmatpush1.bf16.msra.mxu0 %v5989
  %6014 = vmatprep.subr.bf16.mxu0 0
  %6015 = vmatpush1.bf16.msra.mxu0 %v5991
  %6016 = vmatprep.subr.bf16.mxu0 0
  %6017 = vmatpush1.bf16.msra.mxu0 0
  %6018 = vmatprep.subr.bf16.mxu0 0
  %6019 = vmatpush1.bf16.msra.mxu0 0
  %6020 = vmatprep.subr.bf16.mxu0 0
  %6021 = vmatpush1.bf16.msra.mxu0 0
  %6022 = vmatprep.subr.bf16.mxu0 0
  %6023 = vmatpush1.bf16.msra.mxu0 0
  %6024 = vmatprep.subr.bf16.mxu0 0
  %6025 = vmatpush1.bf16.msra.mxu0 0
  %6026 = vmatprep.subr.bf16.mxu0 0
  %6027 = vmatpush1.bf16.msra.mxu0 0
  %6028 = vmatprep.subr.bf16.mxu0 0
  %6029 = vmatpush1.bf16.msra.mxu0 0
  %6030 = vmatprep.subr.bf16.mxu0 0
  %6031 = vmatpush1.bf16.msra.mxu0 0
  %6032 = vmatprep.mubr.bf16.mxu0 0
  %6033 = vmatmul.mubr.bf16.gmra.mrb[0].mxu0 %v5960
  %v6034 = vpop.f32.mrb[0].mxu0
  %v6035 = vadd.f32 0.0, %v6034
  %v6036 = vpop.f32.mrb[0].mxu0
  %v6037 = vpop.f32.mrb[0].mxu0
  %v6038 = vadd.f32 0.0, %v6037
  %v6039 = vpop.f32.mrb[0].mxu0
  %6040 = vmatprep.mubr.bf16.mxu0 0
  %6041 = vmatmul.mubr.bf16.gmra.mrb[0].mxu0 %v5961
  %v6042 = vpop.f32.mrb[0].mxu0
  %v6043 = vadd.f32 0.0, %v6042
  %v6044 = vpop.f32.mrb[0].mxu0
  %v6045 = vpop.f32.mrb[0].mxu0
  %v6046 = vadd.f32 0.0, %v6045
  %v6047 = vpop.f32.mrb[0].mxu0
  %6048 = vmatprep.mubr.bf16.mxu0 0
  %6049 = vmatmul.mubr.bf16.gmra.mrb[0].mxu0 %v5962
  %v6050 = vpop.f32.mrb[0].mxu0
  %v6051 = vadd.f32 0.0, %v6050
  %v6052 = vpop.f32.mrb[0].mxu0
  %v6053 = vpop.f32.mrb[0].mxu0
  %v6054 = vadd.f32 0.0, %v6053
  %v6055 = vpop.f32.mrb[0].mxu0
  %6056 = vmatprep.mubr.bf16.mxu0 0
  %6057 = vmatmul.mubr.bf16.gmra.mrb[0].mxu0 %v5963
  %v6058 = vpop.f32.mrb[0].mxu0
  %v6059 = vadd.f32 0.0, %v6058
  %v6060 = vpop.f32.mrb[0].mxu0
  %v6061 = vpop.f32.mrb[0].mxu0
  %v6062 = vadd.f32 0.0, %v6061
  %v6063 = vpop.f32.mrb[0].mxu0
  %6064 = vmatprep.mubr.bf16.mxu0 0
  %6065 = vmatmul.mubr.bf16.gmra.mrb[0].mxu0 %v5964
  %v6066 = vpop.f32.mrb[0].mxu0
  %v6067 = vadd.f32 0.0, %v6066
  %v6068 = vpop.f32.mrb[0].mxu0
  %v6069 = vpop.f32.mrb[0].mxu0
  %v6070 = vadd.f32 0.0, %v6069
  %v6071 = vpop.f32.mrb[0].mxu0
  %6072 = vmatprep.mubr.bf16.mxu0 0
  %6073 = vmatmul.mubr.bf16.gmra.mrb[0].mxu0 %v5965
  %v6074 = vpop.f32.mrb[0].mxu0
  %v6075 = vadd.f32 0.0, %v6074
  %v6076 = vpop.f32.mrb[0].mxu0
  %v6077 = vpop.f32.mrb[0].mxu0
  %v6078 = vadd.f32 0.0, %v6077
  %v6079 = vpop.f32.mrb[0].mxu0
  %6080 = vmatprep.mubr.bf16.mxu0 0
  %6081 = vmatmul.mubr.bf16.gmra.mrb[0].mxu0 %v5966
  %v6082 = vpop.f32.mrb[0].mxu0
  %v6083 = vadd.f32 0.0, %v6082
  %v6084 = vpop.f32.mrb[0].mxu0
  %v6085 = vpop.f32.mrb[0].mxu0
  %v6086 = vadd.f32 0.0, %v6085
  %v6087 = vpop.f32.mrb[0].mxu0
  %6088 = vmatprep.mubr.bf16.mxu0 0
  %6089 = vmatmul.mubr.bf16.gmra.mrb[0].mxu0 %v5967
  %v6090 = vpop.f32.mrb[0].mxu0
  %v6091 = vadd.f32 0.0, %v6090
  %v6092 = vpop.f32.mrb[0].mxu0
  %v6093 = vpop.f32.mrb[0].mxu0
  %v6094 = vadd.f32 0.0, %v6093
  %v6095 = vpop.f32.mrb[0].mxu0
  %6096 = vdwg.mxu0
  %6097 = vrot.lane.b32.xlu0 %v5173, 96
  %v6098 = vpop.permute.xlu0 %6097
  %6099 = vrot.lane.b32.xlu0 %v5174, 96
  %v6100 = vpop.permute.xlu0 %6099
  %6101 = vrot.lane.b32.xlu0 %v5175, 96
  %v6102 = vpop.permute.xlu0 %6101
  %6103 = vrot.lane.b32.xlu0 %v5176, 96
  %v6104 = vpop.permute.xlu0 %6103
  %6105 = vrot.lane.b32.xlu0 %v5177, 96
  %v6106 = vpop.permute.xlu0 %6105
  %6107 = vrot.lane.b32.xlu0 %v5178, 96
  %v6108 = vpop.permute.xlu0 %6107
  %6109 = vrot.lane.b32.xlu0 %v5179, 96
  %v6110 = vpop.permute.xlu0 %6109
  %6111 = vrot.lane.b32.xlu0 %v5180, 96
  %v6112 = vpop.permute.xlu0 %6111
  %6113 = vrot.lane.b32.xlu0 %v5173, 32
  %v6114 = vpop.permute.xlu0 %6113
  %6115 = vrot.lane.b32.xlu0 %v5174, 32
  %v6116 = vpop.permute.xlu0 %6115
  %6117 = vrot.lane.b32.xlu0 %v5175, 32
  %v6118 = vpop.permute.xlu0 %6117
  %6119 = vrot.lane.b32.xlu0 %v5176, 32
  %v6120 = vpop.permute.xlu0 %6119
  %6121 = vrot.lane.b32.xlu0 %v5177, 32
  %v6122 = vpop.permute.xlu0 %6121
  %6123 = vrot.lane.b32.xlu0 %v5178, 32
  %v6124 = vpop.permute.xlu0 %6123
  %6125 = vrot.lane.b32.xlu0 %v5179, 32
  %v6126 = vpop.permute.xlu0 %6125
  %6127 = vrot.lane.b32.xlu0 %v5180, 32
  %v6128 = vpop.permute.xlu0 %6127
  %v6130 = vsel %vm1582, %v6098, 0
  %v6133 = vsel %vm1582, %v6100, 0
  %v6136 = vsel %vm1582, %v6102, 0
  %v6139 = vsel %vm1582, %v6104, 0
  %v6142 = vsel %vm1582, %v6106, 0
  %v6145 = vsel %vm1582, %v6108, 0
  %v6148 = vsel %vm1582, %v6110, 0
  %v6151 = vsel %vm1582, %v6112, 0
  %v6154 = vsel %vm1582, %v6114, 0
  %v6157 = vsel %vm1582, %v6116, 0
  %v6160 = vsel %vm1582, %v6118, 0
  %v6163 = vsel %vm1582, %v6120, 0
  %v6166 = vsel %vm1582, %v6122, 0
  %v6169 = vsel %vm1582, %v6124, 0
  %v6172 = vsel %vm1582, %v6126, 0
  %v6175 = vsel %vm1582, %v6128, 0
  %6177 = vmatprep.subr.bf16.mxu0 0
  %6178 = vmatpush1.bf16.xpose.msra.mxu0 %v6154
  %6179 = vmatprep.subr.bf16.mxu0 0
  %6180 = vmatpush1.bf16.xpose.msra.mxu0 %v6157
  %6181 = vmatprep.subr.bf16.mxu0 0
  %6182 = vmatpush1.bf16.xpose.msra.mxu0 %v6160
  %6183 = vmatprep.subr.bf16.mxu0 0
  %6184 = vmatpush1.bf16.xpose.msra.mxu0 %v6163
  %6185 = vmatprep.subr.bf16.mxu0 0
  %6186 = vmatpush1.bf16.xpose.msra.mxu0 %v6166
  %6187 = vmatprep.subr.bf16.mxu0 0
  %6188 = vmatpush1.bf16.xpose.msra.mxu0 %v6169
  %6189 = vmatprep.subr.bf16.mxu0 0
  %6190 = vmatpush1.bf16.xpose.msra.mxu0 %v6172
  %6191 = vmatprep.subr.bf16.mxu0 0
  %6192 = vmatpush1.bf16.xpose.msra.mxu0 %v6175
  %6193 = vmatprep.subr.bf16.mxu0 0
  %6194 = vmatpush1.bf16.xpose.msra.mxu0 0
  %6195 = vmatprep.subr.bf16.mxu0 0
  %6196 = vmatpush1.bf16.xpose.msra.mxu0 0
  %6197 = vmatprep.subr.bf16.mxu0 0
  %6198 = vmatpush1.bf16.xpose.msra.mxu0 0
  %6199 = vmatprep.subr.bf16.mxu0 0
  %6200 = vmatpush1.bf16.xpose.msra.mxu0 0
  %6201 = vmatprep.subr.bf16.mxu0 0
  %6202 = vmatpush1.bf16.xpose.msra.mxu0 0
  %6203 = vmatprep.subr.bf16.mxu0 0
  %6204 = vmatpush1.bf16.xpose.msra.mxu0 0
  %6205 = vmatprep.subr.bf16.mxu0 0
  %6206 = vmatpush1.bf16.xpose.msra.mxu0 0
  %6207 = vmatprep.subr.bf16.mxu0 0
  %6208 = vmatpush1.bf16.xpose.msra.mxu0 0
  %6209 = vmatprep.mubr.bf16.mxu0 0
  %6210 = vmatmul.mubr.bf16.gmra.mrb[0].mxu0 %v6130
  %v6211 = vpop.f32.mrb[0].mxu0
  %v6212 = vadd.f32 0.0, %v6211
  %v6213 = vpop.f32.mrb[0].mxu0
  %v6214 = vpop.f32.mrb[0].mxu0
  %v6215 = vadd.f32 0.0, %v6214
  %v6216 = vpop.f32.mrb[0].mxu0
  %6217 = vmatprep.mubr.bf16.mxu0 0
  %6218 = vmatmul.mubr.bf16.gmra.mrb[0].mxu0 %v6133
  %v6219 = vpop.f32.mrb[0].mxu0
  %v6220 = vadd.f32 0.0, %v6219
  %v6221 = vpop.f32.mrb[0].mxu0
  %v6222 = vpop.f32.mrb[0].mxu0
  %v6223 = vadd.f32 0.0, %v6222
  %v6224 = vpop.f32.mrb[0].mxu0
  %6225 = vmatprep.mubr.bf16.mxu0 0
  %6226 = vmatmul.mubr.bf16.gmra.mrb[0].mxu0 %v6136
  %v6227 = vpop.f32.mrb[0].mxu0
  %v6228 = vadd.f32 0.0, %v6227
  %v6229 = vpop.f32.mrb[0].mxu0
  %v6230 = vpop.f32.mrb[0].mxu0
  %v6231 = vadd.f32 0.0, %v6230
  %v6232 = vpop.f32.mrb[0].mxu0
  %6233 = vmatprep.mubr.bf16.mxu0 0
  %6234 = vmatmul.mubr.bf16.gmra.mrb[0].mxu0 %v6139
  %v6235 = vpop.f32.mrb[0].mxu0
  %v6236 = vadd.f32 0.0, %v6235
  %v6237 = vpop.f32.mrb[0].mxu0
  %v6238 = vpop.f32.mrb[0].mxu0
  %v6239 = vadd.f32 0.0, %v6238
  %v6240 = vpop.f32.mrb[0].mxu0
  %6241 = vmatprep.mubr.bf16.mxu0 0
  %6242 = vmatmul.mubr.bf16.gmra.mrb[0].mxu0 %v6142
  %v6243 = vpop.f32.mrb[0].mxu0
  %v6244 = vadd.f32 0.0, %v6243
  %v6245 = vpop.f32.mrb[0].mxu0
  %v6246 = vpop.f32.mrb[0].mxu0
  %v6247 = vadd.f32 0.0, %v6246
  %v6248 = vpop.f32.mrb[0].mxu0
  %6249 = vmatprep.mubr.bf16.mxu0 0
  %6250 = vmatmul.mubr.bf16.gmra.mrb[0].mxu0 %v6145
  %v6251 = vpop.f32.mrb[0].mxu0
  %v6252 = vadd.f32 0.0, %v6251
  %v6253 = vpop.f32.mrb[0].mxu0
  %v6254 = vpop.f32.mrb[0].mxu0
  %v6255 = vadd.f32 0.0, %v6254
  %v6256 = vpop.f32.mrb[0].mxu0
  %6257 = vmatprep.mubr.bf16.mxu0 0
  %6258 = vmatmul.mubr.bf16.gmra.mrb[0].mxu0 %v6148
  %v6259 = vpop.f32.mrb[0].mxu0
  %v6260 = vadd.f32 0.0, %v6259
  %v6261 = vpop.f32.mrb[0].mxu0
  %v6262 = vpop.f32.mrb[0].mxu0
  %v6263 = vadd.f32 0.0, %v6262
  %v6264 = vpop.f32.mrb[0].mxu0
  %6265 = vmatprep.mubr.bf16.mxu0 0
  %6266 = vmatmul.mubr.bf16.gmra.mrb[0].mxu0 %v6151
  %v6267 = vpop.f32.mrb[0].mxu0
  %v6268 = vadd.f32 0.0, %v6267
  %v6269 = vpop.f32.mrb[0].mxu0
  %v6270 = vpop.f32.mrb[0].mxu0
  %v6271 = vadd.f32 0.0, %v6270
  %v6272 = vpop.f32.mrb[0].mxu0
  %6273 = vdwg.mxu0
  %v6274 = vsel %vm1078, %v6212, -1e+30
  %v6275 = vsel %vm1079, %v6215, -1e+30
  %v6276 = vsel %vm1080, %v6220, -1e+30
  %v6277 = vsel %vm1081, %v6223, -1e+30
  %v6278 = vsel %vm1082, %v6228, -1e+30
  %v6279 = vsel %vm1083, %v6231, -1e+30
  %v6280 = vsel %vm1084, %v6236, -1e+30
  %v6281 = vsel %vm1085, %v6239, -1e+30
  %v6282 = vsel %vm1086, %v6244, -1e+30
  %v6283 = vsel %vm1087, %v6247, -1e+30
  %v6284 = vsel %vm1088, %v6252, -1e+30
  %v6285 = vsel %vm1089, %v6255, -1e+30
  %v6286 = vsel %vm1090, %v6260, -1e+30
  %v6287 = vsel %vm1091, %v6263, -1e+30
  %v6288 = vsel %vm1092, %v6268, -1e+30
  %v6289 = vsel %vm1093, %v6271, -1e+30
  %6290 = vmax.xlane.f32.xlu0 %v6274
  %v6291 = vpop.xlane.xlu0 %6290
  %6292 = vmax.xlane.f32.xlu0 %v6275
  %v6293 = vpop.xlane.xlu0 %6292
  %6294 = vmax.xlane.f32.xlu0 %v6276
  %v6295 = vpop.xlane.xlu0 %6294
  %6296 = vmax.xlane.f32.xlu0 %v6277
  %v6297 = vpop.xlane.xlu0 %6296
  %6298 = vmax.xlane.f32.xlu0 %v6278
  %v6299 = vpop.xlane.xlu0 %6298
  %6300 = vmax.xlane.f32.xlu0 %v6279
  %v6301 = vpop.xlane.xlu0 %6300
  %6302 = vmax.xlane.f32.xlu0 %v6280
  %v6303 = vpop.xlane.xlu0 %6302
  %6304 = vmax.xlane.f32.xlu0 %v6281
  %v6305 = vpop.xlane.xlu0 %6304
  %6306 = vmax.xlane.f32.xlu0 %v6282
  %v6307 = vpop.xlane.xlu0 %6306
  %6308 = vmax.xlane.f32.xlu0 %v6283
  %v6309 = vpop.xlane.xlu0 %6308
  %6310 = vmax.xlane.f32.xlu0 %v6284
  %v6311 = vpop.xlane.xlu0 %6310
  %6312 = vmax.xlane.f32.xlu0 %v6285
  %v6313 = vpop.xlane.xlu0 %6312
  %6314 = vmax.xlane.f32.xlu0 %v6286
  %v6315 = vpop.xlane.xlu0 %6314
  %6316 = vmax.xlane.f32.xlu0 %v6287
  %v6317 = vpop.xlane.xlu0 %6316
  %6318 = vmax.xlane.f32.xlu0 %v6288
  %v6319 = vpop.xlane.xlu0 %6318
  %6320 = vmax.xlane.f32.xlu0 %v6289
  %v6321 = vpop.xlane.xlu0 %6320
  %v6322 = vsub.f32 %v6274, %v6291
  %v6323 = vsub.f32 %v6275, %v6293
  %v6324 = vsub.f32 %v6276, %v6295
  %v6325 = vsub.f32 %v6277, %v6297
  %v6326 = vsub.f32 %v6278, %v6299
  %v6327 = vsub.f32 %v6279, %v6301
  %v6328 = vsub.f32 %v6280, %v6303
  %v6329 = vsub.f32 %v6281, %v6305
  %v6330 = vsub.f32 %v6282, %v6307
  %v6331 = vsub.f32 %v6283, %v6309
  %v6332 = vsub.f32 %v6284, %v6311
  %v6333 = vsub.f32 %v6285, %v6313
  %v6334 = vsub.f32 %v6286, %v6315
  %v6335 = vsub.f32 %v6287, %v6317
  %v6336 = vsub.f32 %v6288, %v6319
  %v6337 = vsub.f32 %v6289, %v6321
  %v6338 = vmul.f32 %v6322, 1.442695
  %v6339 = vpow.pop %v6338
  %v6340 = vmul.f32 %v6323, 1.442695
  %v6341 = vpow.pop %v6340
  %v6342 = vmul.f32 %v6324, 1.442695
  %v6343 = vpow.pop %v6342
  %v6344 = vmul.f32 %v6325, 1.442695
  %v6345 = vpow.pop %v6344
  %v6346 = vmul.f32 %v6326, 1.442695
  %v6347 = vpow.pop %v6346
  %v6348 = vmul.f32 %v6327, 1.442695
  %v6349 = vpow.pop %v6348
  %v6350 = vmul.f32 %v6328, 1.442695
  %v6351 = vpow.pop %v6350
  %v6352 = vmul.f32 %v6329, 1.442695
  %v6353 = vpow.pop %v6352
  %v6354 = vmul.f32 %v6330, 1.442695
  %v6355 = vpow.pop %v6354
  %v6356 = vmul.f32 %v6331, 1.442695
  %v6357 = vpow.pop %v6356
  %v6358 = vmul.f32 %v6332, 1.442695
  %v6359 = vpow.pop %v6358
  %v6360 = vmul.f32 %v6333, 1.442695
  %v6361 = vpow.pop %v6360
  %v6362 = vmul.f32 %v6334, 1.442695
  %v6363 = vpow.pop %v6362
  %v6364 = vmul.f32 %v6335, 1.442695
  %v6365 = vpow.pop %v6364
  %v6366 = vmul.f32 %v6336, 1.442695
  %v6367 = vpow.pop %v6366
  %v6368 = vmul.f32 %v6337, 1.442695
  %v6369 = vpow.pop %v6368
  %6370 = vadd.xlane.f32.xlu0 %v6339
  %v6371 = vpop.xlane.xlu0 %6370
  %6372 = vadd.xlane.f32.xlu0 %v6341
  %v6373 = vpop.xlane.xlu0 %6372
  %6374 = vadd.xlane.f32.xlu0 %v6343
  %v6375 = vpop.xlane.xlu0 %6374
  %6376 = vadd.xlane.f32.xlu0 %v6345
  %v6377 = vpop.xlane.xlu0 %6376
  %6378 = vadd.xlane.f32.xlu0 %v6347
  %v6379 = vpop.xlane.xlu0 %6378
  %6380 = vadd.xlane.f32.xlu0 %v6349
  %v6381 = vpop.xlane.xlu0 %6380
  %6382 = vadd.xlane.f32.xlu0 %v6351
  %v6383 = vpop.xlane.xlu0 %6382
  %6384 = vadd.xlane.f32.xlu0 %v6353
  %v6385 = vpop.xlane.xlu0 %6384
  %6386 = vadd.xlane.f32.xlu0 %v6355
  %v6387 = vpop.xlane.xlu0 %6386
  %6388 = vadd.xlane.f32.xlu0 %v6357
  %v6389 = vpop.xlane.xlu0 %6388
  %6390 = vadd.xlane.f32.xlu0 %v6359
  %v6391 = vpop.xlane.xlu0 %6390
  %6392 = vadd.xlane.f32.xlu0 %v6361
  %v6393 = vpop.xlane.xlu0 %6392
  %6394 = vadd.xlane.f32.xlu0 %v6363
  %v6395 = vpop.xlane.xlu0 %6394
  %6396 = vadd.xlane.f32.xlu0 %v6365
  %v6397 = vpop.xlane.xlu0 %6396
  %6398 = vadd.xlane.f32.xlu0 %v6367
  %v6399 = vpop.xlane.xlu0 %6398
  %6400 = vadd.xlane.f32.xlu0 %v6369
  %v6401 = vpop.xlane.xlu0 %6400
  %v6402 = vrcp.pop %v6371
  %v6403 = vrcp.pop %v6373
  %v6404 = vrcp.pop %v6375
  %v6405 = vrcp.pop %v6377
  %v6406 = vrcp.pop %v6379
  %v6407 = vrcp.pop %v6381
  %v6408 = vrcp.pop %v6383
  %v6409 = vrcp.pop %v6385
  %v6410 = vrcp.pop %v6387
  %v6411 = vrcp.pop %v6389
  %v6412 = vrcp.pop %v6391
  %v6413 = vrcp.pop %v6393
  %v6414 = vrcp.pop %v6395
  %v6415 = vrcp.pop %v6397
  %v6416 = vrcp.pop %v6399
  %v6417 = vrcp.pop %v6401
  %v6418 = vmul.f32 %v6339, %v6402
  %v6419 = vmul.f32 %v6341, %v6403
  %v6420 = vmul.f32 %v6343, %v6404
  %v6421 = vmul.f32 %v6345, %v6405
  %v6422 = vmul.f32 %v6347, %v6406
  %v6423 = vmul.f32 %v6349, %v6407
  %v6424 = vmul.f32 %v6351, %v6408
  %v6425 = vmul.f32 %v6353, %v6409
  %v6426 = vmul.f32 %v6355, %v6410
  %v6427 = vmul.f32 %v6357, %v6411
  %v6428 = vmul.f32 %v6359, %v6412
  %v6429 = vmul.f32 %v6361, %v6413
  %v6430 = vmul.f32 %v6363, %v6414
  %v6431 = vmul.f32 %v6365, %v6415
  %v6432 = vmul.f32 %v6367, %v6416
  %v6433 = vmul.f32 %v6369, %v6417
  %v6434 = vpack.c.bf16 %v6419, %v6418
  %v6435 = vpack.c.bf16 %v6421, %v6420
  %v6436 = vpack.c.bf16 %v6423, %v6422
  %v6437 = vpack.c.bf16 %v6425, %v6424
  %v6438 = vpack.c.bf16 %v6427, %v6426
  %v6439 = vpack.c.bf16 %v6429, %v6428
  %v6440 = vpack.c.bf16 %v6431, %v6430
  %v6441 = vpack.c.bf16 %v6433, %v6432
  %6442 = vrot.lane.b32.xlu0 %v5518, 96
  %v6443 = vpop.permute.xlu0 %6442
  %6444 = vrot.lane.b32.xlu0 %v5519, 96
  %v6445 = vpop.permute.xlu0 %6444
  %6446 = vrot.lane.b32.xlu0 %v5520, 96
  %v6447 = vpop.permute.xlu0 %6446
  %6448 = vrot.lane.b32.xlu0 %v5521, 96
  %v6449 = vpop.permute.xlu0 %6448
  %6450 = vrot.lane.b32.xlu0 %v5522, 96
  %v6451 = vpop.permute.xlu0 %6450
  %6452 = vrot.lane.b32.xlu0 %v5523, 96
  %v6453 = vpop.permute.xlu0 %6452
  %6454 = vrot.lane.b32.xlu0 %v5524, 96
  %v6455 = vpop.permute.xlu0 %6454
  %6456 = vrot.lane.b32.xlu0 %v5525, 96
  %v6457 = vpop.permute.xlu0 %6456
  %6466 = vmatprep.subr.bf16.mxu0 0
  %6467 = vmatpush1.bf16.msra.mxu0 %v6443
  %6468 = vmatprep.subr.bf16.mxu0 0
  %6469 = vmatpush1.bf16.msra.mxu0 %v6445
  %6470 = vmatprep.subr.bf16.mxu0 0
  %6471 = vmatpush1.bf16.msra.mxu0 %v6447
  %6472 = vmatprep.subr.bf16.mxu0 0
  %6473 = vmatpush1.bf16.msra.mxu0 %v6449
  %6474 = vmatprep.subr.bf16.mxu0 0
  %6475 = vmatpush1.bf16.msra.mxu0 %v6451
  %6476 = vmatprep.subr.bf16.mxu0 0
  %6477 = vmatpush1.bf16.msra.mxu0 %v6453
  %6478 = vmatprep.subr.bf16.mxu0 0
  %6479 = vmatpush1.bf16.msra.mxu0 %v6455
  %6480 = vmatprep.subr.bf16.mxu0 0
  %6481 = vmatpush1.bf16.msra.mxu0 %v6457
  %6482 = vmatprep.subr.bf16.mxu0 0
  %6483 = vmatpush1.bf16.msra.mxu0 0
  %6484 = vmatprep.subr.bf16.mxu0 0
  %6485 = vmatpush1.bf16.msra.mxu0 0
  %6486 = vmatprep.subr.bf16.mxu0 0
  %6487 = vmatpush1.bf16.msra.mxu0 0
  %6488 = vmatprep.subr.bf16.mxu0 0
  %6489 = vmatpush1.bf16.msra.mxu0 0
  %6490 = vmatprep.subr.bf16.mxu0 0
  %6491 = vmatpush1.bf16.msra.mxu0 0
  %6492 = vmatprep.subr.bf16.mxu0 0
  %6493 = vmatpush1.bf16.msra.mxu0 0
  %6494 = vmatprep.subr.bf16.mxu0 0
  %6495 = vmatpush1.bf16.msra.mxu0 0
  %6496 = vmatprep.subr.bf16.mxu0 0
  %6497 = vmatpush1.bf16.msra.mxu0 0
  %6498 = vmatprep.mubr.bf16.mxu0 0
  %6499 = vmatmul.mubr.bf16.gmra.mrb[0].mxu0 %v6434
  %v6500 = vpop.f32.mrb[0].mxu0
  %v6501 = vadd.f32 0.0, %v6500
  %v6502 = vpop.f32.mrb[0].mxu0
  %v6503 = vpop.f32.mrb[0].mxu0
  %v6504 = vadd.f32 0.0, %v6503
  %v6505 = vpop.f32.mrb[0].mxu0
  %6506 = vmatprep.mubr.bf16.mxu0 0
  %6507 = vmatmul.mubr.bf16.gmra.mrb[0].mxu0 %v6435
  %v6508 = vpop.f32.mrb[0].mxu0
  %v6509 = vadd.f32 0.0, %v6508
  %v6510 = vpop.f32.mrb[0].mxu0
  %v6511 = vpop.f32.mrb[0].mxu0
  %v6512 = vadd.f32 0.0, %v6511
  %v6513 = vpop.f32.mrb[0].mxu0
  %6514 = vmatprep.mubr.bf16.mxu0 0
  %6515 = vmatmul.mubr.bf16.gmra.mrb[0].mxu0 %v6436
  %v6516 = vpop.f32.mrb[0].mxu0
  %v6517 = vadd.f32 0.0, %v6516
  %v6518 = vpop.f32.mrb[0].mxu0
  %v6519 = vpop.f32.mrb[0].mxu0
  %v6520 = vadd.f32 0.0, %v6519
  %v6521 = vpop.f32.mrb[0].mxu0
  %6522 = vmatprep.mubr.bf16.mxu0 0
  %6523 = vmatmul.mubr.bf16.gmra.mrb[0].mxu0 %v6437
  %v6524 = vpop.f32.mrb[0].mxu0
  %v6525 = vadd.f32 0.0, %v6524
  %v6526 = vpop.f32.mrb[0].mxu0
  %v6527 = vpop.f32.mrb[0].mxu0
  %v6528 = vadd.f32 0.0, %v6527
  %v6529 = vpop.f32.mrb[0].mxu0
  %6530 = vmatprep.mubr.bf16.mxu0 0
  %6531 = vmatmul.mubr.bf16.gmra.mrb[0].mxu0 %v6438
  %v6532 = vpop.f32.mrb[0].mxu0
  %v6533 = vadd.f32 0.0, %v6532
  %v6534 = vpop.f32.mrb[0].mxu0
  %v6535 = vpop.f32.mrb[0].mxu0
  %v6536 = vadd.f32 0.0, %v6535
  %v6537 = vpop.f32.mrb[0].mxu0
  %6538 = vmatprep.mubr.bf16.mxu0 0
  %6539 = vmatmul.mubr.bf16.gmra.mrb[0].mxu0 %v6439
  %v6540 = vpop.f32.mrb[0].mxu0
  %v6541 = vadd.f32 0.0, %v6540
  %v6542 = vpop.f32.mrb[0].mxu0
  %v6543 = vpop.f32.mrb[0].mxu0
  %v6544 = vadd.f32 0.0, %v6543
  %v6545 = vpop.f32.mrb[0].mxu0
  %6546 = vmatprep.mubr.bf16.mxu0 0
  %6547 = vmatmul.mubr.bf16.gmra.mrb[0].mxu0 %v6440
  %v6548 = vpop.f32.mrb[0].mxu0
  %v6549 = vadd.f32 0.0, %v6548
  %v6550 = vpop.f32.mrb[0].mxu0
  %v6551 = vpop.f32.mrb[0].mxu0
  %v6552 = vadd.f32 0.0, %v6551
  %v6553 = vpop.f32.mrb[0].mxu0
  %6554 = vmatprep.mubr.bf16.mxu0 0
  %6555 = vmatmul.mubr.bf16.gmra.mrb[0].mxu0 %v6441
  %v6556 = vpop.f32.mrb[0].mxu0
  %v6557 = vadd.f32 0.0, %v6556
  %v6558 = vpop.f32.mrb[0].mxu0
  %v6559 = vpop.f32.mrb[0].mxu0
  %v6560 = vadd.f32 0.0, %v6559
  %v6561 = vpop.f32.mrb[0].mxu0
  %6562 = vdwg.mxu0
  %6563 = vrot.lane.b32.xlu0 %v5173, 80
  %v6564 = vpop.permute.xlu0 %6563
  %6565 = vrot.lane.b32.xlu0 %v5174, 80
  %v6566 = vpop.permute.xlu0 %6565
  %6567 = vrot.lane.b32.xlu0 %v5175, 80
  %v6568 = vpop.permute.xlu0 %6567
  %6569 = vrot.lane.b32.xlu0 %v5176, 80
  %v6570 = vpop.permute.xlu0 %6569
  %6571 = vrot.lane.b32.xlu0 %v5177, 80
  %v6572 = vpop.permute.xlu0 %6571
  %6573 = vrot.lane.b32.xlu0 %v5178, 80
  %v6574 = vpop.permute.xlu0 %6573
  %6575 = vrot.lane.b32.xlu0 %v5179, 80
  %v6576 = vpop.permute.xlu0 %6575
  %6577 = vrot.lane.b32.xlu0 %v5180, 80
  %v6578 = vpop.permute.xlu0 %6577
  %6579 = vrot.lane.b32.xlu0 %v5173, 16
  %v6580 = vpop.permute.xlu0 %6579
  %6581 = vrot.lane.b32.xlu0 %v5174, 16
  %v6582 = vpop.permute.xlu0 %6581
  %6583 = vrot.lane.b32.xlu0 %v5175, 16
  %v6584 = vpop.permute.xlu0 %6583
  %6585 = vrot.lane.b32.xlu0 %v5176, 16
  %v6586 = vpop.permute.xlu0 %6585
  %6587 = vrot.lane.b32.xlu0 %v5177, 16
  %v6588 = vpop.permute.xlu0 %6587
  %6589 = vrot.lane.b32.xlu0 %v5178, 16
  %v6590 = vpop.permute.xlu0 %6589
  %6591 = vrot.lane.b32.xlu0 %v5179, 16
  %v6592 = vpop.permute.xlu0 %6591
  %6593 = vrot.lane.b32.xlu0 %v5180, 16
  %v6594 = vpop.permute.xlu0 %6593
  %v6596 = vsel %vm1582, %v6564, 0
  %v6599 = vsel %vm1582, %v6566, 0
  %v6602 = vsel %vm1582, %v6568, 0
  %v6605 = vsel %vm1582, %v6570, 0
  %v6608 = vsel %vm1582, %v6572, 0
  %v6611 = vsel %vm1582, %v6574, 0
  %v6614 = vsel %vm1582, %v6576, 0
  %v6617 = vsel %vm1582, %v6578, 0
  %v6620 = vsel %vm1582, %v6580, 0
  %v6623 = vsel %vm1582, %v6582, 0
  %v6626 = vsel %vm1582, %v6584, 0
  %v6629 = vsel %vm1582, %v6586, 0
  %v6632 = vsel %vm1582, %v6588, 0
  %v6635 = vsel %vm1582, %v6590, 0
  %v6638 = vsel %vm1582, %v6592, 0
  %v6641 = vsel %vm1582, %v6594, 0
  %6643 = vmatprep.subr.bf16.mxu0 0
  %6644 = vmatpush1.bf16.xpose.msra.mxu0 %v6620
  %6645 = vmatprep.subr.bf16.mxu0 0
  %6646 = vmatpush1.bf16.xpose.msra.mxu0 %v6623
  %6647 = vmatprep.subr.bf16.mxu0 0
  %6648 = vmatpush1.bf16.xpose.msra.mxu0 %v6626
  %6649 = vmatprep.subr.bf16.mxu0 0
  %6650 = vmatpush1.bf16.xpose.msra.mxu0 %v6629
  %6651 = vmatprep.subr.bf16.mxu0 0
  %6652 = vmatpush1.bf16.xpose.msra.mxu0 %v6632
  %6653 = vmatprep.subr.bf16.mxu0 0
  %6654 = vmatpush1.bf16.xpose.msra.mxu0 %v6635
  %6655 = vmatprep.subr.bf16.mxu0 0
  %6656 = vmatpush1.bf16.xpose.msra.mxu0 %v6638
  %6657 = vmatprep.subr.bf16.mxu0 0
  %6658 = vmatpush1.bf16.xpose.msra.mxu0 %v6641
  %6659 = vmatprep.subr.bf16.mxu0 0
  %6660 = vmatpush1.bf16.xpose.msra.mxu0 0
  %6661 = vmatprep.subr.bf16.mxu0 0
  %6662 = vmatpush1.bf16.xpose.msra.mxu0 0
  %6663 = vmatprep.subr.bf16.mxu0 0
  %6664 = vmatpush1.bf16.xpose.msra.mxu0 0
  %6665 = vmatprep.subr.bf16.mxu0 0
  %6666 = vmatpush1.bf16.xpose.msra.mxu0 0
  %6667 = vmatprep.subr.bf16.mxu0 0
  %6668 = vmatpush1.bf16.xpose.msra.mxu0 0
  %6669 = vmatprep.subr.bf16.mxu0 0
  %6670 = vmatpush1.bf16.xpose.msra.mxu0 0
  %6671 = vmatprep.subr.bf16.mxu0 0
  %6672 = vmatpush1.bf16.xpose.msra.mxu0 0
  %6673 = vmatprep.subr.bf16.mxu0 0
  %6674 = vmatpush1.bf16.xpose.msra.mxu0 0
  %6675 = vmatprep.mubr.bf16.mxu0 0
  %6676 = vmatmul.mubr.bf16.gmra.mrb[0].mxu0 %v6596
  %v6677 = vpop.f32.mrb[0].mxu0
  %v6678 = vadd.f32 0.0, %v6677
  %v6679 = vpop.f32.mrb[0].mxu0
  %v6680 = vpop.f32.mrb[0].mxu0
  %v6681 = vadd.f32 0.0, %v6680
  %v6682 = vpop.f32.mrb[0].mxu0
  %6683 = vmatprep.mubr.bf16.mxu0 0
  %6684 = vmatmul.mubr.bf16.gmra.mrb[0].mxu0 %v6599
  %v6685 = vpop.f32.mrb[0].mxu0
  %v6686 = vadd.f32 0.0, %v6685
  %v6687 = vpop.f32.mrb[0].mxu0
  %v6688 = vpop.f32.mrb[0].mxu0
  %v6689 = vadd.f32 0.0, %v6688
  %v6690 = vpop.f32.mrb[0].mxu0
  %6691 = vmatprep.mubr.bf16.mxu0 0
  %6692 = vmatmul.mubr.bf16.gmra.mrb[0].mxu0 %v6602
  %v6693 = vpop.f32.mrb[0].mxu0
  %v6694 = vadd.f32 0.0, %v6693
  %v6695 = vpop.f32.mrb[0].mxu0
  %v6696 = vpop.f32.mrb[0].mxu0
  %v6697 = vadd.f32 0.0, %v6696
  %v6698 = vpop.f32.mrb[0].mxu0
  %6699 = vmatprep.mubr.bf16.mxu0 0
  %6700 = vmatmul.mubr.bf16.gmra.mrb[0].mxu0 %v6605
  %v6701 = vpop.f32.mrb[0].mxu0
  %v6702 = vadd.f32 0.0, %v6701
  %v6703 = vpop.f32.mrb[0].mxu0
  %v6704 = vpop.f32.mrb[0].mxu0
  %v6705 = vadd.f32 0.0, %v6704
  %v6706 = vpop.f32.mrb[0].mxu0
  %6707 = vmatprep.mubr.bf16.mxu0 0
  %6708 = vmatmul.mubr.bf16.gmra.mrb[0].mxu0 %v6608
  %v6709 = vpop.f32.mrb[0].mxu0
  %v6710 = vadd.f32 0.0, %v6709
  %v6711 = vpop.f32.mrb[0].mxu0
  %v6712 = vpop.f32.mrb[0].mxu0
  %v6713 = vadd.f32 0.0, %v6712
  %v6714 = vpop.f32.mrb[0].mxu0
  %6715 = vmatprep.mubr.bf16.mxu0 0
  %6716 = vmatmul.mubr.bf16.gmra.mrb[0].mxu0 %v6611
  %v6717 = vpop.f32.mrb[0].mxu0
  %v6718 = vadd.f32 0.0, %v6717
  %v6719 = vpop.f32.mrb[0].mxu0
  %v6720 = vpop.f32.mrb[0].mxu0
  %v6721 = vadd.f32 0.0, %v6720
  %v6722 = vpop.f32.mrb[0].mxu0
  %6723 = vmatprep.mubr.bf16.mxu0 0
  %6724 = vmatmul.mubr.bf16.gmra.mrb[0].mxu0 %v6614
  %v6725 = vpop.f32.mrb[0].mxu0
  %v6726 = vadd.f32 0.0, %v6725
  %v6727 = vpop.f32.mrb[0].mxu0
  %v6728 = vpop.f32.mrb[0].mxu0
  %v6729 = vadd.f32 0.0, %v6728
  %v6730 = vpop.f32.mrb[0].mxu0
  %6731 = vmatprep.mubr.bf16.mxu0 0
  %6732 = vmatmul.mubr.bf16.gmra.mrb[0].mxu0 %v6617
  %v6733 = vpop.f32.mrb[0].mxu0
  %v6734 = vadd.f32 0.0, %v6733
  %v6735 = vpop.f32.mrb[0].mxu0
  %v6736 = vpop.f32.mrb[0].mxu0
  %v6737 = vadd.f32 0.0, %v6736
  %v6738 = vpop.f32.mrb[0].mxu0
  %6739 = vdwg.mxu0
  %v6740 = vsel %vm1078, %v6678, -1e+30
  %v6741 = vsel %vm1079, %v6681, -1e+30
  %v6742 = vsel %vm1080, %v6686, -1e+30
  %v6743 = vsel %vm1081, %v6689, -1e+30
  %v6744 = vsel %vm1082, %v6694, -1e+30
  %v6745 = vsel %vm1083, %v6697, -1e+30
  %v6746 = vsel %vm1084, %v6702, -1e+30
  %v6747 = vsel %vm1085, %v6705, -1e+30
  %v6748 = vsel %vm1086, %v6710, -1e+30
  %v6749 = vsel %vm1087, %v6713, -1e+30
  %v6750 = vsel %vm1088, %v6718, -1e+30
  %v6751 = vsel %vm1089, %v6721, -1e+30
  %v6752 = vsel %vm1090, %v6726, -1e+30
  %v6753 = vsel %vm1091, %v6729, -1e+30
  %v6754 = vsel %vm1092, %v6734, -1e+30
  %v6755 = vsel %vm1093, %v6737, -1e+30
  %6756 = vmax.xlane.f32.xlu0 %v6740
  %v6757 = vpop.xlane.xlu0 %6756
  %6758 = vmax.xlane.f32.xlu0 %v6741
  %v6759 = vpop.xlane.xlu0 %6758
  %6760 = vmax.xlane.f32.xlu0 %v6742
  %v6761 = vpop.xlane.xlu0 %6760
  %6762 = vmax.xlane.f32.xlu0 %v6743
  %v6763 = vpop.xlane.xlu0 %6762
  %6764 = vmax.xlane.f32.xlu0 %v6744
  %v6765 = vpop.xlane.xlu0 %6764
  %6766 = vmax.xlane.f32.xlu0 %v6745
  %v6767 = vpop.xlane.xlu0 %6766
  %6768 = vmax.xlane.f32.xlu0 %v6746
  %v6769 = vpop.xlane.xlu0 %6768
  %6770 = vmax.xlane.f32.xlu0 %v6747
  %v6771 = vpop.xlane.xlu0 %6770
  %6772 = vmax.xlane.f32.xlu0 %v6748
  %v6773 = vpop.xlane.xlu0 %6772
  %6774 = vmax.xlane.f32.xlu0 %v6749
  %v6775 = vpop.xlane.xlu0 %6774
  %6776 = vmax.xlane.f32.xlu0 %v6750
  %v6777 = vpop.xlane.xlu0 %6776
  %6778 = vmax.xlane.f32.xlu0 %v6751
  %v6779 = vpop.xlane.xlu0 %6778
  %6780 = vmax.xlane.f32.xlu0 %v6752
  %v6781 = vpop.xlane.xlu0 %6780
  %6782 = vmax.xlane.f32.xlu0 %v6753
  %v6783 = vpop.xlane.xlu0 %6782
  %6784 = vmax.xlane.f32.xlu0 %v6754
  %v6785 = vpop.xlane.xlu0 %6784
  %6786 = vmax.xlane.f32.xlu0 %v6755
  %v6787 = vpop.xlane.xlu0 %6786
  %v6788 = vsub.f32 %v6740, %v6757
  %v6789 = vsub.f32 %v6741, %v6759
  %v6790 = vsub.f32 %v6742, %v6761
  %v6791 = vsub.f32 %v6743, %v6763
  %v6792 = vsub.f32 %v6744, %v6765
  %v6793 = vsub.f32 %v6745, %v6767
  %v6794 = vsub.f32 %v6746, %v6769
  %v6795 = vsub.f32 %v6747, %v6771
  %v6796 = vsub.f32 %v6748, %v6773
  %v6797 = vsub.f32 %v6749, %v6775
  %v6798 = vsub.f32 %v6750, %v6777
  %v6799 = vsub.f32 %v6751, %v6779
  %v6800 = vsub.f32 %v6752, %v6781
  %v6801 = vsub.f32 %v6753, %v6783
  %v6802 = vsub.f32 %v6754, %v6785
  %v6803 = vsub.f32 %v6755, %v6787
  %v6804 = vmul.f32 %v6788, 1.442695
  %v6805 = vpow.pop %v6804
  %v6806 = vmul.f32 %v6789, 1.442695
  %v6807 = vpow.pop %v6806
  %v6808 = vmul.f32 %v6790, 1.442695
  %v6809 = vpow.pop %v6808
  %v6810 = vmul.f32 %v6791, 1.442695
  %v6811 = vpow.pop %v6810
  %v6812 = vmul.f32 %v6792, 1.442695
  %v6813 = vpow.pop %v6812
  %v6814 = vmul.f32 %v6793, 1.442695
  %v6815 = vpow.pop %v6814
  %v6816 = vmul.f32 %v6794, 1.442695
  %v6817 = vpow.pop %v6816
  %v6818 = vmul.f32 %v6795, 1.442695
  %v6819 = vpow.pop %v6818
  %v6820 = vmul.f32 %v6796, 1.442695
  %v6821 = vpow.pop %v6820
  %v6822 = vmul.f32 %v6797, 1.442695
  %v6823 = vpow.pop %v6822
  %v6824 = vmul.f32 %v6798, 1.442695
  %v6825 = vpow.pop %v6824
  %v6826 = vmul.f32 %v6799, 1.442695
  %v6827 = vpow.pop %v6826
  %v6828 = vmul.f32 %v6800, 1.442695
  %v6829 = vpow.pop %v6828
  %v6830 = vmul.f32 %v6801, 1.442695
  %v6831 = vpow.pop %v6830
  %v6832 = vmul.f32 %v6802, 1.442695
  %v6833 = vpow.pop %v6832
  %v6834 = vmul.f32 %v6803, 1.442695
  %v6835 = vpow.pop %v6834
  %6836 = vadd.xlane.f32.xlu0 %v6805
  %v6837 = vpop.xlane.xlu0 %6836
  %6838 = vadd.xlane.f32.xlu0 %v6807
  %v6839 = vpop.xlane.xlu0 %6838
  %6840 = vadd.xlane.f32.xlu0 %v6809
  %v6841 = vpop.xlane.xlu0 %6840
  %6842 = vadd.xlane.f32.xlu0 %v6811
  %v6843 = vpop.xlane.xlu0 %6842
  %6844 = vadd.xlane.f32.xlu0 %v6813
  %v6845 = vpop.xlane.xlu0 %6844
  %6846 = vadd.xlane.f32.xlu0 %v6815
  %v6847 = vpop.xlane.xlu0 %6846
  %6848 = vadd.xlane.f32.xlu0 %v6817
  %v6849 = vpop.xlane.xlu0 %6848
  %6850 = vadd.xlane.f32.xlu0 %v6819
  %v6851 = vpop.xlane.xlu0 %6850
  %6852 = vadd.xlane.f32.xlu0 %v6821
  %v6853 = vpop.xlane.xlu0 %6852
  %6854 = vadd.xlane.f32.xlu0 %v6823
  %v6855 = vpop.xlane.xlu0 %6854
  %6856 = vadd.xlane.f32.xlu0 %v6825
  %v6857 = vpop.xlane.xlu0 %6856
  %6858 = vadd.xlane.f32.xlu0 %v6827
  %v6859 = vpop.xlane.xlu0 %6858
  %6860 = vadd.xlane.f32.xlu0 %v6829
  %v6861 = vpop.xlane.xlu0 %6860
  %6862 = vadd.xlane.f32.xlu0 %v6831
  %v6863 = vpop.xlane.xlu0 %6862
  %6864 = vadd.xlane.f32.xlu0 %v6833
  %v6865 = vpop.xlane.xlu0 %6864
  %6866 = vadd.xlane.f32.xlu0 %v6835
  %v6867 = vpop.xlane.xlu0 %6866
  %v6868 = vrcp.pop %v6837
  %v6869 = vrcp.pop %v6839
  %v6870 = vrcp.pop %v6841
  %v6871 = vrcp.pop %v6843
  %v6872 = vrcp.pop %v6845
  %v6873 = vrcp.pop %v6847
  %v6874 = vrcp.pop %v6849
  %v6875 = vrcp.pop %v6851
  %v6876 = vrcp.pop %v6853
  %v6877 = vrcp.pop %v6855
  %v6878 = vrcp.pop %v6857
  %v6879 = vrcp.pop %v6859
  %v6880 = vrcp.pop %v6861
  %v6881 = vrcp.pop %v6863
  %v6882 = vrcp.pop %v6865
  %v6883 = vrcp.pop %v6867
  %v6884 = vmul.f32 %v6805, %v6868
  %v6885 = vmul.f32 %v6807, %v6869
  %v6886 = vmul.f32 %v6809, %v6870
  %v6887 = vmul.f32 %v6811, %v6871
  %v6888 = vmul.f32 %v6813, %v6872
  %v6889 = vmul.f32 %v6815, %v6873
  %v6890 = vmul.f32 %v6817, %v6874
  %v6891 = vmul.f32 %v6819, %v6875
  %v6892 = vmul.f32 %v6821, %v6876
  %v6893 = vmul.f32 %v6823, %v6877
  %v6894 = vmul.f32 %v6825, %v6878
  %v6895 = vmul.f32 %v6827, %v6879
  %v6896 = vmul.f32 %v6829, %v6880
  %v6897 = vmul.f32 %v6831, %v6881
  %v6898 = vmul.f32 %v6833, %v6882
  %v6899 = vmul.f32 %v6835, %v6883
  %v6900 = vpack.c.bf16 %v6885, %v6884
  %v6901 = vpack.c.bf16 %v6887, %v6886
  %v6902 = vpack.c.bf16 %v6889, %v6888
  %v6903 = vpack.c.bf16 %v6891, %v6890
  %v6904 = vpack.c.bf16 %v6893, %v6892
  %v6905 = vpack.c.bf16 %v6895, %v6894
  %v6906 = vpack.c.bf16 %v6897, %v6896
  %v6907 = vpack.c.bf16 %v6899, %v6898
  %6908 = vrot.lane.b32.xlu0 %v5518, 80
  %v6909 = vpop.permute.xlu0 %6908
  %6910 = vrot.lane.b32.xlu0 %v5519, 80
  %v6911 = vpop.permute.xlu0 %6910
  %6912 = vrot.lane.b32.xlu0 %v5520, 80
  %v6913 = vpop.permute.xlu0 %6912
  %6914 = vrot.lane.b32.xlu0 %v5521, 80
  %v6915 = vpop.permute.xlu0 %6914
  %6916 = vrot.lane.b32.xlu0 %v5522, 80
  %v6917 = vpop.permute.xlu0 %6916
  %6918 = vrot.lane.b32.xlu0 %v5523, 80
  %v6919 = vpop.permute.xlu0 %6918
  %6920 = vrot.lane.b32.xlu0 %v5524, 80
  %v6921 = vpop.permute.xlu0 %6920
  %6922 = vrot.lane.b32.xlu0 %v5525, 80
  %v6923 = vpop.permute.xlu0 %6922
  %6932 = vmatprep.subr.bf16.mxu0 0
  %6933 = vmatpush1.bf16.msra.mxu0 %v6909
  %6934 = vmatprep.subr.bf16.mxu0 0
  %6935 = vmatpush1.bf16.msra.mxu0 %v6911
  %6936 = vmatprep.subr.bf16.mxu0 0
  %6937 = vmatpush1.bf16.msra.mxu0 %v6913
  %6938 = vmatprep.subr.bf16.mxu0 0
  %6939 = vmatpush1.bf16.msra.mxu0 %v6915
  %6940 = vmatprep.subr.bf16.mxu0 0
  %6941 = vmatpush1.bf16.msra.mxu0 %v6917
  %6942 = vmatprep.subr.bf16.mxu0 0
  %6943 = vmatpush1.bf16.msra.mxu0 %v6919
  %6944 = vmatprep.subr.bf16.mxu0 0
  %6945 = vmatpush1.bf16.msra.mxu0 %v6921
  %6946 = vmatprep.subr.bf16.mxu0 0
  %6947 = vmatpush1.bf16.msra.mxu0 %v6923
  %6948 = vmatprep.subr.bf16.mxu0 0
  %6949 = vmatpush1.bf16.msra.mxu0 0
  %6950 = vmatprep.subr.bf16.mxu0 0
  %6951 = vmatpush1.bf16.msra.mxu0 0
  %6952 = vmatprep.subr.bf16.mxu0 0
  %6953 = vmatpush1.bf16.msra.mxu0 0
  %6954 = vmatprep.subr.bf16.mxu0 0
  %6955 = vmatpush1.bf16.msra.mxu0 0
  %6956 = vmatprep.subr.bf16.mxu0 0
  %6957 = vmatpush1.bf16.msra.mxu0 0
  %6958 = vmatprep.subr.bf16.mxu0 0
  %6959 = vmatpush1.bf16.msra.mxu0 0
  %6960 = vmatprep.subr.bf16.mxu0 0
  %6961 = vmatpush1.bf16.msra.mxu0 0
  %6962 = vmatprep.subr.bf16.mxu0 0
  %6963 = vmatpush1.bf16.msra.mxu0 0
  %6964 = vmatprep.mubr.bf16.mxu0 0
  %6965 = vmatmul.mubr.bf16.gmra.mrb[0].mxu0 %v6900
  %v6966 = vpop.f32.mrb[0].mxu0
  %v6967 = vadd.f32 0.0, %v6966
  %v6968 = vpop.f32.mrb[0].mxu0
  %v6969 = vpop.f32.mrb[0].mxu0
  %v6970 = vadd.f32 0.0, %v6969
  %v6971 = vpop.f32.mrb[0].mxu0
  %6972 = vmatprep.mubr.bf16.mxu0 0
  %6973 = vmatmul.mubr.bf16.gmra.mrb[0].mxu0 %v6901
  %v6974 = vpop.f32.mrb[0].mxu0
  %v6975 = vadd.f32 0.0, %v6974
  %v6976 = vpop.f32.mrb[0].mxu0
  %v6977 = vpop.f32.mrb[0].mxu0
  %v6978 = vadd.f32 0.0, %v6977
  %v6979 = vpop.f32.mrb[0].mxu0
  %6980 = vmatprep.mubr.bf16.mxu0 0
  %6981 = vmatmul.mubr.bf16.gmra.mrb[0].mxu0 %v6902
  %v6982 = vpop.f32.mrb[0].mxu0
  %v6983 = vadd.f32 0.0, %v6982
  %v6984 = vpop.f32.mrb[0].mxu0
  %v6985 = vpop.f32.mrb[0].mxu0
  %v6986 = vadd.f32 0.0, %v6985
  %v6987 = vpop.f32.mrb[0].mxu0
  %6988 = vmatprep.mubr.bf16.mxu0 0
  %6989 = vmatmul.mubr.bf16.gmra.mrb[0].mxu0 %v6903
  %v6990 = vpop.f32.mrb[0].mxu0
  %v6991 = vadd.f32 0.0, %v6990
  %v6992 = vpop.f32.mrb[0].mxu0
  %v6993 = vpop.f32.mrb[0].mxu0
  %v6994 = vadd.f32 0.0, %v6993
  %v6995 = vpop.f32.mrb[0].mxu0
  %6996 = vmatprep.mubr.bf16.mxu0 0
  %6997 = vmatmul.mubr.bf16.gmra.mrb[0].mxu0 %v6904
  %v6998 = vpop.f32.mrb[0].mxu0
  %v6999 = vadd.f32 0.0, %v6998
  %v7000 = vpop.f32.mrb[0].mxu0
  %v7001 = vpop.f32.mrb[0].mxu0
  %v7002 = vadd.f32 0.0, %v7001
  %v7003 = vpop.f32.mrb[0].mxu0
  %7004 = vmatprep.mubr.bf16.mxu0 0
  %7005 = vmatmul.mubr.bf16.gmra.mrb[0].mxu0 %v6905
  %v7006 = vpop.f32.mrb[0].mxu0
  %v7007 = vadd.f32 0.0, %v7006
  %v7008 = vpop.f32.mrb[0].mxu0
  %v7009 = vpop.f32.mrb[0].mxu0
  %v7010 = vadd.f32 0.0, %v7009
  %v7011 = vpop.f32.mrb[0].mxu0
  %7012 = vmatprep.mubr.bf16.mxu0 0
  %7013 = vmatmul.mubr.bf16.gmra.mrb[0].mxu0 %v6906
  %v7014 = vpop.f32.mrb[0].mxu0
  %v7015 = vadd.f32 0.0, %v7014
  %v7016 = vpop.f32.mrb[0].mxu0
  %v7017 = vpop.f32.mrb[0].mxu0
  %v7018 = vadd.f32 0.0, %v7017
  %v7019 = vpop.f32.mrb[0].mxu0
  %7020 = vmatprep.mubr.bf16.mxu0 0
  %7021 = vmatmul.mubr.bf16.gmra.mrb[0].mxu0 %v6907
  %v7022 = vpop.f32.mrb[0].mxu0
  %v7023 = vadd.f32 0.0, %v7022
  %v7024 = vpop.f32.mrb[0].mxu0
  %v7025 = vpop.f32.mrb[0].mxu0
  %v7026 = vadd.f32 0.0, %v7025
  %v7027 = vpop.f32.mrb[0].mxu0
  %7028 = vdwg.mxu0
  %7045 = vrot.lane.b32.xlu0 %v6035, 16
  %v7046 = vpop.permute.xlu0 %7045
  %7047 = vrot.lane.b32.xlu0 %v6038, 16
  %v7048 = vpop.permute.xlu0 %7047
  %7049 = vrot.lane.b32.xlu0 %v6043, 16
  %v7050 = vpop.permute.xlu0 %7049
  %7051 = vrot.lane.b32.xlu0 %v6046, 16
  %v7052 = vpop.permute.xlu0 %7051
  %7053 = vrot.lane.b32.xlu0 %v6051, 16
  %v7054 = vpop.permute.xlu0 %7053
  %7055 = vrot.lane.b32.xlu0 %v6054, 16
  %v7056 = vpop.permute.xlu0 %7055
  %7057 = vrot.lane.b32.xlu0 %v6059, 16
  %v7058 = vpop.permute.xlu0 %7057
  %7059 = vrot.lane.b32.xlu0 %v6062, 16
  %v7060 = vpop.permute.xlu0 %7059
  %7061 = vrot.lane.b32.xlu0 %v6067, 16
  %v7062 = vpop.permute.xlu0 %7061
  %7063 = vrot.lane.b32.xlu0 %v6070, 16
  %v7064 = vpop.permute.xlu0 %7063
  %7065 = vrot.lane.b32.xlu0 %v6075, 16
  %v7066 = vpop.permute.xlu0 %7065
  %7067 = vrot.lane.b32.xlu0 %v6078, 16
  %v7068 = vpop.permute.xlu0 %7067
  %7069 = vrot.lane.b32.xlu0 %v6083, 16
  %v7070 = vpop.permute.xlu0 %7069
  %7071 = vrot.lane.b32.xlu0 %v6086, 16
  %v7072 = vpop.permute.xlu0 %7071
  %7073 = vrot.lane.b32.xlu0 %v6091, 16
  %v7074 = vpop.permute.xlu0 %7073
  %7075 = vrot.lane.b32.xlu0 %v6094, 16
  %v7076 = vpop.permute.xlu0 %7075
  %7109 = vrot.lane.b32.xlu0 %v6501, 32
  %v7110 = vpop.permute.xlu0 %7109
  %7111 = vrot.lane.b32.xlu0 %v6504, 32
  %v7112 = vpop.permute.xlu0 %7111
  %7113 = vrot.lane.b32.xlu0 %v6509, 32
  %v7114 = vpop.permute.xlu0 %7113
  %7115 = vrot.lane.b32.xlu0 %v6512, 32
  %v7116 = vpop.permute.xlu0 %7115
  %7117 = vrot.lane.b32.xlu0 %v6517, 32
  %v7118 = vpop.permute.xlu0 %7117
  %7119 = vrot.lane.b32.xlu0 %v6520, 32
  %v7120 = vpop.permute.xlu0 %7119
  %7121 = vrot.lane.b32.xlu0 %v6525, 32
  %v7122 = vpop.permute.xlu0 %7121
  %7123 = vrot.lane.b32.xlu0 %v6528, 32
  %v7124 = vpop.permute.xlu0 %7123
  %7125 = vrot.lane.b32.xlu0 %v6533, 32
  %v7126 = vpop.permute.xlu0 %7125
  %7127 = vrot.lane.b32.xlu0 %v6536, 32
  %v7128 = vpop.permute.xlu0 %7127
  %7129 = vrot.lane.b32.xlu0 %v6541, 32
  %v7130 = vpop.permute.xlu0 %7129
  %7131 = vrot.lane.b32.xlu0 %v6544, 32
  %v7132 = vpop.permute.xlu0 %7131
  %7133 = vrot.lane.b32.xlu0 %v6549, 32
  %v7134 = vpop.permute.xlu0 %7133
  %7135 = vrot.lane.b32.xlu0 %v6552, 32
  %v7136 = vpop.permute.xlu0 %7135
  %7137 = vrot.lane.b32.xlu0 %v6557, 32
  %v7138 = vpop.permute.xlu0 %7137
  %7139 = vrot.lane.b32.xlu0 %v6560, 32
  %v7140 = vpop.permute.xlu0 %7139
  %7173 = vrot.lane.b32.xlu0 %v6967, 48
  %v7174 = vpop.permute.xlu0 %7173
  %7175 = vrot.lane.b32.xlu0 %v6970, 48
  %v7176 = vpop.permute.xlu0 %7175
  %7177 = vrot.lane.b32.xlu0 %v6975, 48
  %v7178 = vpop.permute.xlu0 %7177
  %7179 = vrot.lane.b32.xlu0 %v6978, 48
  %v7180 = vpop.permute.xlu0 %7179
  %7181 = vrot.lane.b32.xlu0 %v6983, 48
  %v7182 = vpop.permute.xlu0 %7181
  %7183 = vrot.lane.b32.xlu0 %v6986, 48
  %v7184 = vpop.permute.xlu0 %7183
  %7185 = vrot.lane.b32.xlu0 %v6991, 48
  %v7186 = vpop.permute.xlu0 %7185
  %7187 = vrot.lane.b32.xlu0 %v6994, 48
  %v7188 = vpop.permute.xlu0 %7187
  %7189 = vrot.lane.b32.xlu0 %v6999, 48
  %v7190 = vpop.permute.xlu0 %7189
  %7191 = vrot.lane.b32.xlu0 %v7002, 48
  %v7192 = vpop.permute.xlu0 %7191
  %7193 = vrot.lane.b32.xlu0 %v7007, 48
  %v7194 = vpop.permute.xlu0 %7193
  %7195 = vrot.lane.b32.xlu0 %v7010, 48
  %v7196 = vpop.permute.xlu0 %7195
  %7197 = vrot.lane.b32.xlu0 %v7015, 48
  %v7198 = vpop.permute.xlu0 %7197
  %7199 = vrot.lane.b32.xlu0 %v7018, 48
  %v7200 = vpop.permute.xlu0 %7199
  %7201 = vrot.lane.b32.xlu0 %v7023, 48
  %v7202 = vpop.permute.xlu0 %7201
  %7203 = vrot.lane.b32.xlu0 %v7026, 48
  %v7204 = vpop.permute.xlu0 %7203
  %v7221 = vsel %vm1582, %v5561, %v7046
  %v7222 = vsel %vm1582, %v5564, %v7048
  %v7223 = vsel %vm1582, %v5569, %v7050
  %v7224 = vsel %vm1582, %v5572, %v7052
  %v7225 = vsel %vm1582, %v5577, %v7054
  %v7226 = vsel %vm1582, %v5580, %v7056
  %v7227 = vsel %vm1582, %v5585, %v7058
  %v7228 = vsel %vm1582, %v5588, %v7060
  %v7229 = vsel %vm1582, %v5593, %v7062
  %v7230 = vsel %vm1582, %v5596, %v7064
  %v7231 = vsel %vm1582, %v5601, %v7066
  %v7232 = vsel %vm1582, %v5604, %v7068
  %v7233 = vsel %vm1582, %v5609, %v7070
  %v7234 = vsel %vm1582, %v5612, %v7072
  %v7235 = vsel %vm1582, %v5617, %v7074
  %v7236 = vsel %vm1582, %v5620, %v7076
  %v7237 = vsel %vm3615, %v7221, %v7110
  %v7238 = vsel %vm3615, %v7222, %v7112
  %v7239 = vsel %vm3615, %v7223, %v7114
  %v7240 = vsel %vm3615, %v7224, %v7116
  %v7241 = vsel %vm3615, %v7225, %v7118
  %v7242 = vsel %vm3615, %v7226, %v7120
  %v7243 = vsel %vm3615, %v7227, %v7122
  %v7244 = vsel %vm3615, %v7228, %v7124
  %v7245 = vsel %vm3615, %v7229, %v7126
  %v7246 = vsel %vm3615, %v7230, %v7128
  %v7247 = vsel %vm3615, %v7231, %v7130
  %v7248 = vsel %vm3615, %v7232, %v7132
  %v7249 = vsel %vm3615, %v7233, %v7134
  %v7250 = vsel %vm3615, %v7234, %v7136
  %v7251 = vsel %vm3615, %v7235, %v7138
  %v7252 = vsel %vm3615, %v7236, %v7140
  %v7253 = vsel %vm3632, %v7237, %v7174
  %v7254 = vsel %vm3632, %v7238, %v7176
  %v7255 = vsel %vm3632, %v7239, %v7178
  %v7256 = vsel %vm3632, %v7240, %v7180
  %v7257 = vsel %vm3632, %v7241, %v7182
  %v7258 = vsel %vm3632, %v7242, %v7184
  %v7259 = vsel %vm3632, %v7243, %v7186
  %v7260 = vsel %vm3632, %v7244, %v7188
  %v7261 = vsel %vm3632, %v7245, %v7190
  %v7262 = vsel %vm3632, %v7246, %v7192
  %v7263 = vsel %vm3632, %v7247, %v7194
  %v7264 = vsel %vm3632, %v7248, %v7196
  %v7265 = vsel %vm3632, %v7249, %v7198
  %v7266 = vsel %vm3632, %v7250, %v7200
  %v7267 = vsel %vm3632, %v7251, %v7202
  %v7268 = vsel %vm3632, %v7252, %v7204
  %v7269 = vld [vmem:[%s9] sm:$0xf]
  %v7270 = vld [vmem:[%s9 + $0x4] sm:$0xf]
  %v7271 = vld [vmem:[%s9 + $0x8] sm:$0xf]
  %v7272 = vld [vmem:[%s9 + $0xc] sm:$0xf]
  %v7273 = vld [vmem:[%s9 + $0x10] sm:$0xf]
  %v7274 = vld [vmem:[%s9 + $0x14] sm:$0xf]
  %v7275 = vld [vmem:[%s9 + $0x18] sm:$0xf]
  %v7276 = vld [vmem:[%s9 + $0x1c] sm:$0xf]
  %v7277 = vpack.c.bf16 %v7254, %v7253
  %v7278 = vpack.c.bf16 %v7256, %v7255
  %v7279 = vpack.c.bf16 %v7258, %v7257
  %v7280 = vpack.c.bf16 %v7260, %v7259
  %v7281 = vpack.c.bf16 %v7262, %v7261
  %v7282 = vpack.c.bf16 %v7264, %v7263
  %v7283 = vpack.c.bf16 %v7266, %v7265
  %v7284 = vpack.c.bf16 %v7268, %v7267
  %v7293 = vunpack.c.l.b16 %v7269
  %v7294 = vunpack.c.l.b16 %v7270
  %v7295 = vunpack.c.l.b16 %v7271
  %v7296 = vunpack.c.l.b16 %v7272
  %v7297 = vunpack.c.l.b16 %v7273
  %v7298 = vunpack.c.l.b16 %v7274
  %v7299 = vunpack.c.l.b16 %v7275
  %v7300 = vunpack.c.l.b16 %v7276
  %v7301 = vpack.c.b16 %v7294, %v7293
  %v7302 = vpack.c.b16 %v7296, %v7295
  %v7303 = vpack.c.b16 %v7298, %v7297
  %v7304 = vpack.c.b16 %v7300, %v7299
  %v7310 = vsel %vm1104, %v7277, 0
  %v7313 = vsel %vm1104, %v7278, 0
  %v7316 = vsel %vm1104, %v7279, 0
  %v7319 = vsel %vm1104, %v7280, 0
  %v7322 = vsel %vm1104, %v7281, 0
  %v7325 = vsel %vm1104, %v7282, 0
  %v7328 = vsel %vm1104, %v7283, 0
  %v7331 = vsel %vm1104, %v7284, 0
  %7333 = vmatprep.subr.bf16.mxu0 0
  %7334 = vmatpush1.bf16.msra.mxu0 %v7301
  %7335 = vmatprep.subr.bf16.mxu0 0
  %7336 = vmatpush1.bf16.msra.mxu0 %v7302
  %7337 = vmatprep.subr.bf16.mxu0 0
  %7338 = vmatpush1.bf16.msra.mxu0 %v7303
  %7339 = vmatprep.subr.bf16.mxu0 0
  %7340 = vmatpush1.bf16.msra.mxu0 %v7304
  %7341 = vmatprep.subr.bf16.mxu0 0
  %7342 = vmatpush1.bf16.msra.mxu0 0
  %7343 = vmatprep.subr.bf16.mxu0 0
  %7344 = vmatpush1.bf16.msra.mxu0 0
  %7345 = vmatprep.subr.bf16.mxu0 0
  %7346 = vmatpush1.bf16.msra.mxu0 0
  %7347 = vmatprep.subr.bf16.mxu0 0
  %7348 = vmatpush1.bf16.msra.mxu0 0
  %7349 = vmatprep.subr.bf16.mxu0 0
  %7350 = vmatpush1.bf16.msra.mxu0 0
  %7351 = vmatprep.subr.bf16.mxu0 0
  %7352 = vmatpush1.bf16.msra.mxu0 0
  %7353 = vmatprep.subr.bf16.mxu0 0
  %7354 = vmatpush1.bf16.msra.mxu0 0
  %7355 = vmatprep.subr.bf16.mxu0 0
  %7356 = vmatpush1.bf16.msra.mxu0 0
  %7357 = vmatprep.subr.bf16.mxu0 0
  %7358 = vmatpush1.bf16.msra.mxu0 0
  %7359 = vmatprep.subr.bf16.mxu0 0
  %7360 = vmatpush1.bf16.msra.mxu0 0
  %7361 = vmatprep.subr.bf16.mxu0 0
  %7362 = vmatpush1.bf16.msra.mxu0 0
  %7363 = vmatprep.subr.bf16.mxu0 0
  %7364 = vmatpush1.bf16.msra.mxu0 0
  %7365 = vmatprep.mubr.bf16.mxu0 0
  %7366 = vmatmul.mubr.bf16.gmra.mrb[0].mxu0 %v7310
  %v7367 = vpop.f32.mrb[0].mxu0
  %v7368 = vadd.f32 0.0, %v7367
  %v7369 = vpop.f32.mrb[0].mxu0
  %v7370 = vpop.f32.mrb[0].mxu0
  %v7371 = vadd.f32 0.0, %v7370
  %v7372 = vpop.f32.mrb[0].mxu0
  %7373 = vmatprep.mubr.bf16.mxu0 0
  %7374 = vmatmul.mubr.bf16.gmra.mrb[0].mxu0 %v7313
  %v7375 = vpop.f32.mrb[0].mxu0
  %v7376 = vadd.f32 0.0, %v7375
  %v7377 = vpop.f32.mrb[0].mxu0
  %v7378 = vpop.f32.mrb[0].mxu0
  %v7379 = vadd.f32 0.0, %v7378
  %v7380 = vpop.f32.mrb[0].mxu0
  %7381 = vmatprep.mubr.bf16.mxu0 0
  %7382 = vmatmul.mubr.bf16.gmra.mrb[0].mxu0 %v7316
  %v7383 = vpop.f32.mrb[0].mxu0
  %v7384 = vadd.f32 0.0, %v7383
  %v7385 = vpop.f32.mrb[0].mxu0
  %v7386 = vpop.f32.mrb[0].mxu0
  %v7387 = vadd.f32 0.0, %v7386
  %v7388 = vpop.f32.mrb[0].mxu0
  %7389 = vmatprep.mubr.bf16.mxu0 0
  %7390 = vmatmul.mubr.bf16.gmra.mrb[0].mxu0 %v7319
  %v7391 = vpop.f32.mrb[0].mxu0
  %v7392 = vadd.f32 0.0, %v7391
  %v7393 = vpop.f32.mrb[0].mxu0
  %v7394 = vpop.f32.mrb[0].mxu0
  %v7395 = vadd.f32 0.0, %v7394
  %v7396 = vpop.f32.mrb[0].mxu0
  %7397 = vmatprep.mubr.bf16.mxu0 0
  %7398 = vmatmul.mubr.bf16.gmra.mrb[0].mxu0 %v7322
  %v7399 = vpop.f32.mrb[0].mxu0
  %v7400 = vadd.f32 0.0, %v7399
  %v7401 = vpop.f32.mrb[0].mxu0
  %v7402 = vpop.f32.mrb[0].mxu0
  %v7403 = vadd.f32 0.0, %v7402
  %v7404 = vpop.f32.mrb[0].mxu0
  %7405 = vmatprep.mubr.bf16.mxu0 0
  %7406 = vmatmul.mubr.bf16.gmra.mrb[0].mxu0 %v7325
  %v7407 = vpop.f32.mrb[0].mxu0
  %v7408 = vadd.f32 0.0, %v7407
  %v7409 = vpop.f32.mrb[0].mxu0
  %v7410 = vpop.f32.mrb[0].mxu0
  %v7411 = vadd.f32 0.0, %v7410
  %v7412 = vpop.f32.mrb[0].mxu0
  %7413 = vmatprep.mubr.bf16.mxu0 0
  %7414 = vmatmul.mubr.bf16.gmra.mrb[0].mxu0 %v7328
  %v7415 = vpop.f32.mrb[0].mxu0
  %v7416 = vadd.f32 0.0, %v7415
  %v7417 = vpop.f32.mrb[0].mxu0
  %v7418 = vpop.f32.mrb[0].mxu0
  %v7419 = vadd.f32 0.0, %v7418
  %v7420 = vpop.f32.mrb[0].mxu0
  %7421 = vmatprep.mubr.bf16.mxu0 0
  %7422 = vmatmul.mubr.bf16.gmra.mrb[0].mxu0 %v7331
  %v7423 = vpop.f32.mrb[0].mxu0
  %v7424 = vadd.f32 0.0, %v7423
  %v7425 = vpop.f32.mrb[0].mxu0
  %v7426 = vpop.f32.mrb[0].mxu0
  %v7427 = vadd.f32 0.0, %v7426
  %v7428 = vpop.f32.mrb[0].mxu0
  %7429 = vdwg.mxu0
  %v7430 = vadd.f32 %v4703, %v7368
  %v7431 = vadd.f32 %v4704, %v7371
  %v7432 = vadd.f32 %v4705, %v7376
  %v7433 = vadd.f32 %v4706, %v7379
  %v7434 = vadd.f32 %v4707, %v7384
  %v7435 = vadd.f32 %v4708, %v7387
  %v7436 = vadd.f32 %v4709, %v7392
  %v7437 = vadd.f32 %v4710, %v7395
  %v7438 = vadd.f32 %v4711, %v7400
  %v7439 = vadd.f32 %v4712, %v7403
  %v7440 = vadd.f32 %v4713, %v7408
  %v7441 = vadd.f32 %v4714, %v7411
  %v7442 = vadd.f32 %v4715, %v7416
  %v7443 = vadd.f32 %v4716, %v7419
  %v7444 = vadd.f32 %v4717, %v7424
  %v7445 = vadd.f32 %v4718, %v7427
  %v7446 = vadd.f32 %v7430, %v4725
  %v7447 = vadd.f32 %v7431, %v4725
  %v7448 = vadd.f32 %v7432, %v4725
  %v7449 = vadd.f32 %v7433, %v4725
  %v7450 = vadd.f32 %v7434, %v4725
  %v7451 = vadd.f32 %v7435, %v4725
  %v7452 = vadd.f32 %v7436, %v4725
  %v7453 = vadd.f32 %v7437, %v4725
  %v7454 = vadd.f32 %v7438, %v4725
  %v7455 = vadd.f32 %v7439, %v4725
  %v7456 = vadd.f32 %v7440, %v4725
  %v7457 = vadd.f32 %v7441, %v4725
  %v7458 = vadd.f32 %v7442, %v4725
  %v7459 = vadd.f32 %v7443, %v4725
  %v7460 = vadd.f32 %v7444, %v4725
  %v7461 = vadd.f32 %v7445, %v4725
  %v7462 = vsel %vm1104, %v7446, 0.0
  %7463 = vadd.xlane.f32.xlu0 %v7462
  %v7464 = vpop.xlane.xlu0 %7463
  %v7465 = vsel %vm1104, %v7447, 0.0
  %7466 = vadd.xlane.f32.xlu0 %v7465
  %v7467 = vpop.xlane.xlu0 %7466
  %v7468 = vsel %vm1104, %v7448, 0.0
  %7469 = vadd.xlane.f32.xlu0 %v7468
  %v7470 = vpop.xlane.xlu0 %7469
  %v7471 = vsel %vm1104, %v7449, 0.0
  %7472 = vadd.xlane.f32.xlu0 %v7471
  %v7473 = vpop.xlane.xlu0 %7472
  %v7474 = vsel %vm1104, %v7450, 0.0
  %7475 = vadd.xlane.f32.xlu0 %v7474
  %v7476 = vpop.xlane.xlu0 %7475
  %v7477 = vsel %vm1104, %v7451, 0.0
  %7478 = vadd.xlane.f32.xlu0 %v7477
  %v7479 = vpop.xlane.xlu0 %7478
  %v7480 = vsel %vm1104, %v7452, 0.0
  %7481 = vadd.xlane.f32.xlu0 %v7480
  %v7482 = vpop.xlane.xlu0 %7481
  %v7483 = vsel %vm1104, %v7453, 0.0
  %7484 = vadd.xlane.f32.xlu0 %v7483
  %v7485 = vpop.xlane.xlu0 %7484
  %v7486 = vsel %vm1104, %v7454, 0.0
  %7487 = vadd.xlane.f32.xlu0 %v7486
  %v7488 = vpop.xlane.xlu0 %7487
  %v7489 = vsel %vm1104, %v7455, 0.0
  %7490 = vadd.xlane.f32.xlu0 %v7489
  %v7491 = vpop.xlane.xlu0 %7490
  %v7492 = vsel %vm1104, %v7456, 0.0
  %7493 = vadd.xlane.f32.xlu0 %v7492
  %v7494 = vpop.xlane.xlu0 %7493
  %v7495 = vsel %vm1104, %v7457, 0.0
  %7496 = vadd.xlane.f32.xlu0 %v7495
  %v7497 = vpop.xlane.xlu0 %7496
  %v7498 = vsel %vm1104, %v7458, 0.0
  %7499 = vadd.xlane.f32.xlu0 %v7498
  %v7500 = vpop.xlane.xlu0 %7499
  %v7501 = vsel %vm1104, %v7459, 0.0
  %7502 = vadd.xlane.f32.xlu0 %v7501
  %v7503 = vpop.xlane.xlu0 %7502
  %v7504 = vsel %vm1104, %v7460, 0.0
  %7505 = vadd.xlane.f32.xlu0 %v7504
  %v7506 = vpop.xlane.xlu0 %7505
  %v7507 = vsel %vm1104, %v7461, 0.0
  %7508 = vadd.xlane.f32.xlu0 %v7507
  %v7509 = vpop.xlane.xlu0 %7508
  %v7510 = vmul.f32 %v7464, %v1153
  %v7511 = vmul.f32 %v7467, %v1153
  %v7512 = vmul.f32 %v7470, %v1153
  %v7513 = vmul.f32 %v7473, %v1153
  %v7514 = vmul.f32 %v7476, %v1153
  %v7515 = vmul.f32 %v7479, %v1153
  %v7516 = vmul.f32 %v7482, %v1153
  %v7517 = vmul.f32 %v7485, %v1153
  %v7518 = vmul.f32 %v7488, %v1153
  %v7519 = vmul.f32 %v7491, %v1153
  %v7520 = vmul.f32 %v7494, %v1153
  %v7521 = vmul.f32 %v7497, %v1153
  %v7522 = vmul.f32 %v7500, %v1153
  %v7523 = vmul.f32 %v7503, %v1153
  %v7524 = vmul.f32 %v7506, %v1153
  %v7525 = vmul.f32 %v7509, %v1153
  %v7526 = vsub.f32 %v7446, %v7510
  %v7527 = vsub.f32 %v7447, %v7511
  %v7528 = vsub.f32 %v7448, %v7512
  %v7529 = vsub.f32 %v7449, %v7513
  %v7530 = vsub.f32 %v7450, %v7514
  %v7531 = vsub.f32 %v7451, %v7515
  %v7532 = vsub.f32 %v7452, %v7516
  %v7533 = vsub.f32 %v7453, %v7517
  %v7534 = vsub.f32 %v7454, %v7518
  %v7535 = vsub.f32 %v7455, %v7519
  %v7536 = vsub.f32 %v7456, %v7520
  %v7537 = vsub.f32 %v7457, %v7521
  %v7538 = vsub.f32 %v7458, %v7522
  %v7539 = vsub.f32 %v7459, %v7523
  %v7540 = vsub.f32 %v7460, %v7524
  %v7541 = vsub.f32 %v7461, %v7525
  %v7542 = vmul.f32 %v7526, %v7526
  %v7543 = vmul.f32 %v7527, %v7527
  %v7544 = vmul.f32 %v7528, %v7528
  %v7545 = vmul.f32 %v7529, %v7529
  %v7546 = vmul.f32 %v7530, %v7530
  %v7547 = vmul.f32 %v7531, %v7531
  %v7548 = vmul.f32 %v7532, %v7532
  %v7549 = vmul.f32 %v7533, %v7533
  %v7550 = vmul.f32 %v7534, %v7534
  %v7551 = vmul.f32 %v7535, %v7535
  %v7552 = vmul.f32 %v7536, %v7536
  %v7553 = vmul.f32 %v7537, %v7537
  %v7554 = vmul.f32 %v7538, %v7538
  %v7555 = vmul.f32 %v7539, %v7539
  %v7556 = vmul.f32 %v7540, %v7540
  %v7557 = vmul.f32 %v7541, %v7541
  %v7558 = vsel %vm1104, %v7542, 0.0
  %7559 = vadd.xlane.f32.xlu0 %v7558
  %v7560 = vpop.xlane.xlu0 %7559
  %v7561 = vsel %vm1104, %v7543, 0.0
  %7562 = vadd.xlane.f32.xlu0 %v7561
  %v7563 = vpop.xlane.xlu0 %7562
  %v7564 = vsel %vm1104, %v7544, 0.0
  %7565 = vadd.xlane.f32.xlu0 %v7564
  %v7566 = vpop.xlane.xlu0 %7565
  %v7567 = vsel %vm1104, %v7545, 0.0
  %7568 = vadd.xlane.f32.xlu0 %v7567
  %v7569 = vpop.xlane.xlu0 %7568
  %v7570 = vsel %vm1104, %v7546, 0.0
  %7571 = vadd.xlane.f32.xlu0 %v7570
  %v7572 = vpop.xlane.xlu0 %7571
  %v7573 = vsel %vm1104, %v7547, 0.0
  %7574 = vadd.xlane.f32.xlu0 %v7573
  %v7575 = vpop.xlane.xlu0 %7574
  %v7576 = vsel %vm1104, %v7548, 0.0
  %7577 = vadd.xlane.f32.xlu0 %v7576
  %v7578 = vpop.xlane.xlu0 %7577
  %v7579 = vsel %vm1104, %v7549, 0.0
  %7580 = vadd.xlane.f32.xlu0 %v7579
  %v7581 = vpop.xlane.xlu0 %7580
  %v7582 = vsel %vm1104, %v7550, 0.0
  %7583 = vadd.xlane.f32.xlu0 %v7582
  %v7584 = vpop.xlane.xlu0 %7583
  %v7585 = vsel %vm1104, %v7551, 0.0
  %7586 = vadd.xlane.f32.xlu0 %v7585
  %v7587 = vpop.xlane.xlu0 %7586
  %v7588 = vsel %vm1104, %v7552, 0.0
  %7589 = vadd.xlane.f32.xlu0 %v7588
  %v7590 = vpop.xlane.xlu0 %7589
  %v7591 = vsel %vm1104, %v7553, 0.0
  %7592 = vadd.xlane.f32.xlu0 %v7591
  %v7593 = vpop.xlane.xlu0 %7592
  %v7594 = vsel %vm1104, %v7554, 0.0
  %7595 = vadd.xlane.f32.xlu0 %v7594
  %v7596 = vpop.xlane.xlu0 %7595
  %v7597 = vsel %vm1104, %v7555, 0.0
  %7598 = vadd.xlane.f32.xlu0 %v7597
  %v7599 = vpop.xlane.xlu0 %7598
  %v7600 = vsel %vm1104, %v7556, 0.0
  %7601 = vadd.xlane.f32.xlu0 %v7600
  %v7602 = vpop.xlane.xlu0 %7601
  %v7603 = vsel %vm1104, %v7557, 0.0
  %7604 = vadd.xlane.f32.xlu0 %v7603
  %v7605 = vpop.xlane.xlu0 %7604
  %v7606 = vmul.f32 %v7560, %v1153
  %v7607 = vmul.f32 %v7563, %v1153
  %v7608 = vmul.f32 %v7566, %v1153
  %v7609 = vmul.f32 %v7569, %v1153
  %v7610 = vmul.f32 %v7572, %v1153
  %v7611 = vmul.f32 %v7575, %v1153
  %v7612 = vmul.f32 %v7578, %v1153
  %v7613 = vmul.f32 %v7581, %v1153
  %v7614 = vmul.f32 %v7584, %v1153
  %v7615 = vmul.f32 %v7587, %v1153
  %v7616 = vmul.f32 %v7590, %v1153
  %v7617 = vmul.f32 %v7593, %v1153
  %v7618 = vmul.f32 %v7596, %v1153
  %v7619 = vmul.f32 %v7599, %v1153
  %v7620 = vmul.f32 %v7602, %v1153
  %v7621 = vmul.f32 %v7605, %v1153
  %v7622 = vadd.f32 %v7606, 1e-06
  %v7623 = vadd.f32 %v7607, 1e-06
  %v7624 = vadd.f32 %v7608, 1e-06
  %v7625 = vadd.f32 %v7609, 1e-06
  %v7626 = vadd.f32 %v7610, 1e-06
  %v7627 = vadd.f32 %v7611, 1e-06
  %v7628 = vadd.f32 %v7612, 1e-06
  %v7629 = vadd.f32 %v7613, 1e-06
  %v7630 = vadd.f32 %v7614, 1e-06
  %v7631 = vadd.f32 %v7615, 1e-06
  %v7632 = vadd.f32 %v7616, 1e-06
  %v7633 = vadd.f32 %v7617, 1e-06
  %v7634 = vadd.f32 %v7618, 1e-06
  %v7635 = vadd.f32 %v7619, 1e-06
  %v7636 = vadd.f32 %v7620, 1e-06
  %v7637 = vadd.f32 %v7621, 1e-06
  %v7638 = vrsqrt.pop %v7622
  %v7639 = vrsqrt.pop %v7623
  %v7640 = vrsqrt.pop %v7624
  %v7641 = vrsqrt.pop %v7625
  %v7642 = vrsqrt.pop %v7626
  %v7643 = vrsqrt.pop %v7627
  %v7644 = vrsqrt.pop %v7628
  %v7645 = vrsqrt.pop %v7629
  %v7646 = vrsqrt.pop %v7630
  %v7647 = vrsqrt.pop %v7631
  %v7648 = vrsqrt.pop %v7632
  %v7649 = vrsqrt.pop %v7633
  %v7650 = vrsqrt.pop %v7634
  %v7651 = vrsqrt.pop %v7635
  %v7652 = vrsqrt.pop %v7636
  %v7653 = vrsqrt.pop %v7637
  %v7654 = vmul.f32 %v7526, %v7638
  %v7655 = vmul.f32 %v7527, %v7639
  %v7656 = vmul.f32 %v7528, %v7640
  %v7657 = vmul.f32 %v7529, %v7641
  %v7658 = vmul.f32 %v7530, %v7642
  %v7659 = vmul.f32 %v7531, %v7643
  %v7660 = vmul.f32 %v7532, %v7644
  %v7661 = vmul.f32 %v7533, %v7645
  %v7662 = vmul.f32 %v7534, %v7646
  %v7663 = vmul.f32 %v7535, %v7647
  %v7664 = vmul.f32 %v7536, %v7648
  %v7665 = vmul.f32 %v7537, %v7649
  %v7666 = vmul.f32 %v7538, %v7650
  %v7667 = vmul.f32 %v7539, %v7651
  %v7668 = vmul.f32 %v7540, %v7652
  %v7669 = vmul.f32 %v7541, %v7653
  %v7670 = vmul.f32 %v7654, %v4721
  %v7671 = vmul.f32 %v7655, %v4721
  %v7672 = vmul.f32 %v7656, %v4721
  %v7673 = vmul.f32 %v7657, %v4721
  %v7674 = vmul.f32 %v7658, %v4721
  %v7675 = vmul.f32 %v7659, %v4721
  %v7676 = vmul.f32 %v7660, %v4721
  %v7677 = vmul.f32 %v7661, %v4721
  %v7678 = vmul.f32 %v7662, %v4721
  %v7679 = vmul.f32 %v7663, %v4721
  %v7680 = vmul.f32 %v7664, %v4721
  %v7681 = vmul.f32 %v7665, %v4721
  %v7682 = vmul.f32 %v7666, %v4721
  %v7683 = vmul.f32 %v7667, %v4721
  %v7684 = vmul.f32 %v7668, %v4721
  %v7685 = vmul.f32 %v7669, %v4721
  %v7686 = vadd.f32 %v7670, %v4722
  %v7687 = vadd.f32 %v7671, %v4722
  %v7688 = vadd.f32 %v7672, %v4722
  %v7689 = vadd.f32 %v7673, %v4722
  %v7690 = vadd.f32 %v7674, %v4722
  %v7691 = vadd.f32 %v7675, %v4722
  %v7692 = vadd.f32 %v7676, %v4722
  %v7693 = vadd.f32 %v7677, %v4722
  %v7694 = vadd.f32 %v7678, %v4722
  %v7695 = vadd.f32 %v7679, %v4722
  %v7696 = vadd.f32 %v7680, %v4722
  %v7697 = vadd.f32 %v7681, %v4722
  %v7698 = vadd.f32 %v7682, %v4722
  %v7699 = vadd.f32 %v7683, %v4722
  %v7700 = vadd.f32 %v7684, %v4722
  %v7701 = vadd.f32 %v7685, %v4722
  %v7702 = vld [vmem:[%s10] sm:$0xff]
  %v7703 = vld [vmem:[%s10 + $0x8] sm:$0xff]
  %v7704 = vld [vmem:[%s10 + $0x10] sm:$0xff]
  %v7705 = vld [vmem:[%s10 + $0x18] sm:$0xff]
  %v7706 = vld [vmem:[%s10 + $0x20] sm:$0xff]
  %v7707 = vld [vmem:[%s10 + $0x28] sm:$0xff]
  %v7708 = vld [vmem:[%s10 + $0x30] sm:$0xff]
  %v7709 = vld [vmem:[%s10 + $0x38] sm:$0xff]
  %v7710 = vpack.c.bf16 %v7687, %v7686
  %v7711 = vpack.c.bf16 %v7689, %v7688
  %v7712 = vpack.c.bf16 %v7691, %v7690
  %v7713 = vpack.c.bf16 %v7693, %v7692
  %v7714 = vpack.c.bf16 %v7695, %v7694
  %v7715 = vpack.c.bf16 %v7697, %v7696
  %v7716 = vpack.c.bf16 %v7699, %v7698
  %v7717 = vpack.c.bf16 %v7701, %v7700
  %v7719 = vlaneseq
  %v7720 = vshrl.u32 %v7719, 7
  %v7721 = vsub.s32 0, %v7720
  %v7722 = vrot.slane %v4727, %v7721
  %v7723 = vlaneseq
  %v7724 = vshrl.u32 %v7723, 7
  %v7725 = vsub.s32 1, %v7724
  %v7726 = vrot.slane %v4727, %v7725
  %v7737 = vunpack.c.l.b16 %v7702
  %v7738 = vunpack.c.h.b16 %v7702
  %v7739 = vunpack.c.l.b16 %v7703
  %v7740 = vunpack.c.h.b16 %v7703
  %v7741 = vunpack.c.l.b16 %v7704
  %v7742 = vunpack.c.h.b16 %v7704
  %v7743 = vunpack.c.l.b16 %v7705
  %v7744 = vunpack.c.h.b16 %v7705
  %v7745 = vunpack.c.l.b16 %v7706
  %v7746 = vunpack.c.h.b16 %v7706
  %v7747 = vunpack.c.l.b16 %v7707
  %v7748 = vunpack.c.h.b16 %v7707
  %v7749 = vunpack.c.l.b16 %v7708
  %v7750 = vunpack.c.h.b16 %v7708
  %v7751 = vunpack.c.l.b16 %v7709
  %v7752 = vunpack.c.h.b16 %v7709
  %v7753 = vpack.c.b16 %v7739, %v7737
  %v7754 = vpack.c.b16 %v7740, %v7738
  %v7755 = vpack.c.b16 %v7743, %v7741
  %v7756 = vpack.c.b16 %v7744, %v7742
  %v7757 = vpack.c.b16 %v7747, %v7745
  %v7758 = vpack.c.b16 %v7748, %v7746
  %v7759 = vpack.c.b16 %v7751, %v7749
  %v7760 = vpack.c.b16 %v7752, %v7750
  %v7770 = vsel %vm1104, %v7710, 0
  %v7773 = vsel %vm1104, %v7711, 0
  %v7776 = vsel %vm1104, %v7712, 0
  %v7779 = vsel %vm1104, %v7713, 0
  %v7782 = vsel %vm1104, %v7714, 0
  %v7785 = vsel %vm1104, %v7715, 0
  %v7788 = vsel %vm1104, %v7716, 0
  %v7791 = vsel %vm1104, %v7717, 0
  %7793 = vmatprep.subr.bf16.mxu0 %v7754
  %7794 = vmatpush1.bf16.msra.mxu0 %v7753
  %7795 = vmatprep.subr.bf16.mxu0 %v7756
  %7796 = vmatpush1.bf16.msra.mxu0 %v7755
  %7797 = vmatprep.subr.bf16.mxu0 %v7758
  %7798 = vmatpush1.bf16.msra.mxu0 %v7757
  %7799 = vmatprep.subr.bf16.mxu0 %v7760
  %7800 = vmatpush1.bf16.msra.mxu0 %v7759
  %7801 = vmatprep.subr.bf16.mxu0 0
  %7802 = vmatpush1.bf16.msra.mxu0 0
  %7803 = vmatprep.subr.bf16.mxu0 0
  %7804 = vmatpush1.bf16.msra.mxu0 0
  %7805 = vmatprep.subr.bf16.mxu0 0
  %7806 = vmatpush1.bf16.msra.mxu0 0
  %7807 = vmatprep.subr.bf16.mxu0 0
  %7808 = vmatpush1.bf16.msra.mxu0 0
  %7809 = vmatprep.subr.bf16.mxu0 0
  %7810 = vmatpush1.bf16.msra.mxu0 0
  %7811 = vmatprep.subr.bf16.mxu0 0
  %7812 = vmatpush1.bf16.msra.mxu0 0
  %7813 = vmatprep.subr.bf16.mxu0 0
  %7814 = vmatpush1.bf16.msra.mxu0 0
  %7815 = vmatprep.subr.bf16.mxu0 0
  %7816 = vmatpush1.bf16.msra.mxu0 0
  %7817 = vmatprep.subr.bf16.mxu0 0
  %7818 = vmatpush1.bf16.msra.mxu0 0
  %7819 = vmatprep.subr.bf16.mxu0 0
  %7820 = vmatpush1.bf16.msra.mxu0 0
  %7821 = vmatprep.subr.bf16.mxu0 0
  %7822 = vmatpush1.bf16.msra.mxu0 0
  %7823 = vmatprep.subr.bf16.mxu0 0
  %7824 = vmatpush1.bf16.msra.mxu0 0
  %7825 = vmatprep.mubr.bf16.mxu0 0
  %7826 = vmatmul.mubr.bf16.gmra.mrb[0].mxu0 %v7770
  %v7827 = vpop.f32.mrb[0].mxu0
  %v7828 = vadd.f32 %v7722, %v7827
  %v7829 = vpop.f32.mrb[0].mxu0
  %v7830 = vadd.f32 %v7726, %v7829
  %v7831 = vpop.f32.mrb[0].mxu0
  %v7832 = vadd.f32 %v7722, %v7831
  %v7833 = vpop.f32.mrb[0].mxu0
  %v7834 = vadd.f32 %v7726, %v7833
  %7835 = vmatprep.mubr.bf16.mxu0 0
  %7836 = vmatmul.mubr.bf16.gmra.mrb[0].mxu0 %v7773
  %v7837 = vpop.f32.mrb[0].mxu0
  %v7838 = vadd.f32 %v7722, %v7837
  %v7839 = vpop.f32.mrb[0].mxu0
  %v7840 = vadd.f32 %v7726, %v7839
  %v7841 = vpop.f32.mrb[0].mxu0
  %v7842 = vadd.f32 %v7722, %v7841
  %v7843 = vpop.f32.mrb[0].mxu0
  %v7844 = vadd.f32 %v7726, %v7843
  %7845 = vmatprep.mubr.bf16.mxu0 0
  %7846 = vmatmul.mubr.bf16.gmra.mrb[0].mxu0 %v7776
  %v7847 = vpop.f32.mrb[0].mxu0
  %v7848 = vadd.f32 %v7722, %v7847
  %v7849 = vpop.f32.mrb[0].mxu0
  %v7850 = vadd.f32 %v7726, %v7849
  %v7851 = vpop.f32.mrb[0].mxu0
  %v7852 = vadd.f32 %v7722, %v7851
  %v7853 = vpop.f32.mrb[0].mxu0
  %v7854 = vadd.f32 %v7726, %v7853
  %7855 = vmatprep.mubr.bf16.mxu0 0
  %7856 = vmatmul.mubr.bf16.gmra.mrb[0].mxu0 %v7779
  %v7857 = vpop.f32.mrb[0].mxu0
  %v7858 = vadd.f32 %v7722, %v7857
  %v7859 = vpop.f32.mrb[0].mxu0
  %v7860 = vadd.f32 %v7726, %v7859
  %v7861 = vpop.f32.mrb[0].mxu0
  %v7862 = vadd.f32 %v7722, %v7861
  %v7863 = vpop.f32.mrb[0].mxu0
  %v7864 = vadd.f32 %v7726, %v7863
  %7865 = vmatprep.mubr.bf16.mxu0 0
  %7866 = vmatmul.mubr.bf16.gmra.mrb[0].mxu0 %v7782
  %v7867 = vpop.f32.mrb[0].mxu0
  %v7868 = vadd.f32 %v7722, %v7867
  %v7869 = vpop.f32.mrb[0].mxu0
  %v7870 = vadd.f32 %v7726, %v7869
  %v7871 = vpop.f32.mrb[0].mxu0
  %v7872 = vadd.f32 %v7722, %v7871
  %v7873 = vpop.f32.mrb[0].mxu0
  %v7874 = vadd.f32 %v7726, %v7873
  %7875 = vmatprep.mubr.bf16.mxu0 0
  %7876 = vmatmul.mubr.bf16.gmra.mrb[0].mxu0 %v7785
  %v7877 = vpop.f32.mrb[0].mxu0
  %v7878 = vadd.f32 %v7722, %v7877
  %v7879 = vpop.f32.mrb[0].mxu0
  %v7880 = vadd.f32 %v7726, %v7879
  %v7881 = vpop.f32.mrb[0].mxu0
  %v7882 = vadd.f32 %v7722, %v7881
  %v7883 = vpop.f32.mrb[0].mxu0
  %v7884 = vadd.f32 %v7726, %v7883
  %7885 = vmatprep.mubr.bf16.mxu0 0
  %7886 = vmatmul.mubr.bf16.gmra.mrb[0].mxu0 %v7788
  %v7887 = vpop.f32.mrb[0].mxu0
  %v7888 = vadd.f32 %v7722, %v7887
  %v7889 = vpop.f32.mrb[0].mxu0
  %v7890 = vadd.f32 %v7726, %v7889
  %v7891 = vpop.f32.mrb[0].mxu0
  %v7892 = vadd.f32 %v7722, %v7891
  %v7893 = vpop.f32.mrb[0].mxu0
  %v7894 = vadd.f32 %v7726, %v7893
  %7895 = vmatprep.mubr.bf16.mxu0 0
  %7896 = vmatmul.mubr.bf16.gmra.mrb[0].mxu0 %v7791
  %v7897 = vpop.f32.mrb[0].mxu0
  %v7898 = vadd.f32 %v7722, %v7897
  %v7899 = vpop.f32.mrb[0].mxu0
  %v7900 = vadd.f32 %v7726, %v7899
  %v7901 = vpop.f32.mrb[0].mxu0
  %v7902 = vadd.f32 %v7722, %v7901
  %v7903 = vpop.f32.mrb[0].mxu0
  %v7904 = vadd.f32 %v7726, %v7903
  %7905 = vdwg.mxu0
  %v7906 = vmul.f32 %v7828, 0.5
  %v7907 = vmul.f32 %v7830, 0.5
  %v7908 = vmul.f32 %v7832, 0.5
  %v7909 = vmul.f32 %v7834, 0.5
  %v7910 = vmul.f32 %v7838, 0.5
  %v7911 = vmul.f32 %v7840, 0.5
  %v7912 = vmul.f32 %v7842, 0.5
  %v7913 = vmul.f32 %v7844, 0.5
  %v7914 = vmul.f32 %v7848, 0.5
  %v7915 = vmul.f32 %v7850, 0.5
  %v7916 = vmul.f32 %v7852, 0.5
  %v7917 = vmul.f32 %v7854, 0.5
  %v7918 = vmul.f32 %v7858, 0.5
  %v7919 = vmul.f32 %v7860, 0.5
  %v7920 = vmul.f32 %v7862, 0.5
  %v7921 = vmul.f32 %v7864, 0.5
  %v7922 = vmul.f32 %v7868, 0.5
  %v7923 = vmul.f32 %v7870, 0.5
  %v7924 = vmul.f32 %v7872, 0.5
  %v7925 = vmul.f32 %v7874, 0.5
  %v7926 = vmul.f32 %v7878, 0.5
  %v7927 = vmul.f32 %v7880, 0.5
  %v7928 = vmul.f32 %v7882, 0.5
  %v7929 = vmul.f32 %v7884, 0.5
  %v7930 = vmul.f32 %v7888, 0.5
  %v7931 = vmul.f32 %v7890, 0.5
  %v7932 = vmul.f32 %v7892, 0.5
  %v7933 = vmul.f32 %v7894, 0.5
  %v7934 = vmul.f32 %v7898, 0.5
  %v7935 = vmul.f32 %v7900, 0.5
  %v7936 = vmul.f32 %v7902, 0.5
  %v7937 = vmul.f32 %v7904, 0.5
  %v7938 = vmul.f32 %v7828, 0.70710677
  %v7939 = vmul.f32 %v7830, 0.70710677
  %v7940 = vmul.f32 %v7832, 0.70710677
  %v7941 = vmul.f32 %v7834, 0.70710677
  %v7942 = vmul.f32 %v7838, 0.70710677
  %v7943 = vmul.f32 %v7840, 0.70710677
  %v7944 = vmul.f32 %v7842, 0.70710677
  %v7945 = vmul.f32 %v7844, 0.70710677
  %v7946 = vmul.f32 %v7848, 0.70710677
  %v7947 = vmul.f32 %v7850, 0.70710677
  %v7948 = vmul.f32 %v7852, 0.70710677
  %v7949 = vmul.f32 %v7854, 0.70710677
  %v7950 = vmul.f32 %v7858, 0.70710677
  %v7951 = vmul.f32 %v7860, 0.70710677
  %v7952 = vmul.f32 %v7862, 0.70710677
  %v7953 = vmul.f32 %v7864, 0.70710677
  %v7954 = vmul.f32 %v7868, 0.70710677
  %v7955 = vmul.f32 %v7870, 0.70710677
  %v7956 = vmul.f32 %v7872, 0.70710677
  %v7957 = vmul.f32 %v7874, 0.70710677
  %v7958 = vmul.f32 %v7878, 0.70710677
  %v7959 = vmul.f32 %v7880, 0.70710677
  %v7960 = vmul.f32 %v7882, 0.70710677
  %v7961 = vmul.f32 %v7884, 0.70710677
  %v7962 = vmul.f32 %v7888, 0.70710677
  %v7963 = vmul.f32 %v7890, 0.70710677
  %v7964 = vmul.f32 %v7892, 0.70710677
  %v7965 = vmul.f32 %v7894, 0.70710677
  %v7966 = vmul.f32 %v7898, 0.70710677
  %v7967 = vmul.f32 %v7900, 0.70710677
  %v7968 = vmul.f32 %v7902, 0.70710677
  %v7969 = vmul.f32 %v7904, 0.70710677
  %v7970 = verf.f32.pop %v7938
  %v7971 = verf.f32.pop %v7939
  %v7972 = verf.f32.pop %v7940
  %v7973 = verf.f32.pop %v7941
  %v7974 = verf.f32.pop %v7942
  %v7975 = verf.f32.pop %v7943
  %v7976 = verf.f32.pop %v7944
  %v7977 = verf.f32.pop %v7945
  %v7978 = verf.f32.pop %v7946
  %v7979 = verf.f32.pop %v7947
  %v7980 = verf.f32.pop %v7948
  %v7981 = verf.f32.pop %v7949
  %v7982 = verf.f32.pop %v7950
  %v7983 = verf.f32.pop %v7951
  %v7984 = verf.f32.pop %v7952
  %v7985 = verf.f32.pop %v7953
  %v7986 = verf.f32.pop %v7954
  %v7987 = verf.f32.pop %v7955
  %v7988 = verf.f32.pop %v7956
  %v7989 = verf.f32.pop %v7957
  %v7990 = verf.f32.pop %v7958
  %v7991 = verf.f32.pop %v7959
  %v7992 = verf.f32.pop %v7960
  %v7993 = verf.f32.pop %v7961
  %v7994 = verf.f32.pop %v7962
  %v7995 = verf.f32.pop %v7963
  %v7996 = verf.f32.pop %v7964
  %v7997 = verf.f32.pop %v7965
  %v7998 = verf.f32.pop %v7966
  %v7999 = verf.f32.pop %v7967
  %v8000 = verf.f32.pop %v7968
  %v8001 = verf.f32.pop %v7969
  %v8002 = vadd.f32 %v7970, 1.0
  %v8003 = vadd.f32 %v7971, 1.0
  %v8004 = vadd.f32 %v7972, 1.0
  %v8005 = vadd.f32 %v7973, 1.0
  %v8006 = vadd.f32 %v7974, 1.0
  %v8007 = vadd.f32 %v7975, 1.0
  %v8008 = vadd.f32 %v7976, 1.0
  %v8009 = vadd.f32 %v7977, 1.0
  %v8010 = vadd.f32 %v7978, 1.0
  %v8011 = vadd.f32 %v7979, 1.0
  %v8012 = vadd.f32 %v7980, 1.0
  %v8013 = vadd.f32 %v7981, 1.0
  %v8014 = vadd.f32 %v7982, 1.0
  %v8015 = vadd.f32 %v7983, 1.0
  %v8016 = vadd.f32 %v7984, 1.0
  %v8017 = vadd.f32 %v7985, 1.0
  %v8018 = vadd.f32 %v7986, 1.0
  %v8019 = vadd.f32 %v7987, 1.0
  %v8020 = vadd.f32 %v7988, 1.0
  %v8021 = vadd.f32 %v7989, 1.0
  %v8022 = vadd.f32 %v7990, 1.0
  %v8023 = vadd.f32 %v7991, 1.0
  %v8024 = vadd.f32 %v7992, 1.0
  %v8025 = vadd.f32 %v7993, 1.0
  %v8026 = vadd.f32 %v7994, 1.0
  %v8027 = vadd.f32 %v7995, 1.0
  %v8028 = vadd.f32 %v7996, 1.0
  %v8029 = vadd.f32 %v7997, 1.0
  %v8030 = vadd.f32 %v7998, 1.0
  %v8031 = vadd.f32 %v7999, 1.0
  %v8032 = vadd.f32 %v8000, 1.0
  %v8033 = vadd.f32 %v8001, 1.0
  %v8034 = vmul.f32 %v7906, %v8002
  %v8035 = vmul.f32 %v7907, %v8003
  %v8036 = vmul.f32 %v7908, %v8004
  %v8037 = vmul.f32 %v7909, %v8005
  %v8038 = vmul.f32 %v7910, %v8006
  %v8039 = vmul.f32 %v7911, %v8007
  %v8040 = vmul.f32 %v7912, %v8008
  %v8041 = vmul.f32 %v7913, %v8009
  %v8042 = vmul.f32 %v7914, %v8010
  %v8043 = vmul.f32 %v7915, %v8011
  %v8044 = vmul.f32 %v7916, %v8012
  %v8045 = vmul.f32 %v7917, %v8013
  %v8046 = vmul.f32 %v7918, %v8014
  %v8047 = vmul.f32 %v7919, %v8015
  %v8048 = vmul.f32 %v7920, %v8016
  %v8049 = vmul.f32 %v7921, %v8017
  %v8050 = vmul.f32 %v7922, %v8018
  %v8051 = vmul.f32 %v7923, %v8019
  %v8052 = vmul.f32 %v7924, %v8020
  %v8053 = vmul.f32 %v7925, %v8021
  %v8054 = vmul.f32 %v7926, %v8022
  %v8055 = vmul.f32 %v7927, %v8023
  %v8056 = vmul.f32 %v7928, %v8024
  %v8057 = vmul.f32 %v7929, %v8025
  %v8058 = vmul.f32 %v7930, %v8026
  %v8059 = vmul.f32 %v7931, %v8027
  %v8060 = vmul.f32 %v7932, %v8028
  %v8061 = vmul.f32 %v7933, %v8029
  %v8062 = vmul.f32 %v7934, %v8030
  %v8063 = vmul.f32 %v7935, %v8031
  %v8064 = vmul.f32 %v7936, %v8032
  %v8065 = vmul.f32 %v7937, %v8033
  %v8066 = vld [vmem:[%s11] sm:$0xf]
  %v8067 = vld [vmem:[%s11 + $0x4] sm:$0xf]
  %v8068 = vld [vmem:[%s11 + $0x8] sm:$0xf]
  %v8069 = vld [vmem:[%s11 + $0xc] sm:$0xf]
  %v8070 = vld [vmem:[%s11 + $0x10] sm:$0xf]
  %v8071 = vld [vmem:[%s11 + $0x14] sm:$0xf]
  %v8072 = vld [vmem:[%s11 + $0x18] sm:$0xf]
  %v8073 = vld [vmem:[%s11 + $0x1c] sm:$0xf]
  %v8074 = vld [vmem:[%s11 + $0x20] sm:$0xf]
  %v8075 = vld [vmem:[%s11 + $0x24] sm:$0xf]
  %v8076 = vld [vmem:[%s11 + $0x28] sm:$0xf]
  %v8077 = vld [vmem:[%s11 + $0x2c] sm:$0xf]
  %v8078 = vld [vmem:[%s11 + $0x30] sm:$0xf]
  %v8079 = vld [vmem:[%s11 + $0x34] sm:$0xf]
  %v8080 = vld [vmem:[%s11 + $0x38] sm:$0xf]
  %v8081 = vld [vmem:[%s11 + $0x3c] sm:$0xf]
  %v8082 = vld [vmem:[%s11 + $0x40] sm:$0xf]
  %v8083 = vld [vmem:[%s11 + $0x44] sm:$0xf]
  %v8084 = vld [vmem:[%s11 + $0x48] sm:$0xf]
  %v8085 = vld [vmem:[%s11 + $0x4c] sm:$0xf]
  %v8086 = vld [vmem:[%s11 + $0x50] sm:$0xf]
  %v8087 = vld [vmem:[%s11 + $0x54] sm:$0xf]
  %v8088 = vld [vmem:[%s11 + $0x58] sm:$0xf]
  %v8089 = vld [vmem:[%s11 + $0x5c] sm:$0xf]
  %v8090 = vld [vmem:[%s11 + $0x60] sm:$0xf]
  %v8091 = vld [vmem:[%s11 + $0x64] sm:$0xf]
  %v8092 = vld [vmem:[%s11 + $0x68] sm:$0xf]
  %v8093 = vld [vmem:[%s11 + $0x6c] sm:$0xf]
  %v8094 = vld [vmem:[%s11 + $0x70] sm:$0xf]
  %v8095 = vld [vmem:[%s11 + $0x74] sm:$0xf]
  %v8096 = vld [vmem:[%s11 + $0x78] sm:$0xf]
  %v8097 = vld [vmem:[%s11 + $0x7c] sm:$0xf]
  %v8098 = vpack.c.bf16 %v8036, %v8034
  %v8099 = vpack.c.bf16 %v8037, %v8035
  %v8100 = vpack.c.bf16 %v8040, %v8038
  %v8101 = vpack.c.bf16 %v8041, %v8039
  %v8102 = vpack.c.bf16 %v8044, %v8042
  %v8103 = vpack.c.bf16 %v8045, %v8043
  %v8104 = vpack.c.bf16 %v8048, %v8046
  %v8105 = vpack.c.bf16 %v8049, %v8047
  %v8106 = vpack.c.bf16 %v8052, %v8050
  %v8107 = vpack.c.bf16 %v8053, %v8051
  %v8108 = vpack.c.bf16 %v8056, %v8054
  %v8109 = vpack.c.bf16 %v8057, %v8055
  %v8110 = vpack.c.bf16 %v8060, %v8058
  %v8111 = vpack.c.bf16 %v8061, %v8059
  %v8112 = vpack.c.bf16 %v8064, %v8062
  %v8113 = vpack.c.bf16 %v8065, %v8063
  %v8146 = vunpack.c.l.b16 %v8066
  %v8147 = vunpack.c.l.b16 %v8067
  %v8148 = vunpack.c.l.b16 %v8068
  %v8149 = vunpack.c.l.b16 %v8069
  %v8150 = vunpack.c.l.b16 %v8070
  %v8151 = vunpack.c.l.b16 %v8071
  %v8152 = vunpack.c.l.b16 %v8072
  %v8153 = vunpack.c.l.b16 %v8073
  %v8154 = vunpack.c.l.b16 %v8074
  %v8155 = vunpack.c.l.b16 %v8075
  %v8156 = vunpack.c.l.b16 %v8076
  %v8157 = vunpack.c.l.b16 %v8077
  %v8158 = vunpack.c.l.b16 %v8078
  %v8159 = vunpack.c.l.b16 %v8079
  %v8160 = vunpack.c.l.b16 %v8080
  %v8161 = vunpack.c.l.b16 %v8081
  %v8162 = vunpack.c.l.b16 %v8082
  %v8163 = vunpack.c.l.b16 %v8083
  %v8164 = vunpack.c.l.b16 %v8084
  %v8165 = vunpack.c.l.b16 %v8085
  %v8166 = vunpack.c.l.b16 %v8086
  %v8167 = vunpack.c.l.b16 %v8087
  %v8168 = vunpack.c.l.b16 %v8088
  %v8169 = vunpack.c.l.b16 %v8089
  %v8170 = vunpack.c.l.b16 %v8090
  %v8171 = vunpack.c.l.b16 %v8091
  %v8172 = vunpack.c.l.b16 %v8092
  %v8173 = vunpack.c.l.b16 %v8093
  %v8174 = vunpack.c.l.b16 %v8094
  %v8175 = vunpack.c.l.b16 %v8095
  %v8176 = vunpack.c.l.b16 %v8096
  %v8177 = vunpack.c.l.b16 %v8097
  %v8178 = vpack.c.b16 %v8147, %v8146
  %v8179 = vpack.c.b16 %v8149, %v8148
  %v8180 = vpack.c.b16 %v8151, %v8150
  %v8181 = vpack.c.b16 %v8153, %v8152
  %v8182 = vpack.c.b16 %v8155, %v8154
  %v8183 = vpack.c.b16 %v8157, %v8156
  %v8184 = vpack.c.b16 %v8159, %v8158
  %v8185 = vpack.c.b16 %v8161, %v8160
  %v8186 = vpack.c.b16 %v8163, %v8162
  %v8187 = vpack.c.b16 %v8165, %v8164
  %v8188 = vpack.c.b16 %v8167, %v8166
  %v8189 = vpack.c.b16 %v8169, %v8168
  %v8190 = vpack.c.b16 %v8171, %v8170
  %v8191 = vpack.c.b16 %v8173, %v8172
  %v8192 = vpack.c.b16 %v8175, %v8174
  %v8193 = vpack.c.b16 %v8177, %v8176
  %8210 = vmatprep.subr.bf16.mxu0 0
  %8211 = vmatpush1.bf16.msra.mxu0 %v8178
  %8212 = vmatprep.subr.bf16.mxu0 0
  %8213 = vmatpush1.bf16.msra.mxu0 %v8179
  %8214 = vmatprep.subr.bf16.mxu0 0
  %8215 = vmatpush1.bf16.msra.mxu0 %v8180
  %8216 = vmatprep.subr.bf16.mxu0 0
  %8217 = vmatpush1.bf16.msra.mxu0 %v8181
  %8218 = vmatprep.subr.bf16.mxu0 0
  %8219 = vmatpush1.bf16.msra.mxu0 %v8182
  %8220 = vmatprep.subr.bf16.mxu0 0
  %8221 = vmatpush1.bf16.msra.mxu0 %v8183
  %8222 = vmatprep.subr.bf16.mxu0 0
  %8223 = vmatpush1.bf16.msra.mxu0 %v8184
  %8224 = vmatprep.subr.bf16.mxu0 0
  %8225 = vmatpush1.bf16.msra.mxu0 %v8185
  %8226 = vmatprep.subr.bf16.mxu0 0
  %8227 = vmatpush1.bf16.msra.mxu0 %v8186
  %8228 = vmatprep.subr.bf16.mxu0 0
  %8229 = vmatpush1.bf16.msra.mxu0 %v8187
  %8230 = vmatprep.subr.bf16.mxu0 0
  %8231 = vmatpush1.bf16.msra.mxu0 %v8188
  %8232 = vmatprep.subr.bf16.mxu0 0
  %8233 = vmatpush1.bf16.msra.mxu0 %v8189
  %8234 = vmatprep.subr.bf16.mxu0 0
  %8235 = vmatpush1.bf16.msra.mxu0 %v8190
  %8236 = vmatprep.subr.bf16.mxu0 0
  %8237 = vmatpush1.bf16.msra.mxu0 %v8191
  %8238 = vmatprep.subr.bf16.mxu0 0
  %8239 = vmatpush1.bf16.msra.mxu0 %v8192
  %8240 = vmatprep.subr.bf16.mxu0 0
  %8241 = vmatpush1.bf16.msra.mxu0 %v8193
  %8242 = vmatprep.mubr.bf16.mxu0 %v8099
  %8243 = vmatmul.mubr.bf16.gmra.mrb[0].mxu0 %v8098
  %v8244 = vpop.f32.mrb[0].mxu0
  %v8245 = vadd.f32 0.0, %v8244
  %v8246 = vpop.f32.mrb[0].mxu0
  %v8247 = vpop.f32.mrb[0].mxu0
  %v8248 = vadd.f32 0.0, %v8247
  %v8249 = vpop.f32.mrb[0].mxu0
  %8250 = vmatprep.mubr.bf16.mxu0 %v8101
  %8251 = vmatmul.mubr.bf16.gmra.mrb[0].mxu0 %v8100
  %v8252 = vpop.f32.mrb[0].mxu0
  %v8253 = vadd.f32 0.0, %v8252
  %v8254 = vpop.f32.mrb[0].mxu0
  %v8255 = vpop.f32.mrb[0].mxu0
  %v8256 = vadd.f32 0.0, %v8255
  %v8257 = vpop.f32.mrb[0].mxu0
  %8258 = vmatprep.mubr.bf16.mxu0 %v8103
  %8259 = vmatmul.mubr.bf16.gmra.mrb[0].mxu0 %v8102
  %v8260 = vpop.f32.mrb[0].mxu0
  %v8261 = vadd.f32 0.0, %v8260
  %v8262 = vpop.f32.mrb[0].mxu0
  %v8263 = vpop.f32.mrb[0].mxu0
  %v8264 = vadd.f32 0.0, %v8263
  %v8265 = vpop.f32.mrb[0].mxu0
  %8266 = vmatprep.mubr.bf16.mxu0 %v8105
  %8267 = vmatmul.mubr.bf16.gmra.mrb[0].mxu0 %v8104
  %v8268 = vpop.f32.mrb[0].mxu0
  %v8269 = vadd.f32 0.0, %v8268
  %v8270 = vpop.f32.mrb[0].mxu0
  %v8271 = vpop.f32.mrb[0].mxu0
  %v8272 = vadd.f32 0.0, %v8271
  %v8273 = vpop.f32.mrb[0].mxu0
  %8274 = vmatprep.mubr.bf16.mxu0 %v8107
  %8275 = vmatmul.mubr.bf16.gmra.mrb[0].mxu0 %v8106
  %v8276 = vpop.f32.mrb[0].mxu0
  %v8277 = vadd.f32 0.0, %v8276
  %v8278 = vpop.f32.mrb[0].mxu0
  %v8279 = vpop.f32.mrb[0].mxu0
  %v8280 = vadd.f32 0.0, %v8279
  %v8281 = vpop.f32.mrb[0].mxu0
  %8282 = vmatprep.mubr.bf16.mxu0 %v8109
  %8283 = vmatmul.mubr.bf16.gmra.mrb[0].mxu0 %v8108
  %v8284 = vpop.f32.mrb[0].mxu0
  %v8285 = vadd.f32 0.0, %v8284
  %v8286 = vpop.f32.mrb[0].mxu0
  %v8287 = vpop.f32.mrb[0].mxu0
  %v8288 = vadd.f32 0.0, %v8287
  %v8289 = vpop.f32.mrb[0].mxu0
  %8290 = vmatprep.mubr.bf16.mxu0 %v8111
  %8291 = vmatmul.mubr.bf16.gmra.mrb[0].mxu0 %v8110
  %v8292 = vpop.f32.mrb[0].mxu0
  %v8293 = vadd.f32 0.0, %v8292
  %v8294 = vpop.f32.mrb[0].mxu0
  %v8295 = vpop.f32.mrb[0].mxu0
  %v8296 = vadd.f32 0.0, %v8295
  %v8297 = vpop.f32.mrb[0].mxu0
  %8298 = vmatprep.mubr.bf16.mxu0 %v8113
  %8299 = vmatmul.mubr.bf16.gmra.mrb[0].mxu0 %v8112
  %v8300 = vpop.f32.mrb[0].mxu0
  %v8301 = vadd.f32 0.0, %v8300
  %v8302 = vpop.f32.mrb[0].mxu0
  %v8303 = vpop.f32.mrb[0].mxu0
  %v8304 = vadd.f32 0.0, %v8303
  %v8305 = vpop.f32.mrb[0].mxu0
  %8306 = vdwg.mxu0
  %v8307 = vadd.f32 %v7446, %v8245
  %v8308 = vadd.f32 %v7447, %v8248
  %v8309 = vadd.f32 %v7448, %v8253
  %v8310 = vadd.f32 %v7449, %v8256
  %v8311 = vadd.f32 %v7450, %v8261
  %v8312 = vadd.f32 %v7451, %v8264
  %v8313 = vadd.f32 %v7452, %v8269
  %v8314 = vadd.f32 %v7453, %v8272
  %v8315 = vadd.f32 %v7454, %v8277
  %v8316 = vadd.f32 %v7455, %v8280
  %v8317 = vadd.f32 %v7456, %v8285
  %v8318 = vadd.f32 %v7457, %v8288
  %v8319 = vadd.f32 %v7458, %v8293
  %v8320 = vadd.f32 %v7459, %v8296
  %v8321 = vadd.f32 %v7460, %v8301
  %v8322 = vadd.f32 %v7461, %v8304
  %v8323 = vadd.f32 %v8307, %v4728
  %v8324 = vadd.f32 %v8308, %v4728
  %v8325 = vadd.f32 %v8309, %v4728
  %v8326 = vadd.f32 %v8310, %v4728
  %v8327 = vadd.f32 %v8311, %v4728
  %v8328 = vadd.f32 %v8312, %v4728
  %v8329 = vadd.f32 %v8313, %v4728
  %v8330 = vadd.f32 %v8314, %v4728
  %v8331 = vadd.f32 %v8315, %v4728
  %v8332 = vadd.f32 %v8316, %v4728
  %v8333 = vadd.f32 %v8317, %v4728
  %v8334 = vadd.f32 %v8318, %v4728
  %v8335 = vadd.f32 %v8319, %v4728
  %v8336 = vadd.f32 %v8320, %v4728
  %v8337 = vadd.f32 %v8321, %v4728
  %v8338 = vadd.f32 %v8322, %v4728
  %v8339 = vld [vmem:[%s3 + $0x20] ss:$0 sm:$0xff]
  %v8340 = vld [vmem:[%s3 + $0x21] ss:$0 sm:$0xff]
  %v8341 = vld [vmem:[%s3 + $0x22] ss:$0 sm:$0xff]
  %v8342 = vsel %vm1104, %v8323, 0.0
  %8343 = vadd.xlane.f32.xlu0 %v8342
  %v8344 = vpop.xlane.xlu0 %8343
  %v8345 = vsel %vm1104, %v8324, 0.0
  %8346 = vadd.xlane.f32.xlu0 %v8345
  %v8347 = vpop.xlane.xlu0 %8346
  %v8348 = vsel %vm1104, %v8325, 0.0
  %8349 = vadd.xlane.f32.xlu0 %v8348
  %v8350 = vpop.xlane.xlu0 %8349
  %v8351 = vsel %vm1104, %v8326, 0.0
  %8352 = vadd.xlane.f32.xlu0 %v8351
  %v8353 = vpop.xlane.xlu0 %8352
  %v8354 = vsel %vm1104, %v8327, 0.0
  %8355 = vadd.xlane.f32.xlu0 %v8354
  %v8356 = vpop.xlane.xlu0 %8355
  %v8357 = vsel %vm1104, %v8328, 0.0
  %8358 = vadd.xlane.f32.xlu0 %v8357
  %v8359 = vpop.xlane.xlu0 %8358
  %v8360 = vsel %vm1104, %v8329, 0.0
  %8361 = vadd.xlane.f32.xlu0 %v8360
  %v8362 = vpop.xlane.xlu0 %8361
  %v8363 = vsel %vm1104, %v8330, 0.0
  %8364 = vadd.xlane.f32.xlu0 %v8363
  %v8365 = vpop.xlane.xlu0 %8364
  %v8366 = vsel %vm1104, %v8331, 0.0
  %8367 = vadd.xlane.f32.xlu0 %v8366
  %v8368 = vpop.xlane.xlu0 %8367
  %v8369 = vsel %vm1104, %v8332, 0.0
  %8370 = vadd.xlane.f32.xlu0 %v8369
  %v8371 = vpop.xlane.xlu0 %8370
  %v8372 = vsel %vm1104, %v8333, 0.0
  %8373 = vadd.xlane.f32.xlu0 %v8372
  %v8374 = vpop.xlane.xlu0 %8373
  %v8375 = vsel %vm1104, %v8334, 0.0
  %8376 = vadd.xlane.f32.xlu0 %v8375
  %v8377 = vpop.xlane.xlu0 %8376
  %v8378 = vsel %vm1104, %v8335, 0.0
  %8379 = vadd.xlane.f32.xlu0 %v8378
  %v8380 = vpop.xlane.xlu0 %8379
  %v8381 = vsel %vm1104, %v8336, 0.0
  %8382 = vadd.xlane.f32.xlu0 %v8381
  %v8383 = vpop.xlane.xlu0 %8382
  %v8384 = vsel %vm1104, %v8337, 0.0
  %8385 = vadd.xlane.f32.xlu0 %v8384
  %v8386 = vpop.xlane.xlu0 %8385
  %v8387 = vsel %vm1104, %v8338, 0.0
  %8388 = vadd.xlane.f32.xlu0 %v8387
  %v8389 = vpop.xlane.xlu0 %8388
  %v8390 = vmul.f32 %v8344, %v1153
  %v8391 = vmul.f32 %v8347, %v1153
  %v8392 = vmul.f32 %v8350, %v1153
  %v8393 = vmul.f32 %v8353, %v1153
  %v8394 = vmul.f32 %v8356, %v1153
  %v8395 = vmul.f32 %v8359, %v1153
  %v8396 = vmul.f32 %v8362, %v1153
  %v8397 = vmul.f32 %v8365, %v1153
  %v8398 = vmul.f32 %v8368, %v1153
  %v8399 = vmul.f32 %v8371, %v1153
  %v8400 = vmul.f32 %v8374, %v1153
  %v8401 = vmul.f32 %v8377, %v1153
  %v8402 = vmul.f32 %v8380, %v1153
  %v8403 = vmul.f32 %v8383, %v1153
  %v8404 = vmul.f32 %v8386, %v1153
  %v8405 = vmul.f32 %v8389, %v1153
  %v8406 = vsub.f32 %v8323, %v8390
  %v8407 = vsub.f32 %v8324, %v8391
  %v8408 = vsub.f32 %v8325, %v8392
  %v8409 = vsub.f32 %v8326, %v8393
  %v8410 = vsub.f32 %v8327, %v8394
  %v8411 = vsub.f32 %v8328, %v8395
  %v8412 = vsub.f32 %v8329, %v8396
  %v8413 = vsub.f32 %v8330, %v8397
  %v8414 = vsub.f32 %v8331, %v8398
  %v8415 = vsub.f32 %v8332, %v8399
  %v8416 = vsub.f32 %v8333, %v8400
  %v8417 = vsub.f32 %v8334, %v8401
  %v8418 = vsub.f32 %v8335, %v8402
  %v8419 = vsub.f32 %v8336, %v8403
  %v8420 = vsub.f32 %v8337, %v8404
  %v8421 = vsub.f32 %v8338, %v8405
  %v8422 = vmul.f32 %v8406, %v8406
  %v8423 = vmul.f32 %v8407, %v8407
  %v8424 = vmul.f32 %v8408, %v8408
  %v8425 = vmul.f32 %v8409, %v8409
  %v8426 = vmul.f32 %v8410, %v8410
  %v8427 = vmul.f32 %v8411, %v8411
  %v8428 = vmul.f32 %v8412, %v8412
  %v8429 = vmul.f32 %v8413, %v8413
  %v8430 = vmul.f32 %v8414, %v8414
  %v8431 = vmul.f32 %v8415, %v8415
  %v8432 = vmul.f32 %v8416, %v8416
  %v8433 = vmul.f32 %v8417, %v8417
  %v8434 = vmul.f32 %v8418, %v8418
  %v8435 = vmul.f32 %v8419, %v8419
  %v8436 = vmul.f32 %v8420, %v8420
  %v8437 = vmul.f32 %v8421, %v8421
  %v8438 = vsel %vm1104, %v8422, 0.0
  %8439 = vadd.xlane.f32.xlu0 %v8438
  %v8440 = vpop.xlane.xlu0 %8439
  %v8441 = vsel %vm1104, %v8423, 0.0
  %8442 = vadd.xlane.f32.xlu0 %v8441
  %v8443 = vpop.xlane.xlu0 %8442
  %v8444 = vsel %vm1104, %v8424, 0.0
  %8445 = vadd.xlane.f32.xlu0 %v8444
  %v8446 = vpop.xlane.xlu0 %8445
  %v8447 = vsel %vm1104, %v8425, 0.0
  %8448 = vadd.xlane.f32.xlu0 %v8447
  %v8449 = vpop.xlane.xlu0 %8448
  %v8450 = vsel %vm1104, %v8426, 0.0
  %8451 = vadd.xlane.f32.xlu0 %v8450
  %v8452 = vpop.xlane.xlu0 %8451
  %v8453 = vsel %vm1104, %v8427, 0.0
  %8454 = vadd.xlane.f32.xlu0 %v8453
  %v8455 = vpop.xlane.xlu0 %8454
  %v8456 = vsel %vm1104, %v8428, 0.0
  %8457 = vadd.xlane.f32.xlu0 %v8456
  %v8458 = vpop.xlane.xlu0 %8457
  %v8459 = vsel %vm1104, %v8429, 0.0
  %8460 = vadd.xlane.f32.xlu0 %v8459
  %v8461 = vpop.xlane.xlu0 %8460
  %v8462 = vsel %vm1104, %v8430, 0.0
  %8463 = vadd.xlane.f32.xlu0 %v8462
  %v8464 = vpop.xlane.xlu0 %8463
  %v8465 = vsel %vm1104, %v8431, 0.0
  %8466 = vadd.xlane.f32.xlu0 %v8465
  %v8467 = vpop.xlane.xlu0 %8466
  %v8468 = vsel %vm1104, %v8432, 0.0
  %8469 = vadd.xlane.f32.xlu0 %v8468
  %v8470 = vpop.xlane.xlu0 %8469
  %v8471 = vsel %vm1104, %v8433, 0.0
  %8472 = vadd.xlane.f32.xlu0 %v8471
  %v8473 = vpop.xlane.xlu0 %8472
  %v8474 = vsel %vm1104, %v8434, 0.0
  %8475 = vadd.xlane.f32.xlu0 %v8474
  %v8476 = vpop.xlane.xlu0 %8475
  %v8477 = vsel %vm1104, %v8435, 0.0
  %8478 = vadd.xlane.f32.xlu0 %v8477
  %v8479 = vpop.xlane.xlu0 %8478
  %v8480 = vsel %vm1104, %v8436, 0.0
  %8481 = vadd.xlane.f32.xlu0 %v8480
  %v8482 = vpop.xlane.xlu0 %8481
  %v8483 = vsel %vm1104, %v8437, 0.0
  %8484 = vadd.xlane.f32.xlu0 %v8483
  %v8485 = vpop.xlane.xlu0 %8484
  %v8486 = vmul.f32 %v8440, %v1153
  %v8487 = vmul.f32 %v8443, %v1153
  %v8488 = vmul.f32 %v8446, %v1153
  %v8489 = vmul.f32 %v8449, %v1153
  %v8490 = vmul.f32 %v8452, %v1153
  %v8491 = vmul.f32 %v8455, %v1153
  %v8492 = vmul.f32 %v8458, %v1153
  %v8493 = vmul.f32 %v8461, %v1153
  %v8494 = vmul.f32 %v8464, %v1153
  %v8495 = vmul.f32 %v8467, %v1153
  %v8496 = vmul.f32 %v8470, %v1153
  %v8497 = vmul.f32 %v8473, %v1153
  %v8498 = vmul.f32 %v8476, %v1153
  %v8499 = vmul.f32 %v8479, %v1153
  %v8500 = vmul.f32 %v8482, %v1153
  %v8501 = vmul.f32 %v8485, %v1153
  %v8502 = vadd.f32 %v8486, 1e-06
  %v8503 = vadd.f32 %v8487, 1e-06
  %v8504 = vadd.f32 %v8488, 1e-06
  %v8505 = vadd.f32 %v8489, 1e-06
  %v8506 = vadd.f32 %v8490, 1e-06
  %v8507 = vadd.f32 %v8491, 1e-06
  %v8508 = vadd.f32 %v8492, 1e-06
  %v8509 = vadd.f32 %v8493, 1e-06
  %v8510 = vadd.f32 %v8494, 1e-06
  %v8511 = vadd.f32 %v8495, 1e-06
  %v8512 = vadd.f32 %v8496, 1e-06
  %v8513 = vadd.f32 %v8497, 1e-06
  %v8514 = vadd.f32 %v8498, 1e-06
  %v8515 = vadd.f32 %v8499, 1e-06
  %v8516 = vadd.f32 %v8500, 1e-06
  %v8517 = vadd.f32 %v8501, 1e-06
  %v8518 = vrsqrt.pop %v8502
  %v8519 = vrsqrt.pop %v8503
  %v8520 = vrsqrt.pop %v8504
  %v8521 = vrsqrt.pop %v8505
  %v8522 = vrsqrt.pop %v8506
  %v8523 = vrsqrt.pop %v8507
  %v8524 = vrsqrt.pop %v8508
  %v8525 = vrsqrt.pop %v8509
  %v8526 = vrsqrt.pop %v8510
  %v8527 = vrsqrt.pop %v8511
  %v8528 = vrsqrt.pop %v8512
  %v8529 = vrsqrt.pop %v8513
  %v8530 = vrsqrt.pop %v8514
  %v8531 = vrsqrt.pop %v8515
  %v8532 = vrsqrt.pop %v8516
  %v8533 = vrsqrt.pop %v8517
  %v8534 = vmul.f32 %v8406, %v8518
  %v8535 = vmul.f32 %v8407, %v8519
  %v8536 = vmul.f32 %v8408, %v8520
  %v8537 = vmul.f32 %v8409, %v8521
  %v8538 = vmul.f32 %v8410, %v8522
  %v8539 = vmul.f32 %v8411, %v8523
  %v8540 = vmul.f32 %v8412, %v8524
  %v8541 = vmul.f32 %v8413, %v8525
  %v8542 = vmul.f32 %v8414, %v8526
  %v8543 = vmul.f32 %v8415, %v8527
  %v8544 = vmul.f32 %v8416, %v8528
  %v8545 = vmul.f32 %v8417, %v8529
  %v8546 = vmul.f32 %v8418, %v8530
  %v8547 = vmul.f32 %v8419, %v8531
  %v8548 = vmul.f32 %v8420, %v8532
  %v8549 = vmul.f32 %v8421, %v8533
  %v8550 = vmul.f32 %v8534, %v8339
  %v8551 = vmul.f32 %v8535, %v8339
  %v8552 = vmul.f32 %v8536, %v8339
  %v8553 = vmul.f32 %v8537, %v8339
  %v8554 = vmul.f32 %v8538, %v8339
  %v8555 = vmul.f32 %v8539, %v8339
  %v8556 = vmul.f32 %v8540, %v8339
  %v8557 = vmul.f32 %v8541, %v8339
  %v8558 = vmul.f32 %v8542, %v8339
  %v8559 = vmul.f32 %v8543, %v8339
  %v8560 = vmul.f32 %v8544, %v8339
  %v8561 = vmul.f32 %v8545, %v8339
  %v8562 = vmul.f32 %v8546, %v8339
  %v8563 = vmul.f32 %v8547, %v8339
  %v8564 = vmul.f32 %v8548, %v8339
  %v8565 = vmul.f32 %v8549, %v8339
  %v8566 = vadd.f32 %v8550, %v8340
  %v8567 = vadd.f32 %v8551, %v8340
  %v8568 = vadd.f32 %v8552, %v8340
  %v8569 = vadd.f32 %v8553, %v8340
  %v8570 = vadd.f32 %v8554, %v8340
  %v8571 = vadd.f32 %v8555, %v8340
  %v8572 = vadd.f32 %v8556, %v8340
  %v8573 = vadd.f32 %v8557, %v8340
  %v8574 = vadd.f32 %v8558, %v8340
  %v8575 = vadd.f32 %v8559, %v8340
  %v8576 = vadd.f32 %v8560, %v8340
  %v8577 = vadd.f32 %v8561, %v8340
  %v8578 = vadd.f32 %v8562, %v8340
  %v8579 = vadd.f32 %v8563, %v8340
  %v8580 = vadd.f32 %v8564, %v8340
  %v8581 = vadd.f32 %v8565, %v8340
  %v8582 = vmul.u32 %v1025, 8
  %v8583 = vmul.u32 %v1026, 8
  %vm8584 = vcmp.eq.s32.totalorder %v1042, %v8582
  %vm8585 = vcmp.eq.s32.totalorder %v1042, %v8583
  %v8586 = vsel %vm8584, 1, 0
  %v8587 = vsel %vm8585, 1, 0
  %v8588 = vcvt.s32.f32 %v8586
  %v8589 = vcvt.s32.f32 %v8587
  %v8590 = vpack.c.bf16 %v8589, %v8588
  %v8591 = vpack.c.bf16 %v8567, %v8566
  %v8592 = vpack.c.bf16 %v8569, %v8568
  %v8593 = vpack.c.bf16 %v8571, %v8570
  %v8594 = vpack.c.bf16 %v8573, %v8572
  %v8595 = vpack.c.bf16 %v8575, %v8574
  %v8596 = vpack.c.bf16 %v8577, %v8576
  %v8597 = vpack.c.bf16 %v8579, %v8578
  %v8598 = vpack.c.bf16 %v8581, %v8580
  %8599 = vmatprep.subr.bf16.mxu0 0
  %8600 = vmatpush1.bf16.msra.mxu0 %v8591
  %8601 = vmatprep.subr.bf16.mxu0 0
  %8602 = vmatpush1.bf16.msra.mxu0 %v8592
  %8603 = vmatprep.subr.bf16.mxu0 0
  %8604 = vmatpush1.bf16.msra.mxu0 %v8593
  %8605 = vmatprep.subr.bf16.mxu0 0
  %8606 = vmatpush1.bf16.msra.mxu0 %v8594
  %8607 = vmatprep.subr.bf16.mxu0 0
  %8608 = vmatpush1.bf16.msra.mxu0 %v8595
  %8609 = vmatprep.subr.bf16.mxu0 0
  %8610 = vmatpush1.bf16.msra.mxu0 %v8596
  %8611 = vmatprep.subr.bf16.mxu0 0
  %8612 = vmatpush1.bf16.msra.mxu0 %v8597
  %8613 = vmatprep.subr.bf16.mxu0 0
  %8614 = vmatpush1.bf16.msra.mxu0 %v8598
  %8615 = vmatprep.subr.bf16.mxu0 0
  %8616 = vmatpush1.bf16.msra.mxu0 0
  %8617 = vmatprep.subr.bf16.mxu0 0
  %8618 = vmatpush1.bf16.msra.mxu0 0
  %8619 = vmatprep.subr.bf16.mxu0 0
  %8620 = vmatpush1.bf16.msra.mxu0 0
  %8621 = vmatprep.subr.bf16.mxu0 0
  %8622 = vmatpush1.bf16.msra.mxu0 0
  %8623 = vmatprep.subr.bf16.mxu0 0
  %8624 = vmatpush1.bf16.msra.mxu0 0
  %8625 = vmatprep.subr.bf16.mxu0 0
  %8626 = vmatpush1.bf16.msra.mxu0 0
  %8627 = vmatprep.subr.bf16.mxu0 0
  %8628 = vmatpush1.bf16.msra.mxu0 0
  %8629 = vmatprep.subr.bf16.mxu0 0
  %8630 = vmatpush1.bf16.msra.mxu0 0
  %8631 = vmatprep.mubr.bf16.mxu0 0
  %8632 = vmatmul.mubr.bf16.gmra.mrb[0].mxu0 %v8590
  %v8633 = vpop.f32.mrb[0].mxu0
  %v8634 = vadd.f32 0.0, %v8633
  %v8635 = vpop.f32.mrb[0].mxu0
  %v8636 = vpop.f32.mrb[0].mxu0
  %v8637 = vadd.f32 0.0, %v8636
  %v8638 = vpop.f32.mrb[0].mxu0
  %8639 = vdwg.mxu0
  %v8640 = vld [vmem:[%s12] sm:$0xf]
  %v8641 = vld [vmem:[%s12 + $0x4] sm:$0xf]
  %v8642 = vld [vmem:[%s12 + $0x8] sm:$0xf]
  %v8643 = vld [vmem:[%s12 + $0xc] sm:$0xf]
  %v8644 = vld [vmem:[%s12 + $0x10] sm:$0xf]
  %v8645 = vld [vmem:[%s12 + $0x14] sm:$0xf]
  %v8646 = vld [vmem:[%s12 + $0x18] sm:$0xf]
  %v8647 = vld [vmem:[%s12 + $0x1c] sm:$0xf]
  %v8648 = vpack.c.bf16 %v8637, %v8634
  %v8657 = vunpack.c.l.b16 %v8640
  %v8658 = vunpack.c.l.b16 %v8641
  %v8659 = vunpack.c.l.b16 %v8642
  %v8660 = vunpack.c.l.b16 %v8643
  %v8661 = vunpack.c.l.b16 %v8644
  %v8662 = vunpack.c.l.b16 %v8645
  %v8663 = vunpack.c.l.b16 %v8646
  %v8664 = vunpack.c.l.b16 %v8647
  %v8665 = vpack.c.b16 %v8658, %v8657
  %v8666 = vpack.c.b16 %v8660, %v8659
  %v8667 = vpack.c.b16 %v8662, %v8661
  %v8668 = vpack.c.b16 %v8664, %v8663
  %v8674 = vsel %vm1104, %v8648, 0
  %8676 = vmatprep.subr.bf16.mxu0 0
  %8677 = vmatpush1.bf16.msra.mxu0 %v8665
  %8678 = vmatprep.subr.bf16.mxu0 0
  %8679 = vmatpush1.bf16.msra.mxu0 %v8666
  %8680 = vmatprep.subr.bf16.mxu0 0
  %8681 = vmatpush1.bf16.msra.mxu0 %v8667
  %8682 = vmatprep.subr.bf16.mxu0 0
  %8683 = vmatpush1.bf16.msra.mxu0 %v8668
  %8684 = vmatprep.subr.bf16.mxu0 0
  %8685 = vmatpush1.bf16.msra.mxu0 0
  %8686 = vmatprep.subr.bf16.mxu0 0
  %8687 = vmatpush1.bf16.msra.mxu0 0
  %8688 = vmatprep.subr.bf16.mxu0 0
  %8689 = vmatpush1.bf16.msra.mxu0 0
  %8690 = vmatprep.subr.bf16.mxu0 0
  %8691 = vmatpush1.bf16.msra.mxu0 0
  %8692 = vmatprep.subr.bf16.mxu0 0
  %8693 = vmatpush1.bf16.msra.mxu0 0
  %8694 = vmatprep.subr.bf16.mxu0 0
  %8695 = vmatpush1.bf16.msra.mxu0 0
  %8696 = vmatprep.subr.bf16.mxu0 0
  %8697 = vmatpush1.bf16.msra.mxu0 0
  %8698 = vmatprep.subr.bf16.mxu0 0
  %8699 = vmatpush1.bf16.msra.mxu0 0
  %8700 = vmatprep.subr.bf16.mxu0 0
  %8701 = vmatpush1.bf16.msra.mxu0 0
  %8702 = vmatprep.subr.bf16.mxu0 0
  %8703 = vmatpush1.bf16.msra.mxu0 0
  %8704 = vmatprep.subr.bf16.mxu0 0
  %8705 = vmatpush1.bf16.msra.mxu0 0
  %8706 = vmatprep.subr.bf16.mxu0 0
  %8707 = vmatpush1.bf16.msra.mxu0 0
  %8708 = vmatprep.mubr.bf16.mxu0 0
  %8709 = vmatmul.mubr.bf16.gmra.mrb[0].mxu0 %v8674
  %v8710 = vpop.f32.mrb[0].mxu0
  %v8711 = vadd.f32 %v8341, %v8710
  %v8712 = vpop.f32.mrb[0].mxu0
  %v8713 = vpop.f32.mrb[0].mxu0
  %v8714 = vadd.f32 %v8341, %v8713
  %v8715 = vpop.f32.mrb[0].mxu0
  %8716 = vdwg.mxu0
  %8717 = vst [vmem:[%s13] sm:$0xff] %v8711
  %8718 = vst [vmem:[%s13 + $0x8] sm:$0xff] %v8714
  // Predicated region
  $region54: #{vit16_forward.1} parent=0 // pred_check
    _
  $region55: #{vit16_forward.1} parent=0 // pred_check_branch
    %8720 = sbr.rel (0) target = $region57
  $region56: #{vit16_forward.1} parent=0 // pred_region
    _
  $region57: #{vit16_forward.1} parent=0 // pred_fallthru
    _
  // Predicated region
  $region58: #{vit16_forward.1} parent=0 // pred_check
    _
  $region59: #{vit16_forward.1} parent=0 // pred_check_branch
    %8722 = sbr.rel (0) target = $region61
  $region60: #{vit16_forward.1} parent=0 // pred_region
    _
  $region61: #{vit16_forward.1} parent=0 // pred_fallthru
    _

</llo_original>
